<compile_context>
chip_gen: v5e
topology: v5e:2x2
jax: 0.10.0
libtpu: 0.0.40
codegen_flags: <defaults>
</compile_context>

<pallas_src>
import jax
import jax.numpy as jnp
from jax.experimental import pallas as pl
from jax.experimental.pallas import tpu as pltpu


# ---------------------------------------------------------------------------
# Fixed LeNet-5 geometry (32x32 RGB input).
# ---------------------------------------------------------------------------
H0 = W0 = 32
IN_PAD = 1152            # 3*32*32 = 1024 flattened + zero slack for tap reads
H1, W1V = 28, 28         # conv1 valid output, stored at row width W0 = 32
P1W = 14                 # pool1 logical row width
P1_PAD = 256             # pool1 flat storage: 14*14 = 196 real + zero slack
H2, W2V = 10, 10         # conv2 valid output, stored at row width P1W = 14
P2W = 5                  # pool2 logical row width
P2_PAD = 32              # pool2 flat storage: 5*5 = 25 real + zero slack
NCLASS = 10
NCLASS_PAD = 16
NEG = -1e30              # bias padding for the padded logit rows


# ---------------------------------------------------------------------------
# In-kernel helpers (traced into the single fused kernel)
# ---------------------------------------------------------------------------
def _conv_taps(inp, w_ref, b_ref, cin, row_w, out_len):
    """Valid 5x5 / stride-1 conv as 25 shifted MXU dots.

    inp   : bf16 (cin, S) activation, spatial flattened row-major with row
            width `row_w` (extra columns are finite zero padding).
    w_ref : bf16 (cout, 25*cin) weights, column order (di*5+dj)*cin + ci.
    b_ref : f32  (cout, 1) bias.
    Returns f32 (cout, out_len) pre-activation (output keeps row width row_w;
    columns >= valid width are don't-care but stay finite).
    """
    acc = None
    for di in range(5):
        for dj in range(5):
            t = di * 5 + dj
            rhs = inp[:, di * row_w + dj: di * row_w + dj + out_len]
            lhs = w_ref[:, t * cin:(t + 1) * cin]
            d = jnp.dot(lhs, rhs, preferred_element_type=jnp.float32)
            acc = d if acc is None else acc + d
    return acc + b_ref[...]


def _pool2x2(v, row_w, sel_ref):
    """2x2 / stride-2 max pool of f32 (C, H*row_w): two shifted maxes build
    the per-window max, then one 0/1 selection matmul decimates and re-packs
    the result densely (zero in padding columns)."""
    s = v.shape[1]
    hm = jnp.maximum(v[:, :s - 1], v[:, 1:])                 # horizontal pair
    vm = jnp.maximum(hm[:, :s - 1 - row_w], hm[:, row_w:])   # + vertical pair
    return jnp.dot(vm, sel_ref[...], preferred_element_type=jnp.float32)


def _tree16(x, op):
    """Reduce a (16, 1) column with `op` down to (1, 1)."""
    x = op(x[0:8, :], x[8:16, :])
    x = op(x[0:4, :], x[4:8, :])
    x = op(x[0:2, :], x[2:4, :])
    return op(x[0:1, :], x[1:2, :])


def _lenet_kernel(x_ref, w1_ref, b1_ref, w2_ref, b2_ref, w3_ref, b3_ref,
                  wf1_ref, bf1_ref, wf2_ref, bf2_ref, sel1_ref, sel2_ref,
                  out_ref):
    # One image per grid step; activations live entirely in VMEM / vregs with
    # channels on sublanes and flattened spatial on lanes.
    x = x_ref[0]                                                    # (3,1152) bf16
    v1 = jnp.tanh(_conv_taps(x, w1_ref, b1_ref, 3, W0, H1 * W0))    # (6,896) f32
    p1 = _pool2x2(v1, W0, sel1_ref).astype(jnp.bfloat16)            # (6,256)
    v2 = jnp.tanh(_conv_taps(p1, w2_ref, b2_ref, 6, P1W, H2 * P1W))  # (16,140)
    p2 = _pool2x2(v2, P1W, sel2_ref).astype(jnp.bfloat16)           # (16,32)
    a3 = jnp.tanh(_conv_taps(p2, w3_ref, b3_ref, 16, P2W, P2W))     # (120,5)
    feat = a3[:, 0:1].astype(jnp.bfloat16)                          # (120,1)

    # Classifier head (nn.Dropout is identity at inference time).
    h = jnp.tanh(jnp.dot(wf1_ref[...], feat,
                         preferred_element_type=jnp.float32) + bf1_ref[...])
    logits = jnp.dot(wf2_ref[...], h.astype(jnp.bfloat16),
                     preferred_element_type=jnp.float32) + bf2_ref[...]  # (16,1)

    m = _tree16(logits, jnp.maximum)         # max logit (padded rows = -1e30)
    e = jnp.exp(logits - m)                  # padded rows underflow to 0
    s = _tree16(e, jnp.add)                  # (1, 1) denominator
    inv = pl.reciprocal(s, approx=True)
    inv = inv * (2.0 - s * inv)              # one Newton step -> ~f32 accuracy
    out_ref[0] = e * inv                     # (16, 1) probabilities (pad = 0)


# ---------------------------------------------------------------------------
# Wrapper-side (model-boundary) layout plumbing
# ---------------------------------------------------------------------------
def _pool_selection(conv_h, row_w, valid_w, out_w):
    """0/1 f32 matrix (conv_h*row_w - row_w - 1, out_w) that picks the
    top-left corner of every 2x2 window from the shifted-max map, producing a
    densely packed (valid_w//2 wide) pooled layout with zero padding cols."""
    hp, wp = conv_h // 2, valid_w // 2
    src_len = conv_h * row_w - row_w - 1
    k = jnp.arange(out_w)
    src = 2 * (k // wp) * row_w + 2 * (k % wp)
    valid = k < hp * wp
    p = jnp.arange(src_len)[:, None]
    return ((p == src[None, :]) & valid[None, :]).astype(jnp.float32)


def _pack_params(p):
    """Torch-layout f32 params -> kernel-ready (bf16 weights, padded fc2)."""
    def conv_w(w):  # (Cout, Cin, 5, 5) -> (Cout, 25*Cin), tap-major, ci minor
        cout, cin = w.shape[0], w.shape[1]
        return (w.transpose(0, 2, 3, 1).reshape(cout, 25 * cin)
                .astype(jnp.bfloat16))

    return dict(
        w1=conv_w(p["conv1_w"]), b1=p["conv1_b"].reshape(6, 1),
        w2=conv_w(p["conv2_w"]), b2=p["conv2_b"].reshape(16, 1),
        w3=conv_w(p["conv3_w"]), b3=p["conv3_b"].reshape(120, 1),
        wf1=p["fc1_w"].astype(jnp.bfloat16),
        bf1=p["fc1_b"].reshape(84, 1),
        wf2=jnp.concatenate(
            [p["fc2_w"], jnp.zeros((NCLASS_PAD - NCLASS, 84), jnp.float32)],
            axis=0).astype(jnp.bfloat16),
        bf2=jnp.concatenate(
            [p["fc2_b"], jnp.full((NCLASS_PAD - NCLASS,), NEG, jnp.float32)],
            axis=0).reshape(NCLASS_PAD, 1),
    )


@jax.jit
def lenet5_forward(params, x):
    """x: (B, 3, 32, 32) float32 NCHW -> (B, 10) softmax probabilities."""
    B = x.shape[0]
    kp = _pack_params(params)
    sel1 = _pool_selection(H1, W0, W1V, P1_PAD)     # (863, 256)
    sel2 = _pool_selection(H2, P1W, W2V, P2_PAD)    # (125, 32)

    # Model-boundary layout: flatten spatial, zero-pad slack, bf16 for the MXU.
    xp = x.reshape(B, 3, H0 * W0)
    xp = jnp.pad(xp, ((0, 0), (0, 0), (0, IN_PAD - H0 * W0)))
    xp = xp.astype(jnp.bfloat16)

    def full(a):  # whole array resident in VMEM, fetched once
        return pl.BlockSpec(a.shape, lambda b: (0, 0))

    out = pl.pallas_call(
        _lenet_kernel,
        out_shape=jax.ShapeDtypeStruct((B, NCLASS_PAD, 1), jnp.float32),
        grid_spec=pltpu.PrefetchScalarGridSpec(
            num_scalar_prefetch=0,
            grid=(B,),
            in_specs=[
                pl.BlockSpec((1, 3, IN_PAD), lambda b: (b, 0, 0)),
                full(kp["w1"]), full(kp["b1"]),
                full(kp["w2"]), full(kp["b2"]),
                full(kp["w3"]), full(kp["b3"]),
                full(kp["wf1"]), full(kp["bf1"]),
                full(kp["wf2"]), full(kp["bf2"]),
                full(sel1), full(sel2),
            ],
            out_specs=pl.BlockSpec((1, NCLASS_PAD, 1), lambda b: (b, 0, 0)),
        ),
        compiler_params=pltpu.CompilerParams(
            dimension_semantics=("parallel",),
        ),
    )(xp, kp["w1"], kp["b1"], kp["w2"], kp["b2"], kp["w3"], kp["b3"],
      kp["wf1"], kp["bf1"], kp["wf2"], kp["bf2"], sel1, sel2)

    return out[:, :NCLASS, 0]


# ---------------------------------------------------------------------------
# Parameters (torch-equivalent init / layouts) and plain-JAX reference
# ---------------------------------------------------------------------------
def init_params(key):
    ks = jax.random.split(key, 10)

    def u(k, shape, fan_in):
        bound = 1.0 / (fan_in ** 0.5)
        return jax.random.uniform(k, shape, jnp.float32, -bound, bound)

    return {
        "conv1_w": u(ks[0], (6, 3, 5, 5), 3 * 25),
        "conv1_b": u(ks[1], (6,), 3 * 25),
        "conv2_w": u(ks[2], (16, 6, 5, 5), 6 * 25),
        "conv2_b": u(ks[3], (16,), 6 * 25),
        "conv3_w": u(ks[4], (120, 16, 5, 5), 16 * 25),
        "conv3_b": u(ks[5], (120,), 16 * 25),
        "fc1_w": u(ks[6], (84, 120), 120),   # torch nn.Linear layout (out, in)
        "fc1_b": u(ks[7], (84,), 120),
        "fc2_w": u(ks[8], (10, 84), 84),
        "fc2_b": u(ks[9], (10,), 84),
    }


def _reference_forward(params, x):
    def conv(v, w, b):
        y = jax.lax.conv_general_dilated(
            v, w, window_strides=(1, 1), padding="VALID",
            dimension_numbers=("NCHW", "OIHW", "NCHW"))
        return jnp.tanh(y + b[None, :, None, None])

    def pool(v):
        return jax.lax.reduce_window(v, -jnp.inf, jax.lax.max,
                                     (1, 1, 2, 2), (1, 1, 2, 2), "VALID")

    y = pool(conv(x, params["conv1_w"], params["conv1_b"]))
    y = pool(conv(y, params["conv2_w"], params["conv2_b"]))
    y = conv(y, params["conv3_w"], params["conv3_b"])
    y = y.reshape(y.shape[0], -1)
    h = jnp.tanh(y @ params["fc1_w"].T + params["fc1_b"])
    logits = h @ params["fc2_w"].T + params["fc2_b"]
    return jax.nn.softmax(logits, axis=-1)


if __name__ == "__main__":
    key = jax.random.PRNGKey(0)
    k_param, k_x = jax.random.split(key)
    params = init_params(k_param)
    # LeNet-5 geometry requires 32x32 spatial input so the final conv is 1x1.
    x = jax.random.normal(k_x, (2, 3, 32, 32), dtype=jnp.float32)

    probs = jax.block_until_ready(lenet5_forward(params, x))

    assert probs.shape == (2, 10)
    assert bool(jnp.all(jnp.isfinite(probs)))
    assert bool(jnp.allclose(jnp.sum(probs, axis=1), 1.0, atol=1e-4))

    # Cross-check against a plain-JAX f32 reference (the kernel uses bf16 MXU
    # inputs, so allow a small tolerance on the probabilities).
    ref = jax.block_until_ready(_reference_forward(params, x))
    assert float(jnp.max(jnp.abs(probs - ref))) < 5e-2

    print("KERNEL_OK")
</pallas_src>

<mosaic_0001>
module attributes {stable_mosaic.version = 11 : i64} {
  func.func @_lenet_kernel(%arg0: i32, %arg1: memref<1x3x1152xbf16, #tpu.memory_space<vmem>>, %arg2: memref<6x75xbf16, #tpu.memory_space<vmem>>, %arg3: memref<6x1xf32, #tpu.memory_space<vmem>>, %arg4: memref<16x150xbf16, #tpu.memory_space<vmem>>, %arg5: memref<16x1xf32, #tpu.memory_space<vmem>>, %arg6: memref<120x400xbf16, #tpu.memory_space<vmem>>, %arg7: memref<120x1xf32, #tpu.memory_space<vmem>>, %arg8: memref<84x120xbf16, #tpu.memory_space<vmem>>, %arg9: memref<84x1xf32, #tpu.memory_space<vmem>>, %arg10: memref<16x84xbf16, #tpu.memory_space<vmem>>, %arg11: memref<16x1xf32, #tpu.memory_space<vmem>>, %arg12: memref<863x256xf32, #tpu.memory_space<vmem>>, %arg13: memref<125x32xf32, #tpu.memory_space<vmem>>, %arg14: memref<1x16x1xf32, #tpu.memory_space<vmem>>) attributes {dimension_semantics = [#tpu.dimension_semantics<parallel>], iteration_bounds = array<i64: 2>, scalar_prefetch = 0 : i64, scratch_operands = 0 : i64, tpu.core_type = #tpu.core_type<tc>, window_params = [{transform_indices = @transform_0, window_bounds = array<i64: 1, 3, 1152>}, {pipeline_mode = #tpu.pipeline_mode<synchronous>, transform_indices = @transform_1, window_bounds = array<i64: 6, 75>}, {pipeline_mode = #tpu.pipeline_mode<synchronous>, transform_indices = @transform_2, window_bounds = array<i64: 6, 1>}, {pipeline_mode = #tpu.pipeline_mode<synchronous>, transform_indices = @transform_3, window_bounds = array<i64: 16, 150>}, {pipeline_mode = #tpu.pipeline_mode<synchronous>, transform_indices = @transform_4, window_bounds = array<i64: 16, 1>}, {pipeline_mode = #tpu.pipeline_mode<synchronous>, transform_indices = @transform_5, window_bounds = array<i64: 120, 400>}, {pipeline_mode = #tpu.pipeline_mode<synchronous>, transform_indices = @transform_6, window_bounds = array<i64: 120, 1>}, {pipeline_mode = #tpu.pipeline_mode<synchronous>, transform_indices = @transform_7, window_bounds = array<i64: 84, 120>}, {pipeline_mode = #tpu.pipeline_mode<synchronous>, transform_indices = @transform_8, window_bounds = array<i64: 84, 1>}, {pipeline_mode = #tpu.pipeline_mode<synchronous>, transform_indices = @transform_9, window_bounds = array<i64: 16, 84>}, {pipeline_mode = #tpu.pipeline_mode<synchronous>, transform_indices = @transform_10, window_bounds = array<i64: 16, 1>}, {pipeline_mode = #tpu.pipeline_mode<synchronous>, transform_indices = @transform_11, window_bounds = array<i64: 863, 256>}, {pipeline_mode = #tpu.pipeline_mode<synchronous>, transform_indices = @transform_12, window_bounds = array<i64: 125, 32>}, {transform_indices = @transform_13, window_bounds = array<i64: 1, 16, 1>}]} {
    %c0 = arith.constant 0 : index
    %c0_0 = arith.constant 0 : index
    %c0_1 = arith.constant 0 : index
    %0 = vector.load %arg1[%c0, %c0_0, %c0_1] : memref<1x3x1152xbf16, #tpu.memory_space<vmem>>, vector<1x3x1152xbf16>
    %1 = vector.shape_cast %0 : vector<1x3x1152xbf16> to vector<3x1152xbf16>
    %2 = vector.extract_strided_slice %1 {offsets = [0, 0], sizes = [3, 896], strides = [1, 1]} : vector<3x1152xbf16> to vector<3x896xbf16>
    %c0_2 = arith.constant 0 : index
    %c0_3 = arith.constant 0 : index
    %3 = vector.load %arg2[%c0_2, %c0_3] : memref<6x75xbf16, #tpu.memory_space<vmem>>, vector<6x3xbf16>
    %cst = arith.constant dense<0.000000e+00> : vector<6x896xf32>
    %4 = tpu.matmul %3, %2, %cst {dimension_numbers = #tpu.dot_dimension_numbers<[1], [0], [0], [1], [0, 0, 1, 1], [], []>} : vector<6x3xbf16>, vector<3x896xbf16>, vector<6x896xf32> -> vector<6x896xf32>
    %5 = vector.extract_strided_slice %1 {offsets = [0, 1], sizes = [3, 896], strides = [1, 1]} : vector<3x1152xbf16> to vector<3x896xbf16>
    %c0_4 = arith.constant 0 : index
    %c3 = arith.constant 3 : index
    %6 = vector.load %arg2[%c0_4, %c3] : memref<6x75xbf16, #tpu.memory_space<vmem>>, vector<6x3xbf16>
    %cst_5 = arith.constant dense<0.000000e+00> : vector<6x896xf32>
    %7 = tpu.matmul %6, %5, %cst_5 {dimension_numbers = #tpu.dot_dimension_numbers<[1], [0], [0], [1], [0, 0, 1, 1], [], []>} : vector<6x3xbf16>, vector<3x896xbf16>, vector<6x896xf32> -> vector<6x896xf32>
    %8 = arith.addf %4, %7 : vector<6x896xf32>
    %9 = vector.extract_strided_slice %1 {offsets = [0, 2], sizes = [3, 896], strides = [1, 1]} : vector<3x1152xbf16> to vector<3x896xbf16>
    %c0_6 = arith.constant 0 : index
    %c6 = arith.constant 6 : index
    %10 = vector.load %arg2[%c0_6, %c6] : memref<6x75xbf16, #tpu.memory_space<vmem>>, vector<6x3xbf16>
    %cst_7 = arith.constant dense<0.000000e+00> : vector<6x896xf32>
    %11 = tpu.matmul %10, %9, %cst_7 {dimension_numbers = #tpu.dot_dimension_numbers<[1], [0], [0], [1], [0, 0, 1, 1], [], []>} : vector<6x3xbf16>, vector<3x896xbf16>, vector<6x896xf32> -> vector<6x896xf32>
    %12 = arith.addf %8, %11 : vector<6x896xf32>
    %13 = vector.extract_strided_slice %1 {offsets = [0, 3], sizes = [3, 896], strides = [1, 1]} : vector<3x1152xbf16> to vector<3x896xbf16>
    %c0_8 = arith.constant 0 : index
    %c9 = arith.constant 9 : index
    %14 = vector.load %arg2[%c0_8, %c9] : memref<6x75xbf16, #tpu.memory_space<vmem>>, vector<6x3xbf16>
    %cst_9 = arith.constant dense<0.000000e+00> : vector<6x896xf32>
    %15 = tpu.matmul %14, %13, %cst_9 {dimension_numbers = #tpu.dot_dimension_numbers<[1], [0], [0], [1], [0, 0, 1, 1], [], []>} : vector<6x3xbf16>, vector<3x896xbf16>, vector<6x896xf32> -> vector<6x896xf32>
    %16 = arith.addf %12, %15 : vector<6x896xf32>
    %17 = vector.extract_strided_slice %1 {offsets = [0, 4], sizes = [3, 896], strides = [1, 1]} : vector<3x1152xbf16> to vector<3x896xbf16>
    %c0_10 = arith.constant 0 : index
    %c12 = arith.constant 12 : index
    %18 = vector.load %arg2[%c0_10, %c12] : memref<6x75xbf16, #tpu.memory_space<vmem>>, vector<6x3xbf16>
    %cst_11 = arith.constant dense<0.000000e+00> : vector<6x896xf32>
    %19 = tpu.matmul %18, %17, %cst_11 {dimension_numbers = #tpu.dot_dimension_numbers<[1], [0], [0], [1], [0, 0, 1, 1], [], []>} : vector<6x3xbf16>, vector<3x896xbf16>, vector<6x896xf32> -> vector<6x896xf32>
    %20 = arith.addf %16, %19 : vector<6x896xf32>
    %21 = vector.extract_strided_slice %1 {offsets = [0, 32], sizes = [3, 896], strides = [1, 1]} : vector<3x1152xbf16> to vector<3x896xbf16>
    %c0_12 = arith.constant 0 : index
    %c15 = arith.constant 15 : index
    %22 = vector.load %arg2[%c0_12, %c15] : memref<6x75xbf16, #tpu.memory_space<vmem>>, vector<6x3xbf16>
    %cst_13 = arith.constant dense<0.000000e+00> : vector<6x896xf32>
    %23 = tpu.matmul %22, %21, %cst_13 {dimension_numbers = #tpu.dot_dimension_numbers<[1], [0], [0], [1], [0, 0, 1, 1], [], []>} : vector<6x3xbf16>, vector<3x896xbf16>, vector<6x896xf32> -> vector<6x896xf32>
    %24 = arith.addf %20, %23 : vector<6x896xf32>
    %25 = vector.extract_strided_slice %1 {offsets = [0, 33], sizes = [3, 896], strides = [1, 1]} : vector<3x1152xbf16> to vector<3x896xbf16>
    %c0_14 = arith.constant 0 : index
    %c18 = arith.constant 18 : index
    %26 = vector.load %arg2[%c0_14, %c18] : memref<6x75xbf16, #tpu.memory_space<vmem>>, vector<6x3xbf16>
    %cst_15 = arith.constant dense<0.000000e+00> : vector<6x896xf32>
    %27 = tpu.matmul %26, %25, %cst_15 {dimension_numbers = #tpu.dot_dimension_numbers<[1], [0], [0], [1], [0, 0, 1, 1], [], []>} : vector<6x3xbf16>, vector<3x896xbf16>, vector<6x896xf32> -> vector<6x896xf32>
    %28 = arith.addf %24, %27 : vector<6x896xf32>
    %29 = vector.extract_strided_slice %1 {offsets = [0, 34], sizes = [3, 896], strides = [1, 1]} : vector<3x1152xbf16> to vector<3x896xbf16>
    %c0_16 = arith.constant 0 : index
    %c21 = arith.constant 21 : index
    %30 = vector.load %arg2[%c0_16, %c21] : memref<6x75xbf16, #tpu.memory_space<vmem>>, vector<6x3xbf16>
    %cst_17 = arith.constant dense<0.000000e+00> : vector<6x896xf32>
    %31 = tpu.matmul %30, %29, %cst_17 {dimension_numbers = #tpu.dot_dimension_numbers<[1], [0], [0], [1], [0, 0, 1, 1], [], []>} : vector<6x3xbf16>, vector<3x896xbf16>, vector<6x896xf32> -> vector<6x896xf32>
    %32 = arith.addf %28, %31 : vector<6x896xf32>
    %33 = vector.extract_strided_slice %1 {offsets = [0, 35], sizes = [3, 896], strides = [1, 1]} : vector<3x1152xbf16> to vector<3x896xbf16>
    %c0_18 = arith.constant 0 : index
    %c24 = arith.constant 24 : index
    %34 = vector.load %arg2[%c0_18, %c24] : memref<6x75xbf16, #tpu.memory_space<vmem>>, vector<6x3xbf16>
    %cst_19 = arith.constant dense<0.000000e+00> : vector<6x896xf32>
    %35 = tpu.matmul %34, %33, %cst_19 {dimension_numbers = #tpu.dot_dimension_numbers<[1], [0], [0], [1], [0, 0, 1, 1], [], []>} : vector<6x3xbf16>, vector<3x896xbf16>, vector<6x896xf32> -> vector<6x896xf32>
    %36 = arith.addf %32, %35 : vector<6x896xf32>
    %37 = vector.extract_strided_slice %1 {offsets = [0, 36], sizes = [3, 896], strides = [1, 1]} : vector<3x1152xbf16> to vector<3x896xbf16>
    %c0_20 = arith.constant 0 : index
    %c27 = arith.constant 27 : index
    %38 = vector.load %arg2[%c0_20, %c27] : memref<6x75xbf16, #tpu.memory_space<vmem>>, vector<6x3xbf16>
    %cst_21 = arith.constant dense<0.000000e+00> : vector<6x896xf32>
    %39 = tpu.matmul %38, %37, %cst_21 {dimension_numbers = #tpu.dot_dimension_numbers<[1], [0], [0], [1], [0, 0, 1, 1], [], []>} : vector<6x3xbf16>, vector<3x896xbf16>, vector<6x896xf32> -> vector<6x896xf32>
    %40 = arith.addf %36, %39 : vector<6x896xf32>
    %41 = vector.extract_strided_slice %1 {offsets = [0, 64], sizes = [3, 896], strides = [1, 1]} : vector<3x1152xbf16> to vector<3x896xbf16>
    %c0_22 = arith.constant 0 : index
    %c30 = arith.constant 30 : index
    %42 = vector.load %arg2[%c0_22, %c30] : memref<6x75xbf16, #tpu.memory_space<vmem>>, vector<6x3xbf16>
    %cst_23 = arith.constant dense<0.000000e+00> : vector<6x896xf32>
    %43 = tpu.matmul %42, %41, %cst_23 {dimension_numbers = #tpu.dot_dimension_numbers<[1], [0], [0], [1], [0, 0, 1, 1], [], []>} : vector<6x3xbf16>, vector<3x896xbf16>, vector<6x896xf32> -> vector<6x896xf32>
    %44 = arith.addf %40, %43 : vector<6x896xf32>
    %45 = vector.extract_strided_slice %1 {offsets = [0, 65], sizes = [3, 896], strides = [1, 1]} : vector<3x1152xbf16> to vector<3x896xbf16>
    %c0_24 = arith.constant 0 : index
    %c33 = arith.constant 33 : index
    %46 = vector.load %arg2[%c0_24, %c33] : memref<6x75xbf16, #tpu.memory_space<vmem>>, vector<6x3xbf16>
    %cst_25 = arith.constant dense<0.000000e+00> : vector<6x896xf32>
    %47 = tpu.matmul %46, %45, %cst_25 {dimension_numbers = #tpu.dot_dimension_numbers<[1], [0], [0], [1], [0, 0, 1, 1], [], []>} : vector<6x3xbf16>, vector<3x896xbf16>, vector<6x896xf32> -> vector<6x896xf32>
    %48 = arith.addf %44, %47 : vector<6x896xf32>
    %49 = vector.extract_strided_slice %1 {offsets = [0, 66], sizes = [3, 896], strides = [1, 1]} : vector<3x1152xbf16> to vector<3x896xbf16>
    %c0_26 = arith.constant 0 : index
    %c36 = arith.constant 36 : index
    %50 = vector.load %arg2[%c0_26, %c36] : memref<6x75xbf16, #tpu.memory_space<vmem>>, vector<6x3xbf16>
    %cst_27 = arith.constant dense<0.000000e+00> : vector<6x896xf32>
    %51 = tpu.matmul %50, %49, %cst_27 {dimension_numbers = #tpu.dot_dimension_numbers<[1], [0], [0], [1], [0, 0, 1, 1], [], []>} : vector<6x3xbf16>, vector<3x896xbf16>, vector<6x896xf32> -> vector<6x896xf32>
    %52 = arith.addf %48, %51 : vector<6x896xf32>
    %53 = vector.extract_strided_slice %1 {offsets = [0, 67], sizes = [3, 896], strides = [1, 1]} : vector<3x1152xbf16> to vector<3x896xbf16>
    %c0_28 = arith.constant 0 : index
    %c39 = arith.constant 39 : index
    %54 = vector.load %arg2[%c0_28, %c39] : memref<6x75xbf16, #tpu.memory_space<vmem>>, vector<6x3xbf16>
    %cst_29 = arith.constant dense<0.000000e+00> : vector<6x896xf32>
    %55 = tpu.matmul %54, %53, %cst_29 {dimension_numbers = #tpu.dot_dimension_numbers<[1], [0], [0], [1], [0, 0, 1, 1], [], []>} : vector<6x3xbf16>, vector<3x896xbf16>, vector<6x896xf32> -> vector<6x896xf32>
    %56 = arith.addf %52, %55 : vector<6x896xf32>
    %57 = vector.extract_strided_slice %1 {offsets = [0, 68], sizes = [3, 896], strides = [1, 1]} : vector<3x1152xbf16> to vector<3x896xbf16>
    %c0_30 = arith.constant 0 : index
    %c42 = arith.constant 42 : index
    %58 = vector.load %arg2[%c0_30, %c42] : memref<6x75xbf16, #tpu.memory_space<vmem>>, vector<6x3xbf16>
    %cst_31 = arith.constant dense<0.000000e+00> : vector<6x896xf32>
    %59 = tpu.matmul %58, %57, %cst_31 {dimension_numbers = #tpu.dot_dimension_numbers<[1], [0], [0], [1], [0, 0, 1, 1], [], []>} : vector<6x3xbf16>, vector<3x896xbf16>, vector<6x896xf32> -> vector<6x896xf32>
    %60 = arith.addf %56, %59 : vector<6x896xf32>
    %61 = vector.extract_strided_slice %1 {offsets = [0, 96], sizes = [3, 896], strides = [1, 1]} : vector<3x1152xbf16> to vector<3x896xbf16>
    %c0_32 = arith.constant 0 : index
    %c45 = arith.constant 45 : index
    %62 = vector.load %arg2[%c0_32, %c45] : memref<6x75xbf16, #tpu.memory_space<vmem>>, vector<6x3xbf16>
    %cst_33 = arith.constant dense<0.000000e+00> : vector<6x896xf32>
    %63 = tpu.matmul %62, %61, %cst_33 {dimension_numbers = #tpu.dot_dimension_numbers<[1], [0], [0], [1], [0, 0, 1, 1], [], []>} : vector<6x3xbf16>, vector<3x896xbf16>, vector<6x896xf32> -> vector<6x896xf32>
    %64 = arith.addf %60, %63 : vector<6x896xf32>
    %65 = vector.extract_strided_slice %1 {offsets = [0, 97], sizes = [3, 896], strides = [1, 1]} : vector<3x1152xbf16> to vector<3x896xbf16>
    %c0_34 = arith.constant 0 : index
    %c48 = arith.constant 48 : index
    %66 = vector.load %arg2[%c0_34, %c48] : memref<6x75xbf16, #tpu.memory_space<vmem>>, vector<6x3xbf16>
    %cst_35 = arith.constant dense<0.000000e+00> : vector<6x896xf32>
    %67 = tpu.matmul %66, %65, %cst_35 {dimension_numbers = #tpu.dot_dimension_numbers<[1], [0], [0], [1], [0, 0, 1, 1], [], []>} : vector<6x3xbf16>, vector<3x896xbf16>, vector<6x896xf32> -> vector<6x896xf32>
    %68 = arith.addf %64, %67 : vector<6x896xf32>
    %69 = vector.extract_strided_slice %1 {offsets = [0, 98], sizes = [3, 896], strides = [1, 1]} : vector<3x1152xbf16> to vector<3x896xbf16>
    %c0_36 = arith.constant 0 : index
    %c51 = arith.constant 51 : index
    %70 = vector.load %arg2[%c0_36, %c51] : memref<6x75xbf16, #tpu.memory_space<vmem>>, vector<6x3xbf16>
    %cst_37 = arith.constant dense<0.000000e+00> : vector<6x896xf32>
    %71 = tpu.matmul %70, %69, %cst_37 {dimension_numbers = #tpu.dot_dimension_numbers<[1], [0], [0], [1], [0, 0, 1, 1], [], []>} : vector<6x3xbf16>, vector<3x896xbf16>, vector<6x896xf32> -> vector<6x896xf32>
    %72 = arith.addf %68, %71 : vector<6x896xf32>
    %73 = vector.extract_strided_slice %1 {offsets = [0, 99], sizes = [3, 896], strides = [1, 1]} : vector<3x1152xbf16> to vector<3x896xbf16>
    %c0_38 = arith.constant 0 : index
    %c54 = arith.constant 54 : index
    %74 = vector.load %arg2[%c0_38, %c54] : memref<6x75xbf16, #tpu.memory_space<vmem>>, vector<6x3xbf16>
    %cst_39 = arith.constant dense<0.000000e+00> : vector<6x896xf32>
    %75 = tpu.matmul %74, %73, %cst_39 {dimension_numbers = #tpu.dot_dimension_numbers<[1], [0], [0], [1], [0, 0, 1, 1], [], []>} : vector<6x3xbf16>, vector<3x896xbf16>, vector<6x896xf32> -> vector<6x896xf32>
    %76 = arith.addf %72, %75 : vector<6x896xf32>
    %77 = vector.extract_strided_slice %1 {offsets = [0, 100], sizes = [3, 896], strides = [1, 1]} : vector<3x1152xbf16> to vector<3x896xbf16>
    %c0_40 = arith.constant 0 : index
    %c57 = arith.constant 57 : index
    %78 = vector.load %arg2[%c0_40, %c57] : memref<6x75xbf16, #tpu.memory_space<vmem>>, vector<6x3xbf16>
    %cst_41 = arith.constant dense<0.000000e+00> : vector<6x896xf32>
    %79 = tpu.matmul %78, %77, %cst_41 {dimension_numbers = #tpu.dot_dimension_numbers<[1], [0], [0], [1], [0, 0, 1, 1], [], []>} : vector<6x3xbf16>, vector<3x896xbf16>, vector<6x896xf32> -> vector<6x896xf32>
    %80 = arith.addf %76, %79 : vector<6x896xf32>
    %81 = vector.extract_strided_slice %1 {offsets = [0, 128], sizes = [3, 896], strides = [1, 1]} : vector<3x1152xbf16> to vector<3x896xbf16>
    %c0_42 = arith.constant 0 : index
    %c60 = arith.constant 60 : index
    %82 = vector.load %arg2[%c0_42, %c60] : memref<6x75xbf16, #tpu.memory_space<vmem>>, vector<6x3xbf16>
    %cst_43 = arith.constant dense<0.000000e+00> : vector<6x896xf32>
    %83 = tpu.matmul %82, %81, %cst_43 {dimension_numbers = #tpu.dot_dimension_numbers<[1], [0], [0], [1], [0, 0, 1, 1], [], []>} : vector<6x3xbf16>, vector<3x896xbf16>, vector<6x896xf32> -> vector<6x896xf32>
    %84 = arith.addf %80, %83 : vector<6x896xf32>
    %85 = vector.extract_strided_slice %1 {offsets = [0, 129], sizes = [3, 896], strides = [1, 1]} : vector<3x1152xbf16> to vector<3x896xbf16>
    %c0_44 = arith.constant 0 : index
    %c63 = arith.constant 63 : index
    %86 = vector.load %arg2[%c0_44, %c63] : memref<6x75xbf16, #tpu.memory_space<vmem>>, vector<6x3xbf16>
    %cst_45 = arith.constant dense<0.000000e+00> : vector<6x896xf32>
    %87 = tpu.matmul %86, %85, %cst_45 {dimension_numbers = #tpu.dot_dimension_numbers<[1], [0], [0], [1], [0, 0, 1, 1], [], []>} : vector<6x3xbf16>, vector<3x896xbf16>, vector<6x896xf32> -> vector<6x896xf32>
    %88 = arith.addf %84, %87 : vector<6x896xf32>
    %89 = vector.extract_strided_slice %1 {offsets = [0, 130], sizes = [3, 896], strides = [1, 1]} : vector<3x1152xbf16> to vector<3x896xbf16>
    %c0_46 = arith.constant 0 : index
    %c66 = arith.constant 66 : index
    %90 = vector.load %arg2[%c0_46, %c66] : memref<6x75xbf16, #tpu.memory_space<vmem>>, vector<6x3xbf16>
    %cst_47 = arith.constant dense<0.000000e+00> : vector<6x896xf32>
    %91 = tpu.matmul %90, %89, %cst_47 {dimension_numbers = #tpu.dot_dimension_numbers<[1], [0], [0], [1], [0, 0, 1, 1], [], []>} : vector<6x3xbf16>, vector<3x896xbf16>, vector<6x896xf32> -> vector<6x896xf32>
    %92 = arith.addf %88, %91 : vector<6x896xf32>
    %93 = vector.extract_strided_slice %1 {offsets = [0, 131], sizes = [3, 896], strides = [1, 1]} : vector<3x1152xbf16> to vector<3x896xbf16>
    %c0_48 = arith.constant 0 : index
    %c69 = arith.constant 69 : index
    %94 = vector.load %arg2[%c0_48, %c69] : memref<6x75xbf16, #tpu.memory_space<vmem>>, vector<6x3xbf16>
    %cst_49 = arith.constant dense<0.000000e+00> : vector<6x896xf32>
    %95 = tpu.matmul %94, %93, %cst_49 {dimension_numbers = #tpu.dot_dimension_numbers<[1], [0], [0], [1], [0, 0, 1, 1], [], []>} : vector<6x3xbf16>, vector<3x896xbf16>, vector<6x896xf32> -> vector<6x896xf32>
    %96 = arith.addf %92, %95 : vector<6x896xf32>
    %97 = vector.extract_strided_slice %1 {offsets = [0, 132], sizes = [3, 896], strides = [1, 1]} : vector<3x1152xbf16> to vector<3x896xbf16>
    %c0_50 = arith.constant 0 : index
    %c72 = arith.constant 72 : index
    %98 = vector.load %arg2[%c0_50, %c72] : memref<6x75xbf16, #tpu.memory_space<vmem>>, vector<6x3xbf16>
    %cst_51 = arith.constant dense<0.000000e+00> : vector<6x896xf32>
    %99 = tpu.matmul %98, %97, %cst_51 {dimension_numbers = #tpu.dot_dimension_numbers<[1], [0], [0], [1], [0, 0, 1, 1], [], []>} : vector<6x3xbf16>, vector<3x896xbf16>, vector<6x896xf32> -> vector<6x896xf32>
    %100 = arith.addf %96, %99 : vector<6x896xf32>
    %c0_52 = arith.constant 0 : index
    %c0_53 = arith.constant 0 : index
    %101 = vector.load %arg3[%c0_52, %c0_53] : memref<6x1xf32, #tpu.memory_space<vmem>>, vector<6x1xf32>
    %102 = vector.broadcast %101 : vector<6x1xf32> to vector<6x896xf32>
    %103 = arith.addf %100, %102 : vector<6x896xf32>
    %104 = math.tanh %103 : vector<6x896xf32>
    %105 = vector.extract_strided_slice %104 {offsets = [0, 0], sizes = [6, 895], strides = [1, 1]} : vector<6x896xf32> to vector<6x895xf32>
    %106 = vector.extract_strided_slice %104 {offsets = [0, 1], sizes = [6, 895], strides = [1, 1]} : vector<6x896xf32> to vector<6x895xf32>
    %107 = arith.maximumf %105, %106 : vector<6x895xf32>
    %108 = vector.extract_strided_slice %107 {offsets = [0, 0], sizes = [6, 863], strides = [1, 1]} : vector<6x895xf32> to vector<6x863xf32>
    %109 = vector.extract_strided_slice %107 {offsets = [0, 32], sizes = [6, 863], strides = [1, 1]} : vector<6x895xf32> to vector<6x863xf32>
    %110 = arith.maximumf %108, %109 : vector<6x863xf32>
    %c0_54 = arith.constant 0 : index
    %c0_55 = arith.constant 0 : index
    %111 = vector.load %arg12[%c0_54, %c0_55] : memref<863x256xf32, #tpu.memory_space<vmem>>, vector<863x256xf32>
    %cst_56 = arith.constant dense<0.000000e+00> : vector<6x256xf32>
    %112 = tpu.matmul %110, %111, %cst_56 {dimension_numbers = #tpu.dot_dimension_numbers<[1], [0], [0], [1], [0, 0, 1, 1], [], []>} : vector<6x863xf32>, vector<863x256xf32>, vector<6x256xf32> -> vector<6x256xf32>
    %113 = arith.truncf %112 : vector<6x256xf32> to vector<6x256xbf16>
    %114 = vector.extract_strided_slice %113 {offsets = [0, 0], sizes = [6, 140], strides = [1, 1]} : vector<6x256xbf16> to vector<6x140xbf16>
    %c0_57 = arith.constant 0 : index
    %c0_58 = arith.constant 0 : index
    %115 = vector.load %arg4[%c0_57, %c0_58] : memref<16x150xbf16, #tpu.memory_space<vmem>>, vector<16x6xbf16>
    %cst_59 = arith.constant dense<0.000000e+00> : vector<16x140xf32>
    %116 = tpu.matmul %115, %114, %cst_59 {dimension_numbers = #tpu.dot_dimension_numbers<[1], [0], [0], [1], [0, 0, 1, 1], [], []>} : vector<16x6xbf16>, vector<6x140xbf16>, vector<16x140xf32> -> vector<16x140xf32>
    %117 = vector.extract_strided_slice %113 {offsets = [0, 1], sizes = [6, 140], strides = [1, 1]} : vector<6x256xbf16> to vector<6x140xbf16>
    %c0_60 = arith.constant 0 : index
    %c6_61 = arith.constant 6 : index
    %118 = vector.load %arg4[%c0_60, %c6_61] : memref<16x150xbf16, #tpu.memory_space<vmem>>, vector<16x6xbf16>
    %cst_62 = arith.constant dense<0.000000e+00> : vector<16x140xf32>
    %119 = tpu.matmul %118, %117, %cst_62 {dimension_numbers = #tpu.dot_dimension_numbers<[1], [0], [0], [1], [0, 0, 1, 1], [], []>} : vector<16x6xbf16>, vector<6x140xbf16>, vector<16x140xf32> -> vector<16x140xf32>
    %120 = arith.addf %116, %119 : vector<16x140xf32>
    %121 = vector.extract_strided_slice %113 {offsets = [0, 2], sizes = [6, 140], strides = [1, 1]} : vector<6x256xbf16> to vector<6x140xbf16>
    %c0_63 = arith.constant 0 : index
    %c12_64 = arith.constant 12 : index
    %122 = vector.load %arg4[%c0_63, %c12_64] : memref<16x150xbf16, #tpu.memory_space<vmem>>, vector<16x6xbf16>
    %cst_65 = arith.constant dense<0.000000e+00> : vector<16x140xf32>
    %123 = tpu.matmul %122, %121, %cst_65 {dimension_numbers = #tpu.dot_dimension_numbers<[1], [0], [0], [1], [0, 0, 1, 1], [], []>} : vector<16x6xbf16>, vector<6x140xbf16>, vector<16x140xf32> -> vector<16x140xf32>
    %124 = arith.addf %120, %123 : vector<16x140xf32>
    %125 = vector.extract_strided_slice %113 {offsets = [0, 3], sizes = [6, 140], strides = [1, 1]} : vector<6x256xbf16> to vector<6x140xbf16>
    %c0_66 = arith.constant 0 : index
    %c18_67 = arith.constant 18 : index
    %126 = vector.load %arg4[%c0_66, %c18_67] : memref<16x150xbf16, #tpu.memory_space<vmem>>, vector<16x6xbf16>
    %cst_68 = arith.constant dense<0.000000e+00> : vector<16x140xf32>
    %127 = tpu.matmul %126, %125, %cst_68 {dimension_numbers = #tpu.dot_dimension_numbers<[1], [0], [0], [1], [0, 0, 1, 1], [], []>} : vector<16x6xbf16>, vector<6x140xbf16>, vector<16x140xf32> -> vector<16x140xf32>
    %128 = arith.addf %124, %127 : vector<16x140xf32>
    %129 = vector.extract_strided_slice %113 {offsets = [0, 4], sizes = [6, 140], strides = [1, 1]} : vector<6x256xbf16> to vector<6x140xbf16>
    %c0_69 = arith.constant 0 : index
    %c24_70 = arith.constant 24 : index
    %130 = vector.load %arg4[%c0_69, %c24_70] : memref<16x150xbf16, #tpu.memory_space<vmem>>, vector<16x6xbf16>
    %cst_71 = arith.constant dense<0.000000e+00> : vector<16x140xf32>
    %131 = tpu.matmul %130, %129, %cst_71 {dimension_numbers = #tpu.dot_dimension_numbers<[1], [0], [0], [1], [0, 0, 1, 1], [], []>} : vector<16x6xbf16>, vector<6x140xbf16>, vector<16x140xf32> -> vector<16x140xf32>
    %132 = arith.addf %128, %131 : vector<16x140xf32>
    %133 = vector.extract_strided_slice %113 {offsets = [0, 14], sizes = [6, 140], strides = [1, 1]} : vector<6x256xbf16> to vector<6x140xbf16>
    %c0_72 = arith.constant 0 : index
    %c30_73 = arith.constant 30 : index
    %134 = vector.load %arg4[%c0_72, %c30_73] : memref<16x150xbf16, #tpu.memory_space<vmem>>, vector<16x6xbf16>
    %cst_74 = arith.constant dense<0.000000e+00> : vector<16x140xf32>
    %135 = tpu.matmul %134, %133, %cst_74 {dimension_numbers = #tpu.dot_dimension_numbers<[1], [0], [0], [1], [0, 0, 1, 1], [], []>} : vector<16x6xbf16>, vector<6x140xbf16>, vector<16x140xf32> -> vector<16x140xf32>
    %136 = arith.addf %132, %135 : vector<16x140xf32>
    %137 = vector.extract_strided_slice %113 {offsets = [0, 15], sizes = [6, 140], strides = [1, 1]} : vector<6x256xbf16> to vector<6x140xbf16>
    %c0_75 = arith.constant 0 : index
    %c36_76 = arith.constant 36 : index
    %138 = vector.load %arg4[%c0_75, %c36_76] : memref<16x150xbf16, #tpu.memory_space<vmem>>, vector<16x6xbf16>
    %cst_77 = arith.constant dense<0.000000e+00> : vector<16x140xf32>
    %139 = tpu.matmul %138, %137, %cst_77 {dimension_numbers = #tpu.dot_dimension_numbers<[1], [0], [0], [1], [0, 0, 1, 1], [], []>} : vector<16x6xbf16>, vector<6x140xbf16>, vector<16x140xf32> -> vector<16x140xf32>
    %140 = arith.addf %136, %139 : vector<16x140xf32>
    %141 = vector.extract_strided_slice %113 {offsets = [0, 16], sizes = [6, 140], strides = [1, 1]} : vector<6x256xbf16> to vector<6x140xbf16>
    %c0_78 = arith.constant 0 : index
    %c42_79 = arith.constant 42 : index
    %142 = vector.load %arg4[%c0_78, %c42_79] : memref<16x150xbf16, #tpu.memory_space<vmem>>, vector<16x6xbf16>
    %cst_80 = arith.constant dense<0.000000e+00> : vector<16x140xf32>
    %143 = tpu.matmul %142, %141, %cst_80 {dimension_numbers = #tpu.dot_dimension_numbers<[1], [0], [0], [1], [0, 0, 1, 1], [], []>} : vector<16x6xbf16>, vector<6x140xbf16>, vector<16x140xf32> -> vector<16x140xf32>
    %144 = arith.addf %140, %143 : vector<16x140xf32>
    %145 = vector.extract_strided_slice %113 {offsets = [0, 17], sizes = [6, 140], strides = [1, 1]} : vector<6x256xbf16> to vector<6x140xbf16>
    %c0_81 = arith.constant 0 : index
    %c48_82 = arith.constant 48 : index
    %146 = vector.load %arg4[%c0_81, %c48_82] : memref<16x150xbf16, #tpu.memory_space<vmem>>, vector<16x6xbf16>
    %cst_83 = arith.constant dense<0.000000e+00> : vector<16x140xf32>
    %147 = tpu.matmul %146, %145, %cst_83 {dimension_numbers = #tpu.dot_dimension_numbers<[1], [0], [0], [1], [0, 0, 1, 1], [], []>} : vector<16x6xbf16>, vector<6x140xbf16>, vector<16x140xf32> -> vector<16x140xf32>
    %148 = arith.addf %144, %147 : vector<16x140xf32>
    %149 = vector.extract_strided_slice %113 {offsets = [0, 18], sizes = [6, 140], strides = [1, 1]} : vector<6x256xbf16> to vector<6x140xbf16>
    %c0_84 = arith.constant 0 : index
    %c54_85 = arith.constant 54 : index
    %150 = vector.load %arg4[%c0_84, %c54_85] : memref<16x150xbf16, #tpu.memory_space<vmem>>, vector<16x6xbf16>
    %cst_86 = arith.constant dense<0.000000e+00> : vector<16x140xf32>
    %151 = tpu.matmul %150, %149, %cst_86 {dimension_numbers = #tpu.dot_dimension_numbers<[1], [0], [0], [1], [0, 0, 1, 1], [], []>} : vector<16x6xbf16>, vector<6x140xbf16>, vector<16x140xf32> -> vector<16x140xf32>
    %152 = arith.addf %148, %151 : vector<16x140xf32>
    %153 = vector.extract_strided_slice %113 {offsets = [0, 28], sizes = [6, 140], strides = [1, 1]} : vector<6x256xbf16> to vector<6x140xbf16>
    %c0_87 = arith.constant 0 : index
    %c60_88 = arith.constant 60 : index
    %154 = vector.load %arg4[%c0_87, %c60_88] : memref<16x150xbf16, #tpu.memory_space<vmem>>, vector<16x6xbf16>
    %cst_89 = arith.constant dense<0.000000e+00> : vector<16x140xf32>
    %155 = tpu.matmul %154, %153, %cst_89 {dimension_numbers = #tpu.dot_dimension_numbers<[1], [0], [0], [1], [0, 0, 1, 1], [], []>} : vector<16x6xbf16>, vector<6x140xbf16>, vector<16x140xf32> -> vector<16x140xf32>
    %156 = arith.addf %152, %155 : vector<16x140xf32>
    %157 = vector.extract_strided_slice %113 {offsets = [0, 29], sizes = [6, 140], strides = [1, 1]} : vector<6x256xbf16> to vector<6x140xbf16>
    %c0_90 = arith.constant 0 : index
    %c66_91 = arith.constant 66 : index
    %158 = vector.load %arg4[%c0_90, %c66_91] : memref<16x150xbf16, #tpu.memory_space<vmem>>, vector<16x6xbf16>
    %cst_92 = arith.constant dense<0.000000e+00> : vector<16x140xf32>
    %159 = tpu.matmul %158, %157, %cst_92 {dimension_numbers = #tpu.dot_dimension_numbers<[1], [0], [0], [1], [0, 0, 1, 1], [], []>} : vector<16x6xbf16>, vector<6x140xbf16>, vector<16x140xf32> -> vector<16x140xf32>
    %160 = arith.addf %156, %159 : vector<16x140xf32>
    %161 = vector.extract_strided_slice %113 {offsets = [0, 30], sizes = [6, 140], strides = [1, 1]} : vector<6x256xbf16> to vector<6x140xbf16>
    %c0_93 = arith.constant 0 : index
    %c72_94 = arith.constant 72 : index
    %162 = vector.load %arg4[%c0_93, %c72_94] : memref<16x150xbf16, #tpu.memory_space<vmem>>, vector<16x6xbf16>
    %cst_95 = arith.constant dense<0.000000e+00> : vector<16x140xf32>
    %163 = tpu.matmul %162, %161, %cst_95 {dimension_numbers = #tpu.dot_dimension_numbers<[1], [0], [0], [1], [0, 0, 1, 1], [], []>} : vector<16x6xbf16>, vector<6x140xbf16>, vector<16x140xf32> -> vector<16x140xf32>
    %164 = arith.addf %160, %163 : vector<16x140xf32>
    %165 = vector.extract_strided_slice %113 {offsets = [0, 31], sizes = [6, 140], strides = [1, 1]} : vector<6x256xbf16> to vector<6x140xbf16>
    %c0_96 = arith.constant 0 : index
    %c78 = arith.constant 78 : index
    %166 = vector.load %arg4[%c0_96, %c78] : memref<16x150xbf16, #tpu.memory_space<vmem>>, vector<16x6xbf16>
    %cst_97 = arith.constant dense<0.000000e+00> : vector<16x140xf32>
    %167 = tpu.matmul %166, %165, %cst_97 {dimension_numbers = #tpu.dot_dimension_numbers<[1], [0], [0], [1], [0, 0, 1, 1], [], []>} : vector<16x6xbf16>, vector<6x140xbf16>, vector<16x140xf32> -> vector<16x140xf32>
    %168 = arith.addf %164, %167 : vector<16x140xf32>
    %169 = vector.extract_strided_slice %113 {offsets = [0, 32], sizes = [6, 140], strides = [1, 1]} : vector<6x256xbf16> to vector<6x140xbf16>
    %c0_98 = arith.constant 0 : index
    %c84 = arith.constant 84 : index
    %170 = vector.load %arg4[%c0_98, %c84] : memref<16x150xbf16, #tpu.memory_space<vmem>>, vector<16x6xbf16>
    %cst_99 = arith.constant dense<0.000000e+00> : vector<16x140xf32>
    %171 = tpu.matmul %170, %169, %cst_99 {dimension_numbers = #tpu.dot_dimension_numbers<[1], [0], [0], [1], [0, 0, 1, 1], [], []>} : vector<16x6xbf16>, vector<6x140xbf16>, vector<16x140xf32> -> vector<16x140xf32>
    %172 = arith.addf %168, %171 : vector<16x140xf32>
    %173 = vector.extract_strided_slice %113 {offsets = [0, 42], sizes = [6, 140], strides = [1, 1]} : vector<6x256xbf16> to vector<6x140xbf16>
    %c0_100 = arith.constant 0 : index
    %c90 = arith.constant 90 : index
    %174 = vector.load %arg4[%c0_100, %c90] : memref<16x150xbf16, #tpu.memory_space<vmem>>, vector<16x6xbf16>
    %cst_101 = arith.constant dense<0.000000e+00> : vector<16x140xf32>
    %175 = tpu.matmul %174, %173, %cst_101 {dimension_numbers = #tpu.dot_dimension_numbers<[1], [0], [0], [1], [0, 0, 1, 1], [], []>} : vector<16x6xbf16>, vector<6x140xbf16>, vector<16x140xf32> -> vector<16x140xf32>
    %176 = arith.addf %172, %175 : vector<16x140xf32>
    %177 = vector.extract_strided_slice %113 {offsets = [0, 43], sizes = [6, 140], strides = [1, 1]} : vector<6x256xbf16> to vector<6x140xbf16>
    %c0_102 = arith.constant 0 : index
    %c96 = arith.constant 96 : index
    %178 = vector.load %arg4[%c0_102, %c96] : memref<16x150xbf16, #tpu.memory_space<vmem>>, vector<16x6xbf16>
    %cst_103 = arith.constant dense<0.000000e+00> : vector<16x140xf32>
    %179 = tpu.matmul %178, %177, %cst_103 {dimension_numbers = #tpu.dot_dimension_numbers<[1], [0], [0], [1], [0, 0, 1, 1], [], []>} : vector<16x6xbf16>, vector<6x140xbf16>, vector<16x140xf32> -> vector<16x140xf32>
    %180 = arith.addf %176, %179 : vector<16x140xf32>
    %181 = vector.extract_strided_slice %113 {offsets = [0, 44], sizes = [6, 140], strides = [1, 1]} : vector<6x256xbf16> to vector<6x140xbf16>
    %c0_104 = arith.constant 0 : index
    %c102 = arith.constant 102 : index
    %182 = vector.load %arg4[%c0_104, %c102] : memref<16x150xbf16, #tpu.memory_space<vmem>>, vector<16x6xbf16>
    %cst_105 = arith.constant dense<0.000000e+00> : vector<16x140xf32>
    %183 = tpu.matmul %182, %181, %cst_105 {dimension_numbers = #tpu.dot_dimension_numbers<[1], [0], [0], [1], [0, 0, 1, 1], [], []>} : vector<16x6xbf16>, vector<6x140xbf16>, vector<16x140xf32> -> vector<16x140xf32>
    %184 = arith.addf %180, %183 : vector<16x140xf32>
    %185 = vector.extract_strided_slice %113 {offsets = [0, 45], sizes = [6, 140], strides = [1, 1]} : vector<6x256xbf16> to vector<6x140xbf16>
    %c0_106 = arith.constant 0 : index
    %c108 = arith.constant 108 : index
    %186 = vector.load %arg4[%c0_106, %c108] : memref<16x150xbf16, #tpu.memory_space<vmem>>, vector<16x6xbf16>
    %cst_107 = arith.constant dense<0.000000e+00> : vector<16x140xf32>
    %187 = tpu.matmul %186, %185, %cst_107 {dimension_numbers = #tpu.dot_dimension_numbers<[1], [0], [0], [1], [0, 0, 1, 1], [], []>} : vector<16x6xbf16>, vector<6x140xbf16>, vector<16x140xf32> -> vector<16x140xf32>
    %188 = arith.addf %184, %187 : vector<16x140xf32>
    %189 = vector.extract_strided_slice %113 {offsets = [0, 46], sizes = [6, 140], strides = [1, 1]} : vector<6x256xbf16> to vector<6x140xbf16>
    %c0_108 = arith.constant 0 : index
    %c114 = arith.constant 114 : index
    %190 = vector.load %arg4[%c0_108, %c114] : memref<16x150xbf16, #tpu.memory_space<vmem>>, vector<16x6xbf16>
    %cst_109 = arith.constant dense<0.000000e+00> : vector<16x140xf32>
    %191 = tpu.matmul %190, %189, %cst_109 {dimension_numbers = #tpu.dot_dimension_numbers<[1], [0], [0], [1], [0, 0, 1, 1], [], []>} : vector<16x6xbf16>, vector<6x140xbf16>, vector<16x140xf32> -> vector<16x140xf32>
    %192 = arith.addf %188, %191 : vector<16x140xf32>
    %193 = vector.extract_strided_slice %113 {offsets = [0, 56], sizes = [6, 140], strides = [1, 1]} : vector<6x256xbf16> to vector<6x140xbf16>
    %c0_110 = arith.constant 0 : index
    %c120 = arith.constant 120 : index
    %194 = vector.load %arg4[%c0_110, %c120] : memref<16x150xbf16, #tpu.memory_space<vmem>>, vector<16x6xbf16>
    %cst_111 = arith.constant dense<0.000000e+00> : vector<16x140xf32>
    %195 = tpu.matmul %194, %193, %cst_111 {dimension_numbers = #tpu.dot_dimension_numbers<[1], [0], [0], [1], [0, 0, 1, 1], [], []>} : vector<16x6xbf16>, vector<6x140xbf16>, vector<16x140xf32> -> vector<16x140xf32>
    %196 = arith.addf %192, %195 : vector<16x140xf32>
    %197 = vector.extract_strided_slice %113 {offsets = [0, 57], sizes = [6, 140], strides = [1, 1]} : vector<6x256xbf16> to vector<6x140xbf16>
    %c0_112 = arith.constant 0 : index
    %c126 = arith.constant 126 : index
    %198 = vector.load %arg4[%c0_112, %c126] : memref<16x150xbf16, #tpu.memory_space<vmem>>, vector<16x6xbf16>
    %cst_113 = arith.constant dense<0.000000e+00> : vector<16x140xf32>
    %199 = tpu.matmul %198, %197, %cst_113 {dimension_numbers = #tpu.dot_dimension_numbers<[1], [0], [0], [1], [0, 0, 1, 1], [], []>} : vector<16x6xbf16>, vector<6x140xbf16>, vector<16x140xf32> -> vector<16x140xf32>
    %200 = arith.addf %196, %199 : vector<16x140xf32>
    %201 = vector.extract_strided_slice %113 {offsets = [0, 58], sizes = [6, 140], strides = [1, 1]} : vector<6x256xbf16> to vector<6x140xbf16>
    %c0_114 = arith.constant 0 : index
    %c132 = arith.constant 132 : index
    %202 = vector.load %arg4[%c0_114, %c132] : memref<16x150xbf16, #tpu.memory_space<vmem>>, vector<16x6xbf16>
    %cst_115 = arith.constant dense<0.000000e+00> : vector<16x140xf32>
    %203 = tpu.matmul %202, %201, %cst_115 {dimension_numbers = #tpu.dot_dimension_numbers<[1], [0], [0], [1], [0, 0, 1, 1], [], []>} : vector<16x6xbf16>, vector<6x140xbf16>, vector<16x140xf32> -> vector<16x140xf32>
    %204 = arith.addf %200, %203 : vector<16x140xf32>
    %205 = vector.extract_strided_slice %113 {offsets = [0, 59], sizes = [6, 140], strides = [1, 1]} : vector<6x256xbf16> to vector<6x140xbf16>
    %c0_116 = arith.constant 0 : index
    %c138 = arith.constant 138 : index
    %206 = vector.load %arg4[%c0_116, %c138] : memref<16x150xbf16, #tpu.memory_space<vmem>>, vector<16x6xbf16>
    %cst_117 = arith.constant dense<0.000000e+00> : vector<16x140xf32>
    %207 = tpu.matmul %206, %205, %cst_117 {dimension_numbers = #tpu.dot_dimension_numbers<[1], [0], [0], [1], [0, 0, 1, 1], [], []>} : vector<16x6xbf16>, vector<6x140xbf16>, vector<16x140xf32> -> vector<16x140xf32>
    %208 = arith.addf %204, %207 : vector<16x140xf32>
    %209 = vector.extract_strided_slice %113 {offsets = [0, 60], sizes = [6, 140], strides = [1, 1]} : vector<6x256xbf16> to vector<6x140xbf16>
    %c0_118 = arith.constant 0 : index
    %c144 = arith.constant 144 : index
    %210 = vector.load %arg4[%c0_118, %c144] : memref<16x150xbf16, #tpu.memory_space<vmem>>, vector<16x6xbf16>
    %cst_119 = arith.constant dense<0.000000e+00> : vector<16x140xf32>
    %211 = tpu.matmul %210, %209, %cst_119 {dimension_numbers = #tpu.dot_dimension_numbers<[1], [0], [0], [1], [0, 0, 1, 1], [], []>} : vector<16x6xbf16>, vector<6x140xbf16>, vector<16x140xf32> -> vector<16x140xf32>
    %212 = arith.addf %208, %211 : vector<16x140xf32>
    %c0_120 = arith.constant 0 : index
    %c0_121 = arith.constant 0 : index
    %213 = vector.load %arg5[%c0_120, %c0_121] : memref<16x1xf32, #tpu.memory_space<vmem>>, vector<16x1xf32>
    %214 = vector.broadcast %213 : vector<16x1xf32> to vector<16x140xf32>
    %215 = arith.addf %212, %214 : vector<16x140xf32>
    %216 = math.tanh %215 : vector<16x140xf32>
    %217 = vector.extract_strided_slice %216 {offsets = [0, 0], sizes = [16, 139], strides = [1, 1]} : vector<16x140xf32> to vector<16x139xf32>
    %218 = vector.extract_strided_slice %216 {offsets = [0, 1], sizes = [16, 139], strides = [1, 1]} : vector<16x140xf32> to vector<16x139xf32>
    %219 = arith.maximumf %217, %218 : vector<16x139xf32>
    %220 = vector.extract_strided_slice %219 {offsets = [0, 0], sizes = [16, 125], strides = [1, 1]} : vector<16x139xf32> to vector<16x125xf32>
    %221 = vector.extract_strided_slice %219 {offsets = [0, 14], sizes = [16, 125], strides = [1, 1]} : vector<16x139xf32> to vector<16x125xf32>
    %222 = arith.maximumf %220, %221 : vector<16x125xf32>
    %c0_122 = arith.constant 0 : index
    %c0_123 = arith.constant 0 : index
    %223 = vector.load %arg13[%c0_122, %c0_123] : memref<125x32xf32, #tpu.memory_space<vmem>>, vector<125x32xf32>
    %cst_124 = arith.constant dense<0.000000e+00> : vector<16x32xf32>
    %224 = tpu.matmul %222, %223, %cst_124 {dimension_numbers = #tpu.dot_dimension_numbers<[1], [0], [0], [1], [0, 0, 1, 1], [], []>} : vector<16x125xf32>, vector<125x32xf32>, vector<16x32xf32> -> vector<16x32xf32>
    %225 = arith.truncf %224 : vector<16x32xf32> to vector<16x32xbf16>
    %226 = vector.extract_strided_slice %225 {offsets = [0, 0], sizes = [16, 5], strides = [1, 1]} : vector<16x32xbf16> to vector<16x5xbf16>
    %c0_125 = arith.constant 0 : index
    %c0_126 = arith.constant 0 : index
    %227 = vector.load %arg6[%c0_125, %c0_126] : memref<120x400xbf16, #tpu.memory_space<vmem>>, vector<120x16xbf16>
    %cst_127 = arith.constant dense<0.000000e+00> : vector<120x5xf32>
    %228 = tpu.matmul %227, %226, %cst_127 {dimension_numbers = #tpu.dot_dimension_numbers<[1], [0], [0], [1], [0, 0, 1, 1], [], []>} : vector<120x16xbf16>, vector<16x5xbf16>, vector<120x5xf32> -> vector<120x5xf32>
    %229 = vector.extract_strided_slice %225 {offsets = [0, 1], sizes = [16, 5], strides = [1, 1]} : vector<16x32xbf16> to vector<16x5xbf16>
    %c0_128 = arith.constant 0 : index
    %c16 = arith.constant 16 : index
    %230 = vector.load %arg6[%c0_128, %c16] : memref<120x400xbf16, #tpu.memory_space<vmem>>, vector<120x16xbf16>
    %cst_129 = arith.constant dense<0.000000e+00> : vector<120x5xf32>
    %231 = tpu.matmul %230, %229, %cst_129 {dimension_numbers = #tpu.dot_dimension_numbers<[1], [0], [0], [1], [0, 0, 1, 1], [], []>} : vector<120x16xbf16>, vector<16x5xbf16>, vector<120x5xf32> -> vector<120x5xf32>
    %232 = arith.addf %228, %231 : vector<120x5xf32>
    %233 = vector.extract_strided_slice %225 {offsets = [0, 2], sizes = [16, 5], strides = [1, 1]} : vector<16x32xbf16> to vector<16x5xbf16>
    %c0_130 = arith.constant 0 : index
    %c32 = arith.constant 32 : index
    %234 = vector.load %arg6[%c0_130, %c32] : memref<120x400xbf16, #tpu.memory_space<vmem>>, vector<120x16xbf16>
    %cst_131 = arith.constant dense<0.000000e+00> : vector<120x5xf32>
    %235 = tpu.matmul %234, %233, %cst_131 {dimension_numbers = #tpu.dot_dimension_numbers<[1], [0], [0], [1], [0, 0, 1, 1], [], []>} : vector<120x16xbf16>, vector<16x5xbf16>, vector<120x5xf32> -> vector<120x5xf32>
    %236 = arith.addf %232, %235 : vector<120x5xf32>
    %237 = vector.extract_strided_slice %225 {offsets = [0, 3], sizes = [16, 5], strides = [1, 1]} : vector<16x32xbf16> to vector<16x5xbf16>
    %c0_132 = arith.constant 0 : index
    %c48_133 = arith.constant 48 : index
    %238 = vector.load %arg6[%c0_132, %c48_133] : memref<120x400xbf16, #tpu.memory_space<vmem>>, vector<120x16xbf16>
    %cst_134 = arith.constant dense<0.000000e+00> : vector<120x5xf32>
    %239 = tpu.matmul %238, %237, %cst_134 {dimension_numbers = #tpu.dot_dimension_numbers<[1], [0], [0], [1], [0, 0, 1, 1], [], []>} : vector<120x16xbf16>, vector<16x5xbf16>, vector<120x5xf32> -> vector<120x5xf32>
    %240 = arith.addf %236, %239 : vector<120x5xf32>
    %241 = vector.extract_strided_slice %225 {offsets = [0, 4], sizes = [16, 5], strides = [1, 1]} : vector<16x32xbf16> to vector<16x5xbf16>
    %c0_135 = arith.constant 0 : index
    %c64 = arith.constant 64 : index
    %242 = vector.load %arg6[%c0_135, %c64] : memref<120x400xbf16, #tpu.memory_space<vmem>>, vector<120x16xbf16>
    %cst_136 = arith.constant dense<0.000000e+00> : vector<120x5xf32>
    %243 = tpu.matmul %242, %241, %cst_136 {dimension_numbers = #tpu.dot_dimension_numbers<[1], [0], [0], [1], [0, 0, 1, 1], [], []>} : vector<120x16xbf16>, vector<16x5xbf16>, vector<120x5xf32> -> vector<120x5xf32>
    %244 = arith.addf %240, %243 : vector<120x5xf32>
    %245 = vector.extract_strided_slice %225 {offsets = [0, 5], sizes = [16, 5], strides = [1, 1]} : vector<16x32xbf16> to vector<16x5xbf16>
    %c0_137 = arith.constant 0 : index
    %c80 = arith.constant 80 : index
    %246 = vector.load %arg6[%c0_137, %c80] : memref<120x400xbf16, #tpu.memory_space<vmem>>, vector<120x16xbf16>
    %cst_138 = arith.constant dense<0.000000e+00> : vector<120x5xf32>
    %247 = tpu.matmul %246, %245, %cst_138 {dimension_numbers = #tpu.dot_dimension_numbers<[1], [0], [0], [1], [0, 0, 1, 1], [], []>} : vector<120x16xbf16>, vector<16x5xbf16>, vector<120x5xf32> -> vector<120x5xf32>
    %248 = arith.addf %244, %247 : vector<120x5xf32>
    %249 = vector.extract_strided_slice %225 {offsets = [0, 6], sizes = [16, 5], strides = [1, 1]} : vector<16x32xbf16> to vector<16x5xbf16>
    %c0_139 = arith.constant 0 : index
    %c96_140 = arith.constant 96 : index
    %250 = vector.load %arg6[%c0_139, %c96_140] : memref<120x400xbf16, #tpu.memory_space<vmem>>, vector<120x16xbf16>
    %cst_141 = arith.constant dense<0.000000e+00> : vector<120x5xf32>
    %251 = tpu.matmul %250, %249, %cst_141 {dimension_numbers = #tpu.dot_dimension_numbers<[1], [0], [0], [1], [0, 0, 1, 1], [], []>} : vector<120x16xbf16>, vector<16x5xbf16>, vector<120x5xf32> -> vector<120x5xf32>
    %252 = arith.addf %248, %251 : vector<120x5xf32>
    %253 = vector.extract_strided_slice %225 {offsets = [0, 7], sizes = [16, 5], strides = [1, 1]} : vector<16x32xbf16> to vector<16x5xbf16>
    %c0_142 = arith.constant 0 : index
    %c112 = arith.constant 112 : index
    %254 = vector.load %arg6[%c0_142, %c112] : memref<120x400xbf16, #tpu.memory_space<vmem>>, vector<120x16xbf16>
    %cst_143 = arith.constant dense<0.000000e+00> : vector<120x5xf32>
    %255 = tpu.matmul %254, %253, %cst_143 {dimension_numbers = #tpu.dot_dimension_numbers<[1], [0], [0], [1], [0, 0, 1, 1], [], []>} : vector<120x16xbf16>, vector<16x5xbf16>, vector<120x5xf32> -> vector<120x5xf32>
    %256 = arith.addf %252, %255 : vector<120x5xf32>
    %257 = vector.extract_strided_slice %225 {offsets = [0, 8], sizes = [16, 5], strides = [1, 1]} : vector<16x32xbf16> to vector<16x5xbf16>
    %c0_144 = arith.constant 0 : index
    %c128 = arith.constant 128 : index
    %258 = vector.load %arg6[%c0_144, %c128] : memref<120x400xbf16, #tpu.memory_space<vmem>>, vector<120x16xbf16>
    %cst_145 = arith.constant dense<0.000000e+00> : vector<120x5xf32>
    %259 = tpu.matmul %258, %257, %cst_145 {dimension_numbers = #tpu.dot_dimension_numbers<[1], [0], [0], [1], [0, 0, 1, 1], [], []>} : vector<120x16xbf16>, vector<16x5xbf16>, vector<120x5xf32> -> vector<120x5xf32>
    %260 = arith.addf %256, %259 : vector<120x5xf32>
    %261 = vector.extract_strided_slice %225 {offsets = [0, 9], sizes = [16, 5], strides = [1, 1]} : vector<16x32xbf16> to vector<16x5xbf16>
    %c0_146 = arith.constant 0 : index
    %c144_147 = arith.constant 144 : index
    %262 = vector.load %arg6[%c0_146, %c144_147] : memref<120x400xbf16, #tpu.memory_space<vmem>>, vector<120x16xbf16>
    %cst_148 = arith.constant dense<0.000000e+00> : vector<120x5xf32>
    %263 = tpu.matmul %262, %261, %cst_148 {dimension_numbers = #tpu.dot_dimension_numbers<[1], [0], [0], [1], [0, 0, 1, 1], [], []>} : vector<120x16xbf16>, vector<16x5xbf16>, vector<120x5xf32> -> vector<120x5xf32>
    %264 = arith.addf %260, %263 : vector<120x5xf32>
    %265 = vector.extract_strided_slice %225 {offsets = [0, 10], sizes = [16, 5], strides = [1, 1]} : vector<16x32xbf16> to vector<16x5xbf16>
    %c0_149 = arith.constant 0 : index
    %c160 = arith.constant 160 : index
    %266 = vector.load %arg6[%c0_149, %c160] : memref<120x400xbf16, #tpu.memory_space<vmem>>, vector<120x16xbf16>
    %cst_150 = arith.constant dense<0.000000e+00> : vector<120x5xf32>
    %267 = tpu.matmul %266, %265, %cst_150 {dimension_numbers = #tpu.dot_dimension_numbers<[1], [0], [0], [1], [0, 0, 1, 1], [], []>} : vector<120x16xbf16>, vector<16x5xbf16>, vector<120x5xf32> -> vector<120x5xf32>
    %268 = arith.addf %264, %267 : vector<120x5xf32>
    %269 = vector.extract_strided_slice %225 {offsets = [0, 11], sizes = [16, 5], strides = [1, 1]} : vector<16x32xbf16> to vector<16x5xbf16>
    %c0_151 = arith.constant 0 : index
    %c176 = arith.constant 176 : index
    %270 = vector.load %arg6[%c0_151, %c176] : memref<120x400xbf16, #tpu.memory_space<vmem>>, vector<120x16xbf16>
    %cst_152 = arith.constant dense<0.000000e+00> : vector<120x5xf32>
    %271 = tpu.matmul %270, %269, %cst_152 {dimension_numbers = #tpu.dot_dimension_numbers<[1], [0], [0], [1], [0, 0, 1, 1], [], []>} : vector<120x16xbf16>, vector<16x5xbf16>, vector<120x5xf32> -> vector<120x5xf32>
    %272 = arith.addf %268, %271 : vector<120x5xf32>
    %273 = vector.extract_strided_slice %225 {offsets = [0, 12], sizes = [16, 5], strides = [1, 1]} : vector<16x32xbf16> to vector<16x5xbf16>
    %c0_153 = arith.constant 0 : index
    %c192 = arith.constant 192 : index
    %274 = vector.load %arg6[%c0_153, %c192] : memref<120x400xbf16, #tpu.memory_space<vmem>>, vector<120x16xbf16>
    %cst_154 = arith.constant dense<0.000000e+00> : vector<120x5xf32>
    %275 = tpu.matmul %274, %273, %cst_154 {dimension_numbers = #tpu.dot_dimension_numbers<[1], [0], [0], [1], [0, 0, 1, 1], [], []>} : vector<120x16xbf16>, vector<16x5xbf16>, vector<120x5xf32> -> vector<120x5xf32>
    %276 = arith.addf %272, %275 : vector<120x5xf32>
    %277 = vector.extract_strided_slice %225 {offsets = [0, 13], sizes = [16, 5], strides = [1, 1]} : vector<16x32xbf16> to vector<16x5xbf16>
    %c0_155 = arith.constant 0 : index
    %c208 = arith.constant 208 : index
    %278 = vector.load %arg6[%c0_155, %c208] : memref<120x400xbf16, #tpu.memory_space<vmem>>, vector<120x16xbf16>
    %cst_156 = arith.constant dense<0.000000e+00> : vector<120x5xf32>
    %279 = tpu.matmul %278, %277, %cst_156 {dimension_numbers = #tpu.dot_dimension_numbers<[1], [0], [0], [1], [0, 0, 1, 1], [], []>} : vector<120x16xbf16>, vector<16x5xbf16>, vector<120x5xf32> -> vector<120x5xf32>
    %280 = arith.addf %276, %279 : vector<120x5xf32>
    %281 = vector.extract_strided_slice %225 {offsets = [0, 14], sizes = [16, 5], strides = [1, 1]} : vector<16x32xbf16> to vector<16x5xbf16>
    %c0_157 = arith.constant 0 : index
    %c224 = arith.constant 224 : index
    %282 = vector.load %arg6[%c0_157, %c224] : memref<120x400xbf16, #tpu.memory_space<vmem>>, vector<120x16xbf16>
    %cst_158 = arith.constant dense<0.000000e+00> : vector<120x5xf32>
    %283 = tpu.matmul %282, %281, %cst_158 {dimension_numbers = #tpu.dot_dimension_numbers<[1], [0], [0], [1], [0, 0, 1, 1], [], []>} : vector<120x16xbf16>, vector<16x5xbf16>, vector<120x5xf32> -> vector<120x5xf32>
    %284 = arith.addf %280, %283 : vector<120x5xf32>
    %285 = vector.extract_strided_slice %225 {offsets = [0, 15], sizes = [16, 5], strides = [1, 1]} : vector<16x32xbf16> to vector<16x5xbf16>
    %c0_159 = arith.constant 0 : index
    %c240 = arith.constant 240 : index
    %286 = vector.load %arg6[%c0_159, %c240] : memref<120x400xbf16, #tpu.memory_space<vmem>>, vector<120x16xbf16>
    %cst_160 = arith.constant dense<0.000000e+00> : vector<120x5xf32>
    %287 = tpu.matmul %286, %285, %cst_160 {dimension_numbers = #tpu.dot_dimension_numbers<[1], [0], [0], [1], [0, 0, 1, 1], [], []>} : vector<120x16xbf16>, vector<16x5xbf16>, vector<120x5xf32> -> vector<120x5xf32>
    %288 = arith.addf %284, %287 : vector<120x5xf32>
    %289 = vector.extract_strided_slice %225 {offsets = [0, 16], sizes = [16, 5], strides = [1, 1]} : vector<16x32xbf16> to vector<16x5xbf16>
    %c0_161 = arith.constant 0 : index
    %c256 = arith.constant 256 : index
    %290 = vector.load %arg6[%c0_161, %c256] : memref<120x400xbf16, #tpu.memory_space<vmem>>, vector<120x16xbf16>
    %cst_162 = arith.constant dense<0.000000e+00> : vector<120x5xf32>
    %291 = tpu.matmul %290, %289, %cst_162 {dimension_numbers = #tpu.dot_dimension_numbers<[1], [0], [0], [1], [0, 0, 1, 1], [], []>} : vector<120x16xbf16>, vector<16x5xbf16>, vector<120x5xf32> -> vector<120x5xf32>
    %292 = arith.addf %288, %291 : vector<120x5xf32>
    %293 = vector.extract_strided_slice %225 {offsets = [0, 17], sizes = [16, 5], strides = [1, 1]} : vector<16x32xbf16> to vector<16x5xbf16>
    %c0_163 = arith.constant 0 : index
    %c272 = arith.constant 272 : index
    %294 = vector.load %arg6[%c0_163, %c272] : memref<120x400xbf16, #tpu.memory_space<vmem>>, vector<120x16xbf16>
    %cst_164 = arith.constant dense<0.000000e+00> : vector<120x5xf32>
    %295 = tpu.matmul %294, %293, %cst_164 {dimension_numbers = #tpu.dot_dimension_numbers<[1], [0], [0], [1], [0, 0, 1, 1], [], []>} : vector<120x16xbf16>, vector<16x5xbf16>, vector<120x5xf32> -> vector<120x5xf32>
    %296 = arith.addf %292, %295 : vector<120x5xf32>
    %297 = vector.extract_strided_slice %225 {offsets = [0, 18], sizes = [16, 5], strides = [1, 1]} : vector<16x32xbf16> to vector<16x5xbf16>
    %c0_165 = arith.constant 0 : index
    %c288 = arith.constant 288 : index
    %298 = vector.load %arg6[%c0_165, %c288] : memref<120x400xbf16, #tpu.memory_space<vmem>>, vector<120x16xbf16>
    %cst_166 = arith.constant dense<0.000000e+00> : vector<120x5xf32>
    %299 = tpu.matmul %298, %297, %cst_166 {dimension_numbers = #tpu.dot_dimension_numbers<[1], [0], [0], [1], [0, 0, 1, 1], [], []>} : vector<120x16xbf16>, vector<16x5xbf16>, vector<120x5xf32> -> vector<120x5xf32>
    %300 = arith.addf %296, %299 : vector<120x5xf32>
    %301 = vector.extract_strided_slice %225 {offsets = [0, 19], sizes = [16, 5], strides = [1, 1]} : vector<16x32xbf16> to vector<16x5xbf16>
    %c0_167 = arith.constant 0 : index
    %c304 = arith.constant 304 : index
    %302 = vector.load %arg6[%c0_167, %c304] : memref<120x400xbf16, #tpu.memory_space<vmem>>, vector<120x16xbf16>
    %cst_168 = arith.constant dense<0.000000e+00> : vector<120x5xf32>
    %303 = tpu.matmul %302, %301, %cst_168 {dimension_numbers = #tpu.dot_dimension_numbers<[1], [0], [0], [1], [0, 0, 1, 1], [], []>} : vector<120x16xbf16>, vector<16x5xbf16>, vector<120x5xf32> -> vector<120x5xf32>
    %304 = arith.addf %300, %303 : vector<120x5xf32>
    %305 = vector.extract_strided_slice %225 {offsets = [0, 20], sizes = [16, 5], strides = [1, 1]} : vector<16x32xbf16> to vector<16x5xbf16>
    %c0_169 = arith.constant 0 : index
    %c320 = arith.constant 320 : index
    %306 = vector.load %arg6[%c0_169, %c320] : memref<120x400xbf16, #tpu.memory_space<vmem>>, vector<120x16xbf16>
    %cst_170 = arith.constant dense<0.000000e+00> : vector<120x5xf32>
    %307 = tpu.matmul %306, %305, %cst_170 {dimension_numbers = #tpu.dot_dimension_numbers<[1], [0], [0], [1], [0, 0, 1, 1], [], []>} : vector<120x16xbf16>, vector<16x5xbf16>, vector<120x5xf32> -> vector<120x5xf32>
    %308 = arith.addf %304, %307 : vector<120x5xf32>
    %309 = vector.extract_strided_slice %225 {offsets = [0, 21], sizes = [16, 5], strides = [1, 1]} : vector<16x32xbf16> to vector<16x5xbf16>
    %c0_171 = arith.constant 0 : index
    %c336 = arith.constant 336 : index
    %310 = vector.load %arg6[%c0_171, %c336] : memref<120x400xbf16, #tpu.memory_space<vmem>>, vector<120x16xbf16>
    %cst_172 = arith.constant dense<0.000000e+00> : vector<120x5xf32>
    %311 = tpu.matmul %310, %309, %cst_172 {dimension_numbers = #tpu.dot_dimension_numbers<[1], [0], [0], [1], [0, 0, 1, 1], [], []>} : vector<120x16xbf16>, vector<16x5xbf16>, vector<120x5xf32> -> vector<120x5xf32>
    %312 = arith.addf %308, %311 : vector<120x5xf32>
    %313 = vector.extract_strided_slice %225 {offsets = [0, 22], sizes = [16, 5], strides = [1, 1]} : vector<16x32xbf16> to vector<16x5xbf16>
    %c0_173 = arith.constant 0 : index
    %c352 = arith.constant 352 : index
    %314 = vector.load %arg6[%c0_173, %c352] : memref<120x400xbf16, #tpu.memory_space<vmem>>, vector<120x16xbf16>
    %cst_174 = arith.constant dense<0.000000e+00> : vector<120x5xf32>
    %315 = tpu.matmul %314, %313, %cst_174 {dimension_numbers = #tpu.dot_dimension_numbers<[1], [0], [0], [1], [0, 0, 1, 1], [], []>} : vector<120x16xbf16>, vector<16x5xbf16>, vector<120x5xf32> -> vector<120x5xf32>
    %316 = arith.addf %312, %315 : vector<120x5xf32>
    %317 = vector.extract_strided_slice %225 {offsets = [0, 23], sizes = [16, 5], strides = [1, 1]} : vector<16x32xbf16> to vector<16x5xbf16>
    %c0_175 = arith.constant 0 : index
    %c368 = arith.constant 368 : index
    %318 = vector.load %arg6[%c0_175, %c368] : memref<120x400xbf16, #tpu.memory_space<vmem>>, vector<120x16xbf16>
    %cst_176 = arith.constant dense<0.000000e+00> : vector<120x5xf32>
    %319 = tpu.matmul %318, %317, %cst_176 {dimension_numbers = #tpu.dot_dimension_numbers<[1], [0], [0], [1], [0, 0, 1, 1], [], []>} : vector<120x16xbf16>, vector<16x5xbf16>, vector<120x5xf32> -> vector<120x5xf32>
    %320 = arith.addf %316, %319 : vector<120x5xf32>
    %321 = vector.extract_strided_slice %225 {offsets = [0, 24], sizes = [16, 5], strides = [1, 1]} : vector<16x32xbf16> to vector<16x5xbf16>
    %c0_177 = arith.constant 0 : index
    %c384 = arith.constant 384 : index
    %322 = vector.load %arg6[%c0_177, %c384] : memref<120x400xbf16, #tpu.memory_space<vmem>>, vector<120x16xbf16>
    %cst_178 = arith.constant dense<0.000000e+00> : vector<120x5xf32>
    %323 = tpu.matmul %322, %321, %cst_178 {dimension_numbers = #tpu.dot_dimension_numbers<[1], [0], [0], [1], [0, 0, 1, 1], [], []>} : vector<120x16xbf16>, vector<16x5xbf16>, vector<120x5xf32> -> vector<120x5xf32>
    %324 = arith.addf %320, %323 : vector<120x5xf32>
    %c0_179 = arith.constant 0 : index
    %c0_180 = arith.constant 0 : index
    %325 = vector.load %arg7[%c0_179, %c0_180] : memref<120x1xf32, #tpu.memory_space<vmem>>, vector<120x1xf32>
    %326 = vector.broadcast %325 : vector<120x1xf32> to vector<120x5xf32>
    %327 = arith.addf %324, %326 : vector<120x5xf32>
    %328 = math.tanh %327 : vector<120x5xf32>
    %329 = vector.extract_strided_slice %328 {offsets = [0, 0], sizes = [120, 1], strides = [1, 1]} : vector<120x5xf32> to vector<120x1xf32>
    %330 = arith.truncf %329 : vector<120x1xf32> to vector<120x1xbf16>
    %c0_181 = arith.constant 0 : index
    %c0_182 = arith.constant 0 : index
    %331 = vector.load %arg8[%c0_181, %c0_182] : memref<84x120xbf16, #tpu.memory_space<vmem>>, vector<84x120xbf16>
    %cst_183 = arith.constant dense<0.000000e+00> : vector<84x1xf32>
    %332 = tpu.matmul %331, %330, %cst_183 {dimension_numbers = #tpu.dot_dimension_numbers<[1], [0], [0], [1], [0, 0, 1, 1], [], []>} : vector<84x120xbf16>, vector<120x1xbf16>, vector<84x1xf32> -> vector<84x1xf32>
    %c0_184 = arith.constant 0 : index
    %c0_185 = arith.constant 0 : index
    %333 = vector.load %arg9[%c0_184, %c0_185] : memref<84x1xf32, #tpu.memory_space<vmem>>, vector<84x1xf32>
    %334 = arith.addf %332, %333 : vector<84x1xf32>
    %335 = math.tanh %334 : vector<84x1xf32>
    %c0_186 = arith.constant 0 : index
    %c0_187 = arith.constant 0 : index
    %336 = vector.load %arg10[%c0_186, %c0_187] : memref<16x84xbf16, #tpu.memory_space<vmem>>, vector<16x84xbf16>
    %337 = arith.truncf %335 : vector<84x1xf32> to vector<84x1xbf16>
    %cst_188 = arith.constant dense<0.000000e+00> : vector<16x1xf32>
    %338 = tpu.matmul %336, %337, %cst_188 {dimension_numbers = #tpu.dot_dimension_numbers<[1], [0], [0], [1], [0, 0, 1, 1], [], []>} : vector<16x84xbf16>, vector<84x1xbf16>, vector<16x1xf32> -> vector<16x1xf32>
    %c0_189 = arith.constant 0 : index
    %c0_190 = arith.constant 0 : index
    %339 = vector.load %arg11[%c0_189, %c0_190] : memref<16x1xf32, #tpu.memory_space<vmem>>, vector<16x1xf32>
    %340 = arith.addf %338, %339 : vector<16x1xf32>
    %341 = vector.extract_strided_slice %340 {offsets = [0, 0], sizes = [8, 1], strides = [1, 1]} : vector<16x1xf32> to vector<8x1xf32>
    %342 = vector.extract_strided_slice %340 {offsets = [8, 0], sizes = [8, 1], strides = [1, 1]} : vector<16x1xf32> to vector<8x1xf32>
    %343 = arith.maximumf %341, %342 : vector<8x1xf32>
    %344 = vector.extract_strided_slice %343 {offsets = [0, 0], sizes = [4, 1], strides = [1, 1]} : vector<8x1xf32> to vector<4x1xf32>
    %345 = vector.extract_strided_slice %343 {offsets = [4, 0], sizes = [4, 1], strides = [1, 1]} : vector<8x1xf32> to vector<4x1xf32>
    %346 = arith.maximumf %344, %345 : vector<4x1xf32>
    %347 = vector.extract_strided_slice %346 {offsets = [0, 0], sizes = [2, 1], strides = [1, 1]} : vector<4x1xf32> to vector<2x1xf32>
    %348 = vector.extract_strided_slice %346 {offsets = [2, 0], sizes = [2, 1], strides = [1, 1]} : vector<4x1xf32> to vector<2x1xf32>
    %349 = arith.maximumf %347, %348 : vector<2x1xf32>
    %350 = vector.extract_strided_slice %349 {offsets = [0, 0], sizes = [1, 1], strides = [1, 1]} : vector<2x1xf32> to vector<1x1xf32>
    %351 = vector.extract_strided_slice %349 {offsets = [1, 0], sizes = [1, 1], strides = [1, 1]} : vector<2x1xf32> to vector<1x1xf32>
    %352 = arith.maximumf %350, %351 : vector<1x1xf32>
    %353 = vector.broadcast %352 : vector<1x1xf32> to vector<16x1xf32>
    %354 = arith.subf %340, %353 : vector<16x1xf32>
    %355 = math.exp %354 : vector<16x1xf32>
    %356 = vector.extract_strided_slice %355 {offsets = [0, 0], sizes = [8, 1], strides = [1, 1]} : vector<16x1xf32> to vector<8x1xf32>
    %357 = vector.extract_strided_slice %355 {offsets = [8, 0], sizes = [8, 1], strides = [1, 1]} : vector<16x1xf32> to vector<8x1xf32>
    %358 = arith.addf %356, %357 : vector<8x1xf32>
    %359 = vector.extract_strided_slice %358 {offsets = [0, 0], sizes = [4, 1], strides = [1, 1]} : vector<8x1xf32> to vector<4x1xf32>
    %360 = vector.extract_strided_slice %358 {offsets = [4, 0], sizes = [4, 1], strides = [1, 1]} : vector<8x1xf32> to vector<4x1xf32>
    %361 = arith.addf %359, %360 : vector<4x1xf32>
    %362 = vector.extract_strided_slice %361 {offsets = [0, 0], sizes = [2, 1], strides = [1, 1]} : vector<4x1xf32> to vector<2x1xf32>
    %363 = vector.extract_strided_slice %361 {offsets = [2, 0], sizes = [2, 1], strides = [1, 1]} : vector<4x1xf32> to vector<2x1xf32>
    %364 = arith.addf %362, %363 : vector<2x1xf32>
    %365 = vector.extract_strided_slice %364 {offsets = [0, 0], sizes = [1, 1], strides = [1, 1]} : vector<2x1xf32> to vector<1x1xf32>
    %366 = vector.extract_strided_slice %364 {offsets = [1, 0], sizes = [1, 1], strides = [1, 1]} : vector<2x1xf32> to vector<1x1xf32>
    %367 = arith.addf %365, %366 : vector<1x1xf32>
    %368 = tpu.reciprocal %367 {approx = true} : vector<1x1xf32> -> vector<1x1xf32>
    %369 = arith.mulf %367, %368 : vector<1x1xf32>
    %cst_191 = arith.constant 2.000000e+00 : f32
    %370 = vector.broadcast %cst_191 : f32 to vector<1x1xf32>
    %371 = arith.subf %370, %369 : vector<1x1xf32>
    %372 = arith.mulf %368, %371 : vector<1x1xf32>
    %373 = vector.broadcast %372 : vector<1x1xf32> to vector<16x1xf32>
    %374 = arith.mulf %355, %373 : vector<16x1xf32>
    %c0_192 = arith.constant 0 : index
    %c0_193 = arith.constant 0 : index
    %c0_194 = arith.constant 0 : index
    %375 = vector.load %arg14[%c0_192, %c0_193, %c0_194] : memref<1x16x1xf32, #tpu.memory_space<vmem>>, vector<1x16x1xf32>
    %376 = vector.shape_cast %375 : vector<1x16x1xf32> to vector<16x1xf32>
    %377 = vector.shape_cast %374 : vector<16x1xf32> to vector<1x16x1xf32>
    tpu.vector_store %arg14[%c0_192, %c0_193, %c0_194], %377 {strides = array<i32>} : memref<1x16x1xf32, #tpu.memory_space<vmem>>, vector<1x16x1xf32>,
    return
  }
  func.func @transform_0(%arg0: i32) -> (i32, i32, i32) {
    %c0_i32 = arith.constant 0 : i32
    %c0_i32_0 = arith.constant 0 : i32
    %c0_i32_1 = arith.constant 0 : i32
    return %arg0, %c0_i32, %c0_i32_0 : i32, i32, i32
  }
  func.func @transform_1(%arg0: i32) -> (i32, i32) {
    %c0_i32 = arith.constant 0 : i32
    %c0_i32_0 = arith.constant 0 : i32
    %c0_i32_1 = arith.constant 0 : i32
    return %c0_i32, %c0_i32_0 : i32, i32
  }
  func.func @transform_2(%arg0: i32) -> (i32, i32) {
    %c0_i32 = arith.constant 0 : i32
    %c0_i32_0 = arith.constant 0 : i32
    %c0_i32_1 = arith.constant 0 : i32
    return %c0_i32, %c0_i32_0 : i32, i32
  }
  func.func @transform_3(%arg0: i32) -> (i32, i32) {
    %c0_i32 = arith.constant 0 : i32
    %c0_i32_0 = arith.constant 0 : i32
    %c0_i32_1 = arith.constant 0 : i32
    return %c0_i32, %c0_i32_0 : i32, i32
  }
  func.func @transform_4(%arg0: i32) -> (i32, i32) {
    %c0_i32 = arith.constant 0 : i32
    %c0_i32_0 = arith.constant 0 : i32
    %c0_i32_1 = arith.constant 0 : i32
    return %c0_i32, %c0_i32_0 : i32, i32
  }
  func.func @transform_5(%arg0: i32) -> (i32, i32) {
    %c0_i32 = arith.constant 0 : i32
    %c0_i32_0 = arith.constant 0 : i32
    %c0_i32_1 = arith.constant 0 : i32
    return %c0_i32, %c0_i32_0 : i32, i32
  }
  func.func @transform_6(%arg0: i32) -> (i32, i32) {
    %c0_i32 = arith.constant 0 : i32
    %c0_i32_0 = arith.constant 0 : i32
    %c0_i32_1 = arith.constant 0 : i32
    return %c0_i32, %c0_i32_0 : i32, i32
  }
  func.func @transform_7(%arg0: i32) -> (i32, i32) {
    %c0_i32 = arith.constant 0 : i32
    %c0_i32_0 = arith.constant 0 : i32
    %c0_i32_1 = arith.constant 0 : i32
    return %c0_i32, %c0_i32_0 : i32, i32
  }
  func.func @transform_8(%arg0: i32) -> (i32, i32) {
    %c0_i32 = arith.constant 0 : i32
    %c0_i32_0 = arith.constant 0 : i32
    %c0_i32_1 = arith.constant 0 : i32
    return %c0_i32, %c0_i32_0 : i32, i32
  }
  func.func @transform_9(%arg0: i32) -> (i32, i32) {
    %c0_i32 = arith.constant 0 : i32
    %c0_i32_0 = arith.constant 0 : i32
    %c0_i32_1 = arith.constant 0 : i32
    return %c0_i32, %c0_i32_0 : i32, i32
  }
  func.func @transform_10(%arg0: i32) -> (i32, i32) {
    %c0_i32 = arith.constant 0 : i32
    %c0_i32_0 = arith.constant 0 : i32
    %c0_i32_1 = arith.constant 0 : i32
    return %c0_i32, %c0_i32_0 : i32, i32
  }
  func.func @transform_11(%arg0: i32) -> (i32, i32) {
    %c0_i32 = arith.constant 0 : i32
    %c0_i32_0 = arith.constant 0 : i32
    %c0_i32_1 = arith.constant 0 : i32
    return %c0_i32, %c0_i32_0 : i32, i32
  }
  func.func @transform_12(%arg0: i32) -> (i32, i32) {
    %c0_i32 = arith.constant 0 : i32
    %c0_i32_0 = arith.constant 0 : i32
    %c0_i32_1 = arith.constant 0 : i32
    return %c0_i32, %c0_i32_0 : i32, i32
  }
  func.func @transform_13(%arg0: i32) -> (i32, i32, i32) {
    %c0_i32 = arith.constant 0 : i32
    %c0_i32_0 = arith.constant 0 : i32
    %c0_i32_1 = arith.constant 0 : i32
    return %arg0, %c0_i32, %c0_i32_0 : i32, i32, i32
  }
}

</mosaic_0001>

<llo_original>
// kernel: lenet5_forward.1
$region0: #{lenet5_forward.1}
  #allocation0 [shape = 'u32[]', space=smem, size = 0x4, offset = 0x4, fixed_abs, tag = 'smem constant byte address 0x4 - core index']
  #allocation1 [shape = 'u32[72,128]{1,0:T(1,128)}', space=vmem, size = 0x9000, scoped, tag = 'internal scratch']
  %s0 = inlined_call_operand.vmem [shape: bf16[2,3,1152], index: 0, kind: input, shape index: {}]
  %s1 = inlined_call_operand.vmem [shape: bf16[6,75], index: 1, kind: input, shape index: {}]
  %s2 = inlined_call_operand.vmem [shape: f32[6,1], index: 2, kind: input, shape index: {}]
  %s3 = inlined_call_operand.vmem [shape: bf16[16,150], index: 3, kind: input, shape index: {}]
  %s4 = inlined_call_operand.vmem [shape: f32[16,1], index: 4, kind: input, shape index: {}]
  %s5 = inlined_call_operand.vmem [shape: bf16[120,400], index: 5, kind: input, shape index: {}]
  %s6 = inlined_call_operand.vmem [shape: f32[120,1], index: 6, kind: input, shape index: {}]
  %s7 = inlined_call_operand.vmem [shape: bf16[84,120], index: 7, kind: input, shape index: {}]
  %s8 = inlined_call_operand.vmem [shape: f32[84,1], index: 8, kind: input, shape index: {}]
  %s9 = inlined_call_operand.vmem [shape: bf16[16,84], index: 9, kind: input, shape index: {}]
  %s10 = inlined_call_operand.vmem [shape: f32[16,1], index: 10, kind: input, shape index: {}]
  %s11 = inlined_call_operand.vmem [shape: f32[863,256], index: 11, kind: input, shape index: {}]
  %s12 = inlined_call_operand.vmem [shape: f32[125,32], index: 12, kind: input, shape index: {}]
  %s13 = inlined_call_operand.vmem [shape: f32[2,16,1], index: 13, kind: output, shape index: {}]
  %s14 = sld [smem:[#allocation0]]
  $region85: #{lenet5_forward.1} parent=0
    _
  %s16 = ssub.s32 1, %s14
  %s17 = scalar_select 0, %s16, %s14
  loop: start=0, step=1, limit=4
  $region2: #{lenet5_forward.1} parent=0 // loop_pre_header
    _
  $region3: #{lenet5_forward.1} parent=0 // loop_header
    %s19 = sphi 0, %s23
    %p20 = scmp.ge.s32.totalorder %s19, 4
    %s29 = sphi 0, %s31
    %s32 = sphi 0, %s29
    %s33 = sphi 0, %s32
    %s49 = sphi 0, %s33
    %s53 = sphi 0, %s53
    %s55 = sphi 0, %s53
    %s56 = sphi 0, %s55
    %s70 = sphi 0, %s56
    %s74 = sphi 0, %s74
    %s76 = sphi 0, %s74
    %s77 = sphi 0, %s76
    %s91 = sphi 0, %s77
    %s95 = sphi 0, %s95
    %s97 = sphi 0, %s95
    %s98 = sphi 0, %s97
    %s112 = sphi 0, %s98
    %s116 = sphi 0, %s116
    %s118 = sphi 0, %s116
    %s119 = sphi 0, %s118
    %s133 = sphi 0, %s119
    %s137 = sphi 0, %s137
    %s139 = sphi 0, %s137
    %s140 = sphi 0, %s139
    %s154 = sphi 0, %s140
    %s158 = sphi 0, %s158
    %s160 = sphi 0, %s158
    %s161 = sphi 0, %s160
    %s175 = sphi 0, %s161
    %s179 = sphi 0, %s179
    %s181 = sphi 0, %s179
    %s182 = sphi 0, %s181
    %s196 = sphi 0, %s182
    %s200 = sphi 0, %s200
    %s202 = sphi 0, %s200
    %s203 = sphi 0, %s202
    %s217 = sphi 0, %s203
    %s221 = sphi 0, %s221
    %s223 = sphi 0, %s221
    %s224 = sphi 0, %s223
    %s238 = sphi 0, %s224
    %s242 = sphi 0, %s242
    %s244 = sphi 0, %s242
    %s245 = sphi 0, %s244
    %s259 = sphi 0, %s245
    %s263 = sphi 0, %s263
    %s265 = sphi 0, %s263
    %s266 = sphi 0, %s265
    %s280 = sphi 0, %s266
    %s284 = sphi 0, %s284
    %s286 = sphi 0, %s284
    %s287 = sphi 0, %s286
    %s301 = sphi 0, %s287
    %s307 = sphi 0, %s309
    %s310 = sphi 0, %s307
    %s311 = sphi 0, %s310
    %s327 = sphi 0, %s311
  $region4: #{lenet5_forward.1} parent=0 // loop_header_branch
    %22 = sbr.rel (%p20) target = $region8
  $region5: #{lenet5_forward.1} parent=0 // loop_body
    %s24 = ssub.s32 %s19, 1
    %s25 = ssub.s32 %s19, 2
    %s26 = sadd.s32 %s19, 1
    %s27 = ssub.s32 %s19, %s26
    %p28 = scmp.eq.s32.totalorder %s27, 0
    %s30 = sadd.s32 %s29, 1
    %s31 = scalar_select %p28, %s29, %s30
    %p34 = pneg %p28
    %p35 = scmp.eq.s32.totalorder %s19, 1
    %p36 = por %p34, %p35
    %p37 = scmp.ne.s32.totalorder %s29, %s32
    %p38 = scmp.eq.s32.totalorder %s19, 0
    %p39 = por %p37, %p38
    %p40 = scmp.ne.s32.totalorder %s29, %s32
    %p41 = scmp.eq.s32.totalorder %s24, 1
    %p42 = por %p40, %p41
    %p43 = scmp.ne.s32.totalorder %s32, %s33
    %p44 = scmp.eq.s32.totalorder %s24, 0
    %p45 = por %p43, %p44
    %p46 = scmp.ne.s32.totalorder %s32, %s33
    %p47 = scmp.eq.s32.totalorder %s25, 1
    %p48 = por %p46, %p47
    %p50 = scmp.ne.s32.totalorder %s33, %s49
    %p51 = scmp.eq.s32.totalorder %s25, 0
    %p52 = por %p50, %p51
    %s54 = sadd.s32 %s53, 1
    %p57 = scmp.eq.s32.totalorder %s19, 1
    %p58 = scmp.ne.s32.totalorder %s53, %s55
    %p59 = scmp.eq.s32.totalorder %s19, 0
    %p60 = por %p58, %p59
    %p61 = scmp.ne.s32.totalorder %s53, %s55
    %p62 = scmp.eq.s32.totalorder %s24, 1
    %p63 = por %p61, %p62
    %p64 = scmp.ne.s32.totalorder %s55, %s56
    %p65 = scmp.eq.s32.totalorder %s24, 0
    %p66 = por %p64, %p65
    %p67 = scmp.ne.s32.totalorder %s55, %s56
    %p68 = scmp.eq.s32.totalorder %s25, 1
    %p69 = por %p67, %p68
    %p71 = scmp.ne.s32.totalorder %s56, %s70
    %p72 = scmp.eq.s32.totalorder %s25, 0
    %p73 = por %p71, %p72
    %s75 = sadd.s32 %s74, 1
    %p78 = scmp.eq.s32.totalorder %s19, 1
    %p79 = scmp.ne.s32.totalorder %s74, %s76
    %p80 = scmp.eq.s32.totalorder %s19, 0
    %p81 = por %p79, %p80
    %p82 = scmp.ne.s32.totalorder %s74, %s76
    %p83 = scmp.eq.s32.totalorder %s24, 1
    %p84 = por %p82, %p83
    %p85 = scmp.ne.s32.totalorder %s76, %s77
    %p86 = scmp.eq.s32.totalorder %s24, 0
    %p87 = por %p85, %p86
    %p88 = scmp.ne.s32.totalorder %s76, %s77
    %p89 = scmp.eq.s32.totalorder %s25, 1
    %p90 = por %p88, %p89
    %p92 = scmp.ne.s32.totalorder %s77, %s91
    %p93 = scmp.eq.s32.totalorder %s25, 0
    %p94 = por %p92, %p93
    %s96 = sadd.s32 %s95, 1
    %p99 = scmp.eq.s32.totalorder %s19, 1
    %p100 = scmp.ne.s32.totalorder %s95, %s97
    %p101 = scmp.eq.s32.totalorder %s19, 0
    %p102 = por %p100, %p101
    %p103 = scmp.ne.s32.totalorder %s95, %s97
    %p104 = scmp.eq.s32.totalorder %s24, 1
    %p105 = por %p103, %p104
    %p106 = scmp.ne.s32.totalorder %s97, %s98
    %p107 = scmp.eq.s32.totalorder %s24, 0
    %p108 = por %p106, %p107
    %p109 = scmp.ne.s32.totalorder %s97, %s98
    %p110 = scmp.eq.s32.totalorder %s25, 1
    %p111 = por %p109, %p110
    %p113 = scmp.ne.s32.totalorder %s98, %s112
    %p114 = scmp.eq.s32.totalorder %s25, 0
    %p115 = por %p113, %p114
    %s117 = sadd.s32 %s116, 1
    %p120 = scmp.eq.s32.totalorder %s19, 1
    %p121 = scmp.ne.s32.totalorder %s116, %s118
    %p122 = scmp.eq.s32.totalorder %s19, 0
    %p123 = por %p121, %p122
    %p124 = scmp.ne.s32.totalorder %s116, %s118
    %p125 = scmp.eq.s32.totalorder %s24, 1
    %p126 = por %p124, %p125
    %p127 = scmp.ne.s32.totalorder %s118, %s119
    %p128 = scmp.eq.s32.totalorder %s24, 0
    %p129 = por %p127, %p128
    %p130 = scmp.ne.s32.totalorder %s118, %s119
    %p131 = scmp.eq.s32.totalorder %s25, 1
    %p132 = por %p130, %p131
    %p134 = scmp.ne.s32.totalorder %s119, %s133
    %p135 = scmp.eq.s32.totalorder %s25, 0
    %p136 = por %p134, %p135
    %s138 = sadd.s32 %s137, 1
    %p141 = scmp.eq.s32.totalorder %s19, 1
    %p142 = scmp.ne.s32.totalorder %s137, %s139
    %p143 = scmp.eq.s32.totalorder %s19, 0
    %p144 = por %p142, %p143
    %p145 = scmp.ne.s32.totalorder %s137, %s139
    %p146 = scmp.eq.s32.totalorder %s24, 1
    %p147 = por %p145, %p146
    %p148 = scmp.ne.s32.totalorder %s139, %s140
    %p149 = scmp.eq.s32.totalorder %s24, 0
    %p150 = por %p148, %p149
    %p151 = scmp.ne.s32.totalorder %s139, %s140
    %p152 = scmp.eq.s32.totalorder %s25, 1
    %p153 = por %p151, %p152
    %p155 = scmp.ne.s32.totalorder %s140, %s154
    %p156 = scmp.eq.s32.totalorder %s25, 0
    %p157 = por %p155, %p156
    %s159 = sadd.s32 %s158, 1
    %p162 = scmp.eq.s32.totalorder %s19, 1
    %p163 = scmp.ne.s32.totalorder %s158, %s160
    %p164 = scmp.eq.s32.totalorder %s19, 0
    %p165 = por %p163, %p164
    %p166 = scmp.ne.s32.totalorder %s158, %s160
    %p167 = scmp.eq.s32.totalorder %s24, 1
    %p168 = por %p166, %p167
    %p169 = scmp.ne.s32.totalorder %s160, %s161
    %p170 = scmp.eq.s32.totalorder %s24, 0
    %p171 = por %p169, %p170
    %p172 = scmp.ne.s32.totalorder %s160, %s161
    %p173 = scmp.eq.s32.totalorder %s25, 1
    %p174 = por %p172, %p173
    %p176 = scmp.ne.s32.totalorder %s161, %s175
    %p177 = scmp.eq.s32.totalorder %s25, 0
    %p178 = por %p176, %p177
    %s180 = sadd.s32 %s179, 1
    %p183 = scmp.eq.s32.totalorder %s19, 1
    %p184 = scmp.ne.s32.totalorder %s179, %s181
    %p185 = scmp.eq.s32.totalorder %s19, 0
    %p186 = por %p184, %p185
    %p187 = scmp.ne.s32.totalorder %s179, %s181
    %p188 = scmp.eq.s32.totalorder %s24, 1
    %p189 = por %p187, %p188
    %p190 = scmp.ne.s32.totalorder %s181, %s182
    %p191 = scmp.eq.s32.totalorder %s24, 0
    %p192 = por %p190, %p191
    %p193 = scmp.ne.s32.totalorder %s181, %s182
    %p194 = scmp.eq.s32.totalorder %s25, 1
    %p195 = por %p193, %p194
    %p197 = scmp.ne.s32.totalorder %s182, %s196
    %p198 = scmp.eq.s32.totalorder %s25, 0
    %p199 = por %p197, %p198
    %s201 = sadd.s32 %s200, 1
    %p204 = scmp.eq.s32.totalorder %s19, 1
    %p205 = scmp.ne.s32.totalorder %s200, %s202
    %p206 = scmp.eq.s32.totalorder %s19, 0
    %p207 = por %p205, %p206
    %p208 = scmp.ne.s32.totalorder %s200, %s202
    %p209 = scmp.eq.s32.totalorder %s24, 1
    %p210 = por %p208, %p209
    %p211 = scmp.ne.s32.totalorder %s202, %s203
    %p212 = scmp.eq.s32.totalorder %s24, 0
    %p213 = por %p211, %p212
    %p214 = scmp.ne.s32.totalorder %s202, %s203
    %p215 = scmp.eq.s32.totalorder %s25, 1
    %p216 = por %p214, %p215
    %p218 = scmp.ne.s32.totalorder %s203, %s217
    %p219 = scmp.eq.s32.totalorder %s25, 0
    %p220 = por %p218, %p219
    %s222 = sadd.s32 %s221, 1
    %p225 = scmp.eq.s32.totalorder %s19, 1
    %p226 = scmp.ne.s32.totalorder %s221, %s223
    %p227 = scmp.eq.s32.totalorder %s19, 0
    %p228 = por %p226, %p227
    %p229 = scmp.ne.s32.totalorder %s221, %s223
    %p230 = scmp.eq.s32.totalorder %s24, 1
    %p231 = por %p229, %p230
    %p232 = scmp.ne.s32.totalorder %s223, %s224
    %p233 = scmp.eq.s32.totalorder %s24, 0
    %p234 = por %p232, %p233
    %p235 = scmp.ne.s32.totalorder %s223, %s224
    %p236 = scmp.eq.s32.totalorder %s25, 1
    %p237 = por %p235, %p236
    %p239 = scmp.ne.s32.totalorder %s224, %s238
    %p240 = scmp.eq.s32.totalorder %s25, 0
    %p241 = por %p239, %p240
    %s243 = sadd.s32 %s242, 1
    %p246 = scmp.eq.s32.totalorder %s19, 1
    %p247 = scmp.ne.s32.totalorder %s242, %s244
    %p248 = scmp.eq.s32.totalorder %s19, 0
    %p249 = por %p247, %p248
    %p250 = scmp.ne.s32.totalorder %s242, %s244
    %p251 = scmp.eq.s32.totalorder %s24, 1
    %p252 = por %p250, %p251
    %p253 = scmp.ne.s32.totalorder %s244, %s245
    %p254 = scmp.eq.s32.totalorder %s24, 0
    %p255 = por %p253, %p254
    %p256 = scmp.ne.s32.totalorder %s244, %s245
    %p257 = scmp.eq.s32.totalorder %s25, 1
    %p258 = por %p256, %p257
    %p260 = scmp.ne.s32.totalorder %s245, %s259
    %p261 = scmp.eq.s32.totalorder %s25, 0
    %p262 = por %p260, %p261
    %s264 = sadd.s32 %s263, 1
    %p267 = scmp.eq.s32.totalorder %s19, 1
    %p268 = scmp.ne.s32.totalorder %s263, %s265
    %p269 = scmp.eq.s32.totalorder %s19, 0
    %p270 = por %p268, %p269
    %p271 = scmp.ne.s32.totalorder %s263, %s265
    %p272 = scmp.eq.s32.totalorder %s24, 1
    %p273 = por %p271, %p272
    %p274 = scmp.ne.s32.totalorder %s265, %s266
    %p275 = scmp.eq.s32.totalorder %s24, 0
    %p276 = por %p274, %p275
    %p277 = scmp.ne.s32.totalorder %s265, %s266
    %p278 = scmp.eq.s32.totalorder %s25, 1
    %p279 = por %p277, %p278
    %p281 = scmp.ne.s32.totalorder %s266, %s280
    %p282 = scmp.eq.s32.totalorder %s25, 0
    %p283 = por %p281, %p282
    %s285 = sadd.s32 %s284, 1
    %p288 = scmp.eq.s32.totalorder %s19, 1
    %p289 = scmp.ne.s32.totalorder %s284, %s286
    %p290 = scmp.eq.s32.totalorder %s19, 0
    %p291 = por %p289, %p290
    %p292 = scmp.ne.s32.totalorder %s284, %s286
    %p293 = scmp.eq.s32.totalorder %s24, 1
    %p294 = por %p292, %p293
    %p295 = scmp.ne.s32.totalorder %s286, %s287
    %p296 = scmp.eq.s32.totalorder %s24, 0
    %p297 = por %p295, %p296
    %p298 = scmp.ne.s32.totalorder %s286, %s287
    %p299 = scmp.eq.s32.totalorder %s25, 1
    %p300 = por %p298, %p299
    %p302 = scmp.ne.s32.totalorder %s287, %s301
    %p303 = scmp.eq.s32.totalorder %s25, 0
    %p304 = por %p302, %p303
    %s305 = ssub.s32 %s19, %s26
    %p306 = scmp.eq.s32.totalorder %s305, 0
    %s308 = sadd.s32 %s307, 1
    %s309 = scalar_select %p306, %s307, %s308
    %p312 = pneg %p306
    %p313 = scmp.eq.s32.totalorder %s19, 1
    %p314 = por %p312, %p313
    %p315 = scmp.ne.s32.totalorder %s307, %s310
    %p316 = scmp.eq.s32.totalorder %s19, 0
    %p317 = por %p315, %p316
    %p318 = scmp.ne.s32.totalorder %s307, %s310
    %p319 = scmp.eq.s32.totalorder %s24, 1
    %p320 = por %p318, %p319
    %p321 = scmp.ne.s32.totalorder %s310, %s311
    %p322 = scmp.eq.s32.totalorder %s24, 0
    %p323 = por %p321, %p322
    %p324 = scmp.ne.s32.totalorder %s310, %s311
    %p325 = scmp.eq.s32.totalorder %s25, 1
    %p326 = por %p324, %p325
    %p328 = scmp.ne.s32.totalorder %s311, %s327
    %p329 = scmp.eq.s32.totalorder %s25, 0
    %p330 = por %p328, %p329
    %p331 = scmp.le.s32.totalorder 1, %s19
    %p332 = scmp.lt.s32.totalorder %s19, 3
    %p333 = pnand %p331, %p332
    %p334 = pneg %p333
    // Predicated region
    $region9: #{lenet5_forward.1} parent=5 // pred_check
      _
    $region10: #{lenet5_forward.1} parent=5 // pred_check_branch
      %336 = sbr.rel (%p333) target = $region12
    $region11: #{lenet5_forward.1} parent=5 // pred_region
      %s337 = ssub.s32 %s19, 1
      // Predicated region
      $region13: #{lenet5_forward.1} parent=11 // pred_check
        %p338 = pneg %p66
      $region14: #{lenet5_forward.1} parent=11 // pred_check_branch
        %340 = sbr.rel (%p338) target = $region16
      $region15: #{lenet5_forward.1} parent=11 // pred_region
        _
      $region16: #{lenet5_forward.1} parent=11 // pred_fallthru
        _
      // Predicated region
      $region17: #{lenet5_forward.1} parent=11 // pred_check
        %p341 = pneg %p87
      $region18: #{lenet5_forward.1} parent=11 // pred_check_branch
        %343 = sbr.rel (%p341) target = $region20
      $region19: #{lenet5_forward.1} parent=11 // pred_region
        _
      $region20: #{lenet5_forward.1} parent=11 // pred_fallthru
        _
      // Predicated region
      $region21: #{lenet5_forward.1} parent=11 // pred_check
        %p344 = pneg %p108
      $region22: #{lenet5_forward.1} parent=11 // pred_check_branch
        %346 = sbr.rel (%p344) target = $region24
      $region23: #{lenet5_forward.1} parent=11 // pred_region
        _
      $region24: #{lenet5_forward.1} parent=11 // pred_fallthru
        _
      // Predicated region
      $region25: #{lenet5_forward.1} parent=11 // pred_check
        %p347 = pneg %p129
      $region26: #{lenet5_forward.1} parent=11 // pred_check_branch
        %349 = sbr.rel (%p347) target = $region28
      $region27: #{lenet5_forward.1} parent=11 // pred_region
        _
      $region28: #{lenet5_forward.1} parent=11 // pred_fallthru
        _
      // Predicated region
      $region29: #{lenet5_forward.1} parent=11 // pred_check
        %p350 = pneg %p150
      $region30: #{lenet5_forward.1} parent=11 // pred_check_branch
        %352 = sbr.rel (%p350) target = $region32
      $region31: #{lenet5_forward.1} parent=11 // pred_region
        _
      $region32: #{lenet5_forward.1} parent=11 // pred_fallthru
        _
      // Predicated region
      $region33: #{lenet5_forward.1} parent=11 // pred_check
        %p353 = pneg %p171
      $region34: #{lenet5_forward.1} parent=11 // pred_check_branch
        %355 = sbr.rel (%p353) target = $region36
      $region35: #{lenet5_forward.1} parent=11 // pred_region
        _
      $region36: #{lenet5_forward.1} parent=11 // pred_fallthru
        _
      // Predicated region
      $region37: #{lenet5_forward.1} parent=11 // pred_check
        %p356 = pneg %p192
      $region38: #{lenet5_forward.1} parent=11 // pred_check_branch
        %358 = sbr.rel (%p356) target = $region40
      $region39: #{lenet5_forward.1} parent=11 // pred_region
        _
      $region40: #{lenet5_forward.1} parent=11 // pred_fallthru
        _
      // Predicated region
      $region41: #{lenet5_forward.1} parent=11 // pred_check
        %p359 = pneg %p213
      $region42: #{lenet5_forward.1} parent=11 // pred_check_branch
        %361 = sbr.rel (%p359) target = $region44
      $region43: #{lenet5_forward.1} parent=11 // pred_region
        _
      $region44: #{lenet5_forward.1} parent=11 // pred_fallthru
        _
      // Predicated region
      $region45: #{lenet5_forward.1} parent=11 // pred_check
        %p362 = pneg %p234
      $region46: #{lenet5_forward.1} parent=11 // pred_check_branch
        %364 = sbr.rel (%p362) target = $region48
      $region47: #{lenet5_forward.1} parent=11 // pred_region
        _
      $region48: #{lenet5_forward.1} parent=11 // pred_fallthru
        _
      // Predicated region
      $region49: #{lenet5_forward.1} parent=11 // pred_check
        %p365 = pneg %p255
      $region50: #{lenet5_forward.1} parent=11 // pred_check_branch
        %367 = sbr.rel (%p365) target = $region52
      $region51: #{lenet5_forward.1} parent=11 // pred_region
        _
      $region52: #{lenet5_forward.1} parent=11 // pred_fallthru
        _
      // Predicated region
      $region53: #{lenet5_forward.1} parent=11 // pred_check
        %p368 = pneg %p276
      $region54: #{lenet5_forward.1} parent=11 // pred_check_branch
        %370 = sbr.rel (%p368) target = $region56
      $region55: #{lenet5_forward.1} parent=11 // pred_region
        _
      $region56: #{lenet5_forward.1} parent=11 // pred_fallthru
        _
      // Predicated region
      $region57: #{lenet5_forward.1} parent=11 // pred_check
        %p371 = pneg %p297
      $region58: #{lenet5_forward.1} parent=11 // pred_check_branch
        %373 = sbr.rel (%p371) target = $region60
      $region59: #{lenet5_forward.1} parent=11 // pred_region
        _
      $region60: #{lenet5_forward.1} parent=11 // pred_fallthru
        _
    $region12: #{lenet5_forward.1} parent=5 // pred_fallthru
      _
    %p374 = scmp.lt.s32.totalorder %s19, 2
    // Predicated region
    $region61: #{lenet5_forward.1} parent=5 // pred_check
      %p375 = pneg %p374
    $region62: #{lenet5_forward.1} parent=5 // pred_check_branch
      %377 = sbr.rel (%p375) target = $region64
    $region63: #{lenet5_forward.1} parent=5 // pred_region
      // Predicated region
      $region65: #{lenet5_forward.1} parent=63 // pred_check
        %p378 = pneg %p39
      $region66: #{lenet5_forward.1} parent=63 // pred_check_branch
        %380 = sbr.rel (%p378) target = $region68
      $region67: #{lenet5_forward.1} parent=63 // pred_region
        %p381 = scmp.lt.s32.totalorder %s19, 1
        %s382 = scalar_select %p381, %s19, 1
        %s383 = smul.addr %s382, 9
        %s384 = smul.addr %s383, 2
        %s385 = scalar_lea.vmem %s0, %s384
      $region68: #{lenet5_forward.1} parent=63 // pred_fallthru
        _
    $region64: #{lenet5_forward.1} parent=5 // pred_fallthru
      _
    %p386 = scmp.le.s32.totalorder 1, %s19
    %p387 = scmp.lt.s32.totalorder %s19, 3
    %p388 = pnand %p386, %p387
    %p389 = pneg %p388
    // Predicated region
    $region69: #{lenet5_forward.1} parent=5 // pred_check
      _
    $region70: #{lenet5_forward.1} parent=5 // pred_check_branch
      %391 = sbr.rel (%p388) target = $region72
    $region71: #{lenet5_forward.1} parent=5 // pred_region
      %s392 = ssub.s32 %s19, 1
      %p393 = scmp.lt.s32.totalorder %s24, 1
      %s394 = scalar_select %p393, %s24, 1
      %s395 = smul.addr %s394, 9
      %s396 = smul.addr %s395, 2
      %s397 = scalar_lea.vmem %s0, %s396
      %p398 = pneg %p45
      %p399 = pneg %p42
      %p400 = pneg %p66
      %p401 = pneg %p63
      %p402 = pneg %p87
      %p403 = pneg %p84
      %p404 = pneg %p108
      %p405 = pneg %p105
      %p406 = pneg %p129
      %p407 = pneg %p126
      %p408 = pneg %p150
      %p409 = pneg %p147
      %p410 = pneg %p171
      %p411 = pneg %p168
      %p412 = pneg %p192
      %p413 = pneg %p189
      %p414 = pneg %p213
      %p415 = pneg %p210
      %p416 = pneg %p234
      %p417 = pneg %p231
      %p418 = pneg %p255
      %p419 = pneg %p252
      %p420 = pneg %p276
      %p421 = pneg %p273
      %p422 = pneg %p297
      %p423 = pneg %p294
      %p424 = pneg %p323
      %p425 = pneg %p320
      %p426 = scmp.lt.s32.totalorder %s24, 1
      %s427 = scalar_select %p426, %s24, 1
      %s428 = smul.addr %s427, 2
      %s429 = smul.addr %s428, 8
      %s430 = scalar_lea.vmem %s13, %s429
      %p431 = scmp.lt.s32.totalorder %s24, 1
      %s432 = scalar_select %p431, %s24, 1
      %s433 = smul.addr %s432, 9
      %s434 = smul.addr %s433, 2
      %s435 = scalar_lea.vmem %s0, %s434
      %p436 = scmp.lt.s32.totalorder %s24, 1
      %s437 = scalar_select %p436, %s24, 1
      %s438 = smul.addr %s437, 2
      %s439 = smul.addr %s438, 8
      %s440 = scalar_lea.vmem %s13, %s439
      %v442 = vld [vmem:[%s435] sm:$0xff]
      %v443 = vld [vmem:[%s435 + $0x8] sm:$0xff]
      %v444 = vld [vmem:[%s435 + $0x10] sm:$0x3]
      %v445 = vld [vmem:[%s1] sm:$0x7]
      %v447 = vunpack.c.l.b16 %v445
      %v448 = vpack.c.b16 %v447, %v447
      %449 = vrot.lane.b32.xlu0 %v448, 125
      %v450 = vpop.permute.xlu0 %449
      %452 = vst [vmem:[#allocation1] ss:$4 sm:$0xff] %v442
      %s454 = scalar_lea.vmem [#allocation1], 32
      %455 = vst [vmem:[%s454] ss:$4 sm:$0xff] %v443
      %v456 = vld.sshfl [vmem:[#allocation1] sm:$0xff pattern:$0x73625140]
      %v458 = vld.sshfl [vmem:[#allocation1 + $0x8] sm:$0xff pattern:$0x73625140]
      %v460 = vld.sshfl [vmem:[#allocation1 + $0x10] sm:$0xff pattern:$0x73625140]
      %v462 = vld.sshfl [vmem:[#allocation1 + $0x18] sm:$0xff pattern:$0x73625140]
      %v464 = vld.sshfl [vmem:[#allocation1 + $0x20] sm:$0xff pattern:$0x73625140]
      %v466 = vld.sshfl [vmem:[#allocation1 + $0x28] sm:$0xff pattern:$0x73625140]
      %v468 = vld.sshfl [vmem:[#allocation1 + $0x30] sm:$0xff pattern:$0x73625140]
      %v470 = vld.sshfl [vmem:[#allocation1 + $0x38] sm:$0xff pattern:$0x73625140]
      %472 = vrot.lane.b32.xlu0 %v456, 127
      %v473 = vpop.permute.xlu0 %472
      %474 = vrot.lane.b32.xlu0 %v458, 127
      %v475 = vpop.permute.xlu0 %474
      %476 = vrot.lane.b32.xlu0 %v460, 127
      %v477 = vpop.permute.xlu0 %476
      %478 = vrot.lane.b32.xlu0 %v462, 127
      %v479 = vpop.permute.xlu0 %478
      %480 = vrot.lane.b32.xlu0 %v464, 127
      %v481 = vpop.permute.xlu0 %480
      %482 = vrot.lane.b32.xlu0 %v466, 127
      %v483 = vpop.permute.xlu0 %482
      %484 = vrot.lane.b32.xlu0 %v468, 127
      %v485 = vpop.permute.xlu0 %484
      %486 = vrot.lane.b32.xlu0 %v470, 127
      %v487 = vpop.permute.xlu0 %486
      %vm488 = vcmask 1039360
      %v489 = vsel %vm488, %v473, %v475
      %v490 = vsel %vm488, %v475, %v477
      %v491 = vsel %vm488, %v477, %v479
      %v492 = vsel %vm488, %v479, %v481
      %v493 = vsel %vm488, %v481, %v483
      %v494 = vsel %vm488, %v483, %v485
      %v495 = vsel %vm488, %v485, %v487
      %vm496 = vcmask 23552
      %v498 = vsel %vm496, %v450, 0
      %vm500 = vcmask 1040384
      %vm501 = vcmask 1041408
      %v502 = vsel %vm500, 4294967295, 65535
      %v503 = vsel %vm501, %v502, 0
      %v505 = vand.u32 %v489, %v503
      %v508 = vand.u32 %v490, %v503
      %v511 = vand.u32 %v491, %v503
      %v514 = vand.u32 %v492, %v503
      %v517 = vand.u32 %v493, %v503
      %v520 = vand.u32 %v494, %v503
      %v523 = vand.u32 %v495, %v503
      %525 = vmatpush.bf16.msra.mxu0 0
      %526 = vmatpush.bf16.msra.mxu0 0
      %527 = vmatpush.bf16.msra.mxu0 0
      %528 = vmatpush.bf16.msra.mxu0 0
      %529 = vmatpush.bf16.msra.mxu0 0
      %530 = vmatpush.bf16.msra.mxu0 0
      %531 = vmatpush.bf16.msra.mxu0 0
      %532 = vmatpush.bf16.msra.mxu0 %v505
      %533 = vmatmul.bf16.gmra.mxu0 %v498
      %v534 = vpop.f32.mrf.mxu0
      %v535 = vadd.f32 0.0, %v534
      %v536 = vpop.f32.mrf.mxu0
      %537 = vdwg.mxu0
      %538 = vmatpush.bf16.msra.mxu0 0
      %539 = vmatpush.bf16.msra.mxu0 0
      %540 = vmatpush.bf16.msra.mxu0 0
      %541 = vmatpush.bf16.msra.mxu0 0
      %542 = vmatpush.bf16.msra.mxu0 0
      %543 = vmatpush.bf16.msra.mxu0 0
      %544 = vmatpush.bf16.msra.mxu0 0
      %545 = vmatpush.bf16.msra.mxu0 %v508
      %546 = vmatmul.bf16.gmra.mxu0 %v498
      %v547 = vpop.f32.mrf.mxu0
      %v548 = vadd.f32 0.0, %v547
      %v549 = vpop.f32.mrf.mxu0
      %550 = vdwg.mxu0
      %551 = vmatpush.bf16.msra.mxu0 0
      %552 = vmatpush.bf16.msra.mxu0 0
      %553 = vmatpush.bf16.msra.mxu0 0
      %554 = vmatpush.bf16.msra.mxu0 0
      %555 = vmatpush.bf16.msra.mxu0 0
      %556 = vmatpush.bf16.msra.mxu0 0
      %557 = vmatpush.bf16.msra.mxu0 0
      %558 = vmatpush.bf16.msra.mxu0 %v511
      %559 = vmatmul.bf16.gmra.mxu0 %v498
      %v560 = vpop.f32.mrf.mxu0
      %v561 = vadd.f32 0.0, %v560
      %v562 = vpop.f32.mrf.mxu0
      %563 = vdwg.mxu0
      %564 = vmatpush.bf16.msra.mxu0 0
      %565 = vmatpush.bf16.msra.mxu0 0
      %566 = vmatpush.bf16.msra.mxu0 0
      %567 = vmatpush.bf16.msra.mxu0 0
      %568 = vmatpush.bf16.msra.mxu0 0
      %569 = vmatpush.bf16.msra.mxu0 0
      %570 = vmatpush.bf16.msra.mxu0 0
      %571 = vmatpush.bf16.msra.mxu0 %v514
      %572 = vmatmul.bf16.gmra.mxu0 %v498
      %v573 = vpop.f32.mrf.mxu0
      %v574 = vadd.f32 0.0, %v573
      %v575 = vpop.f32.mrf.mxu0
      %576 = vdwg.mxu0
      %577 = vmatpush.bf16.msra.mxu0 0
      %578 = vmatpush.bf16.msra.mxu0 0
      %579 = vmatpush.bf16.msra.mxu0 0
      %580 = vmatpush.bf16.msra.mxu0 0
      %581 = vmatpush.bf16.msra.mxu0 0
      %582 = vmatpush.bf16.msra.mxu0 0
      %583 = vmatpush.bf16.msra.mxu0 0
      %584 = vmatpush.bf16.msra.mxu0 %v517
      %585 = vmatmul.bf16.gmra.mxu0 %v498
      %v586 = vpop.f32.mrf.mxu0
      %v587 = vadd.f32 0.0, %v586
      %v588 = vpop.f32.mrf.mxu0
      %589 = vdwg.mxu0
      %590 = vmatpush.bf16.msra.mxu0 0
      %591 = vmatpush.bf16.msra.mxu0 0
      %592 = vmatpush.bf16.msra.mxu0 0
      %593 = vmatpush.bf16.msra.mxu0 0
      %594 = vmatpush.bf16.msra.mxu0 0
      %595 = vmatpush.bf16.msra.mxu0 0
      %596 = vmatpush.bf16.msra.mxu0 0
      %597 = vmatpush.bf16.msra.mxu0 %v520
      %598 = vmatmul.bf16.gmra.mxu0 %v498
      %v599 = vpop.f32.mrf.mxu0
      %v600 = vadd.f32 0.0, %v599
      %v601 = vpop.f32.mrf.mxu0
      %602 = vdwg.mxu0
      %603 = vmatpush.bf16.msra.mxu0 0
      %604 = vmatpush.bf16.msra.mxu0 0
      %605 = vmatpush.bf16.msra.mxu0 0
      %606 = vmatpush.bf16.msra.mxu0 0
      %607 = vmatpush.bf16.msra.mxu0 0
      %608 = vmatpush.bf16.msra.mxu0 0
      %609 = vmatpush.bf16.msra.mxu0 0
      %610 = vmatpush.bf16.msra.mxu0 %v523
      %611 = vmatmul.bf16.gmra.mxu0 %v498
      %v612 = vpop.f32.mrf.mxu0
      %v613 = vadd.f32 0.0, %v612
      %v614 = vpop.f32.mrf.mxu0
      %615 = vdwg.mxu0
      %616 = vst [vmem:[#allocation1] ss:$4 sm:$0xff] %v442
      %s617 = scalar_lea.vmem [#allocation1], 32
      %618 = vst [vmem:[%s617] ss:$4 sm:$0xff] %v443
      %v619 = vld.sshfl [vmem:[#allocation1] sm:$0xff pattern:$0x73625140]
      %v620 = vld.sshfl [vmem:[#allocation1 + $0x8] sm:$0xff pattern:$0x73625140]
      %v621 = vld.sshfl [vmem:[#allocation1 + $0x10] sm:$0xff pattern:$0x73625140]
      %v622 = vld.sshfl [vmem:[#allocation1 + $0x18] sm:$0xff pattern:$0x73625140]
      %v623 = vld.sshfl [vmem:[#allocation1 + $0x20] sm:$0xff pattern:$0x73625140]
      %v624 = vld.sshfl [vmem:[#allocation1 + $0x28] sm:$0xff pattern:$0x73625140]
      %v625 = vld.sshfl [vmem:[#allocation1 + $0x30] sm:$0xff pattern:$0x73625140]
      %v627 = vsel %vm496, %v445, 0
      %v629 = vand.u32 %v619, %v503
      %v631 = vand.u32 %v620, %v503
      %v633 = vand.u32 %v621, %v503
      %v635 = vand.u32 %v622, %v503
      %v637 = vand.u32 %v623, %v503
      %v639 = vand.u32 %v624, %v503
      %v641 = vand.u32 %v625, %v503
      %643 = vmatpush.bf16.msra.mxu0 0
      %644 = vmatpush.bf16.msra.mxu0 0
      %645 = vmatpush.bf16.msra.mxu0 0
      %646 = vmatpush.bf16.msra.mxu0 0
      %647 = vmatpush.bf16.msra.mxu0 0
      %648 = vmatpush.bf16.msra.mxu0 0
      %649 = vmatpush.bf16.msra.mxu0 0
      %650 = vmatpush.bf16.msra.mxu0 %v629
      %651 = vmatmul.bf16.gmra.mxu0 %v627
      %v652 = vpop.f32.mrf.mxu0
      %v653 = vadd.f32 %v535, %v652
      %v654 = vpop.f32.mrf.mxu0
      %655 = vdwg.mxu0
      %656 = vmatpush.bf16.msra.mxu0 0
      %657 = vmatpush.bf16.msra.mxu0 0
      %658 = vmatpush.bf16.msra.mxu0 0
      %659 = vmatpush.bf16.msra.mxu0 0
      %660 = vmatpush.bf16.msra.mxu0 0
      %661 = vmatpush.bf16.msra.mxu0 0
      %662 = vmatpush.bf16.msra.mxu0 0
      %663 = vmatpush.bf16.msra.mxu0 %v631
      %664 = vmatmul.bf16.gmra.mxu0 %v627
      %v665 = vpop.f32.mrf.mxu0
      %v666 = vadd.f32 %v548, %v665
      %v667 = vpop.f32.mrf.mxu0
      %668 = vdwg.mxu0
      %669 = vmatpush.bf16.msra.mxu0 0
      %670 = vmatpush.bf16.msra.mxu0 0
      %671 = vmatpush.bf16.msra.mxu0 0
      %672 = vmatpush.bf16.msra.mxu0 0
      %673 = vmatpush.bf16.msra.mxu0 0
      %674 = vmatpush.bf16.msra.mxu0 0
      %675 = vmatpush.bf16.msra.mxu0 0
      %676 = vmatpush.bf16.msra.mxu0 %v633
      %677 = vmatmul.bf16.gmra.mxu0 %v627
      %v678 = vpop.f32.mrf.mxu0
      %v679 = vadd.f32 %v561, %v678
      %v680 = vpop.f32.mrf.mxu0
      %681 = vdwg.mxu0
      %682 = vmatpush.bf16.msra.mxu0 0
      %683 = vmatpush.bf16.msra.mxu0 0
      %684 = vmatpush.bf16.msra.mxu0 0
      %685 = vmatpush.bf16.msra.mxu0 0
      %686 = vmatpush.bf16.msra.mxu0 0
      %687 = vmatpush.bf16.msra.mxu0 0
      %688 = vmatpush.bf16.msra.mxu0 0
      %689 = vmatpush.bf16.msra.mxu0 %v635
      %690 = vmatmul.bf16.gmra.mxu0 %v627
      %v691 = vpop.f32.mrf.mxu0
      %v692 = vadd.f32 %v574, %v691
      %v693 = vpop.f32.mrf.mxu0
      %694 = vdwg.mxu0
      %695 = vmatpush.bf16.msra.mxu0 0
      %696 = vmatpush.bf16.msra.mxu0 0
      %697 = vmatpush.bf16.msra.mxu0 0
      %698 = vmatpush.bf16.msra.mxu0 0
      %699 = vmatpush.bf16.msra.mxu0 0
      %700 = vmatpush.bf16.msra.mxu0 0
      %701 = vmatpush.bf16.msra.mxu0 0
      %702 = vmatpush.bf16.msra.mxu0 %v637
      %703 = vmatmul.bf16.gmra.mxu0 %v627
      %v704 = vpop.f32.mrf.mxu0
      %v705 = vadd.f32 %v587, %v704
      %v706 = vpop.f32.mrf.mxu0
      %707 = vdwg.mxu0
      %708 = vmatpush.bf16.msra.mxu0 0
      %709 = vmatpush.bf16.msra.mxu0 0
      %710 = vmatpush.bf16.msra.mxu0 0
      %711 = vmatpush.bf16.msra.mxu0 0
      %712 = vmatpush.bf16.msra.mxu0 0
      %713 = vmatpush.bf16.msra.mxu0 0
      %714 = vmatpush.bf16.msra.mxu0 0
      %715 = vmatpush.bf16.msra.mxu0 %v639
      %716 = vmatmul.bf16.gmra.mxu0 %v627
      %v717 = vpop.f32.mrf.mxu0
      %v718 = vadd.f32 %v600, %v717
      %v719 = vpop.f32.mrf.mxu0
      %720 = vdwg.mxu0
      %721 = vmatpush.bf16.msra.mxu0 0
      %722 = vmatpush.bf16.msra.mxu0 0
      %723 = vmatpush.bf16.msra.mxu0 0
      %724 = vmatpush.bf16.msra.mxu0 0
      %725 = vmatpush.bf16.msra.mxu0 0
      %726 = vmatpush.bf16.msra.mxu0 0
      %727 = vmatpush.bf16.msra.mxu0 0
      %728 = vmatpush.bf16.msra.mxu0 %v641
      %729 = vmatmul.bf16.gmra.mxu0 %v627
      %v730 = vpop.f32.mrf.mxu0
      %v731 = vadd.f32 %v613, %v730
      %v732 = vpop.f32.mrf.mxu0
      %733 = vdwg.mxu0
      %v734 = vld [vmem:[%s1] sm:$0x7]
      %v736 = vunpack.c.l.b16 %v734
      %v737 = vpack.c.b16 %v736, %v736
      %738 = vrot.lane.b32.xlu0 %v737, 122
      %v739 = vpop.permute.xlu0 %738
      %740 = vst [vmem:[#allocation1] ss:$4 sm:$0xff] %v442
      %s741 = scalar_lea.vmem [#allocation1], 32
      %742 = vst [vmem:[%s741] ss:$4 sm:$0xff] %v443
      %v743 = vld.sshfl [vmem:[#allocation1] sm:$0xff pattern:$0x73625140]
      %v745 = vld.sshfl [vmem:[#allocation1 + $0x8] sm:$0xff pattern:$0x73625140]
      %v747 = vld.sshfl [vmem:[#allocation1 + $0x10] sm:$0xff pattern:$0x73625140]
      %v749 = vld.sshfl [vmem:[#allocation1 + $0x18] sm:$0xff pattern:$0x73625140]
      %v751 = vld.sshfl [vmem:[#allocation1 + $0x20] sm:$0xff pattern:$0x73625140]
      %v753 = vld.sshfl [vmem:[#allocation1 + $0x28] sm:$0xff pattern:$0x73625140]
      %v755 = vld.sshfl [vmem:[#allocation1 + $0x30] sm:$0xff pattern:$0x73625140]
      %v757 = vld.sshfl [vmem:[#allocation1 + $0x38] sm:$0xff pattern:$0x73625140]
      %759 = vrot.lane.b32.xlu0 %v743, 126
      %v760 = vpop.permute.xlu0 %759
      %761 = vrot.lane.b32.xlu0 %v745, 126
      %v762 = vpop.permute.xlu0 %761
      %763 = vrot.lane.b32.xlu0 %v747, 126
      %v764 = vpop.permute.xlu0 %763
      %765 = vrot.lane.b32.xlu0 %v749, 126
      %v766 = vpop.permute.xlu0 %765
      %767 = vrot.lane.b32.xlu0 %v751, 126
      %v768 = vpop.permute.xlu0 %767
      %769 = vrot.lane.b32.xlu0 %v753, 126
      %v770 = vpop.permute.xlu0 %769
      %771 = vrot.lane.b32.xlu0 %v755, 126
      %v772 = vpop.permute.xlu0 %771
      %773 = vrot.lane.b32.xlu0 %v757, 126
      %v774 = vpop.permute.xlu0 %773
      %vm775 = vcmask 1031168
      %v776 = vsel %vm775, %v760, %v762
      %v777 = vsel %vm775, %v762, %v764
      %v778 = vsel %vm775, %v764, %v766
      %v779 = vsel %vm775, %v766, %v768
      %v780 = vsel %vm775, %v768, %v770
      %v781 = vsel %vm775, %v770, %v772
      %v782 = vsel %vm775, %v772, %v774
      %v784 = vsel %vm496, %v739, 0
      %v787 = vand.u32 %v776, %v503
      %v790 = vand.u32 %v777, %v503
      %v793 = vand.u32 %v778, %v503
      %v796 = vand.u32 %v779, %v503
      %v799 = vand.u32 %v780, %v503
      %v802 = vand.u32 %v781, %v503
      %v805 = vand.u32 %v782, %v503
      %807 = vmatpush.bf16.msra.mxu0 0
      %808 = vmatpush.bf16.msra.mxu0 0
      %809 = vmatpush.bf16.msra.mxu0 0
      %810 = vmatpush.bf16.msra.mxu0 0
      %811 = vmatpush.bf16.msra.mxu0 0
      %812 = vmatpush.bf16.msra.mxu0 0
      %813 = vmatpush.bf16.msra.mxu0 0
      %814 = vmatpush.bf16.msra.mxu0 %v787
      %815 = vmatmul.bf16.gmra.mxu0 %v784
      %v816 = vpop.f32.mrf.mxu0
      %v817 = vadd.f32 0.0, %v816
      %v818 = vpop.f32.mrf.mxu0
      %819 = vdwg.mxu0
      %820 = vmatpush.bf16.msra.mxu0 0
      %821 = vmatpush.bf16.msra.mxu0 0
      %822 = vmatpush.bf16.msra.mxu0 0
      %823 = vmatpush.bf16.msra.mxu0 0
      %824 = vmatpush.bf16.msra.mxu0 0
      %825 = vmatpush.bf16.msra.mxu0 0
      %826 = vmatpush.bf16.msra.mxu0 0
      %827 = vmatpush.bf16.msra.mxu0 %v790
      %828 = vmatmul.bf16.gmra.mxu0 %v784
      %v829 = vpop.f32.mrf.mxu0
      %v830 = vadd.f32 0.0, %v829
      %v831 = vpop.f32.mrf.mxu0
      %832 = vdwg.mxu0
      %833 = vmatpush.bf16.msra.mxu0 0
      %834 = vmatpush.bf16.msra.mxu0 0
      %835 = vmatpush.bf16.msra.mxu0 0
      %836 = vmatpush.bf16.msra.mxu0 0
      %837 = vmatpush.bf16.msra.mxu0 0
      %838 = vmatpush.bf16.msra.mxu0 0
      %839 = vmatpush.bf16.msra.mxu0 0
      %840 = vmatpush.bf16.msra.mxu0 %v793
      %841 = vmatmul.bf16.gmra.mxu0 %v784
      %v842 = vpop.f32.mrf.mxu0
      %v843 = vadd.f32 0.0, %v842
      %v844 = vpop.f32.mrf.mxu0
      %845 = vdwg.mxu0
      %846 = vmatpush.bf16.msra.mxu0 0
      %847 = vmatpush.bf16.msra.mxu0 0
      %848 = vmatpush.bf16.msra.mxu0 0
      %849 = vmatpush.bf16.msra.mxu0 0
      %850 = vmatpush.bf16.msra.mxu0 0
      %851 = vmatpush.bf16.msra.mxu0 0
      %852 = vmatpush.bf16.msra.mxu0 0
      %853 = vmatpush.bf16.msra.mxu0 %v796
      %854 = vmatmul.bf16.gmra.mxu0 %v784
      %v855 = vpop.f32.mrf.mxu0
      %v856 = vadd.f32 0.0, %v855
      %v857 = vpop.f32.mrf.mxu0
      %858 = vdwg.mxu0
      %859 = vmatpush.bf16.msra.mxu0 0
      %860 = vmatpush.bf16.msra.mxu0 0
      %861 = vmatpush.bf16.msra.mxu0 0
      %862 = vmatpush.bf16.msra.mxu0 0
      %863 = vmatpush.bf16.msra.mxu0 0
      %864 = vmatpush.bf16.msra.mxu0 0
      %865 = vmatpush.bf16.msra.mxu0 0
      %866 = vmatpush.bf16.msra.mxu0 %v799
      %867 = vmatmul.bf16.gmra.mxu0 %v784
      %v868 = vpop.f32.mrf.mxu0
      %v869 = vadd.f32 0.0, %v868
      %v870 = vpop.f32.mrf.mxu0
      %871 = vdwg.mxu0
      %872 = vmatpush.bf16.msra.mxu0 0
      %873 = vmatpush.bf16.msra.mxu0 0
      %874 = vmatpush.bf16.msra.mxu0 0
      %875 = vmatpush.bf16.msra.mxu0 0
      %876 = vmatpush.bf16.msra.mxu0 0
      %877 = vmatpush.bf16.msra.mxu0 0
      %878 = vmatpush.bf16.msra.mxu0 0
      %879 = vmatpush.bf16.msra.mxu0 %v802
      %880 = vmatmul.bf16.gmra.mxu0 %v784
      %v881 = vpop.f32.mrf.mxu0
      %v882 = vadd.f32 0.0, %v881
      %v883 = vpop.f32.mrf.mxu0
      %884 = vdwg.mxu0
      %885 = vmatpush.bf16.msra.mxu0 0
      %886 = vmatpush.bf16.msra.mxu0 0
      %887 = vmatpush.bf16.msra.mxu0 0
      %888 = vmatpush.bf16.msra.mxu0 0
      %889 = vmatpush.bf16.msra.mxu0 0
      %890 = vmatpush.bf16.msra.mxu0 0
      %891 = vmatpush.bf16.msra.mxu0 0
      %892 = vmatpush.bf16.msra.mxu0 %v805
      %893 = vmatmul.bf16.gmra.mxu0 %v784
      %v894 = vpop.f32.mrf.mxu0
      %v895 = vadd.f32 0.0, %v894
      %v896 = vpop.f32.mrf.mxu0
      %897 = vdwg.mxu0
      %v898 = vadd.f32 %v653, %v817
      %v899 = vadd.f32 %v666, %v830
      %v900 = vadd.f32 %v679, %v843
      %v901 = vadd.f32 %v692, %v856
      %v902 = vadd.f32 %v705, %v869
      %v903 = vadd.f32 %v718, %v882
      %v904 = vadd.f32 %v731, %v895
      %v905 = vld [vmem:[%s1] sm:$0x7]
      %v907 = vunpack.c.l.b16 %v905
      %v908 = vpack.c.b16 %v907, %v907
      %909 = vrot.lane.b32.xlu0 %v908, 119
      %v910 = vpop.permute.xlu0 %909
      %911 = vst [vmem:[#allocation1] ss:$4 sm:$0xff] %v442
      %s912 = scalar_lea.vmem [#allocation1], 32
      %913 = vst [vmem:[%s912] ss:$4 sm:$0xff] %v443
      %v914 = vld.sshfl [vmem:[#allocation1] sm:$0xff pattern:$0x73625140]
      %v916 = vld.sshfl [vmem:[#allocation1 + $0x8] sm:$0xff pattern:$0x73625140]
      %v918 = vld.sshfl [vmem:[#allocation1 + $0x10] sm:$0xff pattern:$0x73625140]
      %v920 = vld.sshfl [vmem:[#allocation1 + $0x18] sm:$0xff pattern:$0x73625140]
      %v922 = vld.sshfl [vmem:[#allocation1 + $0x20] sm:$0xff pattern:$0x73625140]
      %v924 = vld.sshfl [vmem:[#allocation1 + $0x28] sm:$0xff pattern:$0x73625140]
      %v926 = vld.sshfl [vmem:[#allocation1 + $0x30] sm:$0xff pattern:$0x73625140]
      %v928 = vld.sshfl [vmem:[#allocation1 + $0x38] sm:$0xff pattern:$0x73625140]
      %930 = vrot.lane.b32.xlu0 %v914, 125
      %v931 = vpop.permute.xlu0 %930
      %932 = vrot.lane.b32.xlu0 %v916, 125
      %v933 = vpop.permute.xlu0 %932
      %934 = vrot.lane.b32.xlu0 %v918, 125
      %v935 = vpop.permute.xlu0 %934
      %936 = vrot.lane.b32.xlu0 %v920, 125
      %v937 = vpop.permute.xlu0 %936
      %938 = vrot.lane.b32.xlu0 %v922, 125
      %v939 = vpop.permute.xlu0 %938
      %940 = vrot.lane.b32.xlu0 %v924, 125
      %v941 = vpop.permute.xlu0 %940
      %942 = vrot.lane.b32.xlu0 %v926, 125
      %v943 = vpop.permute.xlu0 %942
      %944 = vrot.lane.b32.xlu0 %v928, 125
      %v945 = vpop.permute.xlu0 %944
      %vm946 = vcmask 1022976
      %v947 = vsel %vm946, %v931, %v933
      %v948 = vsel %vm946, %v933, %v935
      %v949 = vsel %vm946, %v935, %v937
      %v950 = vsel %vm946, %v937, %v939
      %v951 = vsel %vm946, %v939, %v941
      %v952 = vsel %vm946, %v941, %v943
      %v953 = vsel %vm946, %v943, %v945
      %v955 = vsel %vm496, %v910, 0
      %v958 = vand.u32 %v947, %v503
      %v961 = vand.u32 %v948, %v503
      %v964 = vand.u32 %v949, %v503
      %v967 = vand.u32 %v950, %v503
      %v970 = vand.u32 %v951, %v503
      %v973 = vand.u32 %v952, %v503
      %v976 = vand.u32 %v953, %v503
      %978 = vmatpush.bf16.msra.mxu0 0
      %979 = vmatpush.bf16.msra.mxu0 0
      %980 = vmatpush.bf16.msra.mxu0 0
      %981 = vmatpush.bf16.msra.mxu0 0
      %982 = vmatpush.bf16.msra.mxu0 0
      %983 = vmatpush.bf16.msra.mxu0 0
      %984 = vmatpush.bf16.msra.mxu0 0
      %985 = vmatpush.bf16.msra.mxu0 %v958
      %986 = vmatmul.bf16.gmra.mxu0 %v955
      %v987 = vpop.f32.mrf.mxu0
      %v988 = vadd.f32 0.0, %v987
      %v989 = vpop.f32.mrf.mxu0
      %990 = vdwg.mxu0
      %991 = vmatpush.bf16.msra.mxu0 0
      %992 = vmatpush.bf16.msra.mxu0 0
      %993 = vmatpush.bf16.msra.mxu0 0
      %994 = vmatpush.bf16.msra.mxu0 0
      %995 = vmatpush.bf16.msra.mxu0 0
      %996 = vmatpush.bf16.msra.mxu0 0
      %997 = vmatpush.bf16.msra.mxu0 0
      %998 = vmatpush.bf16.msra.mxu0 %v961
      %999 = vmatmul.bf16.gmra.mxu0 %v955
      %v1000 = vpop.f32.mrf.mxu0
      %v1001 = vadd.f32 0.0, %v1000
      %v1002 = vpop.f32.mrf.mxu0
      %1003 = vdwg.mxu0
      %1004 = vmatpush.bf16.msra.mxu0 0
      %1005 = vmatpush.bf16.msra.mxu0 0
      %1006 = vmatpush.bf16.msra.mxu0 0
      %1007 = vmatpush.bf16.msra.mxu0 0
      %1008 = vmatpush.bf16.msra.mxu0 0
      %1009 = vmatpush.bf16.msra.mxu0 0
      %1010 = vmatpush.bf16.msra.mxu0 0
      %1011 = vmatpush.bf16.msra.mxu0 %v964
      %1012 = vmatmul.bf16.gmra.mxu0 %v955
      %v1013 = vpop.f32.mrf.mxu0
      %v1014 = vadd.f32 0.0, %v1013
      %v1015 = vpop.f32.mrf.mxu0
      %1016 = vdwg.mxu0
      %1017 = vmatpush.bf16.msra.mxu0 0
      %1018 = vmatpush.bf16.msra.mxu0 0
      %1019 = vmatpush.bf16.msra.mxu0 0
      %1020 = vmatpush.bf16.msra.mxu0 0
      %1021 = vmatpush.bf16.msra.mxu0 0
      %1022 = vmatpush.bf16.msra.mxu0 0
      %1023 = vmatpush.bf16.msra.mxu0 0
      %1024 = vmatpush.bf16.msra.mxu0 %v967
      %1025 = vmatmul.bf16.gmra.mxu0 %v955
      %v1026 = vpop.f32.mrf.mxu0
      %v1027 = vadd.f32 0.0, %v1026
      %v1028 = vpop.f32.mrf.mxu0
      %1029 = vdwg.mxu0
      %1030 = vmatpush.bf16.msra.mxu0 0
      %1031 = vmatpush.bf16.msra.mxu0 0
      %1032 = vmatpush.bf16.msra.mxu0 0
      %1033 = vmatpush.bf16.msra.mxu0 0
      %1034 = vmatpush.bf16.msra.mxu0 0
      %1035 = vmatpush.bf16.msra.mxu0 0
      %1036 = vmatpush.bf16.msra.mxu0 0
      %1037 = vmatpush.bf16.msra.mxu0 %v970
      %1038 = vmatmul.bf16.gmra.mxu0 %v955
      %v1039 = vpop.f32.mrf.mxu0
      %v1040 = vadd.f32 0.0, %v1039
      %v1041 = vpop.f32.mrf.mxu0
      %1042 = vdwg.mxu0
      %1043 = vmatpush.bf16.msra.mxu0 0
      %1044 = vmatpush.bf16.msra.mxu0 0
      %1045 = vmatpush.bf16.msra.mxu0 0
      %1046 = vmatpush.bf16.msra.mxu0 0
      %1047 = vmatpush.bf16.msra.mxu0 0
      %1048 = vmatpush.bf16.msra.mxu0 0
      %1049 = vmatpush.bf16.msra.mxu0 0
      %1050 = vmatpush.bf16.msra.mxu0 %v973
      %1051 = vmatmul.bf16.gmra.mxu0 %v955
      %v1052 = vpop.f32.mrf.mxu0
      %v1053 = vadd.f32 0.0, %v1052
      %v1054 = vpop.f32.mrf.mxu0
      %1055 = vdwg.mxu0
      %1056 = vmatpush.bf16.msra.mxu0 0
      %1057 = vmatpush.bf16.msra.mxu0 0
      %1058 = vmatpush.bf16.msra.mxu0 0
      %1059 = vmatpush.bf16.msra.mxu0 0
      %1060 = vmatpush.bf16.msra.mxu0 0
      %1061 = vmatpush.bf16.msra.mxu0 0
      %1062 = vmatpush.bf16.msra.mxu0 0
      %1063 = vmatpush.bf16.msra.mxu0 %v976
      %1064 = vmatmul.bf16.gmra.mxu0 %v955
      %v1065 = vpop.f32.mrf.mxu0
      %v1066 = vadd.f32 0.0, %v1065
      %v1067 = vpop.f32.mrf.mxu0
      %1068 = vdwg.mxu0
      %v1069 = vadd.f32 %v898, %v988
      %v1070 = vadd.f32 %v899, %v1001
      %v1071 = vadd.f32 %v900, %v1014
      %v1072 = vadd.f32 %v901, %v1027
      %v1073 = vadd.f32 %v902, %v1040
      %v1074 = vadd.f32 %v903, %v1053
      %v1075 = vadd.f32 %v904, %v1066
      %v1076 = vld [vmem:[%s1] sm:$0x7]
      %v1078 = vunpack.c.l.b16 %v1076
      %v1079 = vpack.c.b16 %v1078, %v1078
      %1080 = vrot.lane.b32.xlu0 %v1079, 116
      %v1081 = vpop.permute.xlu0 %1080
      %1082 = vst [vmem:[#allocation1] ss:$4 sm:$0xff] %v442
      %s1083 = scalar_lea.vmem [#allocation1], 32
      %1084 = vst [vmem:[%s1083] ss:$4 sm:$0xff] %v443
      %v1085 = vld.sshfl [vmem:[#allocation1] sm:$0xff pattern:$0x73625140]
      %v1087 = vld.sshfl [vmem:[#allocation1 + $0x8] sm:$0xff pattern:$0x73625140]
      %v1089 = vld.sshfl [vmem:[#allocation1 + $0x10] sm:$0xff pattern:$0x73625140]
      %v1091 = vld.sshfl [vmem:[#allocation1 + $0x18] sm:$0xff pattern:$0x73625140]
      %v1093 = vld.sshfl [vmem:[#allocation1 + $0x20] sm:$0xff pattern:$0x73625140]
      %v1095 = vld.sshfl [vmem:[#allocation1 + $0x28] sm:$0xff pattern:$0x73625140]
      %v1097 = vld.sshfl [vmem:[#allocation1 + $0x30] sm:$0xff pattern:$0x73625140]
      %v1099 = vld.sshfl [vmem:[#allocation1 + $0x38] sm:$0xff pattern:$0x73625140]
      %1101 = vrot.lane.b32.xlu0 %v1085, 124
      %v1102 = vpop.permute.xlu0 %1101
      %1103 = vrot.lane.b32.xlu0 %v1087, 124
      %v1104 = vpop.permute.xlu0 %1103
      %1105 = vrot.lane.b32.xlu0 %v1089, 124
      %v1106 = vpop.permute.xlu0 %1105
      %1107 = vrot.lane.b32.xlu0 %v1091, 124
      %v1108 = vpop.permute.xlu0 %1107
      %1109 = vrot.lane.b32.xlu0 %v1093, 124
      %v1110 = vpop.permute.xlu0 %1109
      %1111 = vrot.lane.b32.xlu0 %v1095, 124
      %v1112 = vpop.permute.xlu0 %1111
      %1113 = vrot.lane.b32.xlu0 %v1097, 124
      %v1114 = vpop.permute.xlu0 %1113
      %1115 = vrot.lane.b32.xlu0 %v1099, 124
      %v1116 = vpop.permute.xlu0 %1115
      %vm1117 = vcmask 1014784
      %v1118 = vsel %vm1117, %v1102, %v1104
      %v1119 = vsel %vm1117, %v1104, %v1106
      %v1120 = vsel %vm1117, %v1106, %v1108
      %v1121 = vsel %vm1117, %v1108, %v1110
      %v1122 = vsel %vm1117, %v1110, %v1112
      %v1123 = vsel %vm1117, %v1112, %v1114
      %v1124 = vsel %vm1117, %v1114, %v1116
      %v1126 = vsel %vm496, %v1081, 0
      %v1129 = vand.u32 %v1118, %v503
      %v1132 = vand.u32 %v1119, %v503
      %v1135 = vand.u32 %v1120, %v503
      %v1138 = vand.u32 %v1121, %v503
      %v1141 = vand.u32 %v1122, %v503
      %v1144 = vand.u32 %v1123, %v503
      %v1147 = vand.u32 %v1124, %v503
      %1149 = vmatpush.bf16.msra.mxu0 0
      %1150 = vmatpush.bf16.msra.mxu0 0
      %1151 = vmatpush.bf16.msra.mxu0 0
      %1152 = vmatpush.bf16.msra.mxu0 0
      %1153 = vmatpush.bf16.msra.mxu0 0
      %1154 = vmatpush.bf16.msra.mxu0 0
      %1155 = vmatpush.bf16.msra.mxu0 0
      %1156 = vmatpush.bf16.msra.mxu0 %v1129
      %1157 = vmatmul.bf16.gmra.mxu0 %v1126
      %v1158 = vpop.f32.mrf.mxu0
      %v1159 = vadd.f32 0.0, %v1158
      %v1160 = vpop.f32.mrf.mxu0
      %1161 = vdwg.mxu0
      %1162 = vmatpush.bf16.msra.mxu0 0
      %1163 = vmatpush.bf16.msra.mxu0 0
      %1164 = vmatpush.bf16.msra.mxu0 0
      %1165 = vmatpush.bf16.msra.mxu0 0
      %1166 = vmatpush.bf16.msra.mxu0 0
      %1167 = vmatpush.bf16.msra.mxu0 0
      %1168 = vmatpush.bf16.msra.mxu0 0
      %1169 = vmatpush.bf16.msra.mxu0 %v1132
      %1170 = vmatmul.bf16.gmra.mxu0 %v1126
      %v1171 = vpop.f32.mrf.mxu0
      %v1172 = vadd.f32 0.0, %v1171
      %v1173 = vpop.f32.mrf.mxu0
      %1174 = vdwg.mxu0
      %1175 = vmatpush.bf16.msra.mxu0 0
      %1176 = vmatpush.bf16.msra.mxu0 0
      %1177 = vmatpush.bf16.msra.mxu0 0
      %1178 = vmatpush.bf16.msra.mxu0 0
      %1179 = vmatpush.bf16.msra.mxu0 0
      %1180 = vmatpush.bf16.msra.mxu0 0
      %1181 = vmatpush.bf16.msra.mxu0 0
      %1182 = vmatpush.bf16.msra.mxu0 %v1135
      %1183 = vmatmul.bf16.gmra.mxu0 %v1126
      %v1184 = vpop.f32.mrf.mxu0
      %v1185 = vadd.f32 0.0, %v1184
      %v1186 = vpop.f32.mrf.mxu0
      %1187 = vdwg.mxu0
      %1188 = vmatpush.bf16.msra.mxu0 0
      %1189 = vmatpush.bf16.msra.mxu0 0
      %1190 = vmatpush.bf16.msra.mxu0 0
      %1191 = vmatpush.bf16.msra.mxu0 0
      %1192 = vmatpush.bf16.msra.mxu0 0
      %1193 = vmatpush.bf16.msra.mxu0 0
      %1194 = vmatpush.bf16.msra.mxu0 0
      %1195 = vmatpush.bf16.msra.mxu0 %v1138
      %1196 = vmatmul.bf16.gmra.mxu0 %v1126
      %v1197 = vpop.f32.mrf.mxu0
      %v1198 = vadd.f32 0.0, %v1197
      %v1199 = vpop.f32.mrf.mxu0
      %1200 = vdwg.mxu0
      %1201 = vmatpush.bf16.msra.mxu0 0
      %1202 = vmatpush.bf16.msra.mxu0 0
      %1203 = vmatpush.bf16.msra.mxu0 0
      %1204 = vmatpush.bf16.msra.mxu0 0
      %1205 = vmatpush.bf16.msra.mxu0 0
      %1206 = vmatpush.bf16.msra.mxu0 0
      %1207 = vmatpush.bf16.msra.mxu0 0
      %1208 = vmatpush.bf16.msra.mxu0 %v1141
      %1209 = vmatmul.bf16.gmra.mxu0 %v1126
      %v1210 = vpop.f32.mrf.mxu0
      %v1211 = vadd.f32 0.0, %v1210
      %v1212 = vpop.f32.mrf.mxu0
      %1213 = vdwg.mxu0
      %1214 = vmatpush.bf16.msra.mxu0 0
      %1215 = vmatpush.bf16.msra.mxu0 0
      %1216 = vmatpush.bf16.msra.mxu0 0
      %1217 = vmatpush.bf16.msra.mxu0 0
      %1218 = vmatpush.bf16.msra.mxu0 0
      %1219 = vmatpush.bf16.msra.mxu0 0
      %1220 = vmatpush.bf16.msra.mxu0 0
      %1221 = vmatpush.bf16.msra.mxu0 %v1144
      %1222 = vmatmul.bf16.gmra.mxu0 %v1126
      %v1223 = vpop.f32.mrf.mxu0
      %v1224 = vadd.f32 0.0, %v1223
      %v1225 = vpop.f32.mrf.mxu0
      %1226 = vdwg.mxu0
      %1227 = vmatpush.bf16.msra.mxu0 0
      %1228 = vmatpush.bf16.msra.mxu0 0
      %1229 = vmatpush.bf16.msra.mxu0 0
      %1230 = vmatpush.bf16.msra.mxu0 0
      %1231 = vmatpush.bf16.msra.mxu0 0
      %1232 = vmatpush.bf16.msra.mxu0 0
      %1233 = vmatpush.bf16.msra.mxu0 0
      %1234 = vmatpush.bf16.msra.mxu0 %v1147
      %1235 = vmatmul.bf16.gmra.mxu0 %v1126
      %v1236 = vpop.f32.mrf.mxu0
      %v1237 = vadd.f32 0.0, %v1236
      %v1238 = vpop.f32.mrf.mxu0
      %1239 = vdwg.mxu0
      %v1240 = vadd.f32 %v1069, %v1159
      %v1241 = vadd.f32 %v1070, %v1172
      %v1242 = vadd.f32 %v1071, %v1185
      %v1243 = vadd.f32 %v1072, %v1198
      %v1244 = vadd.f32 %v1073, %v1211
      %v1245 = vadd.f32 %v1074, %v1224
      %v1246 = vadd.f32 %v1075, %v1237
      %v1247 = vld [vmem:[%s1] sm:$0x7]
      %v1249 = vunpack.c.l.b16 %v1247
      %v1250 = vpack.c.b16 %v1249, %v1249
      %1251 = vrot.lane.b32.xlu0 %v1250, 113
      %v1252 = vpop.permute.xlu0 %1251
      %1253 = vst [vmem:[#allocation1] ss:$4 sm:$0xff] %v442
      %s1254 = scalar_lea.vmem [#allocation1], 32
      %1255 = vst [vmem:[%s1254] ss:$4 sm:$0xff] %v443
      %v1256 = vld.sshfl [vmem:[#allocation1] sm:$0xff pattern:$0x73625140]
      %v1258 = vld.sshfl [vmem:[#allocation1 + $0x8] sm:$0xff pattern:$0x73625140]
      %v1260 = vld.sshfl [vmem:[#allocation1 + $0x10] sm:$0xff pattern:$0x73625140]
      %v1262 = vld.sshfl [vmem:[#allocation1 + $0x18] sm:$0xff pattern:$0x73625140]
      %v1264 = vld.sshfl [vmem:[#allocation1 + $0x20] sm:$0xff pattern:$0x73625140]
      %v1266 = vld.sshfl [vmem:[#allocation1 + $0x28] sm:$0xff pattern:$0x73625140]
      %v1268 = vld.sshfl [vmem:[#allocation1 + $0x30] sm:$0xff pattern:$0x73625140]
      %v1270 = vld.sshfl [vmem:[#allocation1 + $0x38] sm:$0xff pattern:$0x73625140]
      %1272 = vrot.lane.b32.xlu0 %v1256, 96
      %v1273 = vpop.permute.xlu0 %1272
      %1274 = vrot.lane.b32.xlu0 %v1258, 96
      %v1275 = vpop.permute.xlu0 %1274
      %1276 = vrot.lane.b32.xlu0 %v1260, 96
      %v1277 = vpop.permute.xlu0 %1276
      %1278 = vrot.lane.b32.xlu0 %v1262, 96
      %v1279 = vpop.permute.xlu0 %1278
      %1280 = vrot.lane.b32.xlu0 %v1264, 96
      %v1281 = vpop.permute.xlu0 %1280
      %1282 = vrot.lane.b32.xlu0 %v1266, 96
      %v1283 = vpop.permute.xlu0 %1282
      %1284 = vrot.lane.b32.xlu0 %v1268, 96
      %v1285 = vpop.permute.xlu0 %1284
      %1286 = vrot.lane.b32.xlu0 %v1270, 96
      %v1287 = vpop.permute.xlu0 %1286
      %vm1288 = vcmask 785408
      %v1289 = vsel %vm1288, %v1273, %v1275
      %v1290 = vsel %vm1288, %v1275, %v1277
      %v1291 = vsel %vm1288, %v1277, %v1279
      %v1292 = vsel %vm1288, %v1279, %v1281
      %v1293 = vsel %vm1288, %v1281, %v1283
      %v1294 = vsel %vm1288, %v1283, %v1285
      %v1295 = vsel %vm1288, %v1285, %v1287
      %v1297 = vsel %vm496, %v1252, 0
      %v1300 = vand.u32 %v1289, %v503
      %v1303 = vand.u32 %v1290, %v503
      %v1306 = vand.u32 %v1291, %v503
      %v1309 = vand.u32 %v1292, %v503
      %v1312 = vand.u32 %v1293, %v503
      %v1315 = vand.u32 %v1294, %v503
      %v1318 = vand.u32 %v1295, %v503
      %1320 = vmatpush.bf16.msra.mxu0 0
      %1321 = vmatpush.bf16.msra.mxu0 0
      %1322 = vmatpush.bf16.msra.mxu0 0
      %1323 = vmatpush.bf16.msra.mxu0 0
      %1324 = vmatpush.bf16.msra.mxu0 0
      %1325 = vmatpush.bf16.msra.mxu0 0
      %1326 = vmatpush.bf16.msra.mxu0 0
      %1327 = vmatpush.bf16.msra.mxu0 %v1300
      %1328 = vmatmul.bf16.gmra.mxu0 %v1297
      %v1329 = vpop.f32.mrf.mxu0
      %v1330 = vadd.f32 0.0, %v1329
      %v1331 = vpop.f32.mrf.mxu0
      %1332 = vdwg.mxu0
      %1333 = vmatpush.bf16.msra.mxu0 0
      %1334 = vmatpush.bf16.msra.mxu0 0
      %1335 = vmatpush.bf16.msra.mxu0 0
      %1336 = vmatpush.bf16.msra.mxu0 0
      %1337 = vmatpush.bf16.msra.mxu0 0
      %1338 = vmatpush.bf16.msra.mxu0 0
      %1339 = vmatpush.bf16.msra.mxu0 0
      %1340 = vmatpush.bf16.msra.mxu0 %v1303
      %1341 = vmatmul.bf16.gmra.mxu0 %v1297
      %v1342 = vpop.f32.mrf.mxu0
      %v1343 = vadd.f32 0.0, %v1342
      %v1344 = vpop.f32.mrf.mxu0
      %1345 = vdwg.mxu0
      %1346 = vmatpush.bf16.msra.mxu0 0
      %1347 = vmatpush.bf16.msra.mxu0 0
      %1348 = vmatpush.bf16.msra.mxu0 0
      %1349 = vmatpush.bf16.msra.mxu0 0
      %1350 = vmatpush.bf16.msra.mxu0 0
      %1351 = vmatpush.bf16.msra.mxu0 0
      %1352 = vmatpush.bf16.msra.mxu0 0
      %1353 = vmatpush.bf16.msra.mxu0 %v1306
      %1354 = vmatmul.bf16.gmra.mxu0 %v1297
      %v1355 = vpop.f32.mrf.mxu0
      %v1356 = vadd.f32 0.0, %v1355
      %v1357 = vpop.f32.mrf.mxu0
      %1358 = vdwg.mxu0
      %1359 = vmatpush.bf16.msra.mxu0 0
      %1360 = vmatpush.bf16.msra.mxu0 0
      %1361 = vmatpush.bf16.msra.mxu0 0
      %1362 = vmatpush.bf16.msra.mxu0 0
      %1363 = vmatpush.bf16.msra.mxu0 0
      %1364 = vmatpush.bf16.msra.mxu0 0
      %1365 = vmatpush.bf16.msra.mxu0 0
      %1366 = vmatpush.bf16.msra.mxu0 %v1309
      %1367 = vmatmul.bf16.gmra.mxu0 %v1297
      %v1368 = vpop.f32.mrf.mxu0
      %v1369 = vadd.f32 0.0, %v1368
      %v1370 = vpop.f32.mrf.mxu0
      %1371 = vdwg.mxu0
      %1372 = vmatpush.bf16.msra.mxu0 0
      %1373 = vmatpush.bf16.msra.mxu0 0
      %1374 = vmatpush.bf16.msra.mxu0 0
      %1375 = vmatpush.bf16.msra.mxu0 0
      %1376 = vmatpush.bf16.msra.mxu0 0
      %1377 = vmatpush.bf16.msra.mxu0 0
      %1378 = vmatpush.bf16.msra.mxu0 0
      %1379 = vmatpush.bf16.msra.mxu0 %v1312
      %1380 = vmatmul.bf16.gmra.mxu0 %v1297
      %v1381 = vpop.f32.mrf.mxu0
      %v1382 = vadd.f32 0.0, %v1381
      %v1383 = vpop.f32.mrf.mxu0
      %1384 = vdwg.mxu0
      %1385 = vmatpush.bf16.msra.mxu0 0
      %1386 = vmatpush.bf16.msra.mxu0 0
      %1387 = vmatpush.bf16.msra.mxu0 0
      %1388 = vmatpush.bf16.msra.mxu0 0
      %1389 = vmatpush.bf16.msra.mxu0 0
      %1390 = vmatpush.bf16.msra.mxu0 0
      %1391 = vmatpush.bf16.msra.mxu0 0
      %1392 = vmatpush.bf16.msra.mxu0 %v1315
      %1393 = vmatmul.bf16.gmra.mxu0 %v1297
      %v1394 = vpop.f32.mrf.mxu0
      %v1395 = vadd.f32 0.0, %v1394
      %v1396 = vpop.f32.mrf.mxu0
      %1397 = vdwg.mxu0
      %1398 = vmatpush.bf16.msra.mxu0 0
      %1399 = vmatpush.bf16.msra.mxu0 0
      %1400 = vmatpush.bf16.msra.mxu0 0
      %1401 = vmatpush.bf16.msra.mxu0 0
      %1402 = vmatpush.bf16.msra.mxu0 0
      %1403 = vmatpush.bf16.msra.mxu0 0
      %1404 = vmatpush.bf16.msra.mxu0 0
      %1405 = vmatpush.bf16.msra.mxu0 %v1318
      %1406 = vmatmul.bf16.gmra.mxu0 %v1297
      %v1407 = vpop.f32.mrf.mxu0
      %v1408 = vadd.f32 0.0, %v1407
      %v1409 = vpop.f32.mrf.mxu0
      %1410 = vdwg.mxu0
      %v1411 = vadd.f32 %v1240, %v1330
      %v1412 = vadd.f32 %v1241, %v1343
      %v1413 = vadd.f32 %v1242, %v1356
      %v1414 = vadd.f32 %v1243, %v1369
      %v1415 = vadd.f32 %v1244, %v1382
      %v1416 = vadd.f32 %v1245, %v1395
      %v1417 = vadd.f32 %v1246, %v1408
      %v1418 = vld [vmem:[%s1] sm:$0x7]
      %v1420 = vunpack.c.l.b16 %v1418
      %v1421 = vpack.c.b16 %v1420, %v1420
      %1422 = vrot.lane.b32.xlu0 %v1421, 110
      %v1423 = vpop.permute.xlu0 %1422
      %1424 = vst [vmem:[#allocation1] ss:$4 sm:$0xff] %v442
      %s1425 = scalar_lea.vmem [#allocation1], 32
      %1426 = vst [vmem:[%s1425] ss:$4 sm:$0xff] %v443
      %v1427 = vld.sshfl [vmem:[#allocation1] sm:$0xff pattern:$0x73625140]
      %v1429 = vld.sshfl [vmem:[#allocation1 + $0x8] sm:$0xff pattern:$0x73625140]
      %v1431 = vld.sshfl [vmem:[#allocation1 + $0x10] sm:$0xff pattern:$0x73625140]
      %v1433 = vld.sshfl [vmem:[#allocation1 + $0x18] sm:$0xff pattern:$0x73625140]
      %v1435 = vld.sshfl [vmem:[#allocation1 + $0x20] sm:$0xff pattern:$0x73625140]
      %v1437 = vld.sshfl [vmem:[#allocation1 + $0x28] sm:$0xff pattern:$0x73625140]
      %v1439 = vld.sshfl [vmem:[#allocation1 + $0x30] sm:$0xff pattern:$0x73625140]
      %v1441 = vld.sshfl [vmem:[#allocation1 + $0x38] sm:$0xff pattern:$0x73625140]
      %1443 = vrot.lane.b32.xlu0 %v1427, 95
      %v1444 = vpop.permute.xlu0 %1443
      %1445 = vrot.lane.b32.xlu0 %v1429, 95
      %v1446 = vpop.permute.xlu0 %1445
      %1447 = vrot.lane.b32.xlu0 %v1431, 95
      %v1448 = vpop.permute.xlu0 %1447
      %1449 = vrot.lane.b32.xlu0 %v1433, 95
      %v1450 = vpop.permute.xlu0 %1449
      %1451 = vrot.lane.b32.xlu0 %v1435, 95
      %v1452 = vpop.permute.xlu0 %1451
      %1453 = vrot.lane.b32.xlu0 %v1437, 95
      %v1454 = vpop.permute.xlu0 %1453
      %1455 = vrot.lane.b32.xlu0 %v1439, 95
      %v1456 = vpop.permute.xlu0 %1455
      %1457 = vrot.lane.b32.xlu0 %v1441, 95
      %v1458 = vpop.permute.xlu0 %1457
      %vm1459 = vcmask 777216
      %v1460 = vsel %vm1459, %v1444, %v1446
      %v1461 = vsel %vm1459, %v1446, %v1448
      %v1462 = vsel %vm1459, %v1448, %v1450
      %v1463 = vsel %vm1459, %v1450, %v1452
      %v1464 = vsel %vm1459, %v1452, %v1454
      %v1465 = vsel %vm1459, %v1454, %v1456
      %v1466 = vsel %vm1459, %v1456, %v1458
      %v1468 = vsel %vm496, %v1423, 0
      %v1471 = vand.u32 %v1460, %v503
      %v1474 = vand.u32 %v1461, %v503
      %v1477 = vand.u32 %v1462, %v503
      %v1480 = vand.u32 %v1463, %v503
      %v1483 = vand.u32 %v1464, %v503
      %v1486 = vand.u32 %v1465, %v503
      %v1489 = vand.u32 %v1466, %v503
      %1491 = vmatpush.bf16.msra.mxu0 0
      %1492 = vmatpush.bf16.msra.mxu0 0
      %1493 = vmatpush.bf16.msra.mxu0 0
      %1494 = vmatpush.bf16.msra.mxu0 0
      %1495 = vmatpush.bf16.msra.mxu0 0
      %1496 = vmatpush.bf16.msra.mxu0 0
      %1497 = vmatpush.bf16.msra.mxu0 0
      %1498 = vmatpush.bf16.msra.mxu0 %v1471
      %1499 = vmatmul.bf16.gmra.mxu0 %v1468
      %v1500 = vpop.f32.mrf.mxu0
      %v1501 = vadd.f32 0.0, %v1500
      %v1502 = vpop.f32.mrf.mxu0
      %1503 = vdwg.mxu0
      %1504 = vmatpush.bf16.msra.mxu0 0
      %1505 = vmatpush.bf16.msra.mxu0 0
      %1506 = vmatpush.bf16.msra.mxu0 0
      %1507 = vmatpush.bf16.msra.mxu0 0
      %1508 = vmatpush.bf16.msra.mxu0 0
      %1509 = vmatpush.bf16.msra.mxu0 0
      %1510 = vmatpush.bf16.msra.mxu0 0
      %1511 = vmatpush.bf16.msra.mxu0 %v1474
      %1512 = vmatmul.bf16.gmra.mxu0 %v1468
      %v1513 = vpop.f32.mrf.mxu0
      %v1514 = vadd.f32 0.0, %v1513
      %v1515 = vpop.f32.mrf.mxu0
      %1516 = vdwg.mxu0
      %1517 = vmatpush.bf16.msra.mxu0 0
      %1518 = vmatpush.bf16.msra.mxu0 0
      %1519 = vmatpush.bf16.msra.mxu0 0
      %1520 = vmatpush.bf16.msra.mxu0 0
      %1521 = vmatpush.bf16.msra.mxu0 0
      %1522 = vmatpush.bf16.msra.mxu0 0
      %1523 = vmatpush.bf16.msra.mxu0 0
      %1524 = vmatpush.bf16.msra.mxu0 %v1477
      %1525 = vmatmul.bf16.gmra.mxu0 %v1468
      %v1526 = vpop.f32.mrf.mxu0
      %v1527 = vadd.f32 0.0, %v1526
      %v1528 = vpop.f32.mrf.mxu0
      %1529 = vdwg.mxu0
      %1530 = vmatpush.bf16.msra.mxu0 0
      %1531 = vmatpush.bf16.msra.mxu0 0
      %1532 = vmatpush.bf16.msra.mxu0 0
      %1533 = vmatpush.bf16.msra.mxu0 0
      %1534 = vmatpush.bf16.msra.mxu0 0
      %1535 = vmatpush.bf16.msra.mxu0 0
      %1536 = vmatpush.bf16.msra.mxu0 0
      %1537 = vmatpush.bf16.msra.mxu0 %v1480
      %1538 = vmatmul.bf16.gmra.mxu0 %v1468
      %v1539 = vpop.f32.mrf.mxu0
      %v1540 = vadd.f32 0.0, %v1539
      %v1541 = vpop.f32.mrf.mxu0
      %1542 = vdwg.mxu0
      %1543 = vmatpush.bf16.msra.mxu0 0
      %1544 = vmatpush.bf16.msra.mxu0 0
      %1545 = vmatpush.bf16.msra.mxu0 0
      %1546 = vmatpush.bf16.msra.mxu0 0
      %1547 = vmatpush.bf16.msra.mxu0 0
      %1548 = vmatpush.bf16.msra.mxu0 0
      %1549 = vmatpush.bf16.msra.mxu0 0
      %1550 = vmatpush.bf16.msra.mxu0 %v1483
      %1551 = vmatmul.bf16.gmra.mxu0 %v1468
      %v1552 = vpop.f32.mrf.mxu0
      %v1553 = vadd.f32 0.0, %v1552
      %v1554 = vpop.f32.mrf.mxu0
      %1555 = vdwg.mxu0
      %1556 = vmatpush.bf16.msra.mxu0 0
      %1557 = vmatpush.bf16.msra.mxu0 0
      %1558 = vmatpush.bf16.msra.mxu0 0
      %1559 = vmatpush.bf16.msra.mxu0 0
      %1560 = vmatpush.bf16.msra.mxu0 0
      %1561 = vmatpush.bf16.msra.mxu0 0
      %1562 = vmatpush.bf16.msra.mxu0 0
      %1563 = vmatpush.bf16.msra.mxu0 %v1486
      %1564 = vmatmul.bf16.gmra.mxu0 %v1468
      %v1565 = vpop.f32.mrf.mxu0
      %v1566 = vadd.f32 0.0, %v1565
      %v1567 = vpop.f32.mrf.mxu0
      %1568 = vdwg.mxu0
      %1569 = vmatpush.bf16.msra.mxu0 0
      %1570 = vmatpush.bf16.msra.mxu0 0
      %1571 = vmatpush.bf16.msra.mxu0 0
      %1572 = vmatpush.bf16.msra.mxu0 0
      %1573 = vmatpush.bf16.msra.mxu0 0
      %1574 = vmatpush.bf16.msra.mxu0 0
      %1575 = vmatpush.bf16.msra.mxu0 0
      %1576 = vmatpush.bf16.msra.mxu0 %v1489
      %1577 = vmatmul.bf16.gmra.mxu0 %v1468
      %v1578 = vpop.f32.mrf.mxu0
      %v1579 = vadd.f32 0.0, %v1578
      %v1580 = vpop.f32.mrf.mxu0
      %1581 = vdwg.mxu0
      %v1582 = vadd.f32 %v1411, %v1501
      %v1583 = vadd.f32 %v1412, %v1514
      %v1584 = vadd.f32 %v1413, %v1527
      %v1585 = vadd.f32 %v1414, %v1540
      %v1586 = vadd.f32 %v1415, %v1553
      %v1587 = vadd.f32 %v1416, %v1566
      %v1588 = vadd.f32 %v1417, %v1579
      %v1589 = vld [vmem:[%s1] sm:$0x7]
      %v1591 = vunpack.c.l.b16 %v1589
      %v1592 = vpack.c.b16 %v1591, %v1591
      %1593 = vrot.lane.b32.xlu0 %v1592, 107
      %v1594 = vpop.permute.xlu0 %1593
      %1595 = vst [vmem:[#allocation1] ss:$4 sm:$0xff] %v442
      %s1596 = scalar_lea.vmem [#allocation1], 32
      %1597 = vst [vmem:[%s1596] ss:$4 sm:$0xff] %v443
      %v1598 = vld.sshfl [vmem:[#allocation1] sm:$0xff pattern:$0x73625140]
      %v1600 = vld.sshfl [vmem:[#allocation1 + $0x8] sm:$0xff pattern:$0x73625140]
      %v1602 = vld.sshfl [vmem:[#allocation1 + $0x10] sm:$0xff pattern:$0x73625140]
      %v1604 = vld.sshfl [vmem:[#allocation1 + $0x18] sm:$0xff pattern:$0x73625140]
      %v1606 = vld.sshfl [vmem:[#allocation1 + $0x20] sm:$0xff pattern:$0x73625140]
      %v1608 = vld.sshfl [vmem:[#allocation1 + $0x28] sm:$0xff pattern:$0x73625140]
      %v1610 = vld.sshfl [vmem:[#allocation1 + $0x30] sm:$0xff pattern:$0x73625140]
      %v1612 = vld.sshfl [vmem:[#allocation1 + $0x38] sm:$0xff pattern:$0x73625140]
      %1614 = vrot.lane.b32.xlu0 %v1598, 94
      %v1615 = vpop.permute.xlu0 %1614
      %1616 = vrot.lane.b32.xlu0 %v1600, 94
      %v1617 = vpop.permute.xlu0 %1616
      %1618 = vrot.lane.b32.xlu0 %v1602, 94
      %v1619 = vpop.permute.xlu0 %1618
      %1620 = vrot.lane.b32.xlu0 %v1604, 94
      %v1621 = vpop.permute.xlu0 %1620
      %1622 = vrot.lane.b32.xlu0 %v1606, 94
      %v1623 = vpop.permute.xlu0 %1622
      %1624 = vrot.lane.b32.xlu0 %v1608, 94
      %v1625 = vpop.permute.xlu0 %1624
      %1626 = vrot.lane.b32.xlu0 %v1610, 94
      %v1627 = vpop.permute.xlu0 %1626
      %1628 = vrot.lane.b32.xlu0 %v1612, 94
      %v1629 = vpop.permute.xlu0 %1628
      %vm1630 = vcmask 769024
      %v1631 = vsel %vm1630, %v1615, %v1617
      %v1632 = vsel %vm1630, %v1617, %v1619
      %v1633 = vsel %vm1630, %v1619, %v1621
      %v1634 = vsel %vm1630, %v1621, %v1623
      %v1635 = vsel %vm1630, %v1623, %v1625
      %v1636 = vsel %vm1630, %v1625, %v1627
      %v1637 = vsel %vm1630, %v1627, %v1629
      %v1639 = vsel %vm496, %v1594, 0
      %v1642 = vand.u32 %v1631, %v503
      %v1645 = vand.u32 %v1632, %v503
      %v1648 = vand.u32 %v1633, %v503
      %v1651 = vand.u32 %v1634, %v503
      %v1654 = vand.u32 %v1635, %v503
      %v1657 = vand.u32 %v1636, %v503
      %v1660 = vand.u32 %v1637, %v503
      %1662 = vmatpush.bf16.msra.mxu0 0
      %1663 = vmatpush.bf16.msra.mxu0 0
      %1664 = vmatpush.bf16.msra.mxu0 0
      %1665 = vmatpush.bf16.msra.mxu0 0
      %1666 = vmatpush.bf16.msra.mxu0 0
      %1667 = vmatpush.bf16.msra.mxu0 0
      %1668 = vmatpush.bf16.msra.mxu0 0
      %1669 = vmatpush.bf16.msra.mxu0 %v1642
      %1670 = vmatmul.bf16.gmra.mxu0 %v1639
      %v1671 = vpop.f32.mrf.mxu0
      %v1672 = vadd.f32 0.0, %v1671
      %v1673 = vpop.f32.mrf.mxu0
      %1674 = vdwg.mxu0
      %1675 = vmatpush.bf16.msra.mxu0 0
      %1676 = vmatpush.bf16.msra.mxu0 0
      %1677 = vmatpush.bf16.msra.mxu0 0
      %1678 = vmatpush.bf16.msra.mxu0 0
      %1679 = vmatpush.bf16.msra.mxu0 0
      %1680 = vmatpush.bf16.msra.mxu0 0
      %1681 = vmatpush.bf16.msra.mxu0 0
      %1682 = vmatpush.bf16.msra.mxu0 %v1645
      %1683 = vmatmul.bf16.gmra.mxu0 %v1639
      %v1684 = vpop.f32.mrf.mxu0
      %v1685 = vadd.f32 0.0, %v1684
      %v1686 = vpop.f32.mrf.mxu0
      %1687 = vdwg.mxu0
      %1688 = vmatpush.bf16.msra.mxu0 0
      %1689 = vmatpush.bf16.msra.mxu0 0
      %1690 = vmatpush.bf16.msra.mxu0 0
      %1691 = vmatpush.bf16.msra.mxu0 0
      %1692 = vmatpush.bf16.msra.mxu0 0
      %1693 = vmatpush.bf16.msra.mxu0 0
      %1694 = vmatpush.bf16.msra.mxu0 0
      %1695 = vmatpush.bf16.msra.mxu0 %v1648
      %1696 = vmatmul.bf16.gmra.mxu0 %v1639
      %v1697 = vpop.f32.mrf.mxu0
      %v1698 = vadd.f32 0.0, %v1697
      %v1699 = vpop.f32.mrf.mxu0
      %1700 = vdwg.mxu0
      %1701 = vmatpush.bf16.msra.mxu0 0
      %1702 = vmatpush.bf16.msra.mxu0 0
      %1703 = vmatpush.bf16.msra.mxu0 0
      %1704 = vmatpush.bf16.msra.mxu0 0
      %1705 = vmatpush.bf16.msra.mxu0 0
      %1706 = vmatpush.bf16.msra.mxu0 0
      %1707 = vmatpush.bf16.msra.mxu0 0
      %1708 = vmatpush.bf16.msra.mxu0 %v1651
      %1709 = vmatmul.bf16.gmra.mxu0 %v1639
      %v1710 = vpop.f32.mrf.mxu0
      %v1711 = vadd.f32 0.0, %v1710
      %v1712 = vpop.f32.mrf.mxu0
      %1713 = vdwg.mxu0
      %1714 = vmatpush.bf16.msra.mxu0 0
      %1715 = vmatpush.bf16.msra.mxu0 0
      %1716 = vmatpush.bf16.msra.mxu0 0
      %1717 = vmatpush.bf16.msra.mxu0 0
      %1718 = vmatpush.bf16.msra.mxu0 0
      %1719 = vmatpush.bf16.msra.mxu0 0
      %1720 = vmatpush.bf16.msra.mxu0 0
      %1721 = vmatpush.bf16.msra.mxu0 %v1654
      %1722 = vmatmul.bf16.gmra.mxu0 %v1639
      %v1723 = vpop.f32.mrf.mxu0
      %v1724 = vadd.f32 0.0, %v1723
      %v1725 = vpop.f32.mrf.mxu0
      %1726 = vdwg.mxu0
      %1727 = vmatpush.bf16.msra.mxu0 0
      %1728 = vmatpush.bf16.msra.mxu0 0
      %1729 = vmatpush.bf16.msra.mxu0 0
      %1730 = vmatpush.bf16.msra.mxu0 0
      %1731 = vmatpush.bf16.msra.mxu0 0
      %1732 = vmatpush.bf16.msra.mxu0 0
      %1733 = vmatpush.bf16.msra.mxu0 0
      %1734 = vmatpush.bf16.msra.mxu0 %v1657
      %1735 = vmatmul.bf16.gmra.mxu0 %v1639
      %v1736 = vpop.f32.mrf.mxu0
      %v1737 = vadd.f32 0.0, %v1736
      %v1738 = vpop.f32.mrf.mxu0
      %1739 = vdwg.mxu0
      %1740 = vmatpush.bf16.msra.mxu0 0
      %1741 = vmatpush.bf16.msra.mxu0 0
      %1742 = vmatpush.bf16.msra.mxu0 0
      %1743 = vmatpush.bf16.msra.mxu0 0
      %1744 = vmatpush.bf16.msra.mxu0 0
      %1745 = vmatpush.bf16.msra.mxu0 0
      %1746 = vmatpush.bf16.msra.mxu0 0
      %1747 = vmatpush.bf16.msra.mxu0 %v1660
      %1748 = vmatmul.bf16.gmra.mxu0 %v1639
      %v1749 = vpop.f32.mrf.mxu0
      %v1750 = vadd.f32 0.0, %v1749
      %v1751 = vpop.f32.mrf.mxu0
      %1752 = vdwg.mxu0
      %v1753 = vadd.f32 %v1582, %v1672
      %v1754 = vadd.f32 %v1583, %v1685
      %v1755 = vadd.f32 %v1584, %v1698
      %v1756 = vadd.f32 %v1585, %v1711
      %v1757 = vadd.f32 %v1586, %v1724
      %v1758 = vadd.f32 %v1587, %v1737
      %v1759 = vadd.f32 %v1588, %v1750
      %v1760 = vld [vmem:[%s1] sm:$0x7]
      %v1762 = vunpack.c.l.b16 %v1760
      %v1763 = vpack.c.b16 %v1762, %v1762
      %1764 = vrot.lane.b32.xlu0 %v1763, 104
      %v1765 = vpop.permute.xlu0 %1764
      %1766 = vst [vmem:[#allocation1] ss:$4 sm:$0xff] %v442
      %s1767 = scalar_lea.vmem [#allocation1], 32
      %1768 = vst [vmem:[%s1767] ss:$4 sm:$0xff] %v443
      %v1769 = vld.sshfl [vmem:[#allocation1] sm:$0xff pattern:$0x73625140]
      %v1771 = vld.sshfl [vmem:[#allocation1 + $0x8] sm:$0xff pattern:$0x73625140]
      %v1773 = vld.sshfl [vmem:[#allocation1 + $0x10] sm:$0xff pattern:$0x73625140]
      %v1775 = vld.sshfl [vmem:[#allocation1 + $0x18] sm:$0xff pattern:$0x73625140]
      %v1777 = vld.sshfl [vmem:[#allocation1 + $0x20] sm:$0xff pattern:$0x73625140]
      %v1779 = vld.sshfl [vmem:[#allocation1 + $0x28] sm:$0xff pattern:$0x73625140]
      %v1781 = vld.sshfl [vmem:[#allocation1 + $0x30] sm:$0xff pattern:$0x73625140]
      %v1783 = vld.sshfl [vmem:[#allocation1 + $0x38] sm:$0xff pattern:$0x73625140]
      %1785 = vrot.lane.b32.xlu0 %v1769, 93
      %v1786 = vpop.permute.xlu0 %1785
      %1787 = vrot.lane.b32.xlu0 %v1771, 93
      %v1788 = vpop.permute.xlu0 %1787
      %1789 = vrot.lane.b32.xlu0 %v1773, 93
      %v1790 = vpop.permute.xlu0 %1789
      %1791 = vrot.lane.b32.xlu0 %v1775, 93
      %v1792 = vpop.permute.xlu0 %1791
      %1793 = vrot.lane.b32.xlu0 %v1777, 93
      %v1794 = vpop.permute.xlu0 %1793
      %1795 = vrot.lane.b32.xlu0 %v1779, 93
      %v1796 = vpop.permute.xlu0 %1795
      %1797 = vrot.lane.b32.xlu0 %v1781, 93
      %v1798 = vpop.permute.xlu0 %1797
      %1799 = vrot.lane.b32.xlu0 %v1783, 93
      %v1800 = vpop.permute.xlu0 %1799
      %vm1801 = vcmask 760832
      %v1802 = vsel %vm1801, %v1786, %v1788
      %v1803 = vsel %vm1801, %v1788, %v1790
      %v1804 = vsel %vm1801, %v1790, %v1792
      %v1805 = vsel %vm1801, %v1792, %v1794
      %v1806 = vsel %vm1801, %v1794, %v1796
      %v1807 = vsel %vm1801, %v1796, %v1798
      %v1808 = vsel %vm1801, %v1798, %v1800
      %v1810 = vsel %vm496, %v1765, 0
      %v1813 = vand.u32 %v1802, %v503
      %v1816 = vand.u32 %v1803, %v503
      %v1819 = vand.u32 %v1804, %v503
      %v1822 = vand.u32 %v1805, %v503
      %v1825 = vand.u32 %v1806, %v503
      %v1828 = vand.u32 %v1807, %v503
      %v1831 = vand.u32 %v1808, %v503
      %1833 = vmatpush.bf16.msra.mxu0 0
      %1834 = vmatpush.bf16.msra.mxu0 0
      %1835 = vmatpush.bf16.msra.mxu0 0
      %1836 = vmatpush.bf16.msra.mxu0 0
      %1837 = vmatpush.bf16.msra.mxu0 0
      %1838 = vmatpush.bf16.msra.mxu0 0
      %1839 = vmatpush.bf16.msra.mxu0 0
      %1840 = vmatpush.bf16.msra.mxu0 %v1813
      %1841 = vmatmul.bf16.gmra.mxu0 %v1810
      %v1842 = vpop.f32.mrf.mxu0
      %v1843 = vadd.f32 0.0, %v1842
      %v1844 = vpop.f32.mrf.mxu0
      %1845 = vdwg.mxu0
      %1846 = vmatpush.bf16.msra.mxu0 0
      %1847 = vmatpush.bf16.msra.mxu0 0
      %1848 = vmatpush.bf16.msra.mxu0 0
      %1849 = vmatpush.bf16.msra.mxu0 0
      %1850 = vmatpush.bf16.msra.mxu0 0
      %1851 = vmatpush.bf16.msra.mxu0 0
      %1852 = vmatpush.bf16.msra.mxu0 0
      %1853 = vmatpush.bf16.msra.mxu0 %v1816
      %1854 = vmatmul.bf16.gmra.mxu0 %v1810
      %v1855 = vpop.f32.mrf.mxu0
      %v1856 = vadd.f32 0.0, %v1855
      %v1857 = vpop.f32.mrf.mxu0
      %1858 = vdwg.mxu0
      %1859 = vmatpush.bf16.msra.mxu0 0
      %1860 = vmatpush.bf16.msra.mxu0 0
      %1861 = vmatpush.bf16.msra.mxu0 0
      %1862 = vmatpush.bf16.msra.mxu0 0
      %1863 = vmatpush.bf16.msra.mxu0 0
      %1864 = vmatpush.bf16.msra.mxu0 0
      %1865 = vmatpush.bf16.msra.mxu0 0
      %1866 = vmatpush.bf16.msra.mxu0 %v1819
      %1867 = vmatmul.bf16.gmra.mxu0 %v1810
      %v1868 = vpop.f32.mrf.mxu0
      %v1869 = vadd.f32 0.0, %v1868
      %v1870 = vpop.f32.mrf.mxu0
      %1871 = vdwg.mxu0
      %1872 = vmatpush.bf16.msra.mxu0 0
      %1873 = vmatpush.bf16.msra.mxu0 0
      %1874 = vmatpush.bf16.msra.mxu0 0
      %1875 = vmatpush.bf16.msra.mxu0 0
      %1876 = vmatpush.bf16.msra.mxu0 0
      %1877 = vmatpush.bf16.msra.mxu0 0
      %1878 = vmatpush.bf16.msra.mxu0 0
      %1879 = vmatpush.bf16.msra.mxu0 %v1822
      %1880 = vmatmul.bf16.gmra.mxu0 %v1810
      %v1881 = vpop.f32.mrf.mxu0
      %v1882 = vadd.f32 0.0, %v1881
      %v1883 = vpop.f32.mrf.mxu0
      %1884 = vdwg.mxu0
      %1885 = vmatpush.bf16.msra.mxu0 0
      %1886 = vmatpush.bf16.msra.mxu0 0
      %1887 = vmatpush.bf16.msra.mxu0 0
      %1888 = vmatpush.bf16.msra.mxu0 0
      %1889 = vmatpush.bf16.msra.mxu0 0
      %1890 = vmatpush.bf16.msra.mxu0 0
      %1891 = vmatpush.bf16.msra.mxu0 0
      %1892 = vmatpush.bf16.msra.mxu0 %v1825
      %1893 = vmatmul.bf16.gmra.mxu0 %v1810
      %v1894 = vpop.f32.mrf.mxu0
      %v1895 = vadd.f32 0.0, %v1894
      %v1896 = vpop.f32.mrf.mxu0
      %1897 = vdwg.mxu0
      %1898 = vmatpush.bf16.msra.mxu0 0
      %1899 = vmatpush.bf16.msra.mxu0 0
      %1900 = vmatpush.bf16.msra.mxu0 0
      %1901 = vmatpush.bf16.msra.mxu0 0
      %1902 = vmatpush.bf16.msra.mxu0 0
      %1903 = vmatpush.bf16.msra.mxu0 0
      %1904 = vmatpush.bf16.msra.mxu0 0
      %1905 = vmatpush.bf16.msra.mxu0 %v1828
      %1906 = vmatmul.bf16.gmra.mxu0 %v1810
      %v1907 = vpop.f32.mrf.mxu0
      %v1908 = vadd.f32 0.0, %v1907
      %v1909 = vpop.f32.mrf.mxu0
      %1910 = vdwg.mxu0
      %1911 = vmatpush.bf16.msra.mxu0 0
      %1912 = vmatpush.bf16.msra.mxu0 0
      %1913 = vmatpush.bf16.msra.mxu0 0
      %1914 = vmatpush.bf16.msra.mxu0 0
      %1915 = vmatpush.bf16.msra.mxu0 0
      %1916 = vmatpush.bf16.msra.mxu0 0
      %1917 = vmatpush.bf16.msra.mxu0 0
      %1918 = vmatpush.bf16.msra.mxu0 %v1831
      %1919 = vmatmul.bf16.gmra.mxu0 %v1810
      %v1920 = vpop.f32.mrf.mxu0
      %v1921 = vadd.f32 0.0, %v1920
      %v1922 = vpop.f32.mrf.mxu0
      %1923 = vdwg.mxu0
      %v1924 = vadd.f32 %v1753, %v1843
      %v1925 = vadd.f32 %v1754, %v1856
      %v1926 = vadd.f32 %v1755, %v1869
      %v1927 = vadd.f32 %v1756, %v1882
      %v1928 = vadd.f32 %v1757, %v1895
      %v1929 = vadd.f32 %v1758, %v1908
      %v1930 = vadd.f32 %v1759, %v1921
      %v1931 = vld [vmem:[%s1] sm:$0x7]
      %v1933 = vunpack.c.l.b16 %v1931
      %v1934 = vpack.c.b16 %v1933, %v1933
      %1935 = vrot.lane.b32.xlu0 %v1934, 101
      %v1936 = vpop.permute.xlu0 %1935
      %1937 = vst [vmem:[#allocation1] ss:$4 sm:$0xff] %v442
      %s1938 = scalar_lea.vmem [#allocation1], 32
      %1939 = vst [vmem:[%s1938] ss:$4 sm:$0xff] %v443
      %v1940 = vld.sshfl [vmem:[#allocation1] sm:$0xff pattern:$0x73625140]
      %v1942 = vld.sshfl [vmem:[#allocation1 + $0x8] sm:$0xff pattern:$0x73625140]
      %v1944 = vld.sshfl [vmem:[#allocation1 + $0x10] sm:$0xff pattern:$0x73625140]
      %v1946 = vld.sshfl [vmem:[#allocation1 + $0x18] sm:$0xff pattern:$0x73625140]
      %v1948 = vld.sshfl [vmem:[#allocation1 + $0x20] sm:$0xff pattern:$0x73625140]
      %v1950 = vld.sshfl [vmem:[#allocation1 + $0x28] sm:$0xff pattern:$0x73625140]
      %v1952 = vld.sshfl [vmem:[#allocation1 + $0x30] sm:$0xff pattern:$0x73625140]
      %v1954 = vld.sshfl [vmem:[#allocation1 + $0x38] sm:$0xff pattern:$0x73625140]
      %1956 = vrot.lane.b32.xlu0 %v1940, 92
      %v1957 = vpop.permute.xlu0 %1956
      %1958 = vrot.lane.b32.xlu0 %v1942, 92
      %v1959 = vpop.permute.xlu0 %1958
      %1960 = vrot.lane.b32.xlu0 %v1944, 92
      %v1961 = vpop.permute.xlu0 %1960
      %1962 = vrot.lane.b32.xlu0 %v1946, 92
      %v1963 = vpop.permute.xlu0 %1962
      %1964 = vrot.lane.b32.xlu0 %v1948, 92
      %v1965 = vpop.permute.xlu0 %1964
      %1966 = vrot.lane.b32.xlu0 %v1950, 92
      %v1967 = vpop.permute.xlu0 %1966
      %1968 = vrot.lane.b32.xlu0 %v1952, 92
      %v1969 = vpop.permute.xlu0 %1968
      %1970 = vrot.lane.b32.xlu0 %v1954, 92
      %v1971 = vpop.permute.xlu0 %1970
      %vm1972 = vcmask 752640
      %v1973 = vsel %vm1972, %v1957, %v1959
      %v1974 = vsel %vm1972, %v1959, %v1961
      %v1975 = vsel %vm1972, %v1961, %v1963
      %v1976 = vsel %vm1972, %v1963, %v1965
      %v1977 = vsel %vm1972, %v1965, %v1967
      %v1978 = vsel %vm1972, %v1967, %v1969
      %v1979 = vsel %vm1972, %v1969, %v1971
      %v1981 = vsel %vm496, %v1936, 0
      %v1984 = vand.u32 %v1973, %v503
      %v1987 = vand.u32 %v1974, %v503
      %v1990 = vand.u32 %v1975, %v503
      %v1993 = vand.u32 %v1976, %v503
      %v1996 = vand.u32 %v1977, %v503
      %v1999 = vand.u32 %v1978, %v503
      %v2002 = vand.u32 %v1979, %v503
      %2004 = vmatpush.bf16.msra.mxu0 0
      %2005 = vmatpush.bf16.msra.mxu0 0
      %2006 = vmatpush.bf16.msra.mxu0 0
      %2007 = vmatpush.bf16.msra.mxu0 0
      %2008 = vmatpush.bf16.msra.mxu0 0
      %2009 = vmatpush.bf16.msra.mxu0 0
      %2010 = vmatpush.bf16.msra.mxu0 0
      %2011 = vmatpush.bf16.msra.mxu0 %v1984
      %2012 = vmatmul.bf16.gmra.mxu0 %v1981
      %v2013 = vpop.f32.mrf.mxu0
      %v2014 = vadd.f32 0.0, %v2013
      %v2015 = vpop.f32.mrf.mxu0
      %2016 = vdwg.mxu0
      %2017 = vmatpush.bf16.msra.mxu0 0
      %2018 = vmatpush.bf16.msra.mxu0 0
      %2019 = vmatpush.bf16.msra.mxu0 0
      %2020 = vmatpush.bf16.msra.mxu0 0
      %2021 = vmatpush.bf16.msra.mxu0 0
      %2022 = vmatpush.bf16.msra.mxu0 0
      %2023 = vmatpush.bf16.msra.mxu0 0
      %2024 = vmatpush.bf16.msra.mxu0 %v1987
      %2025 = vmatmul.bf16.gmra.mxu0 %v1981
      %v2026 = vpop.f32.mrf.mxu0
      %v2027 = vadd.f32 0.0, %v2026
      %v2028 = vpop.f32.mrf.mxu0
      %2029 = vdwg.mxu0
      %2030 = vmatpush.bf16.msra.mxu0 0
      %2031 = vmatpush.bf16.msra.mxu0 0
      %2032 = vmatpush.bf16.msra.mxu0 0
      %2033 = vmatpush.bf16.msra.mxu0 0
      %2034 = vmatpush.bf16.msra.mxu0 0
      %2035 = vmatpush.bf16.msra.mxu0 0
      %2036 = vmatpush.bf16.msra.mxu0 0
      %2037 = vmatpush.bf16.msra.mxu0 %v1990
      %2038 = vmatmul.bf16.gmra.mxu0 %v1981
      %v2039 = vpop.f32.mrf.mxu0
      %v2040 = vadd.f32 0.0, %v2039
      %v2041 = vpop.f32.mrf.mxu0
      %2042 = vdwg.mxu0
      %2043 = vmatpush.bf16.msra.mxu0 0
      %2044 = vmatpush.bf16.msra.mxu0 0
      %2045 = vmatpush.bf16.msra.mxu0 0
      %2046 = vmatpush.bf16.msra.mxu0 0
      %2047 = vmatpush.bf16.msra.mxu0 0
      %2048 = vmatpush.bf16.msra.mxu0 0
      %2049 = vmatpush.bf16.msra.mxu0 0
      %2050 = vmatpush.bf16.msra.mxu0 %v1993
      %2051 = vmatmul.bf16.gmra.mxu0 %v1981
      %v2052 = vpop.f32.mrf.mxu0
      %v2053 = vadd.f32 0.0, %v2052
      %v2054 = vpop.f32.mrf.mxu0
      %2055 = vdwg.mxu0
      %2056 = vmatpush.bf16.msra.mxu0 0
      %2057 = vmatpush.bf16.msra.mxu0 0
      %2058 = vmatpush.bf16.msra.mxu0 0
      %2059 = vmatpush.bf16.msra.mxu0 0
      %2060 = vmatpush.bf16.msra.mxu0 0
      %2061 = vmatpush.bf16.msra.mxu0 0
      %2062 = vmatpush.bf16.msra.mxu0 0
      %2063 = vmatpush.bf16.msra.mxu0 %v1996
      %2064 = vmatmul.bf16.gmra.mxu0 %v1981
      %v2065 = vpop.f32.mrf.mxu0
      %v2066 = vadd.f32 0.0, %v2065
      %v2067 = vpop.f32.mrf.mxu0
      %2068 = vdwg.mxu0
      %2069 = vmatpush.bf16.msra.mxu0 0
      %2070 = vmatpush.bf16.msra.mxu0 0
      %2071 = vmatpush.bf16.msra.mxu0 0
      %2072 = vmatpush.bf16.msra.mxu0 0
      %2073 = vmatpush.bf16.msra.mxu0 0
      %2074 = vmatpush.bf16.msra.mxu0 0
      %2075 = vmatpush.bf16.msra.mxu0 0
      %2076 = vmatpush.bf16.msra.mxu0 %v1999
      %2077 = vmatmul.bf16.gmra.mxu0 %v1981
      %v2078 = vpop.f32.mrf.mxu0
      %v2079 = vadd.f32 0.0, %v2078
      %v2080 = vpop.f32.mrf.mxu0
      %2081 = vdwg.mxu0
      %2082 = vmatpush.bf16.msra.mxu0 0
      %2083 = vmatpush.bf16.msra.mxu0 0
      %2084 = vmatpush.bf16.msra.mxu0 0
      %2085 = vmatpush.bf16.msra.mxu0 0
      %2086 = vmatpush.bf16.msra.mxu0 0
      %2087 = vmatpush.bf16.msra.mxu0 0
      %2088 = vmatpush.bf16.msra.mxu0 0
      %2089 = vmatpush.bf16.msra.mxu0 %v2002
      %2090 = vmatmul.bf16.gmra.mxu0 %v1981
      %v2091 = vpop.f32.mrf.mxu0
      %v2092 = vadd.f32 0.0, %v2091
      %v2093 = vpop.f32.mrf.mxu0
      %2094 = vdwg.mxu0
      %v2095 = vadd.f32 %v1924, %v2014
      %v2096 = vadd.f32 %v1925, %v2027
      %v2097 = vadd.f32 %v1926, %v2040
      %v2098 = vadd.f32 %v1927, %v2053
      %v2099 = vadd.f32 %v1928, %v2066
      %v2100 = vadd.f32 %v1929, %v2079
      %v2101 = vadd.f32 %v1930, %v2092
      %v2102 = vld [vmem:[%s1] sm:$0x7]
      %v2104 = vunpack.c.l.b16 %v2102
      %v2105 = vpack.c.b16 %v2104, %v2104
      %2106 = vrot.lane.b32.xlu0 %v2105, 98
      %v2107 = vpop.permute.xlu0 %2106
      %2108 = vst [vmem:[#allocation1] ss:$4 sm:$0xff] %v442
      %s2109 = scalar_lea.vmem [#allocation1], 32
      %2110 = vst [vmem:[%s2109] ss:$4 sm:$0xff] %v443
      %v2111 = vld.sshfl [vmem:[#allocation1] sm:$0xff pattern:$0x73625140]
      %v2113 = vld.sshfl [vmem:[#allocation1 + $0x8] sm:$0xff pattern:$0x73625140]
      %v2115 = vld.sshfl [vmem:[#allocation1 + $0x10] sm:$0xff pattern:$0x73625140]
      %v2117 = vld.sshfl [vmem:[#allocation1 + $0x18] sm:$0xff pattern:$0x73625140]
      %v2119 = vld.sshfl [vmem:[#allocation1 + $0x20] sm:$0xff pattern:$0x73625140]
      %v2121 = vld.sshfl [vmem:[#allocation1 + $0x28] sm:$0xff pattern:$0x73625140]
      %v2123 = vld.sshfl [vmem:[#allocation1 + $0x30] sm:$0xff pattern:$0x73625140]
      %v2125 = vld.sshfl [vmem:[#allocation1 + $0x38] sm:$0xff pattern:$0x73625140]
      %2127 = vrot.lane.b32.xlu0 %v2111, 64
      %v2128 = vpop.permute.xlu0 %2127
      %2129 = vrot.lane.b32.xlu0 %v2113, 64
      %v2130 = vpop.permute.xlu0 %2129
      %2131 = vrot.lane.b32.xlu0 %v2115, 64
      %v2132 = vpop.permute.xlu0 %2131
      %2133 = vrot.lane.b32.xlu0 %v2117, 64
      %v2134 = vpop.permute.xlu0 %2133
      %2135 = vrot.lane.b32.xlu0 %v2119, 64
      %v2136 = vpop.permute.xlu0 %2135
      %2137 = vrot.lane.b32.xlu0 %v2121, 64
      %v2138 = vpop.permute.xlu0 %2137
      %2139 = vrot.lane.b32.xlu0 %v2123, 64
      %v2140 = vpop.permute.xlu0 %2139
      %2141 = vrot.lane.b32.xlu0 %v2125, 64
      %v2142 = vpop.permute.xlu0 %2141
      %vm2143 = vcmask 523264
      %v2144 = vsel %vm2143, %v2128, %v2130
      %v2145 = vsel %vm2143, %v2130, %v2132
      %v2146 = vsel %vm2143, %v2132, %v2134
      %v2147 = vsel %vm2143, %v2134, %v2136
      %v2148 = vsel %vm2143, %v2136, %v2138
      %v2149 = vsel %vm2143, %v2138, %v2140
      %v2150 = vsel %vm2143, %v2140, %v2142
      %v2152 = vsel %vm496, %v2107, 0
      %v2155 = vand.u32 %v2144, %v503
      %v2158 = vand.u32 %v2145, %v503
      %v2161 = vand.u32 %v2146, %v503
      %v2164 = vand.u32 %v2147, %v503
      %v2167 = vand.u32 %v2148, %v503
      %v2170 = vand.u32 %v2149, %v503
      %v2173 = vand.u32 %v2150, %v503
      %2175 = vmatpush.bf16.msra.mxu0 0
      %2176 = vmatpush.bf16.msra.mxu0 0
      %2177 = vmatpush.bf16.msra.mxu0 0
      %2178 = vmatpush.bf16.msra.mxu0 0
      %2179 = vmatpush.bf16.msra.mxu0 0
      %2180 = vmatpush.bf16.msra.mxu0 0
      %2181 = vmatpush.bf16.msra.mxu0 0
      %2182 = vmatpush.bf16.msra.mxu0 %v2155
      %2183 = vmatmul.bf16.gmra.mxu0 %v2152
      %v2184 = vpop.f32.mrf.mxu0
      %v2185 = vadd.f32 0.0, %v2184
      %v2186 = vpop.f32.mrf.mxu0
      %2187 = vdwg.mxu0
      %2188 = vmatpush.bf16.msra.mxu0 0
      %2189 = vmatpush.bf16.msra.mxu0 0
      %2190 = vmatpush.bf16.msra.mxu0 0
      %2191 = vmatpush.bf16.msra.mxu0 0
      %2192 = vmatpush.bf16.msra.mxu0 0
      %2193 = vmatpush.bf16.msra.mxu0 0
      %2194 = vmatpush.bf16.msra.mxu0 0
      %2195 = vmatpush.bf16.msra.mxu0 %v2158
      %2196 = vmatmul.bf16.gmra.mxu0 %v2152
      %v2197 = vpop.f32.mrf.mxu0
      %v2198 = vadd.f32 0.0, %v2197
      %v2199 = vpop.f32.mrf.mxu0
      %2200 = vdwg.mxu0
      %2201 = vmatpush.bf16.msra.mxu0 0
      %2202 = vmatpush.bf16.msra.mxu0 0
      %2203 = vmatpush.bf16.msra.mxu0 0
      %2204 = vmatpush.bf16.msra.mxu0 0
      %2205 = vmatpush.bf16.msra.mxu0 0
      %2206 = vmatpush.bf16.msra.mxu0 0
      %2207 = vmatpush.bf16.msra.mxu0 0
      %2208 = vmatpush.bf16.msra.mxu0 %v2161
      %2209 = vmatmul.bf16.gmra.mxu0 %v2152
      %v2210 = vpop.f32.mrf.mxu0
      %v2211 = vadd.f32 0.0, %v2210
      %v2212 = vpop.f32.mrf.mxu0
      %2213 = vdwg.mxu0
      %2214 = vmatpush.bf16.msra.mxu0 0
      %2215 = vmatpush.bf16.msra.mxu0 0
      %2216 = vmatpush.bf16.msra.mxu0 0
      %2217 = vmatpush.bf16.msra.mxu0 0
      %2218 = vmatpush.bf16.msra.mxu0 0
      %2219 = vmatpush.bf16.msra.mxu0 0
      %2220 = vmatpush.bf16.msra.mxu0 0
      %2221 = vmatpush.bf16.msra.mxu0 %v2164
      %2222 = vmatmul.bf16.gmra.mxu0 %v2152
      %v2223 = vpop.f32.mrf.mxu0
      %v2224 = vadd.f32 0.0, %v2223
      %v2225 = vpop.f32.mrf.mxu0
      %2226 = vdwg.mxu0
      %2227 = vmatpush.bf16.msra.mxu0 0
      %2228 = vmatpush.bf16.msra.mxu0 0
      %2229 = vmatpush.bf16.msra.mxu0 0
      %2230 = vmatpush.bf16.msra.mxu0 0
      %2231 = vmatpush.bf16.msra.mxu0 0
      %2232 = vmatpush.bf16.msra.mxu0 0
      %2233 = vmatpush.bf16.msra.mxu0 0
      %2234 = vmatpush.bf16.msra.mxu0 %v2167
      %2235 = vmatmul.bf16.gmra.mxu0 %v2152
      %v2236 = vpop.f32.mrf.mxu0
      %v2237 = vadd.f32 0.0, %v2236
      %v2238 = vpop.f32.mrf.mxu0
      %2239 = vdwg.mxu0
      %2240 = vmatpush.bf16.msra.mxu0 0
      %2241 = vmatpush.bf16.msra.mxu0 0
      %2242 = vmatpush.bf16.msra.mxu0 0
      %2243 = vmatpush.bf16.msra.mxu0 0
      %2244 = vmatpush.bf16.msra.mxu0 0
      %2245 = vmatpush.bf16.msra.mxu0 0
      %2246 = vmatpush.bf16.msra.mxu0 0
      %2247 = vmatpush.bf16.msra.mxu0 %v2170
      %2248 = vmatmul.bf16.gmra.mxu0 %v2152
      %v2249 = vpop.f32.mrf.mxu0
      %v2250 = vadd.f32 0.0, %v2249
      %v2251 = vpop.f32.mrf.mxu0
      %2252 = vdwg.mxu0
      %2253 = vmatpush.bf16.msra.mxu0 0
      %2254 = vmatpush.bf16.msra.mxu0 0
      %2255 = vmatpush.bf16.msra.mxu0 0
      %2256 = vmatpush.bf16.msra.mxu0 0
      %2257 = vmatpush.bf16.msra.mxu0 0
      %2258 = vmatpush.bf16.msra.mxu0 0
      %2259 = vmatpush.bf16.msra.mxu0 0
      %2260 = vmatpush.bf16.msra.mxu0 %v2173
      %2261 = vmatmul.bf16.gmra.mxu0 %v2152
      %v2262 = vpop.f32.mrf.mxu0
      %v2263 = vadd.f32 0.0, %v2262
      %v2264 = vpop.f32.mrf.mxu0
      %2265 = vdwg.mxu0
      %v2266 = vadd.f32 %v2095, %v2185
      %v2267 = vadd.f32 %v2096, %v2198
      %v2268 = vadd.f32 %v2097, %v2211
      %v2269 = vadd.f32 %v2098, %v2224
      %v2270 = vadd.f32 %v2099, %v2237
      %v2271 = vadd.f32 %v2100, %v2250
      %v2272 = vadd.f32 %v2101, %v2263
      %v2273 = vld [vmem:[%s1] sm:$0x7]
      %v2275 = vunpack.c.l.b16 %v2273
      %v2276 = vpack.c.b16 %v2275, %v2275
      %2277 = vrot.lane.b32.xlu0 %v2276, 95
      %v2278 = vpop.permute.xlu0 %2277
      %2279 = vst [vmem:[#allocation1] ss:$4 sm:$0xff] %v442
      %s2280 = scalar_lea.vmem [#allocation1], 32
      %2281 = vst [vmem:[%s2280] ss:$4 sm:$0xff] %v443
      %v2282 = vld.sshfl [vmem:[#allocation1] sm:$0xff pattern:$0x73625140]
      %v2284 = vld.sshfl [vmem:[#allocation1 + $0x8] sm:$0xff pattern:$0x73625140]
      %v2286 = vld.sshfl [vmem:[#allocation1 + $0x10] sm:$0xff pattern:$0x73625140]
      %v2288 = vld.sshfl [vmem:[#allocation1 + $0x18] sm:$0xff pattern:$0x73625140]
      %v2290 = vld.sshfl [vmem:[#allocation1 + $0x20] sm:$0xff pattern:$0x73625140]
      %v2292 = vld.sshfl [vmem:[#allocation1 + $0x28] sm:$0xff pattern:$0x73625140]
      %v2294 = vld.sshfl [vmem:[#allocation1 + $0x30] sm:$0xff pattern:$0x73625140]
      %v2296 = vld.sshfl [vmem:[#allocation1 + $0x38] sm:$0xff pattern:$0x73625140]
      %2298 = vrot.lane.b32.xlu0 %v2282, 63
      %v2299 = vpop.permute.xlu0 %2298
      %2300 = vrot.lane.b32.xlu0 %v2284, 63
      %v2301 = vpop.permute.xlu0 %2300
      %2302 = vrot.lane.b32.xlu0 %v2286, 63
      %v2303 = vpop.permute.xlu0 %2302
      %2304 = vrot.lane.b32.xlu0 %v2288, 63
      %v2305 = vpop.permute.xlu0 %2304
      %2306 = vrot.lane.b32.xlu0 %v2290, 63
      %v2307 = vpop.permute.xlu0 %2306
      %2308 = vrot.lane.b32.xlu0 %v2292, 63
      %v2309 = vpop.permute.xlu0 %2308
      %2310 = vrot.lane.b32.xlu0 %v2294, 63
      %v2311 = vpop.permute.xlu0 %2310
      %2312 = vrot.lane.b32.xlu0 %v2296, 63
      %v2313 = vpop.permute.xlu0 %2312
      %vm2314 = vcmask 515072
      %v2315 = vsel %vm2314, %v2299, %v2301
      %v2316 = vsel %vm2314, %v2301, %v2303
      %v2317 = vsel %vm2314, %v2303, %v2305
      %v2318 = vsel %vm2314, %v2305, %v2307
      %v2319 = vsel %vm2314, %v2307, %v2309
      %v2320 = vsel %vm2314, %v2309, %v2311
      %v2321 = vsel %vm2314, %v2311, %v2313
      %v2323 = vsel %vm496, %v2278, 0
      %v2326 = vand.u32 %v2315, %v503
      %v2329 = vand.u32 %v2316, %v503
      %v2332 = vand.u32 %v2317, %v503
      %v2335 = vand.u32 %v2318, %v503
      %v2338 = vand.u32 %v2319, %v503
      %v2341 = vand.u32 %v2320, %v503
      %v2344 = vand.u32 %v2321, %v503
      %2346 = vmatpush.bf16.msra.mxu0 0
      %2347 = vmatpush.bf16.msra.mxu0 0
      %2348 = vmatpush.bf16.msra.mxu0 0
      %2349 = vmatpush.bf16.msra.mxu0 0
      %2350 = vmatpush.bf16.msra.mxu0 0
      %2351 = vmatpush.bf16.msra.mxu0 0
      %2352 = vmatpush.bf16.msra.mxu0 0
      %2353 = vmatpush.bf16.msra.mxu0 %v2326
      %2354 = vmatmul.bf16.gmra.mxu0 %v2323
      %v2355 = vpop.f32.mrf.mxu0
      %v2356 = vadd.f32 0.0, %v2355
      %v2357 = vpop.f32.mrf.mxu0
      %2358 = vdwg.mxu0
      %2359 = vmatpush.bf16.msra.mxu0 0
      %2360 = vmatpush.bf16.msra.mxu0 0
      %2361 = vmatpush.bf16.msra.mxu0 0
      %2362 = vmatpush.bf16.msra.mxu0 0
      %2363 = vmatpush.bf16.msra.mxu0 0
      %2364 = vmatpush.bf16.msra.mxu0 0
      %2365 = vmatpush.bf16.msra.mxu0 0
      %2366 = vmatpush.bf16.msra.mxu0 %v2329
      %2367 = vmatmul.bf16.gmra.mxu0 %v2323
      %v2368 = vpop.f32.mrf.mxu0
      %v2369 = vadd.f32 0.0, %v2368
      %v2370 = vpop.f32.mrf.mxu0
      %2371 = vdwg.mxu0
      %2372 = vmatpush.bf16.msra.mxu0 0
      %2373 = vmatpush.bf16.msra.mxu0 0
      %2374 = vmatpush.bf16.msra.mxu0 0
      %2375 = vmatpush.bf16.msra.mxu0 0
      %2376 = vmatpush.bf16.msra.mxu0 0
      %2377 = vmatpush.bf16.msra.mxu0 0
      %2378 = vmatpush.bf16.msra.mxu0 0
      %2379 = vmatpush.bf16.msra.mxu0 %v2332
      %2380 = vmatmul.bf16.gmra.mxu0 %v2323
      %v2381 = vpop.f32.mrf.mxu0
      %v2382 = vadd.f32 0.0, %v2381
      %v2383 = vpop.f32.mrf.mxu0
      %2384 = vdwg.mxu0
      %2385 = vmatpush.bf16.msra.mxu0 0
      %2386 = vmatpush.bf16.msra.mxu0 0
      %2387 = vmatpush.bf16.msra.mxu0 0
      %2388 = vmatpush.bf16.msra.mxu0 0
      %2389 = vmatpush.bf16.msra.mxu0 0
      %2390 = vmatpush.bf16.msra.mxu0 0
      %2391 = vmatpush.bf16.msra.mxu0 0
      %2392 = vmatpush.bf16.msra.mxu0 %v2335
      %2393 = vmatmul.bf16.gmra.mxu0 %v2323
      %v2394 = vpop.f32.mrf.mxu0
      %v2395 = vadd.f32 0.0, %v2394
      %v2396 = vpop.f32.mrf.mxu0
      %2397 = vdwg.mxu0
      %2398 = vmatpush.bf16.msra.mxu0 0
      %2399 = vmatpush.bf16.msra.mxu0 0
      %2400 = vmatpush.bf16.msra.mxu0 0
      %2401 = vmatpush.bf16.msra.mxu0 0
      %2402 = vmatpush.bf16.msra.mxu0 0
      %2403 = vmatpush.bf16.msra.mxu0 0
      %2404 = vmatpush.bf16.msra.mxu0 0
      %2405 = vmatpush.bf16.msra.mxu0 %v2338
      %2406 = vmatmul.bf16.gmra.mxu0 %v2323
      %v2407 = vpop.f32.mrf.mxu0
      %v2408 = vadd.f32 0.0, %v2407
      %v2409 = vpop.f32.mrf.mxu0
      %2410 = vdwg.mxu0
      %2411 = vmatpush.bf16.msra.mxu0 0
      %2412 = vmatpush.bf16.msra.mxu0 0
      %2413 = vmatpush.bf16.msra.mxu0 0
      %2414 = vmatpush.bf16.msra.mxu0 0
      %2415 = vmatpush.bf16.msra.mxu0 0
      %2416 = vmatpush.bf16.msra.mxu0 0
      %2417 = vmatpush.bf16.msra.mxu0 0
      %2418 = vmatpush.bf16.msra.mxu0 %v2341
      %2419 = vmatmul.bf16.gmra.mxu0 %v2323
      %v2420 = vpop.f32.mrf.mxu0
      %v2421 = vadd.f32 0.0, %v2420
      %v2422 = vpop.f32.mrf.mxu0
      %2423 = vdwg.mxu0
      %2424 = vmatpush.bf16.msra.mxu0 0
      %2425 = vmatpush.bf16.msra.mxu0 0
      %2426 = vmatpush.bf16.msra.mxu0 0
      %2427 = vmatpush.bf16.msra.mxu0 0
      %2428 = vmatpush.bf16.msra.mxu0 0
      %2429 = vmatpush.bf16.msra.mxu0 0
      %2430 = vmatpush.bf16.msra.mxu0 0
      %2431 = vmatpush.bf16.msra.mxu0 %v2344
      %2432 = vmatmul.bf16.gmra.mxu0 %v2323
      %v2433 = vpop.f32.mrf.mxu0
      %v2434 = vadd.f32 0.0, %v2433
      %v2435 = vpop.f32.mrf.mxu0
      %2436 = vdwg.mxu0
      %v2437 = vadd.f32 %v2266, %v2356
      %v2438 = vadd.f32 %v2267, %v2369
      %v2439 = vadd.f32 %v2268, %v2382
      %v2440 = vadd.f32 %v2269, %v2395
      %v2441 = vadd.f32 %v2270, %v2408
      %v2442 = vadd.f32 %v2271, %v2421
      %v2443 = vadd.f32 %v2272, %v2434
      %v2444 = vld [vmem:[%s1] sm:$0x7]
      %v2446 = vunpack.c.l.b16 %v2444
      %v2447 = vpack.c.b16 %v2446, %v2446
      %2448 = vrot.lane.b32.xlu0 %v2447, 92
      %v2449 = vpop.permute.xlu0 %2448
      %2450 = vst [vmem:[#allocation1] ss:$4 sm:$0xff] %v442
      %s2451 = scalar_lea.vmem [#allocation1], 32
      %2452 = vst [vmem:[%s2451] ss:$4 sm:$0xff] %v443
      %v2453 = vld.sshfl [vmem:[#allocation1] sm:$0xff pattern:$0x73625140]
      %v2455 = vld.sshfl [vmem:[#allocation1 + $0x8] sm:$0xff pattern:$0x73625140]
      %v2457 = vld.sshfl [vmem:[#allocation1 + $0x10] sm:$0xff pattern:$0x73625140]
      %v2459 = vld.sshfl [vmem:[#allocation1 + $0x18] sm:$0xff pattern:$0x73625140]
      %v2461 = vld.sshfl [vmem:[#allocation1 + $0x20] sm:$0xff pattern:$0x73625140]
      %v2463 = vld.sshfl [vmem:[#allocation1 + $0x28] sm:$0xff pattern:$0x73625140]
      %v2465 = vld.sshfl [vmem:[#allocation1 + $0x30] sm:$0xff pattern:$0x73625140]
      %v2467 = vld.sshfl [vmem:[#allocation1 + $0x38] sm:$0xff pattern:$0x73625140]
      %2469 = vrot.lane.b32.xlu0 %v2453, 62
      %v2470 = vpop.permute.xlu0 %2469
      %2471 = vrot.lane.b32.xlu0 %v2455, 62
      %v2472 = vpop.permute.xlu0 %2471
      %2473 = vrot.lane.b32.xlu0 %v2457, 62
      %v2474 = vpop.permute.xlu0 %2473
      %2475 = vrot.lane.b32.xlu0 %v2459, 62
      %v2476 = vpop.permute.xlu0 %2475
      %2477 = vrot.lane.b32.xlu0 %v2461, 62
      %v2478 = vpop.permute.xlu0 %2477
      %2479 = vrot.lane.b32.xlu0 %v2463, 62
      %v2480 = vpop.permute.xlu0 %2479
      %2481 = vrot.lane.b32.xlu0 %v2465, 62
      %v2482 = vpop.permute.xlu0 %2481
      %2483 = vrot.lane.b32.xlu0 %v2467, 62
      %v2484 = vpop.permute.xlu0 %2483
      %vm2485 = vcmask 506880
      %v2486 = vsel %vm2485, %v2470, %v2472
      %v2487 = vsel %vm2485, %v2472, %v2474
      %v2488 = vsel %vm2485, %v2474, %v2476
      %v2489 = vsel %vm2485, %v2476, %v2478
      %v2490 = vsel %vm2485, %v2478, %v2480
      %v2491 = vsel %vm2485, %v2480, %v2482
      %v2492 = vsel %vm2485, %v2482, %v2484
      %v2494 = vsel %vm496, %v2449, 0
      %v2497 = vand.u32 %v2486, %v503
      %v2500 = vand.u32 %v2487, %v503
      %v2503 = vand.u32 %v2488, %v503
      %v2506 = vand.u32 %v2489, %v503
      %v2509 = vand.u32 %v2490, %v503
      %v2512 = vand.u32 %v2491, %v503
      %v2515 = vand.u32 %v2492, %v503
      %2517 = vmatpush.bf16.msra.mxu0 0
      %2518 = vmatpush.bf16.msra.mxu0 0
      %2519 = vmatpush.bf16.msra.mxu0 0
      %2520 = vmatpush.bf16.msra.mxu0 0
      %2521 = vmatpush.bf16.msra.mxu0 0
      %2522 = vmatpush.bf16.msra.mxu0 0
      %2523 = vmatpush.bf16.msra.mxu0 0
      %2524 = vmatpush.bf16.msra.mxu0 %v2497
      %2525 = vmatmul.bf16.gmra.mxu0 %v2494
      %v2526 = vpop.f32.mrf.mxu0
      %v2527 = vadd.f32 0.0, %v2526
      %v2528 = vpop.f32.mrf.mxu0
      %2529 = vdwg.mxu0
      %2530 = vmatpush.bf16.msra.mxu0 0
      %2531 = vmatpush.bf16.msra.mxu0 0
      %2532 = vmatpush.bf16.msra.mxu0 0
      %2533 = vmatpush.bf16.msra.mxu0 0
      %2534 = vmatpush.bf16.msra.mxu0 0
      %2535 = vmatpush.bf16.msra.mxu0 0
      %2536 = vmatpush.bf16.msra.mxu0 0
      %2537 = vmatpush.bf16.msra.mxu0 %v2500
      %2538 = vmatmul.bf16.gmra.mxu0 %v2494
      %v2539 = vpop.f32.mrf.mxu0
      %v2540 = vadd.f32 0.0, %v2539
      %v2541 = vpop.f32.mrf.mxu0
      %2542 = vdwg.mxu0
      %2543 = vmatpush.bf16.msra.mxu0 0
      %2544 = vmatpush.bf16.msra.mxu0 0
      %2545 = vmatpush.bf16.msra.mxu0 0
      %2546 = vmatpush.bf16.msra.mxu0 0
      %2547 = vmatpush.bf16.msra.mxu0 0
      %2548 = vmatpush.bf16.msra.mxu0 0
      %2549 = vmatpush.bf16.msra.mxu0 0
      %2550 = vmatpush.bf16.msra.mxu0 %v2503
      %2551 = vmatmul.bf16.gmra.mxu0 %v2494
      %v2552 = vpop.f32.mrf.mxu0
      %v2553 = vadd.f32 0.0, %v2552
      %v2554 = vpop.f32.mrf.mxu0
      %2555 = vdwg.mxu0
      %2556 = vmatpush.bf16.msra.mxu0 0
      %2557 = vmatpush.bf16.msra.mxu0 0
      %2558 = vmatpush.bf16.msra.mxu0 0
      %2559 = vmatpush.bf16.msra.mxu0 0
      %2560 = vmatpush.bf16.msra.mxu0 0
      %2561 = vmatpush.bf16.msra.mxu0 0
      %2562 = vmatpush.bf16.msra.mxu0 0
      %2563 = vmatpush.bf16.msra.mxu0 %v2506
      %2564 = vmatmul.bf16.gmra.mxu0 %v2494
      %v2565 = vpop.f32.mrf.mxu0
      %v2566 = vadd.f32 0.0, %v2565
      %v2567 = vpop.f32.mrf.mxu0
      %2568 = vdwg.mxu0
      %2569 = vmatpush.bf16.msra.mxu0 0
      %2570 = vmatpush.bf16.msra.mxu0 0
      %2571 = vmatpush.bf16.msra.mxu0 0
      %2572 = vmatpush.bf16.msra.mxu0 0
      %2573 = vmatpush.bf16.msra.mxu0 0
      %2574 = vmatpush.bf16.msra.mxu0 0
      %2575 = vmatpush.bf16.msra.mxu0 0
      %2576 = vmatpush.bf16.msra.mxu0 %v2509
      %2577 = vmatmul.bf16.gmra.mxu0 %v2494
      %v2578 = vpop.f32.mrf.mxu0
      %v2579 = vadd.f32 0.0, %v2578
      %v2580 = vpop.f32.mrf.mxu0
      %2581 = vdwg.mxu0
      %2582 = vmatpush.bf16.msra.mxu0 0
      %2583 = vmatpush.bf16.msra.mxu0 0
      %2584 = vmatpush.bf16.msra.mxu0 0
      %2585 = vmatpush.bf16.msra.mxu0 0
      %2586 = vmatpush.bf16.msra.mxu0 0
      %2587 = vmatpush.bf16.msra.mxu0 0
      %2588 = vmatpush.bf16.msra.mxu0 0
      %2589 = vmatpush.bf16.msra.mxu0 %v2512
      %2590 = vmatmul.bf16.gmra.mxu0 %v2494
      %v2591 = vpop.f32.mrf.mxu0
      %v2592 = vadd.f32 0.0, %v2591
      %v2593 = vpop.f32.mrf.mxu0
      %2594 = vdwg.mxu0
      %2595 = vmatpush.bf16.msra.mxu0 0
      %2596 = vmatpush.bf16.msra.mxu0 0
      %2597 = vmatpush.bf16.msra.mxu0 0
      %2598 = vmatpush.bf16.msra.mxu0 0
      %2599 = vmatpush.bf16.msra.mxu0 0
      %2600 = vmatpush.bf16.msra.mxu0 0
      %2601 = vmatpush.bf16.msra.mxu0 0
      %2602 = vmatpush.bf16.msra.mxu0 %v2515
      %2603 = vmatmul.bf16.gmra.mxu0 %v2494
      %v2604 = vpop.f32.mrf.mxu0
      %v2605 = vadd.f32 0.0, %v2604
      %v2606 = vpop.f32.mrf.mxu0
      %2607 = vdwg.mxu0
      %v2608 = vadd.f32 %v2437, %v2527
      %v2609 = vadd.f32 %v2438, %v2540
      %v2610 = vadd.f32 %v2439, %v2553
      %v2611 = vadd.f32 %v2440, %v2566
      %v2612 = vadd.f32 %v2441, %v2579
      %v2613 = vadd.f32 %v2442, %v2592
      %v2614 = vadd.f32 %v2443, %v2605
      %v2615 = vld [vmem:[%s1] sm:$0x7]
      %v2617 = vunpack.c.l.b16 %v2615
      %v2618 = vpack.c.b16 %v2617, %v2617
      %2619 = vrot.lane.b32.xlu0 %v2618, 89
      %v2620 = vpop.permute.xlu0 %2619
      %2621 = vst [vmem:[#allocation1] ss:$4 sm:$0xff] %v442
      %s2622 = scalar_lea.vmem [#allocation1], 32
      %2623 = vst [vmem:[%s2622] ss:$4 sm:$0xff] %v443
      %v2624 = vld.sshfl [vmem:[#allocation1] sm:$0xff pattern:$0x73625140]
      %v2626 = vld.sshfl [vmem:[#allocation1 + $0x8] sm:$0xff pattern:$0x73625140]
      %v2628 = vld.sshfl [vmem:[#allocation1 + $0x10] sm:$0xff pattern:$0x73625140]
      %v2630 = vld.sshfl [vmem:[#allocation1 + $0x18] sm:$0xff pattern:$0x73625140]
      %v2632 = vld.sshfl [vmem:[#allocation1 + $0x20] sm:$0xff pattern:$0x73625140]
      %v2634 = vld.sshfl [vmem:[#allocation1 + $0x28] sm:$0xff pattern:$0x73625140]
      %v2636 = vld.sshfl [vmem:[#allocation1 + $0x30] sm:$0xff pattern:$0x73625140]
      %v2638 = vld.sshfl [vmem:[#allocation1 + $0x38] sm:$0xff pattern:$0x73625140]
      %2640 = vrot.lane.b32.xlu0 %v2624, 61
      %v2641 = vpop.permute.xlu0 %2640
      %2642 = vrot.lane.b32.xlu0 %v2626, 61
      %v2643 = vpop.permute.xlu0 %2642
      %2644 = vrot.lane.b32.xlu0 %v2628, 61
      %v2645 = vpop.permute.xlu0 %2644
      %2646 = vrot.lane.b32.xlu0 %v2630, 61
      %v2647 = vpop.permute.xlu0 %2646
      %2648 = vrot.lane.b32.xlu0 %v2632, 61
      %v2649 = vpop.permute.xlu0 %2648
      %2650 = vrot.lane.b32.xlu0 %v2634, 61
      %v2651 = vpop.permute.xlu0 %2650
      %2652 = vrot.lane.b32.xlu0 %v2636, 61
      %v2653 = vpop.permute.xlu0 %2652
      %2654 = vrot.lane.b32.xlu0 %v2638, 61
      %v2655 = vpop.permute.xlu0 %2654
      %vm2656 = vcmask 498688
      %v2657 = vsel %vm2656, %v2641, %v2643
      %v2658 = vsel %vm2656, %v2643, %v2645
      %v2659 = vsel %vm2656, %v2645, %v2647
      %v2660 = vsel %vm2656, %v2647, %v2649
      %v2661 = vsel %vm2656, %v2649, %v2651
      %v2662 = vsel %vm2656, %v2651, %v2653
      %v2663 = vsel %vm2656, %v2653, %v2655
      %v2665 = vsel %vm496, %v2620, 0
      %v2668 = vand.u32 %v2657, %v503
      %v2671 = vand.u32 %v2658, %v503
      %v2674 = vand.u32 %v2659, %v503
      %v2677 = vand.u32 %v2660, %v503
      %v2680 = vand.u32 %v2661, %v503
      %v2683 = vand.u32 %v2662, %v503
      %v2686 = vand.u32 %v2663, %v503
      %2688 = vmatpush.bf16.msra.mxu0 0
      %2689 = vmatpush.bf16.msra.mxu0 0
      %2690 = vmatpush.bf16.msra.mxu0 0
      %2691 = vmatpush.bf16.msra.mxu0 0
      %2692 = vmatpush.bf16.msra.mxu0 0
      %2693 = vmatpush.bf16.msra.mxu0 0
      %2694 = vmatpush.bf16.msra.mxu0 0
      %2695 = vmatpush.bf16.msra.mxu0 %v2668
      %2696 = vmatmul.bf16.gmra.mxu0 %v2665
      %v2697 = vpop.f32.mrf.mxu0
      %v2698 = vadd.f32 0.0, %v2697
      %v2699 = vpop.f32.mrf.mxu0
      %2700 = vdwg.mxu0
      %2701 = vmatpush.bf16.msra.mxu0 0
      %2702 = vmatpush.bf16.msra.mxu0 0
      %2703 = vmatpush.bf16.msra.mxu0 0
      %2704 = vmatpush.bf16.msra.mxu0 0
      %2705 = vmatpush.bf16.msra.mxu0 0
      %2706 = vmatpush.bf16.msra.mxu0 0
      %2707 = vmatpush.bf16.msra.mxu0 0
      %2708 = vmatpush.bf16.msra.mxu0 %v2671
      %2709 = vmatmul.bf16.gmra.mxu0 %v2665
      %v2710 = vpop.f32.mrf.mxu0
      %v2711 = vadd.f32 0.0, %v2710
      %v2712 = vpop.f32.mrf.mxu0
      %2713 = vdwg.mxu0
      %2714 = vmatpush.bf16.msra.mxu0 0
      %2715 = vmatpush.bf16.msra.mxu0 0
      %2716 = vmatpush.bf16.msra.mxu0 0
      %2717 = vmatpush.bf16.msra.mxu0 0
      %2718 = vmatpush.bf16.msra.mxu0 0
      %2719 = vmatpush.bf16.msra.mxu0 0
      %2720 = vmatpush.bf16.msra.mxu0 0
      %2721 = vmatpush.bf16.msra.mxu0 %v2674
      %2722 = vmatmul.bf16.gmra.mxu0 %v2665
      %v2723 = vpop.f32.mrf.mxu0
      %v2724 = vadd.f32 0.0, %v2723
      %v2725 = vpop.f32.mrf.mxu0
      %2726 = vdwg.mxu0
      %2727 = vmatpush.bf16.msra.mxu0 0
      %2728 = vmatpush.bf16.msra.mxu0 0
      %2729 = vmatpush.bf16.msra.mxu0 0
      %2730 = vmatpush.bf16.msra.mxu0 0
      %2731 = vmatpush.bf16.msra.mxu0 0
      %2732 = vmatpush.bf16.msra.mxu0 0
      %2733 = vmatpush.bf16.msra.mxu0 0
      %2734 = vmatpush.bf16.msra.mxu0 %v2677
      %2735 = vmatmul.bf16.gmra.mxu0 %v2665
      %v2736 = vpop.f32.mrf.mxu0
      %v2737 = vadd.f32 0.0, %v2736
      %v2738 = vpop.f32.mrf.mxu0
      %2739 = vdwg.mxu0
      %2740 = vmatpush.bf16.msra.mxu0 0
      %2741 = vmatpush.bf16.msra.mxu0 0
      %2742 = vmatpush.bf16.msra.mxu0 0
      %2743 = vmatpush.bf16.msra.mxu0 0
      %2744 = vmatpush.bf16.msra.mxu0 0
      %2745 = vmatpush.bf16.msra.mxu0 0
      %2746 = vmatpush.bf16.msra.mxu0 0
      %2747 = vmatpush.bf16.msra.mxu0 %v2680
      %2748 = vmatmul.bf16.gmra.mxu0 %v2665
      %v2749 = vpop.f32.mrf.mxu0
      %v2750 = vadd.f32 0.0, %v2749
      %v2751 = vpop.f32.mrf.mxu0
      %2752 = vdwg.mxu0
      %2753 = vmatpush.bf16.msra.mxu0 0
      %2754 = vmatpush.bf16.msra.mxu0 0
      %2755 = vmatpush.bf16.msra.mxu0 0
      %2756 = vmatpush.bf16.msra.mxu0 0
      %2757 = vmatpush.bf16.msra.mxu0 0
      %2758 = vmatpush.bf16.msra.mxu0 0
      %2759 = vmatpush.bf16.msra.mxu0 0
      %2760 = vmatpush.bf16.msra.mxu0 %v2683
      %2761 = vmatmul.bf16.gmra.mxu0 %v2665
      %v2762 = vpop.f32.mrf.mxu0
      %v2763 = vadd.f32 0.0, %v2762
      %v2764 = vpop.f32.mrf.mxu0
      %2765 = vdwg.mxu0
      %2766 = vmatpush.bf16.msra.mxu0 0
      %2767 = vmatpush.bf16.msra.mxu0 0
      %2768 = vmatpush.bf16.msra.mxu0 0
      %2769 = vmatpush.bf16.msra.mxu0 0
      %2770 = vmatpush.bf16.msra.mxu0 0
      %2771 = vmatpush.bf16.msra.mxu0 0
      %2772 = vmatpush.bf16.msra.mxu0 0
      %2773 = vmatpush.bf16.msra.mxu0 %v2686
      %2774 = vmatmul.bf16.gmra.mxu0 %v2665
      %v2775 = vpop.f32.mrf.mxu0
      %v2776 = vadd.f32 0.0, %v2775
      %v2777 = vpop.f32.mrf.mxu0
      %2778 = vdwg.mxu0
      %v2779 = vadd.f32 %v2608, %v2698
      %v2780 = vadd.f32 %v2609, %v2711
      %v2781 = vadd.f32 %v2610, %v2724
      %v2782 = vadd.f32 %v2611, %v2737
      %v2783 = vadd.f32 %v2612, %v2750
      %v2784 = vadd.f32 %v2613, %v2763
      %v2785 = vadd.f32 %v2614, %v2776
      %v2786 = vld [vmem:[%s1] sm:$0x7]
      %v2788 = vunpack.c.l.b16 %v2786
      %v2789 = vpack.c.b16 %v2788, %v2788
      %2790 = vrot.lane.b32.xlu0 %v2789, 86
      %v2791 = vpop.permute.xlu0 %2790
      %2792 = vst [vmem:[#allocation1] ss:$4 sm:$0xff] %v442
      %s2793 = scalar_lea.vmem [#allocation1], 32
      %2794 = vst [vmem:[%s2793] ss:$4 sm:$0xff] %v443
      %v2795 = vld.sshfl [vmem:[#allocation1] sm:$0xff pattern:$0x73625140]
      %v2797 = vld.sshfl [vmem:[#allocation1 + $0x8] sm:$0xff pattern:$0x73625140]
      %v2799 = vld.sshfl [vmem:[#allocation1 + $0x10] sm:$0xff pattern:$0x73625140]
      %v2801 = vld.sshfl [vmem:[#allocation1 + $0x18] sm:$0xff pattern:$0x73625140]
      %v2803 = vld.sshfl [vmem:[#allocation1 + $0x20] sm:$0xff pattern:$0x73625140]
      %v2805 = vld.sshfl [vmem:[#allocation1 + $0x28] sm:$0xff pattern:$0x73625140]
      %v2807 = vld.sshfl [vmem:[#allocation1 + $0x30] sm:$0xff pattern:$0x73625140]
      %v2809 = vld.sshfl [vmem:[#allocation1 + $0x38] sm:$0xff pattern:$0x73625140]
      %2811 = vrot.lane.b32.xlu0 %v2795, 60
      %v2812 = vpop.permute.xlu0 %2811
      %2813 = vrot.lane.b32.xlu0 %v2797, 60
      %v2814 = vpop.permute.xlu0 %2813
      %2815 = vrot.lane.b32.xlu0 %v2799, 60
      %v2816 = vpop.permute.xlu0 %2815
      %2817 = vrot.lane.b32.xlu0 %v2801, 60
      %v2818 = vpop.permute.xlu0 %2817
      %2819 = vrot.lane.b32.xlu0 %v2803, 60
      %v2820 = vpop.permute.xlu0 %2819
      %2821 = vrot.lane.b32.xlu0 %v2805, 60
      %v2822 = vpop.permute.xlu0 %2821
      %2823 = vrot.lane.b32.xlu0 %v2807, 60
      %v2824 = vpop.permute.xlu0 %2823
      %2825 = vrot.lane.b32.xlu0 %v2809, 60
      %v2826 = vpop.permute.xlu0 %2825
      %vm2827 = vcmask 490496
      %v2828 = vsel %vm2827, %v2812, %v2814
      %v2829 = vsel %vm2827, %v2814, %v2816
      %v2830 = vsel %vm2827, %v2816, %v2818
      %v2831 = vsel %vm2827, %v2818, %v2820
      %v2832 = vsel %vm2827, %v2820, %v2822
      %v2833 = vsel %vm2827, %v2822, %v2824
      %v2834 = vsel %vm2827, %v2824, %v2826
      %v2836 = vsel %vm496, %v2791, 0
      %v2839 = vand.u32 %v2828, %v503
      %v2842 = vand.u32 %v2829, %v503
      %v2845 = vand.u32 %v2830, %v503
      %v2848 = vand.u32 %v2831, %v503
      %v2851 = vand.u32 %v2832, %v503
      %v2854 = vand.u32 %v2833, %v503
      %v2857 = vand.u32 %v2834, %v503
      %2859 = vmatpush.bf16.msra.mxu0 0
      %2860 = vmatpush.bf16.msra.mxu0 0
      %2861 = vmatpush.bf16.msra.mxu0 0
      %2862 = vmatpush.bf16.msra.mxu0 0
      %2863 = vmatpush.bf16.msra.mxu0 0
      %2864 = vmatpush.bf16.msra.mxu0 0
      %2865 = vmatpush.bf16.msra.mxu0 0
      %2866 = vmatpush.bf16.msra.mxu0 %v2839
      %2867 = vmatmul.bf16.gmra.mxu0 %v2836
      %v2868 = vpop.f32.mrf.mxu0
      %v2869 = vadd.f32 0.0, %v2868
      %v2870 = vpop.f32.mrf.mxu0
      %2871 = vdwg.mxu0
      %2872 = vmatpush.bf16.msra.mxu0 0
      %2873 = vmatpush.bf16.msra.mxu0 0
      %2874 = vmatpush.bf16.msra.mxu0 0
      %2875 = vmatpush.bf16.msra.mxu0 0
      %2876 = vmatpush.bf16.msra.mxu0 0
      %2877 = vmatpush.bf16.msra.mxu0 0
      %2878 = vmatpush.bf16.msra.mxu0 0
      %2879 = vmatpush.bf16.msra.mxu0 %v2842
      %2880 = vmatmul.bf16.gmra.mxu0 %v2836
      %v2881 = vpop.f32.mrf.mxu0
      %v2882 = vadd.f32 0.0, %v2881
      %v2883 = vpop.f32.mrf.mxu0
      %2884 = vdwg.mxu0
      %2885 = vmatpush.bf16.msra.mxu0 0
      %2886 = vmatpush.bf16.msra.mxu0 0
      %2887 = vmatpush.bf16.msra.mxu0 0
      %2888 = vmatpush.bf16.msra.mxu0 0
      %2889 = vmatpush.bf16.msra.mxu0 0
      %2890 = vmatpush.bf16.msra.mxu0 0
      %2891 = vmatpush.bf16.msra.mxu0 0
      %2892 = vmatpush.bf16.msra.mxu0 %v2845
      %2893 = vmatmul.bf16.gmra.mxu0 %v2836
      %v2894 = vpop.f32.mrf.mxu0
      %v2895 = vadd.f32 0.0, %v2894
      %v2896 = vpop.f32.mrf.mxu0
      %2897 = vdwg.mxu0
      %2898 = vmatpush.bf16.msra.mxu0 0
      %2899 = vmatpush.bf16.msra.mxu0 0
      %2900 = vmatpush.bf16.msra.mxu0 0
      %2901 = vmatpush.bf16.msra.mxu0 0
      %2902 = vmatpush.bf16.msra.mxu0 0
      %2903 = vmatpush.bf16.msra.mxu0 0
      %2904 = vmatpush.bf16.msra.mxu0 0
      %2905 = vmatpush.bf16.msra.mxu0 %v2848
      %2906 = vmatmul.bf16.gmra.mxu0 %v2836
      %v2907 = vpop.f32.mrf.mxu0
      %v2908 = vadd.f32 0.0, %v2907
      %v2909 = vpop.f32.mrf.mxu0
      %2910 = vdwg.mxu0
      %2911 = vmatpush.bf16.msra.mxu0 0
      %2912 = vmatpush.bf16.msra.mxu0 0
      %2913 = vmatpush.bf16.msra.mxu0 0
      %2914 = vmatpush.bf16.msra.mxu0 0
      %2915 = vmatpush.bf16.msra.mxu0 0
      %2916 = vmatpush.bf16.msra.mxu0 0
      %2917 = vmatpush.bf16.msra.mxu0 0
      %2918 = vmatpush.bf16.msra.mxu0 %v2851
      %2919 = vmatmul.bf16.gmra.mxu0 %v2836
      %v2920 = vpop.f32.mrf.mxu0
      %v2921 = vadd.f32 0.0, %v2920
      %v2922 = vpop.f32.mrf.mxu0
      %2923 = vdwg.mxu0
      %2924 = vmatpush.bf16.msra.mxu0 0
      %2925 = vmatpush.bf16.msra.mxu0 0
      %2926 = vmatpush.bf16.msra.mxu0 0
      %2927 = vmatpush.bf16.msra.mxu0 0
      %2928 = vmatpush.bf16.msra.mxu0 0
      %2929 = vmatpush.bf16.msra.mxu0 0
      %2930 = vmatpush.bf16.msra.mxu0 0
      %2931 = vmatpush.bf16.msra.mxu0 %v2854
      %2932 = vmatmul.bf16.gmra.mxu0 %v2836
      %v2933 = vpop.f32.mrf.mxu0
      %v2934 = vadd.f32 0.0, %v2933
      %v2935 = vpop.f32.mrf.mxu0
      %2936 = vdwg.mxu0
      %2937 = vmatpush.bf16.msra.mxu0 0
      %2938 = vmatpush.bf16.msra.mxu0 0
      %2939 = vmatpush.bf16.msra.mxu0 0
      %2940 = vmatpush.bf16.msra.mxu0 0
      %2941 = vmatpush.bf16.msra.mxu0 0
      %2942 = vmatpush.bf16.msra.mxu0 0
      %2943 = vmatpush.bf16.msra.mxu0 0
      %2944 = vmatpush.bf16.msra.mxu0 %v2857
      %2945 = vmatmul.bf16.gmra.mxu0 %v2836
      %v2946 = vpop.f32.mrf.mxu0
      %v2947 = vadd.f32 0.0, %v2946
      %v2948 = vpop.f32.mrf.mxu0
      %2949 = vdwg.mxu0
      %v2950 = vadd.f32 %v2779, %v2869
      %v2951 = vadd.f32 %v2780, %v2882
      %v2952 = vadd.f32 %v2781, %v2895
      %v2953 = vadd.f32 %v2782, %v2908
      %v2954 = vadd.f32 %v2783, %v2921
      %v2955 = vadd.f32 %v2784, %v2934
      %v2956 = vadd.f32 %v2785, %v2947
      %v2957 = vld [vmem:[%s1] sm:$0x7]
      %v2959 = vunpack.c.l.b16 %v2957
      %v2960 = vpack.c.b16 %v2959, %v2959
      %2961 = vrot.lane.b32.xlu0 %v2960, 83
      %v2962 = vpop.permute.xlu0 %2961
      %2963 = vst [vmem:[#allocation1] ss:$4 sm:$0xff] %v442
      %s2964 = scalar_lea.vmem [#allocation1], 32
      %2965 = vst [vmem:[%s2964] ss:$4 sm:$0xff] %v443
      %v2966 = vld.sshfl [vmem:[#allocation1] sm:$0xff pattern:$0x73625140]
      %v2968 = vld.sshfl [vmem:[#allocation1 + $0x8] sm:$0xff pattern:$0x73625140]
      %v2970 = vld.sshfl [vmem:[#allocation1 + $0x10] sm:$0xff pattern:$0x73625140]
      %v2972 = vld.sshfl [vmem:[#allocation1 + $0x18] sm:$0xff pattern:$0x73625140]
      %v2974 = vld.sshfl [vmem:[#allocation1 + $0x20] sm:$0xff pattern:$0x73625140]
      %v2976 = vld.sshfl [vmem:[#allocation1 + $0x28] sm:$0xff pattern:$0x73625140]
      %v2978 = vld.sshfl [vmem:[#allocation1 + $0x30] sm:$0xff pattern:$0x73625140]
      %v2980 = vld.sshfl [vmem:[#allocation1 + $0x38] sm:$0xff pattern:$0x73625140]
      %2982 = vrot.lane.b32.xlu0 %v2966, 32
      %v2983 = vpop.permute.xlu0 %2982
      %2984 = vrot.lane.b32.xlu0 %v2968, 32
      %v2985 = vpop.permute.xlu0 %2984
      %2986 = vrot.lane.b32.xlu0 %v2970, 32
      %v2987 = vpop.permute.xlu0 %2986
      %2988 = vrot.lane.b32.xlu0 %v2972, 32
      %v2989 = vpop.permute.xlu0 %2988
      %2990 = vrot.lane.b32.xlu0 %v2974, 32
      %v2991 = vpop.permute.xlu0 %2990
      %2992 = vrot.lane.b32.xlu0 %v2976, 32
      %v2993 = vpop.permute.xlu0 %2992
      %2994 = vrot.lane.b32.xlu0 %v2978, 32
      %v2995 = vpop.permute.xlu0 %2994
      %2996 = vrot.lane.b32.xlu0 %v2980, 32
      %v2997 = vpop.permute.xlu0 %2996
      %vm2998 = vcmask 261120
      %v2999 = vsel %vm2998, %v2983, %v2985
      %v3000 = vsel %vm2998, %v2985, %v2987
      %v3001 = vsel %vm2998, %v2987, %v2989
      %v3002 = vsel %vm2998, %v2989, %v2991
      %v3003 = vsel %vm2998, %v2991, %v2993
      %v3004 = vsel %vm2998, %v2993, %v2995
      %v3005 = vsel %vm2998, %v2995, %v2997
      %v3007 = vsel %vm496, %v2962, 0
      %v3010 = vand.u32 %v2999, %v503
      %v3013 = vand.u32 %v3000, %v503
      %v3016 = vand.u32 %v3001, %v503
      %v3019 = vand.u32 %v3002, %v503
      %v3022 = vand.u32 %v3003, %v503
      %v3025 = vand.u32 %v3004, %v503
      %v3028 = vand.u32 %v3005, %v503
      %3030 = vmatpush.bf16.msra.mxu0 0
      %3031 = vmatpush.bf16.msra.mxu0 0
      %3032 = vmatpush.bf16.msra.mxu0 0
      %3033 = vmatpush.bf16.msra.mxu0 0
      %3034 = vmatpush.bf16.msra.mxu0 0
      %3035 = vmatpush.bf16.msra.mxu0 0
      %3036 = vmatpush.bf16.msra.mxu0 0
      %3037 = vmatpush.bf16.msra.mxu0 %v3010
      %3038 = vmatmul.bf16.gmra.mxu0 %v3007
      %v3039 = vpop.f32.mrf.mxu0
      %v3040 = vadd.f32 0.0, %v3039
      %v3041 = vpop.f32.mrf.mxu0
      %3042 = vdwg.mxu0
      %3043 = vmatpush.bf16.msra.mxu0 0
      %3044 = vmatpush.bf16.msra.mxu0 0
      %3045 = vmatpush.bf16.msra.mxu0 0
      %3046 = vmatpush.bf16.msra.mxu0 0
      %3047 = vmatpush.bf16.msra.mxu0 0
      %3048 = vmatpush.bf16.msra.mxu0 0
      %3049 = vmatpush.bf16.msra.mxu0 0
      %3050 = vmatpush.bf16.msra.mxu0 %v3013
      %3051 = vmatmul.bf16.gmra.mxu0 %v3007
      %v3052 = vpop.f32.mrf.mxu0
      %v3053 = vadd.f32 0.0, %v3052
      %v3054 = vpop.f32.mrf.mxu0
      %3055 = vdwg.mxu0
      %3056 = vmatpush.bf16.msra.mxu0 0
      %3057 = vmatpush.bf16.msra.mxu0 0
      %3058 = vmatpush.bf16.msra.mxu0 0
      %3059 = vmatpush.bf16.msra.mxu0 0
      %3060 = vmatpush.bf16.msra.mxu0 0
      %3061 = vmatpush.bf16.msra.mxu0 0
      %3062 = vmatpush.bf16.msra.mxu0 0
      %3063 = vmatpush.bf16.msra.mxu0 %v3016
      %3064 = vmatmul.bf16.gmra.mxu0 %v3007
      %v3065 = vpop.f32.mrf.mxu0
      %v3066 = vadd.f32 0.0, %v3065
      %v3067 = vpop.f32.mrf.mxu0
      %3068 = vdwg.mxu0
      %3069 = vmatpush.bf16.msra.mxu0 0
      %3070 = vmatpush.bf16.msra.mxu0 0
      %3071 = vmatpush.bf16.msra.mxu0 0
      %3072 = vmatpush.bf16.msra.mxu0 0
      %3073 = vmatpush.bf16.msra.mxu0 0
      %3074 = vmatpush.bf16.msra.mxu0 0
      %3075 = vmatpush.bf16.msra.mxu0 0
      %3076 = vmatpush.bf16.msra.mxu0 %v3019
      %3077 = vmatmul.bf16.gmra.mxu0 %v3007
      %v3078 = vpop.f32.mrf.mxu0
      %v3079 = vadd.f32 0.0, %v3078
      %v3080 = vpop.f32.mrf.mxu0
      %3081 = vdwg.mxu0
      %3082 = vmatpush.bf16.msra.mxu0 0
      %3083 = vmatpush.bf16.msra.mxu0 0
      %3084 = vmatpush.bf16.msra.mxu0 0
      %3085 = vmatpush.bf16.msra.mxu0 0
      %3086 = vmatpush.bf16.msra.mxu0 0
      %3087 = vmatpush.bf16.msra.mxu0 0
      %3088 = vmatpush.bf16.msra.mxu0 0
      %3089 = vmatpush.bf16.msra.mxu0 %v3022
      %3090 = vmatmul.bf16.gmra.mxu0 %v3007
      %v3091 = vpop.f32.mrf.mxu0
      %v3092 = vadd.f32 0.0, %v3091
      %v3093 = vpop.f32.mrf.mxu0
      %3094 = vdwg.mxu0
      %3095 = vmatpush.bf16.msra.mxu0 0
      %3096 = vmatpush.bf16.msra.mxu0 0
      %3097 = vmatpush.bf16.msra.mxu0 0
      %3098 = vmatpush.bf16.msra.mxu0 0
      %3099 = vmatpush.bf16.msra.mxu0 0
      %3100 = vmatpush.bf16.msra.mxu0 0
      %3101 = vmatpush.bf16.msra.mxu0 0
      %3102 = vmatpush.bf16.msra.mxu0 %v3025
      %3103 = vmatmul.bf16.gmra.mxu0 %v3007
      %v3104 = vpop.f32.mrf.mxu0
      %v3105 = vadd.f32 0.0, %v3104
      %v3106 = vpop.f32.mrf.mxu0
      %3107 = vdwg.mxu0
      %3108 = vmatpush.bf16.msra.mxu0 0
      %3109 = vmatpush.bf16.msra.mxu0 0
      %3110 = vmatpush.bf16.msra.mxu0 0
      %3111 = vmatpush.bf16.msra.mxu0 0
      %3112 = vmatpush.bf16.msra.mxu0 0
      %3113 = vmatpush.bf16.msra.mxu0 0
      %3114 = vmatpush.bf16.msra.mxu0 0
      %3115 = vmatpush.bf16.msra.mxu0 %v3028
      %3116 = vmatmul.bf16.gmra.mxu0 %v3007
      %v3117 = vpop.f32.mrf.mxu0
      %v3118 = vadd.f32 0.0, %v3117
      %v3119 = vpop.f32.mrf.mxu0
      %3120 = vdwg.mxu0
      %v3121 = vadd.f32 %v2950, %v3040
      %v3122 = vadd.f32 %v2951, %v3053
      %v3123 = vadd.f32 %v2952, %v3066
      %v3124 = vadd.f32 %v2953, %v3079
      %v3125 = vadd.f32 %v2954, %v3092
      %v3126 = vadd.f32 %v2955, %v3105
      %v3127 = vadd.f32 %v2956, %v3118
      %v3128 = vld [vmem:[%s1] sm:$0x7]
      %v3130 = vunpack.c.l.b16 %v3128
      %v3131 = vpack.c.b16 %v3130, %v3130
      %3132 = vrot.lane.b32.xlu0 %v3131, 80
      %v3133 = vpop.permute.xlu0 %3132
      %3134 = vst [vmem:[#allocation1] ss:$4 sm:$0xff] %v442
      %s3135 = scalar_lea.vmem [#allocation1], 32
      %3136 = vst [vmem:[%s3135] ss:$4 sm:$0xff] %v443
      %v3137 = vld.sshfl [vmem:[#allocation1] sm:$0xff pattern:$0x73625140]
      %v3139 = vld.sshfl [vmem:[#allocation1 + $0x8] sm:$0xff pattern:$0x73625140]
      %v3141 = vld.sshfl [vmem:[#allocation1 + $0x10] sm:$0xff pattern:$0x73625140]
      %v3143 = vld.sshfl [vmem:[#allocation1 + $0x18] sm:$0xff pattern:$0x73625140]
      %v3145 = vld.sshfl [vmem:[#allocation1 + $0x20] sm:$0xff pattern:$0x73625140]
      %v3147 = vld.sshfl [vmem:[#allocation1 + $0x28] sm:$0xff pattern:$0x73625140]
      %v3149 = vld.sshfl [vmem:[#allocation1 + $0x30] sm:$0xff pattern:$0x73625140]
      %v3151 = vld.sshfl [vmem:[#allocation1 + $0x38] sm:$0xff pattern:$0x73625140]
      %3153 = vrot.lane.b32.xlu0 %v3137, 31
      %v3154 = vpop.permute.xlu0 %3153
      %3155 = vrot.lane.b32.xlu0 %v3139, 31
      %v3156 = vpop.permute.xlu0 %3155
      %3157 = vrot.lane.b32.xlu0 %v3141, 31
      %v3158 = vpop.permute.xlu0 %3157
      %3159 = vrot.lane.b32.xlu0 %v3143, 31
      %v3160 = vpop.permute.xlu0 %3159
      %3161 = vrot.lane.b32.xlu0 %v3145, 31
      %v3162 = vpop.permute.xlu0 %3161
      %3163 = vrot.lane.b32.xlu0 %v3147, 31
      %v3164 = vpop.permute.xlu0 %3163
      %3165 = vrot.lane.b32.xlu0 %v3149, 31
      %v3166 = vpop.permute.xlu0 %3165
      %3167 = vrot.lane.b32.xlu0 %v3151, 31
      %v3168 = vpop.permute.xlu0 %3167
      %vm3169 = vcmask 252928
      %v3170 = vsel %vm3169, %v3154, %v3156
      %v3171 = vsel %vm3169, %v3156, %v3158
      %v3172 = vsel %vm3169, %v3158, %v3160
      %v3173 = vsel %vm3169, %v3160, %v3162
      %v3174 = vsel %vm3169, %v3162, %v3164
      %v3175 = vsel %vm3169, %v3164, %v3166
      %v3176 = vsel %vm3169, %v3166, %v3168
      %v3178 = vsel %vm496, %v3133, 0
      %v3181 = vand.u32 %v3170, %v503
      %v3184 = vand.u32 %v3171, %v503
      %v3187 = vand.u32 %v3172, %v503
      %v3190 = vand.u32 %v3173, %v503
      %v3193 = vand.u32 %v3174, %v503
      %v3196 = vand.u32 %v3175, %v503
      %v3199 = vand.u32 %v3176, %v503
      %3201 = vmatpush.bf16.msra.mxu0 0
      %3202 = vmatpush.bf16.msra.mxu0 0
      %3203 = vmatpush.bf16.msra.mxu0 0
      %3204 = vmatpush.bf16.msra.mxu0 0
      %3205 = vmatpush.bf16.msra.mxu0 0
      %3206 = vmatpush.bf16.msra.mxu0 0
      %3207 = vmatpush.bf16.msra.mxu0 0
      %3208 = vmatpush.bf16.msra.mxu0 %v3181
      %3209 = vmatmul.bf16.gmra.mxu0 %v3178
      %v3210 = vpop.f32.mrf.mxu0
      %v3211 = vadd.f32 0.0, %v3210
      %v3212 = vpop.f32.mrf.mxu0
      %3213 = vdwg.mxu0
      %3214 = vmatpush.bf16.msra.mxu0 0
      %3215 = vmatpush.bf16.msra.mxu0 0
      %3216 = vmatpush.bf16.msra.mxu0 0
      %3217 = vmatpush.bf16.msra.mxu0 0
      %3218 = vmatpush.bf16.msra.mxu0 0
      %3219 = vmatpush.bf16.msra.mxu0 0
      %3220 = vmatpush.bf16.msra.mxu0 0
      %3221 = vmatpush.bf16.msra.mxu0 %v3184
      %3222 = vmatmul.bf16.gmra.mxu0 %v3178
      %v3223 = vpop.f32.mrf.mxu0
      %v3224 = vadd.f32 0.0, %v3223
      %v3225 = vpop.f32.mrf.mxu0
      %3226 = vdwg.mxu0
      %3227 = vmatpush.bf16.msra.mxu0 0
      %3228 = vmatpush.bf16.msra.mxu0 0
      %3229 = vmatpush.bf16.msra.mxu0 0
      %3230 = vmatpush.bf16.msra.mxu0 0
      %3231 = vmatpush.bf16.msra.mxu0 0
      %3232 = vmatpush.bf16.msra.mxu0 0
      %3233 = vmatpush.bf16.msra.mxu0 0
      %3234 = vmatpush.bf16.msra.mxu0 %v3187
      %3235 = vmatmul.bf16.gmra.mxu0 %v3178
      %v3236 = vpop.f32.mrf.mxu0
      %v3237 = vadd.f32 0.0, %v3236
      %v3238 = vpop.f32.mrf.mxu0
      %3239 = vdwg.mxu0
      %3240 = vmatpush.bf16.msra.mxu0 0
      %3241 = vmatpush.bf16.msra.mxu0 0
      %3242 = vmatpush.bf16.msra.mxu0 0
      %3243 = vmatpush.bf16.msra.mxu0 0
      %3244 = vmatpush.bf16.msra.mxu0 0
      %3245 = vmatpush.bf16.msra.mxu0 0
      %3246 = vmatpush.bf16.msra.mxu0 0
      %3247 = vmatpush.bf16.msra.mxu0 %v3190
      %3248 = vmatmul.bf16.gmra.mxu0 %v3178
      %v3249 = vpop.f32.mrf.mxu0
      %v3250 = vadd.f32 0.0, %v3249
      %v3251 = vpop.f32.mrf.mxu0
      %3252 = vdwg.mxu0
      %3253 = vmatpush.bf16.msra.mxu0 0
      %3254 = vmatpush.bf16.msra.mxu0 0
      %3255 = vmatpush.bf16.msra.mxu0 0
      %3256 = vmatpush.bf16.msra.mxu0 0
      %3257 = vmatpush.bf16.msra.mxu0 0
      %3258 = vmatpush.bf16.msra.mxu0 0
      %3259 = vmatpush.bf16.msra.mxu0 0
      %3260 = vmatpush.bf16.msra.mxu0 %v3193
      %3261 = vmatmul.bf16.gmra.mxu0 %v3178
      %v3262 = vpop.f32.mrf.mxu0
      %v3263 = vadd.f32 0.0, %v3262
      %v3264 = vpop.f32.mrf.mxu0
      %3265 = vdwg.mxu0
      %3266 = vmatpush.bf16.msra.mxu0 0
      %3267 = vmatpush.bf16.msra.mxu0 0
      %3268 = vmatpush.bf16.msra.mxu0 0
      %3269 = vmatpush.bf16.msra.mxu0 0
      %3270 = vmatpush.bf16.msra.mxu0 0
      %3271 = vmatpush.bf16.msra.mxu0 0
      %3272 = vmatpush.bf16.msra.mxu0 0
      %3273 = vmatpush.bf16.msra.mxu0 %v3196
      %3274 = vmatmul.bf16.gmra.mxu0 %v3178
      %v3275 = vpop.f32.mrf.mxu0
      %v3276 = vadd.f32 0.0, %v3275
      %v3277 = vpop.f32.mrf.mxu0
      %3278 = vdwg.mxu0
      %3279 = vmatpush.bf16.msra.mxu0 0
      %3280 = vmatpush.bf16.msra.mxu0 0
      %3281 = vmatpush.bf16.msra.mxu0 0
      %3282 = vmatpush.bf16.msra.mxu0 0
      %3283 = vmatpush.bf16.msra.mxu0 0
      %3284 = vmatpush.bf16.msra.mxu0 0
      %3285 = vmatpush.bf16.msra.mxu0 0
      %3286 = vmatpush.bf16.msra.mxu0 %v3199
      %3287 = vmatmul.bf16.gmra.mxu0 %v3178
      %v3288 = vpop.f32.mrf.mxu0
      %v3289 = vadd.f32 0.0, %v3288
      %v3290 = vpop.f32.mrf.mxu0
      %3291 = vdwg.mxu0
      %v3292 = vadd.f32 %v3121, %v3211
      %v3293 = vadd.f32 %v3122, %v3224
      %v3294 = vadd.f32 %v3123, %v3237
      %v3295 = vadd.f32 %v3124, %v3250
      %v3296 = vadd.f32 %v3125, %v3263
      %v3297 = vadd.f32 %v3126, %v3276
      %v3298 = vadd.f32 %v3127, %v3289
      %v3299 = vld [vmem:[%s1] sm:$0x7]
      %v3301 = vunpack.c.l.b16 %v3299
      %v3302 = vpack.c.b16 %v3301, %v3301
      %3303 = vrot.lane.b32.xlu0 %v3302, 77
      %v3304 = vpop.permute.xlu0 %3303
      %3305 = vst [vmem:[#allocation1] ss:$4 sm:$0xff] %v442
      %s3306 = scalar_lea.vmem [#allocation1], 32
      %3307 = vst [vmem:[%s3306] ss:$4 sm:$0xff] %v443
      %v3308 = vld.sshfl [vmem:[#allocation1] sm:$0xff pattern:$0x73625140]
      %v3310 = vld.sshfl [vmem:[#allocation1 + $0x8] sm:$0xff pattern:$0x73625140]
      %v3312 = vld.sshfl [vmem:[#allocation1 + $0x10] sm:$0xff pattern:$0x73625140]
      %v3314 = vld.sshfl [vmem:[#allocation1 + $0x18] sm:$0xff pattern:$0x73625140]
      %v3316 = vld.sshfl [vmem:[#allocation1 + $0x20] sm:$0xff pattern:$0x73625140]
      %v3318 = vld.sshfl [vmem:[#allocation1 + $0x28] sm:$0xff pattern:$0x73625140]
      %v3320 = vld.sshfl [vmem:[#allocation1 + $0x30] sm:$0xff pattern:$0x73625140]
      %v3322 = vld.sshfl [vmem:[#allocation1 + $0x38] sm:$0xff pattern:$0x73625140]
      %3324 = vrot.lane.b32.xlu0 %v3308, 30
      %v3325 = vpop.permute.xlu0 %3324
      %3326 = vrot.lane.b32.xlu0 %v3310, 30
      %v3327 = vpop.permute.xlu0 %3326
      %3328 = vrot.lane.b32.xlu0 %v3312, 30
      %v3329 = vpop.permute.xlu0 %3328
      %3330 = vrot.lane.b32.xlu0 %v3314, 30
      %v3331 = vpop.permute.xlu0 %3330
      %3332 = vrot.lane.b32.xlu0 %v3316, 30
      %v3333 = vpop.permute.xlu0 %3332
      %3334 = vrot.lane.b32.xlu0 %v3318, 30
      %v3335 = vpop.permute.xlu0 %3334
      %3336 = vrot.lane.b32.xlu0 %v3320, 30
      %v3337 = vpop.permute.xlu0 %3336
      %3338 = vrot.lane.b32.xlu0 %v3322, 30
      %v3339 = vpop.permute.xlu0 %3338
      %vm3340 = vcmask 244736
      %v3341 = vsel %vm3340, %v3325, %v3327
      %v3342 = vsel %vm3340, %v3327, %v3329
      %v3343 = vsel %vm3340, %v3329, %v3331
      %v3344 = vsel %vm3340, %v3331, %v3333
      %v3345 = vsel %vm3340, %v3333, %v3335
      %v3346 = vsel %vm3340, %v3335, %v3337
      %v3347 = vsel %vm3340, %v3337, %v3339
      %v3349 = vsel %vm496, %v3304, 0
      %v3352 = vand.u32 %v3341, %v503
      %v3355 = vand.u32 %v3342, %v503
      %v3358 = vand.u32 %v3343, %v503
      %v3361 = vand.u32 %v3344, %v503
      %v3364 = vand.u32 %v3345, %v503
      %v3367 = vand.u32 %v3346, %v503
      %v3370 = vand.u32 %v3347, %v503
      %3372 = vmatpush.bf16.msra.mxu0 0
      %3373 = vmatpush.bf16.msra.mxu0 0
      %3374 = vmatpush.bf16.msra.mxu0 0
      %3375 = vmatpush.bf16.msra.mxu0 0
      %3376 = vmatpush.bf16.msra.mxu0 0
      %3377 = vmatpush.bf16.msra.mxu0 0
      %3378 = vmatpush.bf16.msra.mxu0 0
      %3379 = vmatpush.bf16.msra.mxu0 %v3352
      %3380 = vmatmul.bf16.gmra.mxu0 %v3349
      %v3381 = vpop.f32.mrf.mxu0
      %v3382 = vadd.f32 0.0, %v3381
      %v3383 = vpop.f32.mrf.mxu0
      %3384 = vdwg.mxu0
      %3385 = vmatpush.bf16.msra.mxu0 0
      %3386 = vmatpush.bf16.msra.mxu0 0
      %3387 = vmatpush.bf16.msra.mxu0 0
      %3388 = vmatpush.bf16.msra.mxu0 0
      %3389 = vmatpush.bf16.msra.mxu0 0
      %3390 = vmatpush.bf16.msra.mxu0 0
      %3391 = vmatpush.bf16.msra.mxu0 0
      %3392 = vmatpush.bf16.msra.mxu0 %v3355
      %3393 = vmatmul.bf16.gmra.mxu0 %v3349
      %v3394 = vpop.f32.mrf.mxu0
      %v3395 = vadd.f32 0.0, %v3394
      %v3396 = vpop.f32.mrf.mxu0
      %3397 = vdwg.mxu0
      %3398 = vmatpush.bf16.msra.mxu0 0
      %3399 = vmatpush.bf16.msra.mxu0 0
      %3400 = vmatpush.bf16.msra.mxu0 0
      %3401 = vmatpush.bf16.msra.mxu0 0
      %3402 = vmatpush.bf16.msra.mxu0 0
      %3403 = vmatpush.bf16.msra.mxu0 0
      %3404 = vmatpush.bf16.msra.mxu0 0
      %3405 = vmatpush.bf16.msra.mxu0 %v3358
      %3406 = vmatmul.bf16.gmra.mxu0 %v3349
      %v3407 = vpop.f32.mrf.mxu0
      %v3408 = vadd.f32 0.0, %v3407
      %v3409 = vpop.f32.mrf.mxu0
      %3410 = vdwg.mxu0
      %3411 = vmatpush.bf16.msra.mxu0 0
      %3412 = vmatpush.bf16.msra.mxu0 0
      %3413 = vmatpush.bf16.msra.mxu0 0
      %3414 = vmatpush.bf16.msra.mxu0 0
      %3415 = vmatpush.bf16.msra.mxu0 0
      %3416 = vmatpush.bf16.msra.mxu0 0
      %3417 = vmatpush.bf16.msra.mxu0 0
      %3418 = vmatpush.bf16.msra.mxu0 %v3361
      %3419 = vmatmul.bf16.gmra.mxu0 %v3349
      %v3420 = vpop.f32.mrf.mxu0
      %v3421 = vadd.f32 0.0, %v3420
      %v3422 = vpop.f32.mrf.mxu0
      %3423 = vdwg.mxu0
      %3424 = vmatpush.bf16.msra.mxu0 0
      %3425 = vmatpush.bf16.msra.mxu0 0
      %3426 = vmatpush.bf16.msra.mxu0 0
      %3427 = vmatpush.bf16.msra.mxu0 0
      %3428 = vmatpush.bf16.msra.mxu0 0
      %3429 = vmatpush.bf16.msra.mxu0 0
      %3430 = vmatpush.bf16.msra.mxu0 0
      %3431 = vmatpush.bf16.msra.mxu0 %v3364
      %3432 = vmatmul.bf16.gmra.mxu0 %v3349
      %v3433 = vpop.f32.mrf.mxu0
      %v3434 = vadd.f32 0.0, %v3433
      %v3435 = vpop.f32.mrf.mxu0
      %3436 = vdwg.mxu0
      %3437 = vmatpush.bf16.msra.mxu0 0
      %3438 = vmatpush.bf16.msra.mxu0 0
      %3439 = vmatpush.bf16.msra.mxu0 0
      %3440 = vmatpush.bf16.msra.mxu0 0
      %3441 = vmatpush.bf16.msra.mxu0 0
      %3442 = vmatpush.bf16.msra.mxu0 0
      %3443 = vmatpush.bf16.msra.mxu0 0
      %3444 = vmatpush.bf16.msra.mxu0 %v3367
      %3445 = vmatmul.bf16.gmra.mxu0 %v3349
      %v3446 = vpop.f32.mrf.mxu0
      %v3447 = vadd.f32 0.0, %v3446
      %v3448 = vpop.f32.mrf.mxu0
      %3449 = vdwg.mxu0
      %3450 = vmatpush.bf16.msra.mxu0 0
      %3451 = vmatpush.bf16.msra.mxu0 0
      %3452 = vmatpush.bf16.msra.mxu0 0
      %3453 = vmatpush.bf16.msra.mxu0 0
      %3454 = vmatpush.bf16.msra.mxu0 0
      %3455 = vmatpush.bf16.msra.mxu0 0
      %3456 = vmatpush.bf16.msra.mxu0 0
      %3457 = vmatpush.bf16.msra.mxu0 %v3370
      %3458 = vmatmul.bf16.gmra.mxu0 %v3349
      %v3459 = vpop.f32.mrf.mxu0
      %v3460 = vadd.f32 0.0, %v3459
      %v3461 = vpop.f32.mrf.mxu0
      %3462 = vdwg.mxu0
      %v3463 = vadd.f32 %v3292, %v3382
      %v3464 = vadd.f32 %v3293, %v3395
      %v3465 = vadd.f32 %v3294, %v3408
      %v3466 = vadd.f32 %v3295, %v3421
      %v3467 = vadd.f32 %v3296, %v3434
      %v3468 = vadd.f32 %v3297, %v3447
      %v3469 = vadd.f32 %v3298, %v3460
      %v3470 = vld [vmem:[%s1] sm:$0x7]
      %v3472 = vunpack.c.l.b16 %v3470
      %v3473 = vpack.c.b16 %v3472, %v3472
      %3474 = vrot.lane.b32.xlu0 %v3473, 74
      %v3475 = vpop.permute.xlu0 %3474
      %3476 = vst [vmem:[#allocation1] ss:$4 sm:$0xff] %v442
      %s3477 = scalar_lea.vmem [#allocation1], 32
      %3478 = vst [vmem:[%s3477] ss:$4 sm:$0xff] %v443
      %v3479 = vld.sshfl [vmem:[#allocation1] sm:$0xff pattern:$0x73625140]
      %v3481 = vld.sshfl [vmem:[#allocation1 + $0x8] sm:$0xff pattern:$0x73625140]
      %v3483 = vld.sshfl [vmem:[#allocation1 + $0x10] sm:$0xff pattern:$0x73625140]
      %v3485 = vld.sshfl [vmem:[#allocation1 + $0x18] sm:$0xff pattern:$0x73625140]
      %v3487 = vld.sshfl [vmem:[#allocation1 + $0x20] sm:$0xff pattern:$0x73625140]
      %v3489 = vld.sshfl [vmem:[#allocation1 + $0x28] sm:$0xff pattern:$0x73625140]
      %v3491 = vld.sshfl [vmem:[#allocation1 + $0x30] sm:$0xff pattern:$0x73625140]
      %v3493 = vld.sshfl [vmem:[#allocation1 + $0x38] sm:$0xff pattern:$0x73625140]
      %3495 = vrot.lane.b32.xlu0 %v3479, 29
      %v3496 = vpop.permute.xlu0 %3495
      %3497 = vrot.lane.b32.xlu0 %v3481, 29
      %v3498 = vpop.permute.xlu0 %3497
      %3499 = vrot.lane.b32.xlu0 %v3483, 29
      %v3500 = vpop.permute.xlu0 %3499
      %3501 = vrot.lane.b32.xlu0 %v3485, 29
      %v3502 = vpop.permute.xlu0 %3501
      %3503 = vrot.lane.b32.xlu0 %v3487, 29
      %v3504 = vpop.permute.xlu0 %3503
      %3505 = vrot.lane.b32.xlu0 %v3489, 29
      %v3506 = vpop.permute.xlu0 %3505
      %3507 = vrot.lane.b32.xlu0 %v3491, 29
      %v3508 = vpop.permute.xlu0 %3507
      %3509 = vrot.lane.b32.xlu0 %v3493, 29
      %v3510 = vpop.permute.xlu0 %3509
      %vm3511 = vcmask 236544
      %v3512 = vsel %vm3511, %v3496, %v3498
      %v3513 = vsel %vm3511, %v3498, %v3500
      %v3514 = vsel %vm3511, %v3500, %v3502
      %v3515 = vsel %vm3511, %v3502, %v3504
      %v3516 = vsel %vm3511, %v3504, %v3506
      %v3517 = vsel %vm3511, %v3506, %v3508
      %v3518 = vsel %vm3511, %v3508, %v3510
      %v3520 = vsel %vm496, %v3475, 0
      %v3523 = vand.u32 %v3512, %v503
      %v3526 = vand.u32 %v3513, %v503
      %v3529 = vand.u32 %v3514, %v503
      %v3532 = vand.u32 %v3515, %v503
      %v3535 = vand.u32 %v3516, %v503
      %v3538 = vand.u32 %v3517, %v503
      %v3541 = vand.u32 %v3518, %v503
      %3543 = vmatpush.bf16.msra.mxu0 0
      %3544 = vmatpush.bf16.msra.mxu0 0
      %3545 = vmatpush.bf16.msra.mxu0 0
      %3546 = vmatpush.bf16.msra.mxu0 0
      %3547 = vmatpush.bf16.msra.mxu0 0
      %3548 = vmatpush.bf16.msra.mxu0 0
      %3549 = vmatpush.bf16.msra.mxu0 0
      %3550 = vmatpush.bf16.msra.mxu0 %v3523
      %3551 = vmatmul.bf16.gmra.mxu0 %v3520
      %v3552 = vpop.f32.mrf.mxu0
      %v3553 = vadd.f32 0.0, %v3552
      %v3554 = vpop.f32.mrf.mxu0
      %3555 = vdwg.mxu0
      %3556 = vmatpush.bf16.msra.mxu0 0
      %3557 = vmatpush.bf16.msra.mxu0 0
      %3558 = vmatpush.bf16.msra.mxu0 0
      %3559 = vmatpush.bf16.msra.mxu0 0
      %3560 = vmatpush.bf16.msra.mxu0 0
      %3561 = vmatpush.bf16.msra.mxu0 0
      %3562 = vmatpush.bf16.msra.mxu0 0
      %3563 = vmatpush.bf16.msra.mxu0 %v3526
      %3564 = vmatmul.bf16.gmra.mxu0 %v3520
      %v3565 = vpop.f32.mrf.mxu0
      %v3566 = vadd.f32 0.0, %v3565
      %v3567 = vpop.f32.mrf.mxu0
      %3568 = vdwg.mxu0
      %3569 = vmatpush.bf16.msra.mxu0 0
      %3570 = vmatpush.bf16.msra.mxu0 0
      %3571 = vmatpush.bf16.msra.mxu0 0
      %3572 = vmatpush.bf16.msra.mxu0 0
      %3573 = vmatpush.bf16.msra.mxu0 0
      %3574 = vmatpush.bf16.msra.mxu0 0
      %3575 = vmatpush.bf16.msra.mxu0 0
      %3576 = vmatpush.bf16.msra.mxu0 %v3529
      %3577 = vmatmul.bf16.gmra.mxu0 %v3520
      %v3578 = vpop.f32.mrf.mxu0
      %v3579 = vadd.f32 0.0, %v3578
      %v3580 = vpop.f32.mrf.mxu0
      %3581 = vdwg.mxu0
      %3582 = vmatpush.bf16.msra.mxu0 0
      %3583 = vmatpush.bf16.msra.mxu0 0
      %3584 = vmatpush.bf16.msra.mxu0 0
      %3585 = vmatpush.bf16.msra.mxu0 0
      %3586 = vmatpush.bf16.msra.mxu0 0
      %3587 = vmatpush.bf16.msra.mxu0 0
      %3588 = vmatpush.bf16.msra.mxu0 0
      %3589 = vmatpush.bf16.msra.mxu0 %v3532
      %3590 = vmatmul.bf16.gmra.mxu0 %v3520
      %v3591 = vpop.f32.mrf.mxu0
      %v3592 = vadd.f32 0.0, %v3591
      %v3593 = vpop.f32.mrf.mxu0
      %3594 = vdwg.mxu0
      %3595 = vmatpush.bf16.msra.mxu0 0
      %3596 = vmatpush.bf16.msra.mxu0 0
      %3597 = vmatpush.bf16.msra.mxu0 0
      %3598 = vmatpush.bf16.msra.mxu0 0
      %3599 = vmatpush.bf16.msra.mxu0 0
      %3600 = vmatpush.bf16.msra.mxu0 0
      %3601 = vmatpush.bf16.msra.mxu0 0
      %3602 = vmatpush.bf16.msra.mxu0 %v3535
      %3603 = vmatmul.bf16.gmra.mxu0 %v3520
      %v3604 = vpop.f32.mrf.mxu0
      %v3605 = vadd.f32 0.0, %v3604
      %v3606 = vpop.f32.mrf.mxu0
      %3607 = vdwg.mxu0
      %3608 = vmatpush.bf16.msra.mxu0 0
      %3609 = vmatpush.bf16.msra.mxu0 0
      %3610 = vmatpush.bf16.msra.mxu0 0
      %3611 = vmatpush.bf16.msra.mxu0 0
      %3612 = vmatpush.bf16.msra.mxu0 0
      %3613 = vmatpush.bf16.msra.mxu0 0
      %3614 = vmatpush.bf16.msra.mxu0 0
      %3615 = vmatpush.bf16.msra.mxu0 %v3538
      %3616 = vmatmul.bf16.gmra.mxu0 %v3520
      %v3617 = vpop.f32.mrf.mxu0
      %v3618 = vadd.f32 0.0, %v3617
      %v3619 = vpop.f32.mrf.mxu0
      %3620 = vdwg.mxu0
      %3621 = vmatpush.bf16.msra.mxu0 0
      %3622 = vmatpush.bf16.msra.mxu0 0
      %3623 = vmatpush.bf16.msra.mxu0 0
      %3624 = vmatpush.bf16.msra.mxu0 0
      %3625 = vmatpush.bf16.msra.mxu0 0
      %3626 = vmatpush.bf16.msra.mxu0 0
      %3627 = vmatpush.bf16.msra.mxu0 0
      %3628 = vmatpush.bf16.msra.mxu0 %v3541
      %3629 = vmatmul.bf16.gmra.mxu0 %v3520
      %v3630 = vpop.f32.mrf.mxu0
      %v3631 = vadd.f32 0.0, %v3630
      %v3632 = vpop.f32.mrf.mxu0
      %3633 = vdwg.mxu0
      %v3634 = vadd.f32 %v3463, %v3553
      %v3635 = vadd.f32 %v3464, %v3566
      %v3636 = vadd.f32 %v3465, %v3579
      %v3637 = vadd.f32 %v3466, %v3592
      %v3638 = vadd.f32 %v3467, %v3605
      %v3639 = vadd.f32 %v3468, %v3618
      %v3640 = vadd.f32 %v3469, %v3631
      %v3641 = vld [vmem:[%s1] sm:$0x7]
      %v3643 = vunpack.c.l.b16 %v3641
      %v3644 = vpack.c.b16 %v3643, %v3643
      %3645 = vrot.lane.b32.xlu0 %v3644, 71
      %v3646 = vpop.permute.xlu0 %3645
      %3647 = vst [vmem:[#allocation1] ss:$4 sm:$0xff] %v442
      %s3648 = scalar_lea.vmem [#allocation1], 32
      %3649 = vst [vmem:[%s3648] ss:$4 sm:$0xff] %v443
      %v3650 = vld.sshfl [vmem:[#allocation1] sm:$0xff pattern:$0x73625140]
      %v3652 = vld.sshfl [vmem:[#allocation1 + $0x8] sm:$0xff pattern:$0x73625140]
      %v3654 = vld.sshfl [vmem:[#allocation1 + $0x10] sm:$0xff pattern:$0x73625140]
      %v3656 = vld.sshfl [vmem:[#allocation1 + $0x18] sm:$0xff pattern:$0x73625140]
      %v3658 = vld.sshfl [vmem:[#allocation1 + $0x20] sm:$0xff pattern:$0x73625140]
      %v3660 = vld.sshfl [vmem:[#allocation1 + $0x28] sm:$0xff pattern:$0x73625140]
      %v3662 = vld.sshfl [vmem:[#allocation1 + $0x30] sm:$0xff pattern:$0x73625140]
      %v3664 = vld.sshfl [vmem:[#allocation1 + $0x38] sm:$0xff pattern:$0x73625140]
      %3666 = vrot.lane.b32.xlu0 %v3650, 28
      %v3667 = vpop.permute.xlu0 %3666
      %3668 = vrot.lane.b32.xlu0 %v3652, 28
      %v3669 = vpop.permute.xlu0 %3668
      %3670 = vrot.lane.b32.xlu0 %v3654, 28
      %v3671 = vpop.permute.xlu0 %3670
      %3672 = vrot.lane.b32.xlu0 %v3656, 28
      %v3673 = vpop.permute.xlu0 %3672
      %3674 = vrot.lane.b32.xlu0 %v3658, 28
      %v3675 = vpop.permute.xlu0 %3674
      %3676 = vrot.lane.b32.xlu0 %v3660, 28
      %v3677 = vpop.permute.xlu0 %3676
      %3678 = vrot.lane.b32.xlu0 %v3662, 28
      %v3679 = vpop.permute.xlu0 %3678
      %3680 = vrot.lane.b32.xlu0 %v3664, 28
      %v3681 = vpop.permute.xlu0 %3680
      %vm3682 = vcmask 228352
      %v3683 = vsel %vm3682, %v3667, %v3669
      %v3684 = vsel %vm3682, %v3669, %v3671
      %v3685 = vsel %vm3682, %v3671, %v3673
      %v3686 = vsel %vm3682, %v3673, %v3675
      %v3687 = vsel %vm3682, %v3675, %v3677
      %v3688 = vsel %vm3682, %v3677, %v3679
      %v3689 = vsel %vm3682, %v3679, %v3681
      %v3691 = vsel %vm496, %v3646, 0
      %v3694 = vand.u32 %v3683, %v503
      %v3697 = vand.u32 %v3684, %v503
      %v3700 = vand.u32 %v3685, %v503
      %v3703 = vand.u32 %v3686, %v503
      %v3706 = vand.u32 %v3687, %v503
      %v3709 = vand.u32 %v3688, %v503
      %v3712 = vand.u32 %v3689, %v503
      %3714 = vmatpush.bf16.msra.mxu0 0
      %3715 = vmatpush.bf16.msra.mxu0 0
      %3716 = vmatpush.bf16.msra.mxu0 0
      %3717 = vmatpush.bf16.msra.mxu0 0
      %3718 = vmatpush.bf16.msra.mxu0 0
      %3719 = vmatpush.bf16.msra.mxu0 0
      %3720 = vmatpush.bf16.msra.mxu0 0
      %3721 = vmatpush.bf16.msra.mxu0 %v3694
      %3722 = vmatmul.bf16.gmra.mxu0 %v3691
      %v3723 = vpop.f32.mrf.mxu0
      %v3724 = vadd.f32 0.0, %v3723
      %v3725 = vpop.f32.mrf.mxu0
      %3726 = vdwg.mxu0
      %3727 = vmatpush.bf16.msra.mxu0 0
      %3728 = vmatpush.bf16.msra.mxu0 0
      %3729 = vmatpush.bf16.msra.mxu0 0
      %3730 = vmatpush.bf16.msra.mxu0 0
      %3731 = vmatpush.bf16.msra.mxu0 0
      %3732 = vmatpush.bf16.msra.mxu0 0
      %3733 = vmatpush.bf16.msra.mxu0 0
      %3734 = vmatpush.bf16.msra.mxu0 %v3697
      %3735 = vmatmul.bf16.gmra.mxu0 %v3691
      %v3736 = vpop.f32.mrf.mxu0
      %v3737 = vadd.f32 0.0, %v3736
      %v3738 = vpop.f32.mrf.mxu0
      %3739 = vdwg.mxu0
      %3740 = vmatpush.bf16.msra.mxu0 0
      %3741 = vmatpush.bf16.msra.mxu0 0
      %3742 = vmatpush.bf16.msra.mxu0 0
      %3743 = vmatpush.bf16.msra.mxu0 0
      %3744 = vmatpush.bf16.msra.mxu0 0
      %3745 = vmatpush.bf16.msra.mxu0 0
      %3746 = vmatpush.bf16.msra.mxu0 0
      %3747 = vmatpush.bf16.msra.mxu0 %v3700
      %3748 = vmatmul.bf16.gmra.mxu0 %v3691
      %v3749 = vpop.f32.mrf.mxu0
      %v3750 = vadd.f32 0.0, %v3749
      %v3751 = vpop.f32.mrf.mxu0
      %3752 = vdwg.mxu0
      %3753 = vmatpush.bf16.msra.mxu0 0
      %3754 = vmatpush.bf16.msra.mxu0 0
      %3755 = vmatpush.bf16.msra.mxu0 0
      %3756 = vmatpush.bf16.msra.mxu0 0
      %3757 = vmatpush.bf16.msra.mxu0 0
      %3758 = vmatpush.bf16.msra.mxu0 0
      %3759 = vmatpush.bf16.msra.mxu0 0
      %3760 = vmatpush.bf16.msra.mxu0 %v3703
      %3761 = vmatmul.bf16.gmra.mxu0 %v3691
      %v3762 = vpop.f32.mrf.mxu0
      %v3763 = vadd.f32 0.0, %v3762
      %v3764 = vpop.f32.mrf.mxu0
      %3765 = vdwg.mxu0
      %3766 = vmatpush.bf16.msra.mxu0 0
      %3767 = vmatpush.bf16.msra.mxu0 0
      %3768 = vmatpush.bf16.msra.mxu0 0
      %3769 = vmatpush.bf16.msra.mxu0 0
      %3770 = vmatpush.bf16.msra.mxu0 0
      %3771 = vmatpush.bf16.msra.mxu0 0
      %3772 = vmatpush.bf16.msra.mxu0 0
      %3773 = vmatpush.bf16.msra.mxu0 %v3706
      %3774 = vmatmul.bf16.gmra.mxu0 %v3691
      %v3775 = vpop.f32.mrf.mxu0
      %v3776 = vadd.f32 0.0, %v3775
      %v3777 = vpop.f32.mrf.mxu0
      %3778 = vdwg.mxu0
      %3779 = vmatpush.bf16.msra.mxu0 0
      %3780 = vmatpush.bf16.msra.mxu0 0
      %3781 = vmatpush.bf16.msra.mxu0 0
      %3782 = vmatpush.bf16.msra.mxu0 0
      %3783 = vmatpush.bf16.msra.mxu0 0
      %3784 = vmatpush.bf16.msra.mxu0 0
      %3785 = vmatpush.bf16.msra.mxu0 0
      %3786 = vmatpush.bf16.msra.mxu0 %v3709
      %3787 = vmatmul.bf16.gmra.mxu0 %v3691
      %v3788 = vpop.f32.mrf.mxu0
      %v3789 = vadd.f32 0.0, %v3788
      %v3790 = vpop.f32.mrf.mxu0
      %3791 = vdwg.mxu0
      %3792 = vmatpush.bf16.msra.mxu0 0
      %3793 = vmatpush.bf16.msra.mxu0 0
      %3794 = vmatpush.bf16.msra.mxu0 0
      %3795 = vmatpush.bf16.msra.mxu0 0
      %3796 = vmatpush.bf16.msra.mxu0 0
      %3797 = vmatpush.bf16.msra.mxu0 0
      %3798 = vmatpush.bf16.msra.mxu0 0
      %3799 = vmatpush.bf16.msra.mxu0 %v3712
      %3800 = vmatmul.bf16.gmra.mxu0 %v3691
      %v3801 = vpop.f32.mrf.mxu0
      %v3802 = vadd.f32 0.0, %v3801
      %v3803 = vpop.f32.mrf.mxu0
      %3804 = vdwg.mxu0
      %v3805 = vadd.f32 %v3634, %v3724
      %v3806 = vadd.f32 %v3635, %v3737
      %v3807 = vadd.f32 %v3636, %v3750
      %v3808 = vadd.f32 %v3637, %v3763
      %v3809 = vadd.f32 %v3638, %v3776
      %v3810 = vadd.f32 %v3639, %v3789
      %v3811 = vadd.f32 %v3640, %v3802
      %v3812 = vld [vmem:[%s1] sm:$0x7]
      %v3814 = vunpack.c.l.b16 %v3812
      %v3815 = vpack.c.b16 %v3814, %v3814
      %3816 = vrot.lane.b32.xlu0 %v3815, 68
      %v3817 = vpop.permute.xlu0 %3816
      %3818 = vst [vmem:[#allocation1] ss:$4 sm:$0xff] %v442
      %s3819 = scalar_lea.vmem [#allocation1], 32
      %3820 = vst [vmem:[%s3819] ss:$4 sm:$0xff] %v443
      %v3821 = vld.sshfl [vmem:[#allocation1 + $0x8] sm:$0xff pattern:$0x73625140]
      %v3822 = vld.sshfl [vmem:[#allocation1 + $0x10] sm:$0xff pattern:$0x73625140]
      %v3823 = vld.sshfl [vmem:[#allocation1 + $0x18] sm:$0xff pattern:$0x73625140]
      %v3824 = vld.sshfl [vmem:[#allocation1 + $0x20] sm:$0xff pattern:$0x73625140]
      %v3825 = vld.sshfl [vmem:[#allocation1 + $0x28] sm:$0xff pattern:$0x73625140]
      %v3826 = vld.sshfl [vmem:[#allocation1 + $0x30] sm:$0xff pattern:$0x73625140]
      %v3827 = vld.sshfl [vmem:[#allocation1 + $0x38] sm:$0xff pattern:$0x73625140]
      %v3829 = vsel %vm496, %v3817, 0
      %v3831 = vand.u32 %v3821, %v503
      %v3833 = vand.u32 %v3822, %v503
      %v3835 = vand.u32 %v3823, %v503
      %v3837 = vand.u32 %v3824, %v503
      %v3839 = vand.u32 %v3825, %v503
      %v3841 = vand.u32 %v3826, %v503
      %v3843 = vand.u32 %v3827, %v503
      %3845 = vmatpush.bf16.msra.mxu0 0
      %3846 = vmatpush.bf16.msra.mxu0 0
      %3847 = vmatpush.bf16.msra.mxu0 0
      %3848 = vmatpush.bf16.msra.mxu0 0
      %3849 = vmatpush.bf16.msra.mxu0 0
      %3850 = vmatpush.bf16.msra.mxu0 0
      %3851 = vmatpush.bf16.msra.mxu0 0
      %3852 = vmatpush.bf16.msra.mxu0 %v3831
      %3853 = vmatmul.bf16.gmra.mxu0 %v3829
      %v3854 = vpop.f32.mrf.mxu0
      %v3855 = vadd.f32 0.0, %v3854
      %v3856 = vpop.f32.mrf.mxu0
      %3857 = vdwg.mxu0
      %3858 = vmatpush.bf16.msra.mxu0 0
      %3859 = vmatpush.bf16.msra.mxu0 0
      %3860 = vmatpush.bf16.msra.mxu0 0
      %3861 = vmatpush.bf16.msra.mxu0 0
      %3862 = vmatpush.bf16.msra.mxu0 0
      %3863 = vmatpush.bf16.msra.mxu0 0
      %3864 = vmatpush.bf16.msra.mxu0 0
      %3865 = vmatpush.bf16.msra.mxu0 %v3833
      %3866 = vmatmul.bf16.gmra.mxu0 %v3829
      %v3867 = vpop.f32.mrf.mxu0
      %v3868 = vadd.f32 0.0, %v3867
      %v3869 = vpop.f32.mrf.mxu0
      %3870 = vdwg.mxu0
      %3871 = vmatpush.bf16.msra.mxu0 0
      %3872 = vmatpush.bf16.msra.mxu0 0
      %3873 = vmatpush.bf16.msra.mxu0 0
      %3874 = vmatpush.bf16.msra.mxu0 0
      %3875 = vmatpush.bf16.msra.mxu0 0
      %3876 = vmatpush.bf16.msra.mxu0 0
      %3877 = vmatpush.bf16.msra.mxu0 0
      %3878 = vmatpush.bf16.msra.mxu0 %v3835
      %3879 = vmatmul.bf16.gmra.mxu0 %v3829
      %v3880 = vpop.f32.mrf.mxu0
      %v3881 = vadd.f32 0.0, %v3880
      %v3882 = vpop.f32.mrf.mxu0
      %3883 = vdwg.mxu0
      %3884 = vmatpush.bf16.msra.mxu0 0
      %3885 = vmatpush.bf16.msra.mxu0 0
      %3886 = vmatpush.bf16.msra.mxu0 0
      %3887 = vmatpush.bf16.msra.mxu0 0
      %3888 = vmatpush.bf16.msra.mxu0 0
      %3889 = vmatpush.bf16.msra.mxu0 0
      %3890 = vmatpush.bf16.msra.mxu0 0
      %3891 = vmatpush.bf16.msra.mxu0 %v3837
      %3892 = vmatmul.bf16.gmra.mxu0 %v3829
      %v3893 = vpop.f32.mrf.mxu0
      %v3894 = vadd.f32 0.0, %v3893
      %v3895 = vpop.f32.mrf.mxu0
      %3896 = vdwg.mxu0
      %3897 = vmatpush.bf16.msra.mxu0 0
      %3898 = vmatpush.bf16.msra.mxu0 0
      %3899 = vmatpush.bf16.msra.mxu0 0
      %3900 = vmatpush.bf16.msra.mxu0 0
      %3901 = vmatpush.bf16.msra.mxu0 0
      %3902 = vmatpush.bf16.msra.mxu0 0
      %3903 = vmatpush.bf16.msra.mxu0 0
      %3904 = vmatpush.bf16.msra.mxu0 %v3839
      %3905 = vmatmul.bf16.gmra.mxu0 %v3829
      %v3906 = vpop.f32.mrf.mxu0
      %v3907 = vadd.f32 0.0, %v3906
      %v3908 = vpop.f32.mrf.mxu0
      %3909 = vdwg.mxu0
      %3910 = vmatpush.bf16.msra.mxu0 0
      %3911 = vmatpush.bf16.msra.mxu0 0
      %3912 = vmatpush.bf16.msra.mxu0 0
      %3913 = vmatpush.bf16.msra.mxu0 0
      %3914 = vmatpush.bf16.msra.mxu0 0
      %3915 = vmatpush.bf16.msra.mxu0 0
      %3916 = vmatpush.bf16.msra.mxu0 0
      %3917 = vmatpush.bf16.msra.mxu0 %v3841
      %3918 = vmatmul.bf16.gmra.mxu0 %v3829
      %v3919 = vpop.f32.mrf.mxu0
      %v3920 = vadd.f32 0.0, %v3919
      %v3921 = vpop.f32.mrf.mxu0
      %3922 = vdwg.mxu0
      %3923 = vmatpush.bf16.msra.mxu0 0
      %3924 = vmatpush.bf16.msra.mxu0 0
      %3925 = vmatpush.bf16.msra.mxu0 0
      %3926 = vmatpush.bf16.msra.mxu0 0
      %3927 = vmatpush.bf16.msra.mxu0 0
      %3928 = vmatpush.bf16.msra.mxu0 0
      %3929 = vmatpush.bf16.msra.mxu0 0
      %3930 = vmatpush.bf16.msra.mxu0 %v3843
      %3931 = vmatmul.bf16.gmra.mxu0 %v3829
      %v3932 = vpop.f32.mrf.mxu0
      %v3933 = vadd.f32 0.0, %v3932
      %v3934 = vpop.f32.mrf.mxu0
      %3935 = vdwg.mxu0
      %v3936 = vadd.f32 %v3805, %v3855
      %v3937 = vadd.f32 %v3806, %v3868
      %v3938 = vadd.f32 %v3807, %v3881
      %v3939 = vadd.f32 %v3808, %v3894
      %v3940 = vadd.f32 %v3809, %v3907
      %v3941 = vadd.f32 %v3810, %v3920
      %v3942 = vadd.f32 %v3811, %v3933
      %v3943 = vld [vmem:[%s1] sm:$0x7]
      %v3945 = vunpack.c.l.b16 %v3943
      %v3946 = vpack.c.b16 %v3945, %v3945
      %3947 = vrot.lane.b32.xlu0 %v3946, 65
      %v3948 = vpop.permute.xlu0 %3947
      %3949 = vst [vmem:[#allocation1] ss:$4 sm:$0xff] %v442
      %s3950 = scalar_lea.vmem [#allocation1], 32
      %3951 = vst [vmem:[%s3950] ss:$4 sm:$0xff] %v443
      %v3952 = vld.sshfl [vmem:[#allocation1 + $0x8] sm:$0xff pattern:$0x73625140]
      %v3954 = vld.sshfl [vmem:[#allocation1 + $0x10] sm:$0xff pattern:$0x73625140]
      %v3956 = vld.sshfl [vmem:[#allocation1 + $0x18] sm:$0xff pattern:$0x73625140]
      %v3958 = vld.sshfl [vmem:[#allocation1 + $0x20] sm:$0xff pattern:$0x73625140]
      %v3960 = vld.sshfl [vmem:[#allocation1 + $0x28] sm:$0xff pattern:$0x73625140]
      %v3962 = vld.sshfl [vmem:[#allocation1 + $0x30] sm:$0xff pattern:$0x73625140]
      %v3964 = vld.sshfl [vmem:[#allocation1 + $0x38] sm:$0xff pattern:$0x73625140]
      %3967 = vst [vmem:[#allocation1] ss:$4 sm:$0xff] %v444
      %v3968 = vld.sshfl [vmem:[#allocation1] sm:$0xff pattern:$0x73625140]
      %3970 = vrot.lane.b32.xlu0 %v3952, 127
      %v3971 = vpop.permute.xlu0 %3970
      %3972 = vrot.lane.b32.xlu0 %v3954, 127
      %v3973 = vpop.permute.xlu0 %3972
      %3974 = vrot.lane.b32.xlu0 %v3956, 127
      %v3975 = vpop.permute.xlu0 %3974
      %3976 = vrot.lane.b32.xlu0 %v3958, 127
      %v3977 = vpop.permute.xlu0 %3976
      %3978 = vrot.lane.b32.xlu0 %v3960, 127
      %v3979 = vpop.permute.xlu0 %3978
      %3980 = vrot.lane.b32.xlu0 %v3962, 127
      %v3981 = vpop.permute.xlu0 %3980
      %3982 = vrot.lane.b32.xlu0 %v3964, 127
      %v3983 = vpop.permute.xlu0 %3982
      %3984 = vrot.lane.b32.xlu0 %v3968, 127
      %v3985 = vpop.permute.xlu0 %3984
      %v3986 = vsel %vm488, %v3971, %v3973
      %v3987 = vsel %vm488, %v3973, %v3975
      %v3988 = vsel %vm488, %v3975, %v3977
      %v3989 = vsel %vm488, %v3977, %v3979
      %v3990 = vsel %vm488, %v3979, %v3981
      %v3991 = vsel %vm488, %v3981, %v3983
      %v3992 = vsel %vm488, %v3983, %v3985
      %v3994 = vsel %vm496, %v3948, 0
      %v3997 = vand.u32 %v3986, %v503
      %v4000 = vand.u32 %v3987, %v503
      %v4003 = vand.u32 %v3988, %v503
      %v4006 = vand.u32 %v3989, %v503
      %v4009 = vand.u32 %v3990, %v503
      %v4012 = vand.u32 %v3991, %v503
      %v4015 = vand.u32 %v3992, %v503
      %4017 = vmatpush.bf16.msra.mxu0 0
      %4018 = vmatpush.bf16.msra.mxu0 0
      %4019 = vmatpush.bf16.msra.mxu0 0
      %4020 = vmatpush.bf16.msra.mxu0 0
      %4021 = vmatpush.bf16.msra.mxu0 0
      %4022 = vmatpush.bf16.msra.mxu0 0
      %4023 = vmatpush.bf16.msra.mxu0 0
      %4024 = vmatpush.bf16.msra.mxu0 %v3997
      %4025 = vmatmul.bf16.gmra.mxu0 %v3994
      %v4026 = vpop.f32.mrf.mxu0
      %v4027 = vadd.f32 0.0, %v4026
      %v4028 = vpop.f32.mrf.mxu0
      %4029 = vdwg.mxu0
      %4030 = vmatpush.bf16.msra.mxu0 0
      %4031 = vmatpush.bf16.msra.mxu0 0
      %4032 = vmatpush.bf16.msra.mxu0 0
      %4033 = vmatpush.bf16.msra.mxu0 0
      %4034 = vmatpush.bf16.msra.mxu0 0
      %4035 = vmatpush.bf16.msra.mxu0 0
      %4036 = vmatpush.bf16.msra.mxu0 0
      %4037 = vmatpush.bf16.msra.mxu0 %v4000
      %4038 = vmatmul.bf16.gmra.mxu0 %v3994
      %v4039 = vpop.f32.mrf.mxu0
      %v4040 = vadd.f32 0.0, %v4039
      %v4041 = vpop.f32.mrf.mxu0
      %4042 = vdwg.mxu0
      %4043 = vmatpush.bf16.msra.mxu0 0
      %4044 = vmatpush.bf16.msra.mxu0 0
      %4045 = vmatpush.bf16.msra.mxu0 0
      %4046 = vmatpush.bf16.msra.mxu0 0
      %4047 = vmatpush.bf16.msra.mxu0 0
      %4048 = vmatpush.bf16.msra.mxu0 0
      %4049 = vmatpush.bf16.msra.mxu0 0
      %4050 = vmatpush.bf16.msra.mxu0 %v4003
      %4051 = vmatmul.bf16.gmra.mxu0 %v3994
      %v4052 = vpop.f32.mrf.mxu0
      %v4053 = vadd.f32 0.0, %v4052
      %v4054 = vpop.f32.mrf.mxu0
      %4055 = vdwg.mxu0
      %4056 = vmatpush.bf16.msra.mxu0 0
      %4057 = vmatpush.bf16.msra.mxu0 0
      %4058 = vmatpush.bf16.msra.mxu0 0
      %4059 = vmatpush.bf16.msra.mxu0 0
      %4060 = vmatpush.bf16.msra.mxu0 0
      %4061 = vmatpush.bf16.msra.mxu0 0
      %4062 = vmatpush.bf16.msra.mxu0 0
      %4063 = vmatpush.bf16.msra.mxu0 %v4006
      %4064 = vmatmul.bf16.gmra.mxu0 %v3994
      %v4065 = vpop.f32.mrf.mxu0
      %v4066 = vadd.f32 0.0, %v4065
      %v4067 = vpop.f32.mrf.mxu0
      %4068 = vdwg.mxu0
      %4069 = vmatpush.bf16.msra.mxu0 0
      %4070 = vmatpush.bf16.msra.mxu0 0
      %4071 = vmatpush.bf16.msra.mxu0 0
      %4072 = vmatpush.bf16.msra.mxu0 0
      %4073 = vmatpush.bf16.msra.mxu0 0
      %4074 = vmatpush.bf16.msra.mxu0 0
      %4075 = vmatpush.bf16.msra.mxu0 0
      %4076 = vmatpush.bf16.msra.mxu0 %v4009
      %4077 = vmatmul.bf16.gmra.mxu0 %v3994
      %v4078 = vpop.f32.mrf.mxu0
      %v4079 = vadd.f32 0.0, %v4078
      %v4080 = vpop.f32.mrf.mxu0
      %4081 = vdwg.mxu0
      %4082 = vmatpush.bf16.msra.mxu0 0
      %4083 = vmatpush.bf16.msra.mxu0 0
      %4084 = vmatpush.bf16.msra.mxu0 0
      %4085 = vmatpush.bf16.msra.mxu0 0
      %4086 = vmatpush.bf16.msra.mxu0 0
      %4087 = vmatpush.bf16.msra.mxu0 0
      %4088 = vmatpush.bf16.msra.mxu0 0
      %4089 = vmatpush.bf16.msra.mxu0 %v4012
      %4090 = vmatmul.bf16.gmra.mxu0 %v3994
      %v4091 = vpop.f32.mrf.mxu0
      %v4092 = vadd.f32 0.0, %v4091
      %v4093 = vpop.f32.mrf.mxu0
      %4094 = vdwg.mxu0
      %4095 = vmatpush.bf16.msra.mxu0 0
      %4096 = vmatpush.bf16.msra.mxu0 0
      %4097 = vmatpush.bf16.msra.mxu0 0
      %4098 = vmatpush.bf16.msra.mxu0 0
      %4099 = vmatpush.bf16.msra.mxu0 0
      %4100 = vmatpush.bf16.msra.mxu0 0
      %4101 = vmatpush.bf16.msra.mxu0 0
      %4102 = vmatpush.bf16.msra.mxu0 %v4015
      %4103 = vmatmul.bf16.gmra.mxu0 %v3994
      %v4104 = vpop.f32.mrf.mxu0
      %v4105 = vadd.f32 0.0, %v4104
      %v4106 = vpop.f32.mrf.mxu0
      %4107 = vdwg.mxu0
      %v4108 = vadd.f32 %v3936, %v4027
      %v4109 = vadd.f32 %v3937, %v4040
      %v4110 = vadd.f32 %v3938, %v4053
      %v4111 = vadd.f32 %v3939, %v4066
      %v4112 = vadd.f32 %v3940, %v4079
      %v4113 = vadd.f32 %v3941, %v4092
      %v4114 = vadd.f32 %v3942, %v4105
      %v4115 = vld [vmem:[%s1] sm:$0x7]
      %v4117 = vunpack.c.l.b16 %v4115
      %v4118 = vpack.c.b16 %v4117, %v4117
      %4119 = vrot.lane.b32.xlu0 %v4118, 62
      %v4120 = vpop.permute.xlu0 %4119
      %4121 = vst [vmem:[#allocation1] ss:$4 sm:$0xff] %v442
      %s4122 = scalar_lea.vmem [#allocation1], 32
      %4123 = vst [vmem:[%s4122] ss:$4 sm:$0xff] %v443
      %v4124 = vld.sshfl [vmem:[#allocation1 + $0x8] sm:$0xff pattern:$0x73625140]
      %v4126 = vld.sshfl [vmem:[#allocation1 + $0x10] sm:$0xff pattern:$0x73625140]
      %v4128 = vld.sshfl [vmem:[#allocation1 + $0x18] sm:$0xff pattern:$0x73625140]
      %v4130 = vld.sshfl [vmem:[#allocation1 + $0x20] sm:$0xff pattern:$0x73625140]
      %v4132 = vld.sshfl [vmem:[#allocation1 + $0x28] sm:$0xff pattern:$0x73625140]
      %v4134 = vld.sshfl [vmem:[#allocation1 + $0x30] sm:$0xff pattern:$0x73625140]
      %v4136 = vld.sshfl [vmem:[#allocation1 + $0x38] sm:$0xff pattern:$0x73625140]
      %4138 = vst [vmem:[#allocation1] ss:$4 sm:$0xff] %v444
      %v4139 = vld.sshfl [vmem:[#allocation1] sm:$0xff pattern:$0x73625140]
      %4141 = vrot.lane.b32.xlu0 %v4124, 126
      %v4142 = vpop.permute.xlu0 %4141
      %4143 = vrot.lane.b32.xlu0 %v4126, 126
      %v4144 = vpop.permute.xlu0 %4143
      %4145 = vrot.lane.b32.xlu0 %v4128, 126
      %v4146 = vpop.permute.xlu0 %4145
      %4147 = vrot.lane.b32.xlu0 %v4130, 126
      %v4148 = vpop.permute.xlu0 %4147
      %4149 = vrot.lane.b32.xlu0 %v4132, 126
      %v4150 = vpop.permute.xlu0 %4149
      %4151 = vrot.lane.b32.xlu0 %v4134, 126
      %v4152 = vpop.permute.xlu0 %4151
      %4153 = vrot.lane.b32.xlu0 %v4136, 126
      %v4154 = vpop.permute.xlu0 %4153
      %4155 = vrot.lane.b32.xlu0 %v4139, 126
      %v4156 = vpop.permute.xlu0 %4155
      %v4157 = vsel %vm775, %v4142, %v4144
      %v4158 = vsel %vm775, %v4144, %v4146
      %v4159 = vsel %vm775, %v4146, %v4148
      %v4160 = vsel %vm775, %v4148, %v4150
      %v4161 = vsel %vm775, %v4150, %v4152
      %v4162 = vsel %vm775, %v4152, %v4154
      %v4163 = vsel %vm775, %v4154, %v4156
      %v4165 = vsel %vm496, %v4120, 0
      %v4168 = vand.u32 %v4157, %v503
      %v4171 = vand.u32 %v4158, %v503
      %v4174 = vand.u32 %v4159, %v503
      %v4177 = vand.u32 %v4160, %v503
      %v4180 = vand.u32 %v4161, %v503
      %v4183 = vand.u32 %v4162, %v503
      %v4186 = vand.u32 %v4163, %v503
      %4188 = vmatpush.bf16.msra.mxu0 0
      %4189 = vmatpush.bf16.msra.mxu0 0
      %4190 = vmatpush.bf16.msra.mxu0 0
      %4191 = vmatpush.bf16.msra.mxu0 0
      %4192 = vmatpush.bf16.msra.mxu0 0
      %4193 = vmatpush.bf16.msra.mxu0 0
      %4194 = vmatpush.bf16.msra.mxu0 0
      %4195 = vmatpush.bf16.msra.mxu0 %v4168
      %4196 = vmatmul.bf16.gmra.mxu0 %v4165
      %v4197 = vpop.f32.mrf.mxu0
      %v4198 = vadd.f32 0.0, %v4197
      %v4199 = vpop.f32.mrf.mxu0
      %4200 = vdwg.mxu0
      %4201 = vmatpush.bf16.msra.mxu0 0
      %4202 = vmatpush.bf16.msra.mxu0 0
      %4203 = vmatpush.bf16.msra.mxu0 0
      %4204 = vmatpush.bf16.msra.mxu0 0
      %4205 = vmatpush.bf16.msra.mxu0 0
      %4206 = vmatpush.bf16.msra.mxu0 0
      %4207 = vmatpush.bf16.msra.mxu0 0
      %4208 = vmatpush.bf16.msra.mxu0 %v4171
      %4209 = vmatmul.bf16.gmra.mxu0 %v4165
      %v4210 = vpop.f32.mrf.mxu0
      %v4211 = vadd.f32 0.0, %v4210
      %v4212 = vpop.f32.mrf.mxu0
      %4213 = vdwg.mxu0
      %4214 = vmatpush.bf16.msra.mxu0 0
      %4215 = vmatpush.bf16.msra.mxu0 0
      %4216 = vmatpush.bf16.msra.mxu0 0
      %4217 = vmatpush.bf16.msra.mxu0 0
      %4218 = vmatpush.bf16.msra.mxu0 0
      %4219 = vmatpush.bf16.msra.mxu0 0
      %4220 = vmatpush.bf16.msra.mxu0 0
      %4221 = vmatpush.bf16.msra.mxu0 %v4174
      %4222 = vmatmul.bf16.gmra.mxu0 %v4165
      %v4223 = vpop.f32.mrf.mxu0
      %v4224 = vadd.f32 0.0, %v4223
      %v4225 = vpop.f32.mrf.mxu0
      %4226 = vdwg.mxu0
      %4227 = vmatpush.bf16.msra.mxu0 0
      %4228 = vmatpush.bf16.msra.mxu0 0
      %4229 = vmatpush.bf16.msra.mxu0 0
      %4230 = vmatpush.bf16.msra.mxu0 0
      %4231 = vmatpush.bf16.msra.mxu0 0
      %4232 = vmatpush.bf16.msra.mxu0 0
      %4233 = vmatpush.bf16.msra.mxu0 0
      %4234 = vmatpush.bf16.msra.mxu0 %v4177
      %4235 = vmatmul.bf16.gmra.mxu0 %v4165
      %v4236 = vpop.f32.mrf.mxu0
      %v4237 = vadd.f32 0.0, %v4236
      %v4238 = vpop.f32.mrf.mxu0
      %4239 = vdwg.mxu0
      %4240 = vmatpush.bf16.msra.mxu0 0
      %4241 = vmatpush.bf16.msra.mxu0 0
      %4242 = vmatpush.bf16.msra.mxu0 0
      %4243 = vmatpush.bf16.msra.mxu0 0
      %4244 = vmatpush.bf16.msra.mxu0 0
      %4245 = vmatpush.bf16.msra.mxu0 0
      %4246 = vmatpush.bf16.msra.mxu0 0
      %4247 = vmatpush.bf16.msra.mxu0 %v4180
      %4248 = vmatmul.bf16.gmra.mxu0 %v4165
      %v4249 = vpop.f32.mrf.mxu0
      %v4250 = vadd.f32 0.0, %v4249
      %v4251 = vpop.f32.mrf.mxu0
      %4252 = vdwg.mxu0
      %4253 = vmatpush.bf16.msra.mxu0 0
      %4254 = vmatpush.bf16.msra.mxu0 0
      %4255 = vmatpush.bf16.msra.mxu0 0
      %4256 = vmatpush.bf16.msra.mxu0 0
      %4257 = vmatpush.bf16.msra.mxu0 0
      %4258 = vmatpush.bf16.msra.mxu0 0
      %4259 = vmatpush.bf16.msra.mxu0 0
      %4260 = vmatpush.bf16.msra.mxu0 %v4183
      %4261 = vmatmul.bf16.gmra.mxu0 %v4165
      %v4262 = vpop.f32.mrf.mxu0
      %v4263 = vadd.f32 0.0, %v4262
      %v4264 = vpop.f32.mrf.mxu0
      %4265 = vdwg.mxu0
      %4266 = vmatpush.bf16.msra.mxu0 0
      %4267 = vmatpush.bf16.msra.mxu0 0
      %4268 = vmatpush.bf16.msra.mxu0 0
      %4269 = vmatpush.bf16.msra.mxu0 0
      %4270 = vmatpush.bf16.msra.mxu0 0
      %4271 = vmatpush.bf16.msra.mxu0 0
      %4272 = vmatpush.bf16.msra.mxu0 0
      %4273 = vmatpush.bf16.msra.mxu0 %v4186
      %4274 = vmatmul.bf16.gmra.mxu0 %v4165
      %v4275 = vpop.f32.mrf.mxu0
      %v4276 = vadd.f32 0.0, %v4275
      %v4277 = vpop.f32.mrf.mxu0
      %4278 = vdwg.mxu0
      %v4279 = vadd.f32 %v4108, %v4198
      %v4280 = vadd.f32 %v4109, %v4211
      %v4281 = vadd.f32 %v4110, %v4224
      %v4282 = vadd.f32 %v4111, %v4237
      %v4283 = vadd.f32 %v4112, %v4250
      %v4284 = vadd.f32 %v4113, %v4263
      %v4285 = vadd.f32 %v4114, %v4276
      %v4286 = vld [vmem:[%s1] sm:$0x7]
      %v4288 = vunpack.c.l.b16 %v4286
      %v4289 = vpack.c.b16 %v4288, %v4288
      %4290 = vrot.lane.b32.xlu0 %v4289, 59
      %v4291 = vpop.permute.xlu0 %4290
      %4292 = vst [vmem:[#allocation1] ss:$4 sm:$0xff] %v442
      %s4293 = scalar_lea.vmem [#allocation1], 32
      %4294 = vst [vmem:[%s4293] ss:$4 sm:$0xff] %v443
      %v4295 = vld.sshfl [vmem:[#allocation1 + $0x8] sm:$0xff pattern:$0x73625140]
      %v4297 = vld.sshfl [vmem:[#allocation1 + $0x10] sm:$0xff pattern:$0x73625140]
      %v4299 = vld.sshfl [vmem:[#allocation1 + $0x18] sm:$0xff pattern:$0x73625140]
      %v4301 = vld.sshfl [vmem:[#allocation1 + $0x20] sm:$0xff pattern:$0x73625140]
      %v4303 = vld.sshfl [vmem:[#allocation1 + $0x28] sm:$0xff pattern:$0x73625140]
      %v4305 = vld.sshfl [vmem:[#allocation1 + $0x30] sm:$0xff pattern:$0x73625140]
      %v4307 = vld.sshfl [vmem:[#allocation1 + $0x38] sm:$0xff pattern:$0x73625140]
      %4309 = vst [vmem:[#allocation1] ss:$4 sm:$0xff] %v444
      %v4310 = vld.sshfl [vmem:[#allocation1] sm:$0xff pattern:$0x73625140]
      %4312 = vrot.lane.b32.xlu0 %v4295, 125
      %v4313 = vpop.permute.xlu0 %4312
      %4314 = vrot.lane.b32.xlu0 %v4297, 125
      %v4315 = vpop.permute.xlu0 %4314
      %4316 = vrot.lane.b32.xlu0 %v4299, 125
      %v4317 = vpop.permute.xlu0 %4316
      %4318 = vrot.lane.b32.xlu0 %v4301, 125
      %v4319 = vpop.permute.xlu0 %4318
      %4320 = vrot.lane.b32.xlu0 %v4303, 125
      %v4321 = vpop.permute.xlu0 %4320
      %4322 = vrot.lane.b32.xlu0 %v4305, 125
      %v4323 = vpop.permute.xlu0 %4322
      %4324 = vrot.lane.b32.xlu0 %v4307, 125
      %v4325 = vpop.permute.xlu0 %4324
      %4326 = vrot.lane.b32.xlu0 %v4310, 125
      %v4327 = vpop.permute.xlu0 %4326
      %v4328 = vsel %vm946, %v4313, %v4315
      %v4329 = vsel %vm946, %v4315, %v4317
      %v4330 = vsel %vm946, %v4317, %v4319
      %v4331 = vsel %vm946, %v4319, %v4321
      %v4332 = vsel %vm946, %v4321, %v4323
      %v4333 = vsel %vm946, %v4323, %v4325
      %v4334 = vsel %vm946, %v4325, %v4327
      %v4336 = vsel %vm496, %v4291, 0
      %v4339 = vand.u32 %v4328, %v503
      %v4342 = vand.u32 %v4329, %v503
      %v4345 = vand.u32 %v4330, %v503
      %v4348 = vand.u32 %v4331, %v503
      %v4351 = vand.u32 %v4332, %v503
      %v4354 = vand.u32 %v4333, %v503
      %v4357 = vand.u32 %v4334, %v503
      %4359 = vmatpush.bf16.msra.mxu0 0
      %4360 = vmatpush.bf16.msra.mxu0 0
      %4361 = vmatpush.bf16.msra.mxu0 0
      %4362 = vmatpush.bf16.msra.mxu0 0
      %4363 = vmatpush.bf16.msra.mxu0 0
      %4364 = vmatpush.bf16.msra.mxu0 0
      %4365 = vmatpush.bf16.msra.mxu0 0
      %4366 = vmatpush.bf16.msra.mxu0 %v4339
      %4367 = vmatmul.bf16.gmra.mxu0 %v4336
      %v4368 = vpop.f32.mrf.mxu0
      %v4369 = vadd.f32 0.0, %v4368
      %v4370 = vpop.f32.mrf.mxu0
      %4371 = vdwg.mxu0
      %4372 = vmatpush.bf16.msra.mxu0 0
      %4373 = vmatpush.bf16.msra.mxu0 0
      %4374 = vmatpush.bf16.msra.mxu0 0
      %4375 = vmatpush.bf16.msra.mxu0 0
      %4376 = vmatpush.bf16.msra.mxu0 0
      %4377 = vmatpush.bf16.msra.mxu0 0
      %4378 = vmatpush.bf16.msra.mxu0 0
      %4379 = vmatpush.bf16.msra.mxu0 %v4342
      %4380 = vmatmul.bf16.gmra.mxu0 %v4336
      %v4381 = vpop.f32.mrf.mxu0
      %v4382 = vadd.f32 0.0, %v4381
      %v4383 = vpop.f32.mrf.mxu0
      %4384 = vdwg.mxu0
      %4385 = vmatpush.bf16.msra.mxu0 0
      %4386 = vmatpush.bf16.msra.mxu0 0
      %4387 = vmatpush.bf16.msra.mxu0 0
      %4388 = vmatpush.bf16.msra.mxu0 0
      %4389 = vmatpush.bf16.msra.mxu0 0
      %4390 = vmatpush.bf16.msra.mxu0 0
      %4391 = vmatpush.bf16.msra.mxu0 0
      %4392 = vmatpush.bf16.msra.mxu0 %v4345
      %4393 = vmatmul.bf16.gmra.mxu0 %v4336
      %v4394 = vpop.f32.mrf.mxu0
      %v4395 = vadd.f32 0.0, %v4394
      %v4396 = vpop.f32.mrf.mxu0
      %4397 = vdwg.mxu0
      %4398 = vmatpush.bf16.msra.mxu0 0
      %4399 = vmatpush.bf16.msra.mxu0 0
      %4400 = vmatpush.bf16.msra.mxu0 0
      %4401 = vmatpush.bf16.msra.mxu0 0
      %4402 = vmatpush.bf16.msra.mxu0 0
      %4403 = vmatpush.bf16.msra.mxu0 0
      %4404 = vmatpush.bf16.msra.mxu0 0
      %4405 = vmatpush.bf16.msra.mxu0 %v4348
      %4406 = vmatmul.bf16.gmra.mxu0 %v4336
      %v4407 = vpop.f32.mrf.mxu0
      %v4408 = vadd.f32 0.0, %v4407
      %v4409 = vpop.f32.mrf.mxu0
      %4410 = vdwg.mxu0
      %4411 = vmatpush.bf16.msra.mxu0 0
      %4412 = vmatpush.bf16.msra.mxu0 0
      %4413 = vmatpush.bf16.msra.mxu0 0
      %4414 = vmatpush.bf16.msra.mxu0 0
      %4415 = vmatpush.bf16.msra.mxu0 0
      %4416 = vmatpush.bf16.msra.mxu0 0
      %4417 = vmatpush.bf16.msra.mxu0 0
      %4418 = vmatpush.bf16.msra.mxu0 %v4351
      %4419 = vmatmul.bf16.gmra.mxu0 %v4336
      %v4420 = vpop.f32.mrf.mxu0
      %v4421 = vadd.f32 0.0, %v4420
      %v4422 = vpop.f32.mrf.mxu0
      %4423 = vdwg.mxu0
      %4424 = vmatpush.bf16.msra.mxu0 0
      %4425 = vmatpush.bf16.msra.mxu0 0
      %4426 = vmatpush.bf16.msra.mxu0 0
      %4427 = vmatpush.bf16.msra.mxu0 0
      %4428 = vmatpush.bf16.msra.mxu0 0
      %4429 = vmatpush.bf16.msra.mxu0 0
      %4430 = vmatpush.bf16.msra.mxu0 0
      %4431 = vmatpush.bf16.msra.mxu0 %v4354
      %4432 = vmatmul.bf16.gmra.mxu0 %v4336
      %v4433 = vpop.f32.mrf.mxu0
      %v4434 = vadd.f32 0.0, %v4433
      %v4435 = vpop.f32.mrf.mxu0
      %4436 = vdwg.mxu0
      %4437 = vmatpush.bf16.msra.mxu0 0
      %4438 = vmatpush.bf16.msra.mxu0 0
      %4439 = vmatpush.bf16.msra.mxu0 0
      %4440 = vmatpush.bf16.msra.mxu0 0
      %4441 = vmatpush.bf16.msra.mxu0 0
      %4442 = vmatpush.bf16.msra.mxu0 0
      %4443 = vmatpush.bf16.msra.mxu0 0
      %4444 = vmatpush.bf16.msra.mxu0 %v4357
      %4445 = vmatmul.bf16.gmra.mxu0 %v4336
      %v4446 = vpop.f32.mrf.mxu0
      %v4447 = vadd.f32 0.0, %v4446
      %v4448 = vpop.f32.mrf.mxu0
      %4449 = vdwg.mxu0
      %v4450 = vadd.f32 %v4279, %v4369
      %v4451 = vadd.f32 %v4280, %v4382
      %v4452 = vadd.f32 %v4281, %v4395
      %v4453 = vadd.f32 %v4282, %v4408
      %v4454 = vadd.f32 %v4283, %v4421
      %v4455 = vadd.f32 %v4284, %v4434
      %v4456 = vadd.f32 %v4285, %v4447
      %v4457 = vld [vmem:[%s1] sm:$0x7]
      %v4459 = vunpack.c.l.b16 %v4457
      %v4460 = vpack.c.b16 %v4459, %v4459
      %4461 = vrot.lane.b32.xlu0 %v4460, 56
      %v4462 = vpop.permute.xlu0 %4461
      %4463 = vst [vmem:[#allocation1] ss:$4 sm:$0xff] %v442
      %s4464 = scalar_lea.vmem [#allocation1], 32
      %4465 = vst [vmem:[%s4464] ss:$4 sm:$0xff] %v443
      %v4466 = vld.sshfl [vmem:[#allocation1 + $0x8] sm:$0xff pattern:$0x73625140]
      %v4468 = vld.sshfl [vmem:[#allocation1 + $0x10] sm:$0xff pattern:$0x73625140]
      %v4470 = vld.sshfl [vmem:[#allocation1 + $0x18] sm:$0xff pattern:$0x73625140]
      %v4472 = vld.sshfl [vmem:[#allocation1 + $0x20] sm:$0xff pattern:$0x73625140]
      %v4474 = vld.sshfl [vmem:[#allocation1 + $0x28] sm:$0xff pattern:$0x73625140]
      %v4476 = vld.sshfl [vmem:[#allocation1 + $0x30] sm:$0xff pattern:$0x73625140]
      %v4478 = vld.sshfl [vmem:[#allocation1 + $0x38] sm:$0xff pattern:$0x73625140]
      %4480 = vst [vmem:[#allocation1] ss:$4 sm:$0xff] %v444
      %v4481 = vld.sshfl [vmem:[#allocation1] sm:$0xff pattern:$0x73625140]
      %4483 = vrot.lane.b32.xlu0 %v4466, 124
      %v4484 = vpop.permute.xlu0 %4483
      %4485 = vrot.lane.b32.xlu0 %v4468, 124
      %v4486 = vpop.permute.xlu0 %4485
      %4487 = vrot.lane.b32.xlu0 %v4470, 124
      %v4488 = vpop.permute.xlu0 %4487
      %4489 = vrot.lane.b32.xlu0 %v4472, 124
      %v4490 = vpop.permute.xlu0 %4489
      %4491 = vrot.lane.b32.xlu0 %v4474, 124
      %v4492 = vpop.permute.xlu0 %4491
      %4493 = vrot.lane.b32.xlu0 %v4476, 124
      %v4494 = vpop.permute.xlu0 %4493
      %4495 = vrot.lane.b32.xlu0 %v4478, 124
      %v4496 = vpop.permute.xlu0 %4495
      %4497 = vrot.lane.b32.xlu0 %v4481, 124
      %v4498 = vpop.permute.xlu0 %4497
      %v4499 = vsel %vm1117, %v4484, %v4486
      %v4500 = vsel %vm1117, %v4486, %v4488
      %v4501 = vsel %vm1117, %v4488, %v4490
      %v4502 = vsel %vm1117, %v4490, %v4492
      %v4503 = vsel %vm1117, %v4492, %v4494
      %v4504 = vsel %vm1117, %v4494, %v4496
      %v4505 = vsel %vm1117, %v4496, %v4498
      %v4507 = vsel %vm496, %v4462, 0
      %v4510 = vand.u32 %v4499, %v503
      %v4513 = vand.u32 %v4500, %v503
      %v4516 = vand.u32 %v4501, %v503
      %v4519 = vand.u32 %v4502, %v503
      %v4522 = vand.u32 %v4503, %v503
      %v4525 = vand.u32 %v4504, %v503
      %v4528 = vand.u32 %v4505, %v503
      %4530 = vmatpush.bf16.msra.mxu0 0
      %4531 = vmatpush.bf16.msra.mxu0 0
      %4532 = vmatpush.bf16.msra.mxu0 0
      %4533 = vmatpush.bf16.msra.mxu0 0
      %4534 = vmatpush.bf16.msra.mxu0 0
      %4535 = vmatpush.bf16.msra.mxu0 0
      %4536 = vmatpush.bf16.msra.mxu0 0
      %4537 = vmatpush.bf16.msra.mxu0 %v4510
      %4538 = vmatmul.bf16.gmra.mxu0 %v4507
      %v4539 = vpop.f32.mrf.mxu0
      %v4540 = vadd.f32 0.0, %v4539
      %v4541 = vpop.f32.mrf.mxu0
      %4542 = vdwg.mxu0
      %4543 = vmatpush.bf16.msra.mxu0 0
      %4544 = vmatpush.bf16.msra.mxu0 0
      %4545 = vmatpush.bf16.msra.mxu0 0
      %4546 = vmatpush.bf16.msra.mxu0 0
      %4547 = vmatpush.bf16.msra.mxu0 0
      %4548 = vmatpush.bf16.msra.mxu0 0
      %4549 = vmatpush.bf16.msra.mxu0 0
      %4550 = vmatpush.bf16.msra.mxu0 %v4513
      %4551 = vmatmul.bf16.gmra.mxu0 %v4507
      %v4552 = vpop.f32.mrf.mxu0
      %v4553 = vadd.f32 0.0, %v4552
      %v4554 = vpop.f32.mrf.mxu0
      %4555 = vdwg.mxu0
      %4556 = vmatpush.bf16.msra.mxu0 0
      %4557 = vmatpush.bf16.msra.mxu0 0
      %4558 = vmatpush.bf16.msra.mxu0 0
      %4559 = vmatpush.bf16.msra.mxu0 0
      %4560 = vmatpush.bf16.msra.mxu0 0
      %4561 = vmatpush.bf16.msra.mxu0 0
      %4562 = vmatpush.bf16.msra.mxu0 0
      %4563 = vmatpush.bf16.msra.mxu0 %v4516
      %4564 = vmatmul.bf16.gmra.mxu0 %v4507
      %v4565 = vpop.f32.mrf.mxu0
      %v4566 = vadd.f32 0.0, %v4565
      %v4567 = vpop.f32.mrf.mxu0
      %4568 = vdwg.mxu0
      %4569 = vmatpush.bf16.msra.mxu0 0
      %4570 = vmatpush.bf16.msra.mxu0 0
      %4571 = vmatpush.bf16.msra.mxu0 0
      %4572 = vmatpush.bf16.msra.mxu0 0
      %4573 = vmatpush.bf16.msra.mxu0 0
      %4574 = vmatpush.bf16.msra.mxu0 0
      %4575 = vmatpush.bf16.msra.mxu0 0
      %4576 = vmatpush.bf16.msra.mxu0 %v4519
      %4577 = vmatmul.bf16.gmra.mxu0 %v4507
      %v4578 = vpop.f32.mrf.mxu0
      %v4579 = vadd.f32 0.0, %v4578
      %v4580 = vpop.f32.mrf.mxu0
      %4581 = vdwg.mxu0
      %4582 = vmatpush.bf16.msra.mxu0 0
      %4583 = vmatpush.bf16.msra.mxu0 0
      %4584 = vmatpush.bf16.msra.mxu0 0
      %4585 = vmatpush.bf16.msra.mxu0 0
      %4586 = vmatpush.bf16.msra.mxu0 0
      %4587 = vmatpush.bf16.msra.mxu0 0
      %4588 = vmatpush.bf16.msra.mxu0 0
      %4589 = vmatpush.bf16.msra.mxu0 %v4522
      %4590 = vmatmul.bf16.gmra.mxu0 %v4507
      %v4591 = vpop.f32.mrf.mxu0
      %v4592 = vadd.f32 0.0, %v4591
      %v4593 = vpop.f32.mrf.mxu0
      %4594 = vdwg.mxu0
      %4595 = vmatpush.bf16.msra.mxu0 0
      %4596 = vmatpush.bf16.msra.mxu0 0
      %4597 = vmatpush.bf16.msra.mxu0 0
      %4598 = vmatpush.bf16.msra.mxu0 0
      %4599 = vmatpush.bf16.msra.mxu0 0
      %4600 = vmatpush.bf16.msra.mxu0 0
      %4601 = vmatpush.bf16.msra.mxu0 0
      %4602 = vmatpush.bf16.msra.mxu0 %v4525
      %4603 = vmatmul.bf16.gmra.mxu0 %v4507
      %v4604 = vpop.f32.mrf.mxu0
      %v4605 = vadd.f32 0.0, %v4604
      %v4606 = vpop.f32.mrf.mxu0
      %4607 = vdwg.mxu0
      %4608 = vmatpush.bf16.msra.mxu0 0
      %4609 = vmatpush.bf16.msra.mxu0 0
      %4610 = vmatpush.bf16.msra.mxu0 0
      %4611 = vmatpush.bf16.msra.mxu0 0
      %4612 = vmatpush.bf16.msra.mxu0 0
      %4613 = vmatpush.bf16.msra.mxu0 0
      %4614 = vmatpush.bf16.msra.mxu0 0
      %4615 = vmatpush.bf16.msra.mxu0 %v4528
      %4616 = vmatmul.bf16.gmra.mxu0 %v4507
      %v4617 = vpop.f32.mrf.mxu0
      %v4618 = vadd.f32 0.0, %v4617
      %v4619 = vpop.f32.mrf.mxu0
      %4620 = vdwg.mxu0
      %v4621 = vadd.f32 %v4450, %v4540
      %v4622 = vadd.f32 %v4451, %v4553
      %v4623 = vadd.f32 %v4452, %v4566
      %v4624 = vadd.f32 %v4453, %v4579
      %v4625 = vadd.f32 %v4454, %v4592
      %v4626 = vadd.f32 %v4455, %v4605
      %v4627 = vadd.f32 %v4456, %v4618
      %v4628 = vld [vmem:[%s2] sm:$0x3f]
      %4630 = vset.pattern.permute.xlu0 0
      %4631 = vperm.xlu0 %4630, %v4628
      %v4632 = vpop.permute.xlu0 %4631
      %v4634 = vadd.f32 %v4621, %v4632
      %v4635 = vadd.f32 %v4622, %v4632
      %v4636 = vadd.f32 %v4623, %v4632
      %v4637 = vadd.f32 %v4624, %v4632
      %v4638 = vadd.f32 %v4625, %v4632
      %v4639 = vadd.f32 %v4626, %v4632
      %v4640 = vadd.f32 %v4627, %v4632
      %v4641 = vtanh.pop %v4634
      %v4642 = vtanh.pop %v4635
      %v4643 = vtanh.pop %v4636
      %v4644 = vtanh.pop %v4637
      %v4645 = vtanh.pop %v4638
      %v4646 = vtanh.pop %v4639
      %v4647 = vtanh.pop %v4640
      %4655 = vrot.lane.b32.xlu0 %v4641, 127
      %v4656 = vpop.permute.xlu0 %4655
      %4657 = vrot.lane.b32.xlu0 %v4642, 127
      %v4658 = vpop.permute.xlu0 %4657
      %4659 = vrot.lane.b32.xlu0 %v4643, 127
      %v4660 = vpop.permute.xlu0 %4659
      %4661 = vrot.lane.b32.xlu0 %v4644, 127
      %v4662 = vpop.permute.xlu0 %4661
      %4663 = vrot.lane.b32.xlu0 %v4645, 127
      %v4664 = vpop.permute.xlu0 %4663
      %4665 = vrot.lane.b32.xlu0 %v4646, 127
      %v4666 = vpop.permute.xlu0 %4665
      %4667 = vrot.lane.b32.xlu0 %v4647, 127
      %v4668 = vpop.permute.xlu0 %4667
      %vm4669 = vcmask 1039360
      %v4670 = vsel %vm4669, %v4656, %v4658
      %v4671 = vsel %vm4669, %v4658, %v4660
      %v4672 = vsel %vm4669, %v4660, %v4662
      %v4673 = vsel %vm4669, %v4662, %v4664
      %v4674 = vsel %vm4669, %v4664, %v4666
      %v4675 = vsel %vm4669, %v4666, %v4668
      %v4683 = vmax.f32 %v4641, %v4670
      %v4684 = vmax.f32 %v4642, %v4671
      %v4685 = vmax.f32 %v4643, %v4672
      %v4686 = vmax.f32 %v4644, %v4673
      %v4687 = vmax.f32 %v4645, %v4674
      %v4688 = vmax.f32 %v4646, %v4675
      %v4689 = vmax.f32 %v4647, %v4668
      %4697 = vrot.lane.b32.xlu0 %v4683, 96
      %v4698 = vpop.permute.xlu0 %4697
      %4699 = vrot.lane.b32.xlu0 %v4684, 96
      %v4700 = vpop.permute.xlu0 %4699
      %4701 = vrot.lane.b32.xlu0 %v4685, 96
      %v4702 = vpop.permute.xlu0 %4701
      %4703 = vrot.lane.b32.xlu0 %v4686, 96
      %v4704 = vpop.permute.xlu0 %4703
      %4705 = vrot.lane.b32.xlu0 %v4687, 96
      %v4706 = vpop.permute.xlu0 %4705
      %4707 = vrot.lane.b32.xlu0 %v4688, 96
      %v4708 = vpop.permute.xlu0 %4707
      %4709 = vrot.lane.b32.xlu0 %v4689, 96
      %v4710 = vpop.permute.xlu0 %4709
      %vm4711 = vcmask 785408
      %v4712 = vsel %vm4711, %v4698, %v4700
      %v4713 = vsel %vm4711, %v4700, %v4702
      %v4714 = vsel %vm4711, %v4702, %v4704
      %v4715 = vsel %vm4711, %v4704, %v4706
      %v4716 = vsel %vm4711, %v4706, %v4708
      %v4717 = vsel %vm4711, %v4708, %v4710
      %v4725 = vmax.f32 %v4683, %v4712
      %v4726 = vmax.f32 %v4684, %v4713
      %v4727 = vmax.f32 %v4685, %v4714
      %v4728 = vmax.f32 %v4686, %v4715
      %v4729 = vmax.f32 %v4687, %v4716
      %v4730 = vmax.f32 %v4688, %v4717
      %v4731 = vmax.f32 %v4689, %v4710
      %v4732 = vld [vmem:[%s11] sm:$0xff]
      %v4733 = vld [vmem:[%s11 + $0x8] sm:$0xff]
      %v4734 = vld [vmem:[%s11 + $0x10] sm:$0xff]
      %v4735 = vld [vmem:[%s11 + $0x18] sm:$0xff]
      %v4736 = vld [vmem:[%s11 + $0x20] sm:$0xff]
      %v4737 = vld [vmem:[%s11 + $0x28] sm:$0xff]
      %v4738 = vld [vmem:[%s11 + $0x30] sm:$0xff]
      %v4739 = vld [vmem:[%s11 + $0x38] sm:$0xff]
      %v4740 = vld [vmem:[%s11 + $0x40] sm:$0xff]
      %v4741 = vld [vmem:[%s11 + $0x48] sm:$0xff]
      %v4742 = vld [vmem:[%s11 + $0x50] sm:$0xff]
      %v4743 = vld [vmem:[%s11 + $0x58] sm:$0xff]
      %v4744 = vld [vmem:[%s11 + $0x60] sm:$0xff]
      %v4745 = vld [vmem:[%s11 + $0x68] sm:$0xff]
      %v4746 = vld [vmem:[%s11 + $0x70] sm:$0xff]
      %v4747 = vld [vmem:[%s11 + $0x78] sm:$0xff]
      %v4748 = vld [vmem:[%s11 + $0x80] sm:$0xff]
      %v4749 = vld [vmem:[%s11 + $0x88] sm:$0xff]
      %v4750 = vld [vmem:[%s11 + $0x90] sm:$0xff]
      %v4751 = vld [vmem:[%s11 + $0x98] sm:$0xff]
      %v4752 = vld [vmem:[%s11 + $0xa0] sm:$0xff]
      %v4753 = vld [vmem:[%s11 + $0xa8] sm:$0xff]
      %v4754 = vld [vmem:[%s11 + $0xb0] sm:$0xff]
      %v4755 = vld [vmem:[%s11 + $0xb8] sm:$0xff]
      %v4756 = vld [vmem:[%s11 + $0xc0] sm:$0xff]
      %v4757 = vld [vmem:[%s11 + $0xc8] sm:$0xff]
      %v4758 = vld [vmem:[%s11 + $0xd0] sm:$0xff]
      %v4759 = vld [vmem:[%s11 + $0xd8] sm:$0xff]
      %v4760 = vld [vmem:[%s11 + $0xe0] sm:$0xff]
      %v4761 = vld [vmem:[%s11 + $0xe8] sm:$0xff]
      %v4762 = vld [vmem:[%s11 + $0xf0] sm:$0xff]
      %v4763 = vld [vmem:[%s11 + $0xf8] sm:$0xff]
      %v4764 = vld [vmem:[%s11 + $0x100] sm:$0xff]
      %v4765 = vld [vmem:[%s11 + $0x108] sm:$0xff]
      %v4766 = vld [vmem:[%s11 + $0x110] sm:$0xff]
      %v4767 = vld [vmem:[%s11 + $0x118] sm:$0xff]
      %v4768 = vld [vmem:[%s11 + $0x120] sm:$0xff]
      %v4769 = vld [vmem:[%s11 + $0x128] sm:$0xff]
      %v4770 = vld [vmem:[%s11 + $0x130] sm:$0xff]
      %v4771 = vld [vmem:[%s11 + $0x138] sm:$0xff]
      %v4772 = vld [vmem:[%s11 + $0x140] sm:$0xff]
      %v4773 = vld [vmem:[%s11 + $0x148] sm:$0xff]
      %v4774 = vld [vmem:[%s11 + $0x150] sm:$0xff]
      %v4775 = vld [vmem:[%s11 + $0x158] sm:$0xff]
      %v4776 = vld [vmem:[%s11 + $0x160] sm:$0xff]
      %v4777 = vld [vmem:[%s11 + $0x168] sm:$0xff]
      %v4778 = vld [vmem:[%s11 + $0x170] sm:$0xff]
      %v4779 = vld [vmem:[%s11 + $0x178] sm:$0xff]
      %v4780 = vld [vmem:[%s11 + $0x180] sm:$0xff]
      %v4781 = vld [vmem:[%s11 + $0x188] sm:$0xff]
      %v4782 = vld [vmem:[%s11 + $0x190] sm:$0xff]
      %v4783 = vld [vmem:[%s11 + $0x198] sm:$0xff]
      %v4784 = vld [vmem:[%s11 + $0x1a0] sm:$0xff]
      %v4785 = vld [vmem:[%s11 + $0x1a8] sm:$0xff]
      %v4786 = vld [vmem:[%s11 + $0x1b0] sm:$0xff]
      %v4787 = vld [vmem:[%s11 + $0x1b8] sm:$0xff]
      %v4788 = vld [vmem:[%s11 + $0x1c0] sm:$0xff]
      %v4789 = vld [vmem:[%s11 + $0x1c8] sm:$0xff]
      %v4790 = vld [vmem:[%s11 + $0x1d0] sm:$0xff]
      %v4791 = vld [vmem:[%s11 + $0x1d8] sm:$0xff]
      %v4792 = vld [vmem:[%s11 + $0x1e0] sm:$0xff]
      %v4793 = vld [vmem:[%s11 + $0x1e8] sm:$0xff]
      %v4794 = vld [vmem:[%s11 + $0x1f0] sm:$0xff]
      %v4795 = vld [vmem:[%s11 + $0x1f8] sm:$0xff]
      %v4796 = vld [vmem:[%s11 + $0x200] sm:$0xff]
      %v4797 = vld [vmem:[%s11 + $0x208] sm:$0xff]
      %v4798 = vld [vmem:[%s11 + $0x210] sm:$0xff]
      %v4799 = vld [vmem:[%s11 + $0x218] sm:$0xff]
      %v4800 = vld [vmem:[%s11 + $0x220] sm:$0xff]
      %v4801 = vld [vmem:[%s11 + $0x228] sm:$0xff]
      %v4802 = vld [vmem:[%s11 + $0x230] sm:$0xff]
      %v4803 = vld [vmem:[%s11 + $0x238] sm:$0xff]
      %v4804 = vld [vmem:[%s11 + $0x240] sm:$0xff]
      %v4805 = vld [vmem:[%s11 + $0x248] sm:$0xff]
      %v4806 = vld [vmem:[%s11 + $0x250] sm:$0xff]
      %v4807 = vld [vmem:[%s11 + $0x258] sm:$0xff]
      %v4808 = vld [vmem:[%s11 + $0x260] sm:$0xff]
      %v4809 = vld [vmem:[%s11 + $0x268] sm:$0xff]
      %v4810 = vld [vmem:[%s11 + $0x270] sm:$0xff]
      %v4811 = vld [vmem:[%s11 + $0x278] sm:$0xff]
      %v4812 = vld [vmem:[%s11 + $0x280] sm:$0xff]
      %v4813 = vld [vmem:[%s11 + $0x288] sm:$0xff]
      %v4814 = vld [vmem:[%s11 + $0x290] sm:$0xff]
      %v4815 = vld [vmem:[%s11 + $0x298] sm:$0xff]
      %v4816 = vld [vmem:[%s11 + $0x2a0] sm:$0xff]
      %v4817 = vld [vmem:[%s11 + $0x2a8] sm:$0xff]
      %v4818 = vld [vmem:[%s11 + $0x2b0] sm:$0xff]
      %v4819 = vld [vmem:[%s11 + $0x2b8] sm:$0xff]
      %v4820 = vld [vmem:[%s11 + $0x2c0] sm:$0xff]
      %v4821 = vld [vmem:[%s11 + $0x2c8] sm:$0xff]
      %v4822 = vld [vmem:[%s11 + $0x2d0] sm:$0xff]
      %v4823 = vld [vmem:[%s11 + $0x2d8] sm:$0xff]
      %v4824 = vld [vmem:[%s11 + $0x2e0] sm:$0xff]
      %v4825 = vld [vmem:[%s11 + $0x2e8] sm:$0xff]
      %v4826 = vld [vmem:[%s11 + $0x2f0] sm:$0xff]
      %v4827 = vld [vmem:[%s11 + $0x2f8] sm:$0xff]
      %v4828 = vld [vmem:[%s11 + $0x300] sm:$0xff]
      %v4829 = vld [vmem:[%s11 + $0x308] sm:$0xff]
      %v4830 = vld [vmem:[%s11 + $0x310] sm:$0xff]
      %v4831 = vld [vmem:[%s11 + $0x318] sm:$0xff]
      %v4832 = vld [vmem:[%s11 + $0x320] sm:$0xff]
      %v4833 = vld [vmem:[%s11 + $0x328] sm:$0xff]
      %v4834 = vld [vmem:[%s11 + $0x330] sm:$0xff]
      %v4835 = vld [vmem:[%s11 + $0x338] sm:$0xff]
      %v4836 = vld [vmem:[%s11 + $0x340] sm:$0xff]
      %v4837 = vld [vmem:[%s11 + $0x348] sm:$0xff]
      %v4838 = vld [vmem:[%s11 + $0x350] sm:$0xff]
      %v4839 = vld [vmem:[%s11 + $0x358] sm:$0xff]
      %v4840 = vld [vmem:[%s11 + $0x360] sm:$0xff]
      %v4841 = vld [vmem:[%s11 + $0x368] sm:$0xff]
      %v4842 = vld [vmem:[%s11 + $0x370] sm:$0xff]
      %v4843 = vld [vmem:[%s11 + $0x378] sm:$0xff]
      %v4844 = vld [vmem:[%s11 + $0x380] sm:$0xff]
      %v4845 = vld [vmem:[%s11 + $0x388] sm:$0xff]
      %v4846 = vld [vmem:[%s11 + $0x390] sm:$0xff]
      %v4847 = vld [vmem:[%s11 + $0x398] sm:$0xff]
      %v4848 = vld [vmem:[%s11 + $0x3a0] sm:$0xff]
      %v4849 = vld [vmem:[%s11 + $0x3a8] sm:$0xff]
      %v4850 = vld [vmem:[%s11 + $0x3b0] sm:$0xff]
      %v4851 = vld [vmem:[%s11 + $0x3b8] sm:$0xff]
      %v4852 = vld [vmem:[%s11 + $0x3c0] sm:$0xff]
      %v4853 = vld [vmem:[%s11 + $0x3c8] sm:$0xff]
      %v4854 = vld [vmem:[%s11 + $0x3d0] sm:$0xff]
      %v4855 = vld [vmem:[%s11 + $0x3d8] sm:$0xff]
      %v4856 = vld [vmem:[%s11 + $0x3e0] sm:$0xff]
      %v4857 = vld [vmem:[%s11 + $0x3e8] sm:$0xff]
      %v4858 = vld [vmem:[%s11 + $0x3f0] sm:$0xff]
      %v4859 = vld [vmem:[%s11 + $0x3f8] sm:$0xff]
      %v4860 = vld [vmem:[%s11 + $0x400] sm:$0xff]
      %v4861 = vld [vmem:[%s11 + $0x408] sm:$0xff]
      %v4862 = vld [vmem:[%s11 + $0x410] sm:$0xff]
      %v4863 = vld [vmem:[%s11 + $0x418] sm:$0xff]
      %v4864 = vld [vmem:[%s11 + $0x420] sm:$0xff]
      %v4865 = vld [vmem:[%s11 + $0x428] sm:$0xff]
      %v4866 = vld [vmem:[%s11 + $0x430] sm:$0xff]
      %v4867 = vld [vmem:[%s11 + $0x438] sm:$0xff]
      %v4868 = vld [vmem:[%s11 + $0x440] sm:$0xff]
      %v4869 = vld [vmem:[%s11 + $0x448] sm:$0xff]
      %v4870 = vld [vmem:[%s11 + $0x450] sm:$0xff]
      %v4871 = vld [vmem:[%s11 + $0x458] sm:$0xff]
      %v4872 = vld [vmem:[%s11 + $0x460] sm:$0xff]
      %v4873 = vld [vmem:[%s11 + $0x468] sm:$0xff]
      %v4874 = vld [vmem:[%s11 + $0x470] sm:$0xff]
      %v4875 = vld [vmem:[%s11 + $0x478] sm:$0xff]
      %v4876 = vld [vmem:[%s11 + $0x480] sm:$0xff]
      %v4877 = vld [vmem:[%s11 + $0x488] sm:$0xff]
      %v4878 = vld [vmem:[%s11 + $0x490] sm:$0xff]
      %v4879 = vld [vmem:[%s11 + $0x498] sm:$0xff]
      %v4880 = vld [vmem:[%s11 + $0x4a0] sm:$0xff]
      %v4881 = vld [vmem:[%s11 + $0x4a8] sm:$0xff]
      %v4882 = vld [vmem:[%s11 + $0x4b0] sm:$0xff]
      %v4883 = vld [vmem:[%s11 + $0x4b8] sm:$0xff]
      %v4884 = vld [vmem:[%s11 + $0x4c0] sm:$0xff]
      %v4885 = vld [vmem:[%s11 + $0x4c8] sm:$0xff]
      %v4886 = vld [vmem:[%s11 + $0x4d0] sm:$0xff]
      %v4887 = vld [vmem:[%s11 + $0x4d8] sm:$0xff]
      %v4888 = vld [vmem:[%s11 + $0x4e0] sm:$0xff]
      %v4889 = vld [vmem:[%s11 + $0x4e8] sm:$0xff]
      %v4890 = vld [vmem:[%s11 + $0x4f0] sm:$0xff]
      %v4891 = vld [vmem:[%s11 + $0x4f8] sm:$0xff]
      %v4892 = vld [vmem:[%s11 + $0x500] sm:$0xff]
      %v4893 = vld [vmem:[%s11 + $0x508] sm:$0xff]
      %v4894 = vld [vmem:[%s11 + $0x510] sm:$0xff]
      %v4895 = vld [vmem:[%s11 + $0x518] sm:$0xff]
      %v4896 = vld [vmem:[%s11 + $0x520] sm:$0xff]
      %v4897 = vld [vmem:[%s11 + $0x528] sm:$0xff]
      %v4898 = vld [vmem:[%s11 + $0x530] sm:$0xff]
      %v4899 = vld [vmem:[%s11 + $0x538] sm:$0xff]
      %v4900 = vld [vmem:[%s11 + $0x540] sm:$0xff]
      %v4901 = vld [vmem:[%s11 + $0x548] sm:$0xff]
      %v4902 = vld [vmem:[%s11 + $0x550] sm:$0xff]
      %v4903 = vld [vmem:[%s11 + $0x558] sm:$0xff]
      %v4904 = vld [vmem:[%s11 + $0x560] sm:$0xff]
      %v4905 = vld [vmem:[%s11 + $0x568] sm:$0xff]
      %v4906 = vld [vmem:[%s11 + $0x570] sm:$0xff]
      %v4907 = vld [vmem:[%s11 + $0x578] sm:$0xff]
      %v4908 = vld [vmem:[%s11 + $0x580] sm:$0xff]
      %v4909 = vld [vmem:[%s11 + $0x588] sm:$0xff]
      %v4910 = vld [vmem:[%s11 + $0x590] sm:$0xff]
      %v4911 = vld [vmem:[%s11 + $0x598] sm:$0xff]
      %v4912 = vld [vmem:[%s11 + $0x5a0] sm:$0xff]
      %v4913 = vld [vmem:[%s11 + $0x5a8] sm:$0xff]
      %v4914 = vld [vmem:[%s11 + $0x5b0] sm:$0xff]
      %v4915 = vld [vmem:[%s11 + $0x5b8] sm:$0xff]
      %v4916 = vld [vmem:[%s11 + $0x5c0] sm:$0xff]
      %v4917 = vld [vmem:[%s11 + $0x5c8] sm:$0xff]
      %v4918 = vld [vmem:[%s11 + $0x5d0] sm:$0xff]
      %v4919 = vld [vmem:[%s11 + $0x5d8] sm:$0xff]
      %v4920 = vld [vmem:[%s11 + $0x5e0] sm:$0xff]
      %v4921 = vld [vmem:[%s11 + $0x5e8] sm:$0xff]
      %v4922 = vld [vmem:[%s11 + $0x5f0] sm:$0xff]
      %v4923 = vld [vmem:[%s11 + $0x5f8] sm:$0xff]
      %v4924 = vld [vmem:[%s11 + $0x600] sm:$0xff]
      %v4925 = vld [vmem:[%s11 + $0x608] sm:$0xff]
      %v4926 = vld [vmem:[%s11 + $0x610] sm:$0xff]
      %v4927 = vld [vmem:[%s11 + $0x618] sm:$0xff]
      %v4928 = vld [vmem:[%s11 + $0x620] sm:$0xff]
      %v4929 = vld [vmem:[%s11 + $0x628] sm:$0xff]
      %v4930 = vld [vmem:[%s11 + $0x630] sm:$0xff]
      %v4931 = vld [vmem:[%s11 + $0x638] sm:$0xff]
      %v4932 = vld [vmem:[%s11 + $0x640] sm:$0xff]
      %v4933 = vld [vmem:[%s11 + $0x648] sm:$0xff]
      %v4934 = vld [vmem:[%s11 + $0x650] sm:$0xff]
      %v4935 = vld [vmem:[%s11 + $0x658] sm:$0xff]
      %v4936 = vld [vmem:[%s11 + $0x660] sm:$0xff]
      %v4937 = vld [vmem:[%s11 + $0x668] sm:$0xff]
      %v4938 = vld [vmem:[%s11 + $0x670] sm:$0xff]
      %v4939 = vld [vmem:[%s11 + $0x678] sm:$0xff]
      %v4940 = vld [vmem:[%s11 + $0x680] sm:$0xff]
      %v4941 = vld [vmem:[%s11 + $0x688] sm:$0xff]
      %v4942 = vld [vmem:[%s11 + $0x690] sm:$0xff]
      %v4943 = vld [vmem:[%s11 + $0x698] sm:$0xff]
      %v4944 = vld [vmem:[%s11 + $0x6a0] sm:$0xff]
      %v4945 = vld [vmem:[%s11 + $0x6a8] sm:$0xff]
      %v4946 = vld [vmem:[%s11 + $0x6b0] sm:$0x7f]
      %v4947 = vld [vmem:[%s11 + $0x6b8] sm:$0x7f]
      %vm4948 = vcmask 777216
      %v4950 = vsel %vm4948, %v4731, 0
      %vm4952 = vcmask 1046528
      %v4954 = vsel %vm4952, %v4946, 0
      %v4957 = vsel %vm4952, %v4947, 0
      %4959 = vmatpush.msra.mxu0 %v4762
      %4960 = vmatpush.msra.mxu0 %v4760
      %4961 = vmatpush.msra.mxu0 %v4758
      %4962 = vmatpush.msra.mxu0 %v4756
      %4963 = vmatpush.msra.mxu0 %v4754
      %4964 = vmatpush.msra.mxu0 %v4752
      %4965 = vmatpush.msra.mxu0 %v4750
      %4966 = vmatpush.msra.mxu0 %v4748
      %4967 = vmatpush.msra.mxu0 %v4746
      %4968 = vmatpush.msra.mxu0 %v4744
      %4969 = vmatpush.msra.mxu0 %v4742
      %4970 = vmatpush.msra.mxu0 %v4740
      %4971 = vmatpush.msra.mxu0 %v4738
      %4972 = vmatpush.msra.mxu0 %v4736
      %4973 = vmatpush.msra.mxu0 %v4734
      %4974 = vmatpush.msra.mxu0 %v4732
      %4975 = vmatmul.f32.gmra.mxu0 %v4725
      %v4976 = vpop.f32.mrf.mxu0
      %v4977 = vadd.f32 0.0, %v4976
      %4978 = vdwg.mxu0
      %4979 = vmatpush.msra.mxu0 %v4794
      %4980 = vmatpush.msra.mxu0 %v4792
      %4981 = vmatpush.msra.mxu0 %v4790
      %4982 = vmatpush.msra.mxu0 %v4788
      %4983 = vmatpush.msra.mxu0 %v4786
      %4984 = vmatpush.msra.mxu0 %v4784
      %4985 = vmatpush.msra.mxu0 %v4782
      %4986 = vmatpush.msra.mxu0 %v4780
      %4987 = vmatpush.msra.mxu0 %v4778
      %4988 = vmatpush.msra.mxu0 %v4776
      %4989 = vmatpush.msra.mxu0 %v4774
      %4990 = vmatpush.msra.mxu0 %v4772
      %4991 = vmatpush.msra.mxu0 %v4770
      %4992 = vmatpush.msra.mxu0 %v4768
      %4993 = vmatpush.msra.mxu0 %v4766
      %4994 = vmatpush.msra.mxu0 %v4764
      %4995 = vmatmul.f32.gmra.mxu0 %v4726
      %v4996 = vpop.f32.mrf.mxu0
      %v4997 = vadd.f32 %v4977, %v4996
      %4998 = vdwg.mxu0
      %4999 = vmatpush.msra.mxu0 %v4826
      %5000 = vmatpush.msra.mxu0 %v4824
      %5001 = vmatpush.msra.mxu0 %v4822
      %5002 = vmatpush.msra.mxu0 %v4820
      %5003 = vmatpush.msra.mxu0 %v4818
      %5004 = vmatpush.msra.mxu0 %v4816
      %5005 = vmatpush.msra.mxu0 %v4814
      %5006 = vmatpush.msra.mxu0 %v4812
      %5007 = vmatpush.msra.mxu0 %v4810
      %5008 = vmatpush.msra.mxu0 %v4808
      %5009 = vmatpush.msra.mxu0 %v4806
      %5010 = vmatpush.msra.mxu0 %v4804
      %5011 = vmatpush.msra.mxu0 %v4802
      %5012 = vmatpush.msra.mxu0 %v4800
      %5013 = vmatpush.msra.mxu0 %v4798
      %5014 = vmatpush.msra.mxu0 %v4796
      %5015 = vmatmul.f32.gmra.mxu0 %v4727
      %v5016 = vpop.f32.mrf.mxu0
      %v5017 = vadd.f32 %v4997, %v5016
      %5018 = vdwg.mxu0
      %5019 = vmatpush.msra.mxu0 %v4858
      %5020 = vmatpush.msra.mxu0 %v4856
      %5021 = vmatpush.msra.mxu0 %v4854
      %5022 = vmatpush.msra.mxu0 %v4852
      %5023 = vmatpush.msra.mxu0 %v4850
      %5024 = vmatpush.msra.mxu0 %v4848
      %5025 = vmatpush.msra.mxu0 %v4846
      %5026 = vmatpush.msra.mxu0 %v4844
      %5027 = vmatpush.msra.mxu0 %v4842
      %5028 = vmatpush.msra.mxu0 %v4840
      %5029 = vmatpush.msra.mxu0 %v4838
      %5030 = vmatpush.msra.mxu0 %v4836
      %5031 = vmatpush.msra.mxu0 %v4834
      %5032 = vmatpush.msra.mxu0 %v4832
      %5033 = vmatpush.msra.mxu0 %v4830
      %5034 = vmatpush.msra.mxu0 %v4828
      %5035 = vmatmul.f32.gmra.mxu0 %v4728
      %v5036 = vpop.f32.mrf.mxu0
      %v5037 = vadd.f32 %v5017, %v5036
      %5038 = vdwg.mxu0
      %5039 = vmatpush.msra.mxu0 %v4890
      %5040 = vmatpush.msra.mxu0 %v4888
      %5041 = vmatpush.msra.mxu0 %v4886
      %5042 = vmatpush.msra.mxu0 %v4884
      %5043 = vmatpush.msra.mxu0 %v4882
      %5044 = vmatpush.msra.mxu0 %v4880
      %5045 = vmatpush.msra.mxu0 %v4878
      %5046 = vmatpush.msra.mxu0 %v4876
      %5047 = vmatpush.msra.mxu0 %v4874
      %5048 = vmatpush.msra.mxu0 %v4872
      %5049 = vmatpush.msra.mxu0 %v4870
      %5050 = vmatpush.msra.mxu0 %v4868
      %5051 = vmatpush.msra.mxu0 %v4866
      %5052 = vmatpush.msra.mxu0 %v4864
      %5053 = vmatpush.msra.mxu0 %v4862
      %5054 = vmatpush.msra.mxu0 %v4860
      %5055 = vmatmul.f32.gmra.mxu0 %v4729
      %v5056 = vpop.f32.mrf.mxu0
      %v5057 = vadd.f32 %v5037, %v5056
      %5058 = vdwg.mxu0
      %5059 = vmatpush.msra.mxu0 %v4922
      %5060 = vmatpush.msra.mxu0 %v4920
      %5061 = vmatpush.msra.mxu0 %v4918
      %5062 = vmatpush.msra.mxu0 %v4916
      %5063 = vmatpush.msra.mxu0 %v4914
      %5064 = vmatpush.msra.mxu0 %v4912
      %5065 = vmatpush.msra.mxu0 %v4910
      %5066 = vmatpush.msra.mxu0 %v4908
      %5067 = vmatpush.msra.mxu0 %v4906
      %5068 = vmatpush.msra.mxu0 %v4904
      %5069 = vmatpush.msra.mxu0 %v4902
      %5070 = vmatpush.msra.mxu0 %v4900
      %5071 = vmatpush.msra.mxu0 %v4898
      %5072 = vmatpush.msra.mxu0 %v4896
      %5073 = vmatpush.msra.mxu0 %v4894
      %5074 = vmatpush.msra.mxu0 %v4892
      %5075 = vmatmul.f32.gmra.mxu0 %v4730
      %v5076 = vpop.f32.mrf.mxu0
      %v5077 = vadd.f32 %v5057, %v5076
      %5078 = vdwg.mxu0
      %5079 = vmatpush.msra.mxu0 0.0
      %5080 = vmatpush.msra.mxu0 0.0
      %5081 = vmatpush.msra.mxu0 0.0
      %5082 = vmatpush.msra.mxu0 0.0
      %5083 = vmatpush.msra.mxu0 %v4954
      %5084 = vmatpush.msra.mxu0 %v4944
      %5085 = vmatpush.msra.mxu0 %v4942
      %5086 = vmatpush.msra.mxu0 %v4940
      %5087 = vmatpush.msra.mxu0 %v4938
      %5088 = vmatpush.msra.mxu0 %v4936
      %5089 = vmatpush.msra.mxu0 %v4934
      %5090 = vmatpush.msra.mxu0 %v4932
      %5091 = vmatpush.msra.mxu0 %v4930
      %5092 = vmatpush.msra.mxu0 %v4928
      %5093 = vmatpush.msra.mxu0 %v4926
      %5094 = vmatpush.msra.mxu0 %v4924
      %5095 = vmatmul.f32.gmra.mxu0 %v4950
      %v5096 = vpop.f32.mrf.mxu0
      %v5097 = vadd.f32 %v5077, %v5096
      %5098 = vdwg.mxu0
      %5099 = vmatpush.msra.mxu0 %v4763
      %5100 = vmatpush.msra.mxu0 %v4761
      %5101 = vmatpush.msra.mxu0 %v4759
      %5102 = vmatpush.msra.mxu0 %v4757
      %5103 = vmatpush.msra.mxu0 %v4755
      %5104 = vmatpush.msra.mxu0 %v4753
      %5105 = vmatpush.msra.mxu0 %v4751
      %5106 = vmatpush.msra.mxu0 %v4749
      %5107 = vmatpush.msra.mxu0 %v4747
      %5108 = vmatpush.msra.mxu0 %v4745
      %5109 = vmatpush.msra.mxu0 %v4743
      %5110 = vmatpush.msra.mxu0 %v4741
      %5111 = vmatpush.msra.mxu0 %v4739
      %5112 = vmatpush.msra.mxu0 %v4737
      %5113 = vmatpush.msra.mxu0 %v4735
      %5114 = vmatpush.msra.mxu0 %v4733
      %5115 = vmatmul.f32.gmra.mxu0 %v4725
      %v5116 = vpop.f32.mrf.mxu0
      %v5117 = vadd.f32 0.0, %v5116
      %5118 = vdwg.mxu0
      %5119 = vmatpush.msra.mxu0 %v4795
      %5120 = vmatpush.msra.mxu0 %v4793
      %5121 = vmatpush.msra.mxu0 %v4791
      %5122 = vmatpush.msra.mxu0 %v4789
      %5123 = vmatpush.msra.mxu0 %v4787
      %5124 = vmatpush.msra.mxu0 %v4785
      %5125 = vmatpush.msra.mxu0 %v4783
      %5126 = vmatpush.msra.mxu0 %v4781
      %5127 = vmatpush.msra.mxu0 %v4779
      %5128 = vmatpush.msra.mxu0 %v4777
      %5129 = vmatpush.msra.mxu0 %v4775
      %5130 = vmatpush.msra.mxu0 %v4773
      %5131 = vmatpush.msra.mxu0 %v4771
      %5132 = vmatpush.msra.mxu0 %v4769
      %5133 = vmatpush.msra.mxu0 %v4767
      %5134 = vmatpush.msra.mxu0 %v4765
      %5135 = vmatmul.f32.gmra.mxu0 %v4726
      %v5136 = vpop.f32.mrf.mxu0
      %v5137 = vadd.f32 %v5117, %v5136
      %5138 = vdwg.mxu0
      %5139 = vmatpush.msra.mxu0 %v4827
      %5140 = vmatpush.msra.mxu0 %v4825
      %5141 = vmatpush.msra.mxu0 %v4823
      %5142 = vmatpush.msra.mxu0 %v4821
      %5143 = vmatpush.msra.mxu0 %v4819
      %5144 = vmatpush.msra.mxu0 %v4817
      %5145 = vmatpush.msra.mxu0 %v4815
      %5146 = vmatpush.msra.mxu0 %v4813
      %5147 = vmatpush.msra.mxu0 %v4811
      %5148 = vmatpush.msra.mxu0 %v4809
      %5149 = vmatpush.msra.mxu0 %v4807
      %5150 = vmatpush.msra.mxu0 %v4805
      %5151 = vmatpush.msra.mxu0 %v4803
      %5152 = vmatpush.msra.mxu0 %v4801
      %5153 = vmatpush.msra.mxu0 %v4799
      %5154 = vmatpush.msra.mxu0 %v4797
      %5155 = vmatmul.f32.gmra.mxu0 %v4727
      %v5156 = vpop.f32.mrf.mxu0
      %v5157 = vadd.f32 %v5137, %v5156
      %5158 = vdwg.mxu0
      %5159 = vmatpush.msra.mxu0 %v4859
      %5160 = vmatpush.msra.mxu0 %v4857
      %5161 = vmatpush.msra.mxu0 %v4855
      %5162 = vmatpush.msra.mxu0 %v4853
      %5163 = vmatpush.msra.mxu0 %v4851
      %5164 = vmatpush.msra.mxu0 %v4849
      %5165 = vmatpush.msra.mxu0 %v4847
      %5166 = vmatpush.msra.mxu0 %v4845
      %5167 = vmatpush.msra.mxu0 %v4843
      %5168 = vmatpush.msra.mxu0 %v4841
      %5169 = vmatpush.msra.mxu0 %v4839
      %5170 = vmatpush.msra.mxu0 %v4837
      %5171 = vmatpush.msra.mxu0 %v4835
      %5172 = vmatpush.msra.mxu0 %v4833
      %5173 = vmatpush.msra.mxu0 %v4831
      %5174 = vmatpush.msra.mxu0 %v4829
      %5175 = vmatmul.f32.gmra.mxu0 %v4728
      %v5176 = vpop.f32.mrf.mxu0
      %v5177 = vadd.f32 %v5157, %v5176
      %5178 = vdwg.mxu0
      %5179 = vmatpush.msra.mxu0 %v4891
      %5180 = vmatpush.msra.mxu0 %v4889
      %5181 = vmatpush.msra.mxu0 %v4887
      %5182 = vmatpush.msra.mxu0 %v4885
      %5183 = vmatpush.msra.mxu0 %v4883
      %5184 = vmatpush.msra.mxu0 %v4881
      %5185 = vmatpush.msra.mxu0 %v4879
      %5186 = vmatpush.msra.mxu0 %v4877
      %5187 = vmatpush.msra.mxu0 %v4875
      %5188 = vmatpush.msra.mxu0 %v4873
      %5189 = vmatpush.msra.mxu0 %v4871
      %5190 = vmatpush.msra.mxu0 %v4869
      %5191 = vmatpush.msra.mxu0 %v4867
      %5192 = vmatpush.msra.mxu0 %v4865
      %5193 = vmatpush.msra.mxu0 %v4863
      %5194 = vmatpush.msra.mxu0 %v4861
      %5195 = vmatmul.f32.gmra.mxu0 %v4729
      %v5196 = vpop.f32.mrf.mxu0
      %v5197 = vadd.f32 %v5177, %v5196
      %5198 = vdwg.mxu0
      %5199 = vmatpush.msra.mxu0 %v4923
      %5200 = vmatpush.msra.mxu0 %v4921
      %5201 = vmatpush.msra.mxu0 %v4919
      %5202 = vmatpush.msra.mxu0 %v4917
      %5203 = vmatpush.msra.mxu0 %v4915
      %5204 = vmatpush.msra.mxu0 %v4913
      %5205 = vmatpush.msra.mxu0 %v4911
      %5206 = vmatpush.msra.mxu0 %v4909
      %5207 = vmatpush.msra.mxu0 %v4907
      %5208 = vmatpush.msra.mxu0 %v4905
      %5209 = vmatpush.msra.mxu0 %v4903
      %5210 = vmatpush.msra.mxu0 %v4901
      %5211 = vmatpush.msra.mxu0 %v4899
      %5212 = vmatpush.msra.mxu0 %v4897
      %5213 = vmatpush.msra.mxu0 %v4895
      %5214 = vmatpush.msra.mxu0 %v4893
      %5215 = vmatmul.f32.gmra.mxu0 %v4730
      %v5216 = vpop.f32.mrf.mxu0
      %v5217 = vadd.f32 %v5197, %v5216
      %5218 = vdwg.mxu0
      %5219 = vmatpush.msra.mxu0 0.0
      %5220 = vmatpush.msra.mxu0 0.0
      %5221 = vmatpush.msra.mxu0 0.0
      %5222 = vmatpush.msra.mxu0 0.0
      %5223 = vmatpush.msra.mxu0 %v4957
      %5224 = vmatpush.msra.mxu0 %v4945
      %5225 = vmatpush.msra.mxu0 %v4943
      %5226 = vmatpush.msra.mxu0 %v4941
      %5227 = vmatpush.msra.mxu0 %v4939
      %5228 = vmatpush.msra.mxu0 %v4937
      %5229 = vmatpush.msra.mxu0 %v4935
      %5230 = vmatpush.msra.mxu0 %v4933
      %5231 = vmatpush.msra.mxu0 %v4931
      %5232 = vmatpush.msra.mxu0 %v4929
      %5233 = vmatpush.msra.mxu0 %v4927
      %5234 = vmatpush.msra.mxu0 %v4925
      %5235 = vmatmul.f32.gmra.mxu0 %v4950
      %v5236 = vpop.f32.mrf.mxu0
      %v5237 = vadd.f32 %v5217, %v5236
      %5238 = vdwg.mxu0
      %v5239 = vpack.c.bf16 %v5237, %v5097
      %v5240 = vld [vmem:[%s3] sm:$0xf]
      %v5241 = vld [vmem:[%s3 + $0x8] sm:$0xf]
      %v5244 = vunpack.c.l.b16 %v5240
      %v5245 = vunpack.c.l.b16 %v5241
      %v5246 = vpack.c.b16 %v5245, %v5244
      %5247 = vrot.lane.b32.xlu0 %v5246, 122
      %v5248 = vpop.permute.xlu0 %5247
      %v5250 = vunpack.c.l.b16 %v5239
      %v5251 = vunpack.c.h.b16 %v5239
      %v5252 = vpack.c.b16 %v5250, %v5250
      %v5253 = vpack.c.b16 %v5251, %v5251
      %5254 = vrot.lane.b32.xlu0 %v5252, 127
      %v5255 = vpop.permute.xlu0 %5254
      %5256 = vrot.lane.b32.xlu0 %v5253, 127
      %v5257 = vpop.permute.xlu0 %5256
      %v5258 = vsel %vm488, %v5255, %v5257
      %vm5259 = vcmask 48128
      %v5261 = vsel %vm5259, %v5248, 0
      %vm5263 = vcmask 1042432
      %v5265 = vsel %vm5263, %v5258, 0
      %v5268 = vsel %vm5263, %v5257, 0
      %5270 = vmatpush.bf16.msra.mxu0 0
      %5271 = vmatpush.bf16.msra.mxu0 0
      %5272 = vmatpush.bf16.msra.mxu0 0
      %5273 = vmatpush.bf16.msra.mxu0 0
      %5274 = vmatpush.bf16.msra.mxu0 0
      %5275 = vmatpush.bf16.msra.mxu0 0
      %5276 = vmatpush.bf16.msra.mxu0 0
      %5277 = vmatpush.bf16.msra.mxu0 %v5265
      %5278 = vmatmul.bf16.gmra.mxu0 %v5261
      %v5279 = vpop.f32.mrf.mxu0
      %v5280 = vadd.f32 0.0, %v5279
      %v5281 = vpop.f32.mrf.mxu0
      %v5282 = vadd.f32 0.0, %v5281
      %5283 = vdwg.mxu0
      %5284 = vmatpush.bf16.msra.mxu0 0
      %5285 = vmatpush.bf16.msra.mxu0 0
      %5286 = vmatpush.bf16.msra.mxu0 0
      %5287 = vmatpush.bf16.msra.mxu0 0
      %5288 = vmatpush.bf16.msra.mxu0 0
      %5289 = vmatpush.bf16.msra.mxu0 0
      %5290 = vmatpush.bf16.msra.mxu0 0
      %5291 = vmatpush.bf16.msra.mxu0 %v5268
      %5292 = vmatmul.bf16.gmra.mxu0 %v5261
      %v5293 = vpop.f32.mrf.mxu0
      %v5294 = vadd.f32 0.0, %v5293
      %v5295 = vpop.f32.mrf.mxu0
      %v5296 = vadd.f32 0.0, %v5295
      %5297 = vdwg.mxu0
      %v5299 = vsel %vm5259, %v5246, 0
      %v5302 = vsel %vm5263, %v5252, 0
      %v5305 = vsel %vm5263, %v5253, 0
      %5307 = vmatpush.bf16.msra.mxu0 0
      %5308 = vmatpush.bf16.msra.mxu0 0
      %5309 = vmatpush.bf16.msra.mxu0 0
      %5310 = vmatpush.bf16.msra.mxu0 0
      %5311 = vmatpush.bf16.msra.mxu0 0
      %5312 = vmatpush.bf16.msra.mxu0 0
      %5313 = vmatpush.bf16.msra.mxu0 0
      %5314 = vmatpush.bf16.msra.mxu0 %v5302
      %5315 = vmatmul.bf16.gmra.mxu0 %v5299
      %v5316 = vpop.f32.mrf.mxu0
      %v5317 = vadd.f32 %v5280, %v5316
      %v5318 = vpop.f32.mrf.mxu0
      %v5319 = vadd.f32 %v5282, %v5318
      %5320 = vdwg.mxu0
      %5321 = vmatpush.bf16.msra.mxu0 0
      %5322 = vmatpush.bf16.msra.mxu0 0
      %5323 = vmatpush.bf16.msra.mxu0 0
      %5324 = vmatpush.bf16.msra.mxu0 0
      %5325 = vmatpush.bf16.msra.mxu0 0
      %5326 = vmatpush.bf16.msra.mxu0 0
      %5327 = vmatpush.bf16.msra.mxu0 0
      %5328 = vmatpush.bf16.msra.mxu0 %v5305
      %5329 = vmatmul.bf16.gmra.mxu0 %v5299
      %v5330 = vpop.f32.mrf.mxu0
      %v5331 = vadd.f32 %v5294, %v5330
      %v5332 = vpop.f32.mrf.mxu0
      %v5333 = vadd.f32 %v5296, %v5332
      %5334 = vdwg.mxu0
      %5335 = vrot.lane.b32.xlu0 %v5246, 116
      %v5336 = vpop.permute.xlu0 %5335
      %5337 = vrot.lane.b32.xlu0 %v5252, 126
      %v5338 = vpop.permute.xlu0 %5337
      %5339 = vrot.lane.b32.xlu0 %v5253, 126
      %v5340 = vpop.permute.xlu0 %5339
      %v5341 = vsel %vm775, %v5338, %v5340
      %v5343 = vsel %vm5259, %v5336, 0
      %v5346 = vsel %vm5263, %v5341, 0
      %v5349 = vsel %vm5263, %v5340, 0
      %5351 = vmatpush.bf16.msra.mxu0 0
      %5352 = vmatpush.bf16.msra.mxu0 0
      %5353 = vmatpush.bf16.msra.mxu0 0
      %5354 = vmatpush.bf16.msra.mxu0 0
      %5355 = vmatpush.bf16.msra.mxu0 0
      %5356 = vmatpush.bf16.msra.mxu0 0
      %5357 = vmatpush.bf16.msra.mxu0 0
      %5358 = vmatpush.bf16.msra.mxu0 %v5346
      %5359 = vmatmul.bf16.gmra.mxu0 %v5343
      %v5360 = vpop.f32.mrf.mxu0
      %v5361 = vadd.f32 0.0, %v5360
      %v5362 = vpop.f32.mrf.mxu0
      %v5363 = vadd.f32 0.0, %v5362
      %5364 = vdwg.mxu0
      %5365 = vmatpush.bf16.msra.mxu0 0
      %5366 = vmatpush.bf16.msra.mxu0 0
      %5367 = vmatpush.bf16.msra.mxu0 0
      %5368 = vmatpush.bf16.msra.mxu0 0
      %5369 = vmatpush.bf16.msra.mxu0 0
      %5370 = vmatpush.bf16.msra.mxu0 0
      %5371 = vmatpush.bf16.msra.mxu0 0
      %5372 = vmatpush.bf16.msra.mxu0 %v5349
      %5373 = vmatmul.bf16.gmra.mxu0 %v5343
      %v5374 = vpop.f32.mrf.mxu0
      %v5375 = vadd.f32 0.0, %v5374
      %v5376 = vpop.f32.mrf.mxu0
      %v5377 = vadd.f32 0.0, %v5376
      %5378 = vdwg.mxu0
      %v5379 = vadd.f32 %v5317, %v5361
      %v5380 = vadd.f32 %v5331, %v5375
      %v5381 = vadd.f32 %v5319, %v5363
      %v5382 = vadd.f32 %v5333, %v5377
      %5383 = vrot.lane.b32.xlu0 %v5246, 110
      %v5384 = vpop.permute.xlu0 %5383
      %5385 = vrot.lane.b32.xlu0 %v5252, 125
      %v5386 = vpop.permute.xlu0 %5385
      %5387 = vrot.lane.b32.xlu0 %v5253, 125
      %v5388 = vpop.permute.xlu0 %5387
      %v5389 = vsel %vm946, %v5386, %v5388
      %v5391 = vsel %vm5259, %v5384, 0
      %v5394 = vsel %vm5263, %v5389, 0
      %v5397 = vsel %vm5263, %v5388, 0
      %5399 = vmatpush.bf16.msra.mxu0 0
      %5400 = vmatpush.bf16.msra.mxu0 0
      %5401 = vmatpush.bf16.msra.mxu0 0
      %5402 = vmatpush.bf16.msra.mxu0 0
      %5403 = vmatpush.bf16.msra.mxu0 0
      %5404 = vmatpush.bf16.msra.mxu0 0
      %5405 = vmatpush.bf16.msra.mxu0 0
      %5406 = vmatpush.bf16.msra.mxu0 %v5394
      %5407 = vmatmul.bf16.gmra.mxu0 %v5391
      %v5408 = vpop.f32.mrf.mxu0
      %v5409 = vadd.f32 0.0, %v5408
      %v5410 = vpop.f32.mrf.mxu0
      %v5411 = vadd.f32 0.0, %v5410
      %5412 = vdwg.mxu0
      %5413 = vmatpush.bf16.msra.mxu0 0
      %5414 = vmatpush.bf16.msra.mxu0 0
      %5415 = vmatpush.bf16.msra.mxu0 0
      %5416 = vmatpush.bf16.msra.mxu0 0
      %5417 = vmatpush.bf16.msra.mxu0 0
      %5418 = vmatpush.bf16.msra.mxu0 0
      %5419 = vmatpush.bf16.msra.mxu0 0
      %5420 = vmatpush.bf16.msra.mxu0 %v5397
      %5421 = vmatmul.bf16.gmra.mxu0 %v5391
      %v5422 = vpop.f32.mrf.mxu0
      %v5423 = vadd.f32 0.0, %v5422
      %v5424 = vpop.f32.mrf.mxu0
      %v5425 = vadd.f32 0.0, %v5424
      %5426 = vdwg.mxu0
      %v5427 = vadd.f32 %v5379, %v5409
      %v5428 = vadd.f32 %v5380, %v5423
      %v5429 = vadd.f32 %v5381, %v5411
      %v5430 = vadd.f32 %v5382, %v5425
      %5431 = vrot.lane.b32.xlu0 %v5246, 104
      %v5432 = vpop.permute.xlu0 %5431
      %5433 = vrot.lane.b32.xlu0 %v5252, 124
      %v5434 = vpop.permute.xlu0 %5433
      %5435 = vrot.lane.b32.xlu0 %v5253, 124
      %v5436 = vpop.permute.xlu0 %5435
      %v5437 = vsel %vm1117, %v5434, %v5436
      %v5439 = vsel %vm5259, %v5432, 0
      %v5442 = vsel %vm5263, %v5437, 0
      %v5445 = vsel %vm5263, %v5436, 0
      %5447 = vmatpush.bf16.msra.mxu0 0
      %5448 = vmatpush.bf16.msra.mxu0 0
      %5449 = vmatpush.bf16.msra.mxu0 0
      %5450 = vmatpush.bf16.msra.mxu0 0
      %5451 = vmatpush.bf16.msra.mxu0 0
      %5452 = vmatpush.bf16.msra.mxu0 0
      %5453 = vmatpush.bf16.msra.mxu0 0
      %5454 = vmatpush.bf16.msra.mxu0 %v5442
      %5455 = vmatmul.bf16.gmra.mxu0 %v5439
      %v5456 = vpop.f32.mrf.mxu0
      %v5457 = vadd.f32 0.0, %v5456
      %v5458 = vpop.f32.mrf.mxu0
      %v5459 = vadd.f32 0.0, %v5458
      %5460 = vdwg.mxu0
      %5461 = vmatpush.bf16.msra.mxu0 0
      %5462 = vmatpush.bf16.msra.mxu0 0
      %5463 = vmatpush.bf16.msra.mxu0 0
      %5464 = vmatpush.bf16.msra.mxu0 0
      %5465 = vmatpush.bf16.msra.mxu0 0
      %5466 = vmatpush.bf16.msra.mxu0 0
      %5467 = vmatpush.bf16.msra.mxu0 0
      %5468 = vmatpush.bf16.msra.mxu0 %v5445
      %5469 = vmatmul.bf16.gmra.mxu0 %v5439
      %v5470 = vpop.f32.mrf.mxu0
      %v5471 = vadd.f32 0.0, %v5470
      %v5472 = vpop.f32.mrf.mxu0
      %v5473 = vadd.f32 0.0, %v5472
      %5474 = vdwg.mxu0
      %v5475 = vadd.f32 %v5427, %v5457
      %v5476 = vadd.f32 %v5428, %v5471
      %v5477 = vadd.f32 %v5429, %v5459
      %v5478 = vadd.f32 %v5430, %v5473
      %5479 = vrot.lane.b32.xlu0 %v5246, 98
      %v5480 = vpop.permute.xlu0 %5479
      %5481 = vrot.lane.b32.xlu0 %v5252, 114
      %v5482 = vpop.permute.xlu0 %5481
      %5483 = vrot.lane.b32.xlu0 %v5253, 114
      %v5484 = vpop.permute.xlu0 %5483
      %vm5485 = vcmask 932864
      %v5486 = vsel %vm5485, %v5482, %v5484
      %v5488 = vsel %vm5259, %v5480, 0
      %v5491 = vsel %vm5263, %v5486, 0
      %v5494 = vsel %vm5263, %v5484, 0
      %5496 = vmatpush.bf16.msra.mxu0 0
      %5497 = vmatpush.bf16.msra.mxu0 0
      %5498 = vmatpush.bf16.msra.mxu0 0
      %5499 = vmatpush.bf16.msra.mxu0 0
      %5500 = vmatpush.bf16.msra.mxu0 0
      %5501 = vmatpush.bf16.msra.mxu0 0
      %5502 = vmatpush.bf16.msra.mxu0 0
      %5503 = vmatpush.bf16.msra.mxu0 %v5491
      %5504 = vmatmul.bf16.gmra.mxu0 %v5488
      %v5505 = vpop.f32.mrf.mxu0
      %v5506 = vadd.f32 0.0, %v5505
      %v5507 = vpop.f32.mrf.mxu0
      %v5508 = vadd.f32 0.0, %v5507
      %5509 = vdwg.mxu0
      %5510 = vmatpush.bf16.msra.mxu0 0
      %5511 = vmatpush.bf16.msra.mxu0 0
      %5512 = vmatpush.bf16.msra.mxu0 0
      %5513 = vmatpush.bf16.msra.mxu0 0
      %5514 = vmatpush.bf16.msra.mxu0 0
      %5515 = vmatpush.bf16.msra.mxu0 0
      %5516 = vmatpush.bf16.msra.mxu0 0
      %5517 = vmatpush.bf16.msra.mxu0 %v5494
      %5518 = vmatmul.bf16.gmra.mxu0 %v5488
      %v5519 = vpop.f32.mrf.mxu0
      %v5520 = vadd.f32 0.0, %v5519
      %v5521 = vpop.f32.mrf.mxu0
      %v5522 = vadd.f32 0.0, %v5521
      %5523 = vdwg.mxu0
      %v5524 = vadd.f32 %v5475, %v5506
      %v5525 = vadd.f32 %v5476, %v5520
      %v5526 = vadd.f32 %v5477, %v5508
      %v5527 = vadd.f32 %v5478, %v5522
      %5528 = vrot.lane.b32.xlu0 %v5246, 92
      %v5529 = vpop.permute.xlu0 %5528
      %5530 = vrot.lane.b32.xlu0 %v5252, 113
      %v5531 = vpop.permute.xlu0 %5530
      %5532 = vrot.lane.b32.xlu0 %v5253, 113
      %v5533 = vpop.permute.xlu0 %5532
      %vm5534 = vcmask 924672
      %v5535 = vsel %vm5534, %v5531, %v5533
      %v5537 = vsel %vm5259, %v5529, 0
      %v5540 = vsel %vm5263, %v5535, 0
      %v5543 = vsel %vm5263, %v5533, 0
      %5545 = vmatpush.bf16.msra.mxu0 0
      %5546 = vmatpush.bf16.msra.mxu0 0
      %5547 = vmatpush.bf16.msra.mxu0 0
      %5548 = vmatpush.bf16.msra.mxu0 0
      %5549 = vmatpush.bf16.msra.mxu0 0
      %5550 = vmatpush.bf16.msra.mxu0 0
      %5551 = vmatpush.bf16.msra.mxu0 0
      %5552 = vmatpush.bf16.msra.mxu0 %v5540
      %5553 = vmatmul.bf16.gmra.mxu0 %v5537
      %v5554 = vpop.f32.mrf.mxu0
      %v5555 = vadd.f32 0.0, %v5554
      %v5556 = vpop.f32.mrf.mxu0
      %v5557 = vadd.f32 0.0, %v5556
      %5558 = vdwg.mxu0
      %5559 = vmatpush.bf16.msra.mxu0 0
      %5560 = vmatpush.bf16.msra.mxu0 0
      %5561 = vmatpush.bf16.msra.mxu0 0
      %5562 = vmatpush.bf16.msra.mxu0 0
      %5563 = vmatpush.bf16.msra.mxu0 0
      %5564 = vmatpush.bf16.msra.mxu0 0
      %5565 = vmatpush.bf16.msra.mxu0 0
      %5566 = vmatpush.bf16.msra.mxu0 %v5543
      %5567 = vmatmul.bf16.gmra.mxu0 %v5537
      %v5568 = vpop.f32.mrf.mxu0
      %v5569 = vadd.f32 0.0, %v5568
      %v5570 = vpop.f32.mrf.mxu0
      %v5571 = vadd.f32 0.0, %v5570
      %5572 = vdwg.mxu0
      %v5573 = vadd.f32 %v5524, %v5555
      %v5574 = vadd.f32 %v5525, %v5569
      %v5575 = vadd.f32 %v5526, %v5557
      %v5576 = vadd.f32 %v5527, %v5571
      %5577 = vrot.lane.b32.xlu0 %v5246, 86
      %v5578 = vpop.permute.xlu0 %5577
      %5579 = vrot.lane.b32.xlu0 %v5252, 112
      %v5580 = vpop.permute.xlu0 %5579
      %5581 = vrot.lane.b32.xlu0 %v5253, 112
      %v5582 = vpop.permute.xlu0 %5581
      %vm5583 = vcmask 916480
      %v5584 = vsel %vm5583, %v5580, %v5582
      %v5586 = vsel %vm5259, %v5578, 0
      %v5589 = vsel %vm5263, %v5584, 0
      %v5592 = vsel %vm5263, %v5582, 0
      %5594 = vmatpush.bf16.msra.mxu0 0
      %5595 = vmatpush.bf16.msra.mxu0 0
      %5596 = vmatpush.bf16.msra.mxu0 0
      %5597 = vmatpush.bf16.msra.mxu0 0
      %5598 = vmatpush.bf16.msra.mxu0 0
      %5599 = vmatpush.bf16.msra.mxu0 0
      %5600 = vmatpush.bf16.msra.mxu0 0
      %5601 = vmatpush.bf16.msra.mxu0 %v5589
      %5602 = vmatmul.bf16.gmra.mxu0 %v5586
      %v5603 = vpop.f32.mrf.mxu0
      %v5604 = vadd.f32 0.0, %v5603
      %v5605 = vpop.f32.mrf.mxu0
      %v5606 = vadd.f32 0.0, %v5605
      %5607 = vdwg.mxu0
      %5608 = vmatpush.bf16.msra.mxu0 0
      %5609 = vmatpush.bf16.msra.mxu0 0
      %5610 = vmatpush.bf16.msra.mxu0 0
      %5611 = vmatpush.bf16.msra.mxu0 0
      %5612 = vmatpush.bf16.msra.mxu0 0
      %5613 = vmatpush.bf16.msra.mxu0 0
      %5614 = vmatpush.bf16.msra.mxu0 0
      %5615 = vmatpush.bf16.msra.mxu0 %v5592
      %5616 = vmatmul.bf16.gmra.mxu0 %v5586
      %v5617 = vpop.f32.mrf.mxu0
      %v5618 = vadd.f32 0.0, %v5617
      %v5619 = vpop.f32.mrf.mxu0
      %v5620 = vadd.f32 0.0, %v5619
      %5621 = vdwg.mxu0
      %v5622 = vadd.f32 %v5573, %v5604
      %v5623 = vadd.f32 %v5574, %v5618
      %v5624 = vadd.f32 %v5575, %v5606
      %v5625 = vadd.f32 %v5576, %v5620
      %5626 = vrot.lane.b32.xlu0 %v5246, 80
      %v5627 = vpop.permute.xlu0 %5626
      %5628 = vrot.lane.b32.xlu0 %v5252, 111
      %v5629 = vpop.permute.xlu0 %5628
      %5630 = vrot.lane.b32.xlu0 %v5253, 111
      %v5631 = vpop.permute.xlu0 %5630
      %vm5632 = vcmask 908288
      %v5633 = vsel %vm5632, %v5629, %v5631
      %v5635 = vsel %vm5259, %v5627, 0
      %v5638 = vsel %vm5263, %v5633, 0
      %v5641 = vsel %vm5263, %v5631, 0
      %5643 = vmatpush.bf16.msra.mxu0 0
      %5644 = vmatpush.bf16.msra.mxu0 0
      %5645 = vmatpush.bf16.msra.mxu0 0
      %5646 = vmatpush.bf16.msra.mxu0 0
      %5647 = vmatpush.bf16.msra.mxu0 0
      %5648 = vmatpush.bf16.msra.mxu0 0
      %5649 = vmatpush.bf16.msra.mxu0 0
      %5650 = vmatpush.bf16.msra.mxu0 %v5638
      %5651 = vmatmul.bf16.gmra.mxu0 %v5635
      %v5652 = vpop.f32.mrf.mxu0
      %v5653 = vadd.f32 0.0, %v5652
      %v5654 = vpop.f32.mrf.mxu0
      %v5655 = vadd.f32 0.0, %v5654
      %5656 = vdwg.mxu0
      %5657 = vmatpush.bf16.msra.mxu0 0
      %5658 = vmatpush.bf16.msra.mxu0 0
      %5659 = vmatpush.bf16.msra.mxu0 0
      %5660 = vmatpush.bf16.msra.mxu0 0
      %5661 = vmatpush.bf16.msra.mxu0 0
      %5662 = vmatpush.bf16.msra.mxu0 0
      %5663 = vmatpush.bf16.msra.mxu0 0
      %5664 = vmatpush.bf16.msra.mxu0 %v5641
      %5665 = vmatmul.bf16.gmra.mxu0 %v5635
      %v5666 = vpop.f32.mrf.mxu0
      %v5667 = vadd.f32 0.0, %v5666
      %v5668 = vpop.f32.mrf.mxu0
      %v5669 = vadd.f32 0.0, %v5668
      %5670 = vdwg.mxu0
      %v5671 = vadd.f32 %v5622, %v5653
      %v5672 = vadd.f32 %v5623, %v5667
      %v5673 = vadd.f32 %v5624, %v5655
      %v5674 = vadd.f32 %v5625, %v5669
      %5675 = vrot.lane.b32.xlu0 %v5246, 74
      %v5676 = vpop.permute.xlu0 %5675
      %5677 = vrot.lane.b32.xlu0 %v5252, 110
      %v5678 = vpop.permute.xlu0 %5677
      %5679 = vrot.lane.b32.xlu0 %v5253, 110
      %v5680 = vpop.permute.xlu0 %5679
      %vm5681 = vcmask 900096
      %v5682 = vsel %vm5681, %v5678, %v5680
      %v5684 = vsel %vm5259, %v5676, 0
      %v5687 = vsel %vm5263, %v5682, 0
      %v5690 = vsel %vm5263, %v5680, 0
      %5692 = vmatpush.bf16.msra.mxu0 0
      %5693 = vmatpush.bf16.msra.mxu0 0
      %5694 = vmatpush.bf16.msra.mxu0 0
      %5695 = vmatpush.bf16.msra.mxu0 0
      %5696 = vmatpush.bf16.msra.mxu0 0
      %5697 = vmatpush.bf16.msra.mxu0 0
      %5698 = vmatpush.bf16.msra.mxu0 0
      %5699 = vmatpush.bf16.msra.mxu0 %v5687
      %5700 = vmatmul.bf16.gmra.mxu0 %v5684
      %v5701 = vpop.f32.mrf.mxu0
      %v5702 = vadd.f32 0.0, %v5701
      %v5703 = vpop.f32.mrf.mxu0
      %v5704 = vadd.f32 0.0, %v5703
      %5705 = vdwg.mxu0
      %5706 = vmatpush.bf16.msra.mxu0 0
      %5707 = vmatpush.bf16.msra.mxu0 0
      %5708 = vmatpush.bf16.msra.mxu0 0
      %5709 = vmatpush.bf16.msra.mxu0 0
      %5710 = vmatpush.bf16.msra.mxu0 0
      %5711 = vmatpush.bf16.msra.mxu0 0
      %5712 = vmatpush.bf16.msra.mxu0 0
      %5713 = vmatpush.bf16.msra.mxu0 %v5690
      %5714 = vmatmul.bf16.gmra.mxu0 %v5684
      %v5715 = vpop.f32.mrf.mxu0
      %v5716 = vadd.f32 0.0, %v5715
      %v5717 = vpop.f32.mrf.mxu0
      %v5718 = vadd.f32 0.0, %v5717
      %5719 = vdwg.mxu0
      %v5720 = vadd.f32 %v5671, %v5702
      %v5721 = vadd.f32 %v5672, %v5716
      %v5722 = vadd.f32 %v5673, %v5704
      %v5723 = vadd.f32 %v5674, %v5718
      %5724 = vrot.lane.b32.xlu0 %v5246, 68
      %v5725 = vpop.permute.xlu0 %5724
      %5726 = vrot.lane.b32.xlu0 %v5252, 100
      %v5727 = vpop.permute.xlu0 %5726
      %5728 = vrot.lane.b32.xlu0 %v5253, 100
      %v5729 = vpop.permute.xlu0 %5728
      %vm5730 = vcmask 818176
      %v5731 = vsel %vm5730, %v5727, %v5729
      %v5733 = vsel %vm5259, %v5725, 0
      %v5736 = vsel %vm5263, %v5731, 0
      %v5739 = vsel %vm5263, %v5729, 0
      %5741 = vmatpush.bf16.msra.mxu0 0
      %5742 = vmatpush.bf16.msra.mxu0 0
      %5743 = vmatpush.bf16.msra.mxu0 0
      %5744 = vmatpush.bf16.msra.mxu0 0
      %5745 = vmatpush.bf16.msra.mxu0 0
      %5746 = vmatpush.bf16.msra.mxu0 0
      %5747 = vmatpush.bf16.msra.mxu0 0
      %5748 = vmatpush.bf16.msra.mxu0 %v5736
      %5749 = vmatmul.bf16.gmra.mxu0 %v5733
      %v5750 = vpop.f32.mrf.mxu0
      %v5751 = vadd.f32 0.0, %v5750
      %v5752 = vpop.f32.mrf.mxu0
      %v5753 = vadd.f32 0.0, %v5752
      %5754 = vdwg.mxu0
      %5755 = vmatpush.bf16.msra.mxu0 0
      %5756 = vmatpush.bf16.msra.mxu0 0
      %5757 = vmatpush.bf16.msra.mxu0 0
      %5758 = vmatpush.bf16.msra.mxu0 0
      %5759 = vmatpush.bf16.msra.mxu0 0
      %5760 = vmatpush.bf16.msra.mxu0 0
      %5761 = vmatpush.bf16.msra.mxu0 0
      %5762 = vmatpush.bf16.msra.mxu0 %v5739
      %5763 = vmatmul.bf16.gmra.mxu0 %v5733
      %v5764 = vpop.f32.mrf.mxu0
      %v5765 = vadd.f32 0.0, %v5764
      %v5766 = vpop.f32.mrf.mxu0
      %v5767 = vadd.f32 0.0, %v5766
      %5768 = vdwg.mxu0
      %v5769 = vadd.f32 %v5720, %v5751
      %v5770 = vadd.f32 %v5721, %v5765
      %v5771 = vadd.f32 %v5722, %v5753
      %v5772 = vadd.f32 %v5723, %v5767
      %5773 = vrot.lane.b32.xlu0 %v5246, 62
      %v5774 = vpop.permute.xlu0 %5773
      %5775 = vrot.lane.b32.xlu0 %v5252, 99
      %v5776 = vpop.permute.xlu0 %5775
      %5777 = vrot.lane.b32.xlu0 %v5253, 99
      %v5778 = vpop.permute.xlu0 %5777
      %vm5779 = vcmask 809984
      %v5780 = vsel %vm5779, %v5776, %v5778
      %v5782 = vsel %vm5259, %v5774, 0
      %v5785 = vsel %vm5263, %v5780, 0
      %v5788 = vsel %vm5263, %v5778, 0
      %5790 = vmatpush.bf16.msra.mxu0 0
      %5791 = vmatpush.bf16.msra.mxu0 0
      %5792 = vmatpush.bf16.msra.mxu0 0
      %5793 = vmatpush.bf16.msra.mxu0 0
      %5794 = vmatpush.bf16.msra.mxu0 0
      %5795 = vmatpush.bf16.msra.mxu0 0
      %5796 = vmatpush.bf16.msra.mxu0 0
      %5797 = vmatpush.bf16.msra.mxu0 %v5785
      %5798 = vmatmul.bf16.gmra.mxu0 %v5782
      %v5799 = vpop.f32.mrf.mxu0
      %v5800 = vadd.f32 0.0, %v5799
      %v5801 = vpop.f32.mrf.mxu0
      %v5802 = vadd.f32 0.0, %v5801
      %5803 = vdwg.mxu0
      %5804 = vmatpush.bf16.msra.mxu0 0
      %5805 = vmatpush.bf16.msra.mxu0 0
      %5806 = vmatpush.bf16.msra.mxu0 0
      %5807 = vmatpush.bf16.msra.mxu0 0
      %5808 = vmatpush.bf16.msra.mxu0 0
      %5809 = vmatpush.bf16.msra.mxu0 0
      %5810 = vmatpush.bf16.msra.mxu0 0
      %5811 = vmatpush.bf16.msra.mxu0 %v5788
      %5812 = vmatmul.bf16.gmra.mxu0 %v5782
      %v5813 = vpop.f32.mrf.mxu0
      %v5814 = vadd.f32 0.0, %v5813
      %v5815 = vpop.f32.mrf.mxu0
      %v5816 = vadd.f32 0.0, %v5815
      %5817 = vdwg.mxu0
      %v5818 = vadd.f32 %v5769, %v5800
      %v5819 = vadd.f32 %v5770, %v5814
      %v5820 = vadd.f32 %v5771, %v5802
      %v5821 = vadd.f32 %v5772, %v5816
      %5822 = vrot.lane.b32.xlu0 %v5246, 56
      %v5823 = vpop.permute.xlu0 %5822
      %5824 = vrot.lane.b32.xlu0 %v5252, 98
      %v5825 = vpop.permute.xlu0 %5824
      %5826 = vrot.lane.b32.xlu0 %v5253, 98
      %v5827 = vpop.permute.xlu0 %5826
      %vm5828 = vcmask 801792
      %v5829 = vsel %vm5828, %v5825, %v5827
      %v5831 = vsel %vm5259, %v5823, 0
      %v5834 = vsel %vm5263, %v5829, 0
      %v5837 = vsel %vm5263, %v5827, 0
      %5839 = vmatpush.bf16.msra.mxu0 0
      %5840 = vmatpush.bf16.msra.mxu0 0
      %5841 = vmatpush.bf16.msra.mxu0 0
      %5842 = vmatpush.bf16.msra.mxu0 0
      %5843 = vmatpush.bf16.msra.mxu0 0
      %5844 = vmatpush.bf16.msra.mxu0 0
      %5845 = vmatpush.bf16.msra.mxu0 0
      %5846 = vmatpush.bf16.msra.mxu0 %v5834
      %5847 = vmatmul.bf16.gmra.mxu0 %v5831
      %v5848 = vpop.f32.mrf.mxu0
      %v5849 = vadd.f32 0.0, %v5848
      %v5850 = vpop.f32.mrf.mxu0
      %v5851 = vadd.f32 0.0, %v5850
      %5852 = vdwg.mxu0
      %5853 = vmatpush.bf16.msra.mxu0 0
      %5854 = vmatpush.bf16.msra.mxu0 0
      %5855 = vmatpush.bf16.msra.mxu0 0
      %5856 = vmatpush.bf16.msra.mxu0 0
      %5857 = vmatpush.bf16.msra.mxu0 0
      %5858 = vmatpush.bf16.msra.mxu0 0
      %5859 = vmatpush.bf16.msra.mxu0 0
      %5860 = vmatpush.bf16.msra.mxu0 %v5837
      %5861 = vmatmul.bf16.gmra.mxu0 %v5831
      %v5862 = vpop.f32.mrf.mxu0
      %v5863 = vadd.f32 0.0, %v5862
      %v5864 = vpop.f32.mrf.mxu0
      %v5865 = vadd.f32 0.0, %v5864
      %5866 = vdwg.mxu0
      %v5867 = vadd.f32 %v5818, %v5849
      %v5868 = vadd.f32 %v5819, %v5863
      %v5869 = vadd.f32 %v5820, %v5851
      %v5870 = vadd.f32 %v5821, %v5865
      %5871 = vrot.lane.b32.xlu0 %v5246, 50
      %v5872 = vpop.permute.xlu0 %5871
      %5873 = vrot.lane.b32.xlu0 %v5252, 97
      %v5874 = vpop.permute.xlu0 %5873
      %5875 = vrot.lane.b32.xlu0 %v5253, 97
      %v5876 = vpop.permute.xlu0 %5875
      %vm5877 = vcmask 793600
      %v5878 = vsel %vm5877, %v5874, %v5876
      %v5880 = vsel %vm5259, %v5872, 0
      %v5883 = vsel %vm5263, %v5878, 0
      %v5886 = vsel %vm5263, %v5876, 0
      %5888 = vmatpush.bf16.msra.mxu0 0
      %5889 = vmatpush.bf16.msra.mxu0 0
      %5890 = vmatpush.bf16.msra.mxu0 0
      %5891 = vmatpush.bf16.msra.mxu0 0
      %5892 = vmatpush.bf16.msra.mxu0 0
      %5893 = vmatpush.bf16.msra.mxu0 0
      %5894 = vmatpush.bf16.msra.mxu0 0
      %5895 = vmatpush.bf16.msra.mxu0 %v5883
      %5896 = vmatmul.bf16.gmra.mxu0 %v5880
      %v5897 = vpop.f32.mrf.mxu0
      %v5898 = vadd.f32 0.0, %v5897
      %v5899 = vpop.f32.mrf.mxu0
      %v5900 = vadd.f32 0.0, %v5899
      %5901 = vdwg.mxu0
      %5902 = vmatpush.bf16.msra.mxu0 0
      %5903 = vmatpush.bf16.msra.mxu0 0
      %5904 = vmatpush.bf16.msra.mxu0 0
      %5905 = vmatpush.bf16.msra.mxu0 0
      %5906 = vmatpush.bf16.msra.mxu0 0
      %5907 = vmatpush.bf16.msra.mxu0 0
      %5908 = vmatpush.bf16.msra.mxu0 0
      %5909 = vmatpush.bf16.msra.mxu0 %v5886
      %5910 = vmatmul.bf16.gmra.mxu0 %v5880
      %v5911 = vpop.f32.mrf.mxu0
      %v5912 = vadd.f32 0.0, %v5911
      %v5913 = vpop.f32.mrf.mxu0
      %v5914 = vadd.f32 0.0, %v5913
      %5915 = vdwg.mxu0
      %v5916 = vadd.f32 %v5867, %v5898
      %v5917 = vadd.f32 %v5868, %v5912
      %v5918 = vadd.f32 %v5869, %v5900
      %v5919 = vadd.f32 %v5870, %v5914
      %5920 = vrot.lane.b32.xlu0 %v5246, 44
      %v5921 = vpop.permute.xlu0 %5920
      %5922 = vrot.lane.b32.xlu0 %v5252, 96
      %v5923 = vpop.permute.xlu0 %5922
      %5924 = vrot.lane.b32.xlu0 %v5253, 96
      %v5925 = vpop.permute.xlu0 %5924
      %v5926 = vsel %vm1288, %v5923, %v5925
      %v5928 = vsel %vm5259, %v5921, 0
      %v5931 = vsel %vm5263, %v5926, 0
      %v5934 = vsel %vm5263, %v5925, 0
      %5936 = vmatpush.bf16.msra.mxu0 0
      %5937 = vmatpush.bf16.msra.mxu0 0
      %5938 = vmatpush.bf16.msra.mxu0 0
      %5939 = vmatpush.bf16.msra.mxu0 0
      %5940 = vmatpush.bf16.msra.mxu0 0
      %5941 = vmatpush.bf16.msra.mxu0 0
      %5942 = vmatpush.bf16.msra.mxu0 0
      %5943 = vmatpush.bf16.msra.mxu0 %v5931
      %5944 = vmatmul.bf16.gmra.mxu0 %v5928
      %v5945 = vpop.f32.mrf.mxu0
      %v5946 = vadd.f32 0.0, %v5945
      %v5947 = vpop.f32.mrf.mxu0
      %v5948 = vadd.f32 0.0, %v5947
      %5949 = vdwg.mxu0
      %5950 = vmatpush.bf16.msra.mxu0 0
      %5951 = vmatpush.bf16.msra.mxu0 0
      %5952 = vmatpush.bf16.msra.mxu0 0
      %5953 = vmatpush.bf16.msra.mxu0 0
      %5954 = vmatpush.bf16.msra.mxu0 0
      %5955 = vmatpush.bf16.msra.mxu0 0
      %5956 = vmatpush.bf16.msra.mxu0 0
      %5957 = vmatpush.bf16.msra.mxu0 %v5934
      %5958 = vmatmul.bf16.gmra.mxu0 %v5928
      %v5959 = vpop.f32.mrf.mxu0
      %v5960 = vadd.f32 0.0, %v5959
      %v5961 = vpop.f32.mrf.mxu0
      %v5962 = vadd.f32 0.0, %v5961
      %5963 = vdwg.mxu0
      %v5964 = vadd.f32 %v5916, %v5946
      %v5965 = vadd.f32 %v5917, %v5960
      %v5966 = vadd.f32 %v5918, %v5948
      %v5967 = vadd.f32 %v5919, %v5962
      %5968 = vrot.lane.b32.xlu0 %v5246, 38
      %v5969 = vpop.permute.xlu0 %5968
      %5970 = vrot.lane.b32.xlu0 %v5252, 86
      %v5971 = vpop.permute.xlu0 %5970
      %5972 = vrot.lane.b32.xlu0 %v5253, 86
      %v5973 = vpop.permute.xlu0 %5972
      %vm5974 = vcmask 703488
      %v5975 = vsel %vm5974, %v5971, %v5973
      %v5977 = vsel %vm5259, %v5969, 0
      %v5980 = vsel %vm5263, %v5975, 0
      %v5983 = vsel %vm5263, %v5973, 0
      %5985 = vmatpush.bf16.msra.mxu0 0
      %5986 = vmatpush.bf16.msra.mxu0 0
      %5987 = vmatpush.bf16.msra.mxu0 0
      %5988 = vmatpush.bf16.msra.mxu0 0
      %5989 = vmatpush.bf16.msra.mxu0 0
      %5990 = vmatpush.bf16.msra.mxu0 0
      %5991 = vmatpush.bf16.msra.mxu0 0
      %5992 = vmatpush.bf16.msra.mxu0 %v5980
      %5993 = vmatmul.bf16.gmra.mxu0 %v5977
      %v5994 = vpop.f32.mrf.mxu0
      %v5995 = vadd.f32 0.0, %v5994
      %v5996 = vpop.f32.mrf.mxu0
      %v5997 = vadd.f32 0.0, %v5996
      %5998 = vdwg.mxu0
      %5999 = vmatpush.bf16.msra.mxu0 0
      %6000 = vmatpush.bf16.msra.mxu0 0
      %6001 = vmatpush.bf16.msra.mxu0 0
      %6002 = vmatpush.bf16.msra.mxu0 0
      %6003 = vmatpush.bf16.msra.mxu0 0
      %6004 = vmatpush.bf16.msra.mxu0 0
      %6005 = vmatpush.bf16.msra.mxu0 0
      %6006 = vmatpush.bf16.msra.mxu0 %v5983
      %6007 = vmatmul.bf16.gmra.mxu0 %v5977
      %v6008 = vpop.f32.mrf.mxu0
      %v6009 = vadd.f32 0.0, %v6008
      %v6010 = vpop.f32.mrf.mxu0
      %v6011 = vadd.f32 0.0, %v6010
      %6012 = vdwg.mxu0
      %v6013 = vadd.f32 %v5964, %v5995
      %v6014 = vadd.f32 %v5965, %v6009
      %v6015 = vadd.f32 %v5966, %v5997
      %v6016 = vadd.f32 %v5967, %v6011
      %6017 = vrot.lane.b32.xlu0 %v5246, 32
      %v6018 = vpop.permute.xlu0 %6017
      %6019 = vrot.lane.b32.xlu0 %v5252, 85
      %v6020 = vpop.permute.xlu0 %6019
      %6021 = vrot.lane.b32.xlu0 %v5253, 85
      %v6022 = vpop.permute.xlu0 %6021
      %vm6023 = vcmask 695296
      %v6024 = vsel %vm6023, %v6020, %v6022
      %v6026 = vsel %vm5259, %v6018, 0
      %v6029 = vsel %vm5263, %v6024, 0
      %v6032 = vsel %vm5263, %v6022, 0
      %6034 = vmatpush.bf16.msra.mxu0 0
      %6035 = vmatpush.bf16.msra.mxu0 0
      %6036 = vmatpush.bf16.msra.mxu0 0
      %6037 = vmatpush.bf16.msra.mxu0 0
      %6038 = vmatpush.bf16.msra.mxu0 0
      %6039 = vmatpush.bf16.msra.mxu0 0
      %6040 = vmatpush.bf16.msra.mxu0 0
      %6041 = vmatpush.bf16.msra.mxu0 %v6029
      %6042 = vmatmul.bf16.gmra.mxu0 %v6026
      %v6043 = vpop.f32.mrf.mxu0
      %v6044 = vadd.f32 0.0, %v6043
      %v6045 = vpop.f32.mrf.mxu0
      %v6046 = vadd.f32 0.0, %v6045
      %6047 = vdwg.mxu0
      %6048 = vmatpush.bf16.msra.mxu0 0
      %6049 = vmatpush.bf16.msra.mxu0 0
      %6050 = vmatpush.bf16.msra.mxu0 0
      %6051 = vmatpush.bf16.msra.mxu0 0
      %6052 = vmatpush.bf16.msra.mxu0 0
      %6053 = vmatpush.bf16.msra.mxu0 0
      %6054 = vmatpush.bf16.msra.mxu0 0
      %6055 = vmatpush.bf16.msra.mxu0 %v6032
      %6056 = vmatmul.bf16.gmra.mxu0 %v6026
      %v6057 = vpop.f32.mrf.mxu0
      %v6058 = vadd.f32 0.0, %v6057
      %v6059 = vpop.f32.mrf.mxu0
      %v6060 = vadd.f32 0.0, %v6059
      %6061 = vdwg.mxu0
      %v6062 = vadd.f32 %v6013, %v6044
      %v6063 = vadd.f32 %v6014, %v6058
      %v6064 = vadd.f32 %v6015, %v6046
      %v6065 = vadd.f32 %v6016, %v6060
      %6066 = vrot.lane.b32.xlu0 %v5246, 26
      %v6067 = vpop.permute.xlu0 %6066
      %6068 = vrot.lane.b32.xlu0 %v5252, 84
      %v6069 = vpop.permute.xlu0 %6068
      %6070 = vrot.lane.b32.xlu0 %v5253, 84
      %v6071 = vpop.permute.xlu0 %6070
      %vm6072 = vcmask 687104
      %v6073 = vsel %vm6072, %v6069, %v6071
      %v6075 = vsel %vm5259, %v6067, 0
      %v6078 = vsel %vm5263, %v6073, 0
      %v6081 = vsel %vm5263, %v6071, 0
      %6083 = vmatpush.bf16.msra.mxu0 0
      %6084 = vmatpush.bf16.msra.mxu0 0
      %6085 = vmatpush.bf16.msra.mxu0 0
      %6086 = vmatpush.bf16.msra.mxu0 0
      %6087 = vmatpush.bf16.msra.mxu0 0
      %6088 = vmatpush.bf16.msra.mxu0 0
      %6089 = vmatpush.bf16.msra.mxu0 0
      %6090 = vmatpush.bf16.msra.mxu0 %v6078
      %6091 = vmatmul.bf16.gmra.mxu0 %v6075
      %v6092 = vpop.f32.mrf.mxu0
      %v6093 = vadd.f32 0.0, %v6092
      %v6094 = vpop.f32.mrf.mxu0
      %v6095 = vadd.f32 0.0, %v6094
      %6096 = vdwg.mxu0
      %6097 = vmatpush.bf16.msra.mxu0 0
      %6098 = vmatpush.bf16.msra.mxu0 0
      %6099 = vmatpush.bf16.msra.mxu0 0
      %6100 = vmatpush.bf16.msra.mxu0 0
      %6101 = vmatpush.bf16.msra.mxu0 0
      %6102 = vmatpush.bf16.msra.mxu0 0
      %6103 = vmatpush.bf16.msra.mxu0 0
      %6104 = vmatpush.bf16.msra.mxu0 %v6081
      %6105 = vmatmul.bf16.gmra.mxu0 %v6075
      %v6106 = vpop.f32.mrf.mxu0
      %v6107 = vadd.f32 0.0, %v6106
      %v6108 = vpop.f32.mrf.mxu0
      %v6109 = vadd.f32 0.0, %v6108
      %6110 = vdwg.mxu0
      %v6111 = vadd.f32 %v6062, %v6093
      %v6112 = vadd.f32 %v6063, %v6107
      %v6113 = vadd.f32 %v6064, %v6095
      %v6114 = vadd.f32 %v6065, %v6109
      %6115 = vrot.lane.b32.xlu0 %v5246, 20
      %v6116 = vpop.permute.xlu0 %6115
      %6117 = vrot.lane.b32.xlu0 %v5252, 83
      %v6118 = vpop.permute.xlu0 %6117
      %6119 = vrot.lane.b32.xlu0 %v5253, 83
      %v6120 = vpop.permute.xlu0 %6119
      %vm6121 = vcmask 678912
      %v6122 = vsel %vm6121, %v6118, %v6120
      %v6124 = vsel %vm5259, %v6116, 0
      %v6127 = vsel %vm5263, %v6122, 0
      %v6130 = vsel %vm5263, %v6120, 0
      %6132 = vmatpush.bf16.msra.mxu0 0
      %6133 = vmatpush.bf16.msra.mxu0 0
      %6134 = vmatpush.bf16.msra.mxu0 0
      %6135 = vmatpush.bf16.msra.mxu0 0
      %6136 = vmatpush.bf16.msra.mxu0 0
      %6137 = vmatpush.bf16.msra.mxu0 0
      %6138 = vmatpush.bf16.msra.mxu0 0
      %6139 = vmatpush.bf16.msra.mxu0 %v6127
      %6140 = vmatmul.bf16.gmra.mxu0 %v6124
      %v6141 = vpop.f32.mrf.mxu0
      %v6142 = vadd.f32 0.0, %v6141
      %v6143 = vpop.f32.mrf.mxu0
      %v6144 = vadd.f32 0.0, %v6143
      %6145 = vdwg.mxu0
      %6146 = vmatpush.bf16.msra.mxu0 0
      %6147 = vmatpush.bf16.msra.mxu0 0
      %6148 = vmatpush.bf16.msra.mxu0 0
      %6149 = vmatpush.bf16.msra.mxu0 0
      %6150 = vmatpush.bf16.msra.mxu0 0
      %6151 = vmatpush.bf16.msra.mxu0 0
      %6152 = vmatpush.bf16.msra.mxu0 0
      %6153 = vmatpush.bf16.msra.mxu0 %v6130
      %6154 = vmatmul.bf16.gmra.mxu0 %v6124
      %v6155 = vpop.f32.mrf.mxu0
      %v6156 = vadd.f32 0.0, %v6155
      %v6157 = vpop.f32.mrf.mxu0
      %v6158 = vadd.f32 0.0, %v6157
      %6159 = vdwg.mxu0
      %v6160 = vadd.f32 %v6111, %v6142
      %v6161 = vadd.f32 %v6112, %v6156
      %v6162 = vadd.f32 %v6113, %v6144
      %v6163 = vadd.f32 %v6114, %v6158
      %6164 = vrot.lane.b32.xlu0 %v5246, 14
      %v6165 = vpop.permute.xlu0 %6164
      %6166 = vrot.lane.b32.xlu0 %v5252, 82
      %v6167 = vpop.permute.xlu0 %6166
      %6168 = vrot.lane.b32.xlu0 %v5253, 82
      %v6169 = vpop.permute.xlu0 %6168
      %vm6170 = vcmask 670720
      %v6171 = vsel %vm6170, %v6167, %v6169
      %v6173 = vsel %vm5259, %v6165, 0
      %v6176 = vsel %vm5263, %v6171, 0
      %v6179 = vsel %vm5263, %v6169, 0
      %6181 = vmatpush.bf16.msra.mxu0 0
      %6182 = vmatpush.bf16.msra.mxu0 0
      %6183 = vmatpush.bf16.msra.mxu0 0
      %6184 = vmatpush.bf16.msra.mxu0 0
      %6185 = vmatpush.bf16.msra.mxu0 0
      %6186 = vmatpush.bf16.msra.mxu0 0
      %6187 = vmatpush.bf16.msra.mxu0 0
      %6188 = vmatpush.bf16.msra.mxu0 %v6176
      %6189 = vmatmul.bf16.gmra.mxu0 %v6173
      %v6190 = vpop.f32.mrf.mxu0
      %v6191 = vadd.f32 0.0, %v6190
      %v6192 = vpop.f32.mrf.mxu0
      %v6193 = vadd.f32 0.0, %v6192
      %6194 = vdwg.mxu0
      %6195 = vmatpush.bf16.msra.mxu0 0
      %6196 = vmatpush.bf16.msra.mxu0 0
      %6197 = vmatpush.bf16.msra.mxu0 0
      %6198 = vmatpush.bf16.msra.mxu0 0
      %6199 = vmatpush.bf16.msra.mxu0 0
      %6200 = vmatpush.bf16.msra.mxu0 0
      %6201 = vmatpush.bf16.msra.mxu0 0
      %6202 = vmatpush.bf16.msra.mxu0 %v6179
      %6203 = vmatmul.bf16.gmra.mxu0 %v6173
      %v6204 = vpop.f32.mrf.mxu0
      %v6205 = vadd.f32 0.0, %v6204
      %v6206 = vpop.f32.mrf.mxu0
      %v6207 = vadd.f32 0.0, %v6206
      %6208 = vdwg.mxu0
      %v6209 = vadd.f32 %v6160, %v6191
      %v6210 = vadd.f32 %v6161, %v6205
      %v6211 = vadd.f32 %v6162, %v6193
      %v6212 = vadd.f32 %v6163, %v6207
      %6213 = vrot.lane.b32.xlu0 %v5246, 8
      %v6214 = vpop.permute.xlu0 %6213
      %6215 = vrot.lane.b32.xlu0 %v5252, 72
      %v6216 = vpop.permute.xlu0 %6215
      %6217 = vrot.lane.b32.xlu0 %v5253, 72
      %v6218 = vpop.permute.xlu0 %6217
      %vm6219 = vcmask 588800
      %v6220 = vsel %vm6219, %v6216, %v6218
      %v6222 = vsel %vm5259, %v6214, 0
      %v6225 = vsel %vm5263, %v6220, 0
      %v6228 = vsel %vm5263, %v6218, 0
      %6230 = vmatpush.bf16.msra.mxu0 0
      %6231 = vmatpush.bf16.msra.mxu0 0
      %6232 = vmatpush.bf16.msra.mxu0 0
      %6233 = vmatpush.bf16.msra.mxu0 0
      %6234 = vmatpush.bf16.msra.mxu0 0
      %6235 = vmatpush.bf16.msra.mxu0 0
      %6236 = vmatpush.bf16.msra.mxu0 0
      %6237 = vmatpush.bf16.msra.mxu0 %v6225
      %6238 = vmatmul.bf16.gmra.mxu0 %v6222
      %v6239 = vpop.f32.mrf.mxu0
      %v6240 = vadd.f32 0.0, %v6239
      %v6241 = vpop.f32.mrf.mxu0
      %v6242 = vadd.f32 0.0, %v6241
      %6243 = vdwg.mxu0
      %6244 = vmatpush.bf16.msra.mxu0 0
      %6245 = vmatpush.bf16.msra.mxu0 0
      %6246 = vmatpush.bf16.msra.mxu0 0
      %6247 = vmatpush.bf16.msra.mxu0 0
      %6248 = vmatpush.bf16.msra.mxu0 0
      %6249 = vmatpush.bf16.msra.mxu0 0
      %6250 = vmatpush.bf16.msra.mxu0 0
      %6251 = vmatpush.bf16.msra.mxu0 %v6228
      %6252 = vmatmul.bf16.gmra.mxu0 %v6222
      %v6253 = vpop.f32.mrf.mxu0
      %v6254 = vadd.f32 0.0, %v6253
      %v6255 = vpop.f32.mrf.mxu0
      %v6256 = vadd.f32 0.0, %v6255
      %6257 = vdwg.mxu0
      %v6258 = vadd.f32 %v6209, %v6240
      %v6259 = vadd.f32 %v6210, %v6254
      %v6260 = vadd.f32 %v6211, %v6242
      %v6261 = vadd.f32 %v6212, %v6256
      %v6262 = vld [vmem:[%s3] sm:$0xff]
      %v6263 = vld [vmem:[%s3 + $0x8] sm:$0xff]
      %v6266 = vunpack.c.l.b16 %v6262
      %v6267 = vunpack.c.h.b16 %v6262
      %v6268 = vunpack.c.l.b16 %v6263
      %v6269 = vunpack.c.h.b16 %v6263
      %v6270 = vpack.c.b16 %v6268, %v6266
      %v6271 = vpack.c.b16 %v6269, %v6267
      %6272 = vrot.lane.b32.xlu0 %v6270, 2
      %v6273 = vpop.permute.xlu0 %6272
      %6274 = vrot.lane.b32.xlu0 %v6271, 2
      %v6275 = vpop.permute.xlu0 %6274
      %vm6276 = vcmask 15360
      %v6277 = vsel %vm6276, %v6273, %v6275
      %6278 = vrot.lane.b32.xlu0 %v5252, 71
      %v6279 = vpop.permute.xlu0 %6278
      %6280 = vrot.lane.b32.xlu0 %v5253, 71
      %v6281 = vpop.permute.xlu0 %6280
      %vm6282 = vcmask 580608
      %v6283 = vsel %vm6282, %v6279, %v6281
      %v6285 = vsel %vm5259, %v6277, 0
      %v6288 = vsel %vm5263, %v6283, 0
      %v6291 = vsel %vm5263, %v6281, 0
      %6293 = vmatpush.bf16.msra.mxu0 0
      %6294 = vmatpush.bf16.msra.mxu0 0
      %6295 = vmatpush.bf16.msra.mxu0 0
      %6296 = vmatpush.bf16.msra.mxu0 0
      %6297 = vmatpush.bf16.msra.mxu0 0
      %6298 = vmatpush.bf16.msra.mxu0 0
      %6299 = vmatpush.bf16.msra.mxu0 0
      %6300 = vmatpush.bf16.msra.mxu0 %v6288
      %6301 = vmatmul.bf16.gmra.mxu0 %v6285
      %v6302 = vpop.f32.mrf.mxu0
      %v6303 = vadd.f32 0.0, %v6302
      %v6304 = vpop.f32.mrf.mxu0
      %v6305 = vadd.f32 0.0, %v6304
      %6306 = vdwg.mxu0
      %6307 = vmatpush.bf16.msra.mxu0 0
      %6308 = vmatpush.bf16.msra.mxu0 0
      %6309 = vmatpush.bf16.msra.mxu0 0
      %6310 = vmatpush.bf16.msra.mxu0 0
      %6311 = vmatpush.bf16.msra.mxu0 0
      %6312 = vmatpush.bf16.msra.mxu0 0
      %6313 = vmatpush.bf16.msra.mxu0 0
      %6314 = vmatpush.bf16.msra.mxu0 %v6291
      %6315 = vmatmul.bf16.gmra.mxu0 %v6285
      %v6316 = vpop.f32.mrf.mxu0
      %v6317 = vadd.f32 0.0, %v6316
      %v6318 = vpop.f32.mrf.mxu0
      %v6319 = vadd.f32 0.0, %v6318
      %6320 = vdwg.mxu0
      %v6321 = vadd.f32 %v6258, %v6303
      %v6322 = vadd.f32 %v6259, %v6317
      %v6323 = vadd.f32 %v6260, %v6305
      %v6324 = vadd.f32 %v6261, %v6319
      %v6325 = vld [vmem:[%s3 + $0x4] sm:$0xf]
      %v6326 = vld [vmem:[%s3 + $0xc] sm:$0xf]
      %v6329 = vunpack.c.l.b16 %v6325
      %v6330 = vunpack.c.l.b16 %v6326
      %v6331 = vpack.c.b16 %v6330, %v6329
      %6332 = vrot.lane.b32.xlu0 %v6331, 124
      %v6333 = vpop.permute.xlu0 %6332
      %6334 = vrot.lane.b32.xlu0 %v5252, 70
      %v6335 = vpop.permute.xlu0 %6334
      %6336 = vrot.lane.b32.xlu0 %v5253, 70
      %v6337 = vpop.permute.xlu0 %6336
      %vm6338 = vcmask 572416
      %v6339 = vsel %vm6338, %v6335, %v6337
      %v6341 = vsel %vm5259, %v6333, 0
      %v6344 = vsel %vm5263, %v6339, 0
      %v6347 = vsel %vm5263, %v6337, 0
      %6349 = vmatpush.bf16.msra.mxu0 0
      %6350 = vmatpush.bf16.msra.mxu0 0
      %6351 = vmatpush.bf16.msra.mxu0 0
      %6352 = vmatpush.bf16.msra.mxu0 0
      %6353 = vmatpush.bf16.msra.mxu0 0
      %6354 = vmatpush.bf16.msra.mxu0 0
      %6355 = vmatpush.bf16.msra.mxu0 0
      %6356 = vmatpush.bf16.msra.mxu0 %v6344
      %6357 = vmatmul.bf16.gmra.mxu0 %v6341
      %v6358 = vpop.f32.mrf.mxu0
      %v6359 = vadd.f32 0.0, %v6358
      %v6360 = vpop.f32.mrf.mxu0
      %v6361 = vadd.f32 0.0, %v6360
      %6362 = vdwg.mxu0
      %6363 = vmatpush.bf16.msra.mxu0 0
      %6364 = vmatpush.bf16.msra.mxu0 0
      %6365 = vmatpush.bf16.msra.mxu0 0
      %6366 = vmatpush.bf16.msra.mxu0 0
      %6367 = vmatpush.bf16.msra.mxu0 0
      %6368 = vmatpush.bf16.msra.mxu0 0
      %6369 = vmatpush.bf16.msra.mxu0 0
      %6370 = vmatpush.bf16.msra.mxu0 %v6347
      %6371 = vmatmul.bf16.gmra.mxu0 %v6341
      %v6372 = vpop.f32.mrf.mxu0
      %v6373 = vadd.f32 0.0, %v6372
      %v6374 = vpop.f32.mrf.mxu0
      %v6375 = vadd.f32 0.0, %v6374
      %6376 = vdwg.mxu0
      %v6377 = vadd.f32 %v6321, %v6359
      %v6378 = vadd.f32 %v6322, %v6373
      %v6379 = vadd.f32 %v6323, %v6361
      %v6380 = vadd.f32 %v6324, %v6375
      %6381 = vrot.lane.b32.xlu0 %v6331, 118
      %v6382 = vpop.permute.xlu0 %6381
      %6383 = vrot.lane.b32.xlu0 %v5252, 69
      %v6384 = vpop.permute.xlu0 %6383
      %6385 = vrot.lane.b32.xlu0 %v5253, 69
      %v6386 = vpop.permute.xlu0 %6385
      %vm6387 = vcmask 564224
      %v6388 = vsel %vm6387, %v6384, %v6386
      %v6390 = vsel %vm5259, %v6382, 0
      %v6393 = vsel %vm5263, %v6388, 0
      %v6396 = vsel %vm5263, %v6386, 0
      %6398 = vmatpush.bf16.msra.mxu0 0
      %6399 = vmatpush.bf16.msra.mxu0 0
      %6400 = vmatpush.bf16.msra.mxu0 0
      %6401 = vmatpush.bf16.msra.mxu0 0
      %6402 = vmatpush.bf16.msra.mxu0 0
      %6403 = vmatpush.bf16.msra.mxu0 0
      %6404 = vmatpush.bf16.msra.mxu0 0
      %6405 = vmatpush.bf16.msra.mxu0 %v6393
      %6406 = vmatmul.bf16.gmra.mxu0 %v6390
      %v6407 = vpop.f32.mrf.mxu0
      %v6408 = vadd.f32 0.0, %v6407
      %v6409 = vpop.f32.mrf.mxu0
      %v6410 = vadd.f32 0.0, %v6409
      %6411 = vdwg.mxu0
      %6412 = vmatpush.bf16.msra.mxu0 0
      %6413 = vmatpush.bf16.msra.mxu0 0
      %6414 = vmatpush.bf16.msra.mxu0 0
      %6415 = vmatpush.bf16.msra.mxu0 0
      %6416 = vmatpush.bf16.msra.mxu0 0
      %6417 = vmatpush.bf16.msra.mxu0 0
      %6418 = vmatpush.bf16.msra.mxu0 0
      %6419 = vmatpush.bf16.msra.mxu0 %v6396
      %6420 = vmatmul.bf16.gmra.mxu0 %v6390
      %v6421 = vpop.f32.mrf.mxu0
      %v6422 = vadd.f32 0.0, %v6421
      %v6423 = vpop.f32.mrf.mxu0
      %v6424 = vadd.f32 0.0, %v6423
      %6425 = vdwg.mxu0
      %v6426 = vadd.f32 %v6377, %v6408
      %v6427 = vadd.f32 %v6378, %v6422
      %v6428 = vadd.f32 %v6379, %v6410
      %v6429 = vadd.f32 %v6380, %v6424
      %6430 = vrot.lane.b32.xlu0 %v6331, 112
      %v6431 = vpop.permute.xlu0 %6430
      %6432 = vrot.lane.b32.xlu0 %v5252, 68
      %v6433 = vpop.permute.xlu0 %6432
      %6434 = vrot.lane.b32.xlu0 %v5253, 68
      %v6435 = vpop.permute.xlu0 %6434
      %vm6436 = vcmask 556032
      %v6437 = vsel %vm6436, %v6433, %v6435
      %v6439 = vsel %vm5259, %v6431, 0
      %v6442 = vsel %vm5263, %v6437, 0
      %v6445 = vsel %vm5263, %v6435, 0
      %6447 = vmatpush.bf16.msra.mxu0 0
      %6448 = vmatpush.bf16.msra.mxu0 0
      %6449 = vmatpush.bf16.msra.mxu0 0
      %6450 = vmatpush.bf16.msra.mxu0 0
      %6451 = vmatpush.bf16.msra.mxu0 0
      %6452 = vmatpush.bf16.msra.mxu0 0
      %6453 = vmatpush.bf16.msra.mxu0 0
      %6454 = vmatpush.bf16.msra.mxu0 %v6442
      %6455 = vmatmul.bf16.gmra.mxu0 %v6439
      %v6456 = vpop.f32.mrf.mxu0
      %v6457 = vadd.f32 0.0, %v6456
      %v6458 = vpop.f32.mrf.mxu0
      %v6459 = vadd.f32 0.0, %v6458
      %6460 = vdwg.mxu0
      %6461 = vmatpush.bf16.msra.mxu0 0
      %6462 = vmatpush.bf16.msra.mxu0 0
      %6463 = vmatpush.bf16.msra.mxu0 0
      %6464 = vmatpush.bf16.msra.mxu0 0
      %6465 = vmatpush.bf16.msra.mxu0 0
      %6466 = vmatpush.bf16.msra.mxu0 0
      %6467 = vmatpush.bf16.msra.mxu0 0
      %6468 = vmatpush.bf16.msra.mxu0 %v6445
      %6469 = vmatmul.bf16.gmra.mxu0 %v6439
      %v6470 = vpop.f32.mrf.mxu0
      %v6471 = vadd.f32 0.0, %v6470
      %v6472 = vpop.f32.mrf.mxu0
      %v6473 = vadd.f32 0.0, %v6472
      %6474 = vdwg.mxu0
      %v6475 = vadd.f32 %v6426, %v6457
      %v6476 = vadd.f32 %v6427, %v6471
      %v6477 = vadd.f32 %v6428, %v6459
      %v6478 = vadd.f32 %v6429, %v6473
      %v6479 = vld [vmem:[%s4] sm:$0xff]
      %v6480 = vld [vmem:[%s4 + $0x8] sm:$0xff]
      %6482 = vset.pattern.permute.xlu0 0
      %6483 = vperm.xlu0 %6482, %v6479
      %v6484 = vpop.permute.xlu0 %6483
      %6487 = vset.pattern.permute.xlu0 0
      %6488 = vperm.xlu0 %6487, %v6480
      %v6489 = vpop.permute.xlu0 %6488
      %v6491 = vadd.f32 %v6475, %v6484
      %v6492 = vadd.f32 %v6476, %v6484
      %v6493 = vadd.f32 %v6477, %v6489
      %v6494 = vadd.f32 %v6478, %v6489
      %v6495 = vtanh.pop %v6491
      %v6496 = vtanh.pop %v6492
      %v6497 = vtanh.pop %v6493
      %v6498 = vtanh.pop %v6494
      %6503 = vrot.lane.b32.xlu0 %v6495, 127
      %v6504 = vpop.permute.xlu0 %6503
      %6505 = vrot.lane.b32.xlu0 %v6496, 127
      %v6506 = vpop.permute.xlu0 %6505
      %6507 = vrot.lane.b32.xlu0 %v6497, 127
      %v6508 = vpop.permute.xlu0 %6507
      %6509 = vrot.lane.b32.xlu0 %v6498, 127
      %v6510 = vpop.permute.xlu0 %6509
      %v6511 = vsel %vm4669, %v6504, %v6506
      %v6512 = vsel %vm4669, %v6508, %v6510
      %v6517 = vmax.f32 %v6495, %v6511
      %v6518 = vmax.f32 %v6496, %v6506
      %v6519 = vmax.f32 %v6497, %v6512
      %v6520 = vmax.f32 %v6498, %v6510
      %6525 = vrot.lane.b32.xlu0 %v6517, 114
      %v6526 = vpop.permute.xlu0 %6525
      %6527 = vrot.lane.b32.xlu0 %v6518, 114
      %v6528 = vpop.permute.xlu0 %6527
      %6529 = vrot.lane.b32.xlu0 %v6519, 114
      %v6530 = vpop.permute.xlu0 %6529
      %6531 = vrot.lane.b32.xlu0 %v6520, 114
      %v6532 = vpop.permute.xlu0 %6531
      %vm6533 = vcmask 932864
      %v6534 = vsel %vm6533, %v6526, %v6528
      %v6535 = vsel %vm6533, %v6530, %v6532
      %v6538 = vmax.f32 %v6517, %v6534
      %v6539 = vmax.f32 %v6519, %v6535
      %v6540 = vld [vmem:[%s12] sm:$0xff]
      %v6541 = vld [vmem:[%s12 + $0x8] sm:$0xff]
      %v6542 = vld [vmem:[%s12 + $0x10] sm:$0xff]
      %v6543 = vld [vmem:[%s12 + $0x18] sm:$0xff]
      %v6544 = vld [vmem:[%s12 + $0x20] sm:$0xff]
      %v6545 = vld [vmem:[%s12 + $0x28] sm:$0xff]
      %v6546 = vld [vmem:[%s12 + $0x30] sm:$0xff]
      %v6547 = vld [vmem:[%s12 + $0x38] sm:$0xff]
      %v6548 = vld [vmem:[%s12 + $0x40] sm:$0xff]
      %v6549 = vld [vmem:[%s12 + $0x48] sm:$0xff]
      %v6550 = vld [vmem:[%s12 + $0x50] sm:$0xff]
      %v6551 = vld [vmem:[%s12 + $0x58] sm:$0xff]
      %v6552 = vld [vmem:[%s12 + $0x60] sm:$0xff]
      %v6553 = vld [vmem:[%s12 + $0x68] sm:$0xff]
      %v6554 = vld [vmem:[%s12 + $0x70] sm:$0xff]
      %v6555 = vld [vmem:[%s12 + $0x78] sm:$0x1f]
      %vm6556 = vcmask 1022976
      %v6558 = vsel %vm6556, %v6538, 0
      %v6561 = vsel %vm6556, %v6539, 0
      %vm6563 = vcmask 1044480
      %v6565 = vsel %vm6563, %v6555, 0
      %6567 = vmatpush.msra.mxu0 %v6565
      %6568 = vmatpush.msra.mxu0 %v6554
      %6569 = vmatpush.msra.mxu0 %v6553
      %6570 = vmatpush.msra.mxu0 %v6552
      %6571 = vmatpush.msra.mxu0 %v6551
      %6572 = vmatpush.msra.mxu0 %v6550
      %6573 = vmatpush.msra.mxu0 %v6549
      %6574 = vmatpush.msra.mxu0 %v6548
      %6575 = vmatpush.msra.mxu0 %v6547
      %6576 = vmatpush.msra.mxu0 %v6546
      %6577 = vmatpush.msra.mxu0 %v6545
      %6578 = vmatpush.msra.mxu0 %v6544
      %6579 = vmatpush.msra.mxu0 %v6543
      %6580 = vmatpush.msra.mxu0 %v6542
      %6581 = vmatpush.msra.mxu0 %v6541
      %6582 = vmatpush.msra.mxu0 %v6540
      %6583 = vmatmul.f32.gmra.mxu0 %v6558
      %v6584 = vpop.f32.mrf.mxu0
      %v6585 = vadd.f32 0.0, %v6584
      %6586 = vmatmul.f32.gmra.mxu0 %v6561
      %v6587 = vpop.f32.mrf.mxu0
      %v6588 = vadd.f32 0.0, %v6587
      %6589 = vdwg.mxu0
      %v6590 = vpack.c.bf16 %v6585, %v6585
      %v6591 = vpack.c.bf16 %v6588, %v6588
      %v6592 = vld [vmem:[%s5] sm:$0xf]
      %v6593 = vld [vmem:[%s5 + $0x10] sm:$0xf]
      %v6594 = vld [vmem:[%s5 + $0x20] sm:$0xf]
      %v6595 = vld [vmem:[%s5 + $0x30] sm:$0xf]
      %v6596 = vld [vmem:[%s5 + $0x40] sm:$0xf]
      %v6597 = vld [vmem:[%s5 + $0x50] sm:$0xf]
      %v6598 = vld [vmem:[%s5 + $0x60] sm:$0xf]
      %v6599 = vld [vmem:[%s5 + $0x70] sm:$0xf]
      %v6600 = vld [vmem:[%s5 + $0x80] sm:$0xf]
      %v6601 = vld [vmem:[%s5 + $0x90] sm:$0xf]
      %v6602 = vld [vmem:[%s5 + $0xa0] sm:$0xf]
      %v6603 = vld [vmem:[%s5 + $0xb0] sm:$0xf]
      %v6604 = vld [vmem:[%s5 + $0xc0] sm:$0xf]
      %v6605 = vld [vmem:[%s5 + $0xd0] sm:$0xf]
      %v6606 = vld [vmem:[%s5 + $0xe0] sm:$0xf]
      %v6622 = vunpack.c.l.b16 %v6592
      %v6623 = vunpack.c.l.b16 %v6593
      %v6624 = vunpack.c.l.b16 %v6594
      %v6625 = vunpack.c.l.b16 %v6595
      %v6626 = vunpack.c.l.b16 %v6596
      %v6627 = vunpack.c.l.b16 %v6597
      %v6628 = vunpack.c.l.b16 %v6598
      %v6629 = vunpack.c.l.b16 %v6599
      %v6630 = vunpack.c.l.b16 %v6600
      %v6631 = vunpack.c.l.b16 %v6601
      %v6632 = vunpack.c.l.b16 %v6602
      %v6633 = vunpack.c.l.b16 %v6603
      %v6634 = vunpack.c.l.b16 %v6604
      %v6635 = vunpack.c.l.b16 %v6605
      %v6636 = vunpack.c.l.b16 %v6606
      %v6637 = vpack.c.b16 %v6623, %v6622
      %v6638 = vpack.c.b16 %v6625, %v6624
      %v6639 = vpack.c.b16 %v6627, %v6626
      %v6640 = vpack.c.b16 %v6629, %v6628
      %v6641 = vpack.c.b16 %v6631, %v6630
      %v6642 = vpack.c.b16 %v6633, %v6632
      %v6643 = vpack.c.b16 %v6635, %v6634
      %v6644 = vpack.c.b16 %v6636, %v6636
      %6645 = vrot.lane.b32.xlu0 %v6637, 112
      %v6646 = vpop.permute.xlu0 %6645
      %6647 = vrot.lane.b32.xlu0 %v6638, 112
      %v6648 = vpop.permute.xlu0 %6647
      %6649 = vrot.lane.b32.xlu0 %v6639, 112
      %v6650 = vpop.permute.xlu0 %6649
      %6651 = vrot.lane.b32.xlu0 %v6640, 112
      %v6652 = vpop.permute.xlu0 %6651
      %6653 = vrot.lane.b32.xlu0 %v6641, 112
      %v6654 = vpop.permute.xlu0 %6653
      %6655 = vrot.lane.b32.xlu0 %v6642, 112
      %v6656 = vpop.permute.xlu0 %6655
      %6657 = vrot.lane.b32.xlu0 %v6643, 112
      %v6658 = vpop.permute.xlu0 %6657
      %6659 = vrot.lane.b32.xlu0 %v6644, 112
      %v6660 = vpop.permute.xlu0 %6659
      %v6663 = vunpack.c.l.b16 %v6590
      %v6664 = vunpack.c.l.b16 %v6591
      %v6665 = vpack.c.b16 %v6664, %v6663
      %6666 = vrot.lane.b32.xlu0 %v6665, 127
      %v6667 = vpop.permute.xlu0 %6666
      %vm6669 = vcmask 130048
      %v6671 = vsel %vm6669, %v6646, 0
      %v6674 = vsel %vm6669, %v6648, 0
      %v6677 = vsel %vm6669, %v6650, 0
      %v6680 = vsel %vm6669, %v6652, 0
      %v6683 = vsel %vm6669, %v6654, 0
      %v6686 = vsel %vm6669, %v6656, 0
      %v6689 = vsel %vm6669, %v6658, 0
      %v6692 = vsel %vm6669, %v6660, 0
      %6694 = vmatpush.bf16.msra.mxu0 0
      %6695 = vmatpush.bf16.msra.mxu0 0
      %6696 = vmatpush.bf16.msra.mxu0 0
      %6697 = vmatpush.bf16.msra.mxu0 0
      %6698 = vmatpush.bf16.msra.mxu0 0
      %6699 = vmatpush.bf16.msra.mxu0 0
      %6700 = vmatpush.bf16.msra.mxu0 0
      %6701 = vmatpush.bf16.msra.mxu0 %v6667
      %6702 = vmatmul.bf16.gmra.mxu0 %v6671
      %v6703 = vpop.f32.mrf.mxu0
      %v6704 = vadd.f32 0.0, %v6703
      %v6705 = vpop.f32.mrf.mxu0
      %v6706 = vadd.f32 0.0, %v6705
      %6707 = vmatmul.bf16.gmra.mxu0 %v6674
      %v6708 = vpop.f32.mrf.mxu0
      %v6709 = vadd.f32 0.0, %v6708
      %v6710 = vpop.f32.mrf.mxu0
      %v6711 = vadd.f32 0.0, %v6710
      %6712 = vmatmul.bf16.gmra.mxu0 %v6677
      %v6713 = vpop.f32.mrf.mxu0
      %v6714 = vadd.f32 0.0, %v6713
      %v6715 = vpop.f32.mrf.mxu0
      %v6716 = vadd.f32 0.0, %v6715
      %6717 = vmatmul.bf16.gmra.mxu0 %v6680
      %v6718 = vpop.f32.mrf.mxu0
      %v6719 = vadd.f32 0.0, %v6718
      %v6720 = vpop.f32.mrf.mxu0
      %v6721 = vadd.f32 0.0, %v6720
      %6722 = vmatmul.bf16.gmra.mxu0 %v6683
      %v6723 = vpop.f32.mrf.mxu0
      %v6724 = vadd.f32 0.0, %v6723
      %v6725 = vpop.f32.mrf.mxu0
      %v6726 = vadd.f32 0.0, %v6725
      %6727 = vmatmul.bf16.gmra.mxu0 %v6686
      %v6728 = vpop.f32.mrf.mxu0
      %v6729 = vadd.f32 0.0, %v6728
      %v6730 = vpop.f32.mrf.mxu0
      %v6731 = vadd.f32 0.0, %v6730
      %6732 = vmatmul.bf16.gmra.mxu0 %v6689
      %v6733 = vpop.f32.mrf.mxu0
      %v6734 = vadd.f32 0.0, %v6733
      %v6735 = vpop.f32.mrf.mxu0
      %v6736 = vadd.f32 0.0, %v6735
      %6737 = vmatmul.bf16.gmra.mxu0 %v6692
      %v6738 = vpop.f32.mrf.mxu0
      %v6739 = vadd.f32 0.0, %v6738
      %v6740 = vpop.f32.mrf.mxu0
      %6741 = vdwg.mxu0
      %v6744 = vsel %vm6669, %v6637, 0
      %v6747 = vsel %vm6669, %v6638, 0
      %v6750 = vsel %vm6669, %v6639, 0
      %v6753 = vsel %vm6669, %v6640, 0
      %v6756 = vsel %vm6669, %v6641, 0
      %v6759 = vsel %vm6669, %v6642, 0
      %v6762 = vsel %vm6669, %v6643, 0
      %v6765 = vsel %vm6669, %v6644, 0
      %6767 = vmatpush.bf16.msra.mxu0 0
      %6768 = vmatpush.bf16.msra.mxu0 0
      %6769 = vmatpush.bf16.msra.mxu0 0
      %6770 = vmatpush.bf16.msra.mxu0 0
      %6771 = vmatpush.bf16.msra.mxu0 0
      %6772 = vmatpush.bf16.msra.mxu0 0
      %6773 = vmatpush.bf16.msra.mxu0 0
      %6774 = vmatpush.bf16.msra.mxu0 %v6665
      %6775 = vmatmul.bf16.gmra.mxu0 %v6744
      %v6776 = vpop.f32.mrf.mxu0
      %v6777 = vadd.f32 %v6704, %v6776
      %v6778 = vpop.f32.mrf.mxu0
      %v6779 = vadd.f32 %v6706, %v6778
      %6780 = vmatmul.bf16.gmra.mxu0 %v6747
      %v6781 = vpop.f32.mrf.mxu0
      %v6782 = vadd.f32 %v6709, %v6781
      %v6783 = vpop.f32.mrf.mxu0
      %v6784 = vadd.f32 %v6711, %v6783
      %6785 = vmatmul.bf16.gmra.mxu0 %v6750
      %v6786 = vpop.f32.mrf.mxu0
      %v6787 = vadd.f32 %v6714, %v6786
      %v6788 = vpop.f32.mrf.mxu0
      %v6789 = vadd.f32 %v6716, %v6788
      %6790 = vmatmul.bf16.gmra.mxu0 %v6753
      %v6791 = vpop.f32.mrf.mxu0
      %v6792 = vadd.f32 %v6719, %v6791
      %v6793 = vpop.f32.mrf.mxu0
      %v6794 = vadd.f32 %v6721, %v6793
      %6795 = vmatmul.bf16.gmra.mxu0 %v6756
      %v6796 = vpop.f32.mrf.mxu0
      %v6797 = vadd.f32 %v6724, %v6796
      %v6798 = vpop.f32.mrf.mxu0
      %v6799 = vadd.f32 %v6726, %v6798
      %6800 = vmatmul.bf16.gmra.mxu0 %v6759
      %v6801 = vpop.f32.mrf.mxu0
      %v6802 = vadd.f32 %v6729, %v6801
      %v6803 = vpop.f32.mrf.mxu0
      %v6804 = vadd.f32 %v6731, %v6803
      %6805 = vmatmul.bf16.gmra.mxu0 %v6762
      %v6806 = vpop.f32.mrf.mxu0
      %v6807 = vadd.f32 %v6734, %v6806
      %v6808 = vpop.f32.mrf.mxu0
      %v6809 = vadd.f32 %v6736, %v6808
      %6810 = vmatmul.bf16.gmra.mxu0 %v6765
      %v6811 = vpop.f32.mrf.mxu0
      %v6812 = vadd.f32 %v6739, %v6811
      %v6813 = vpop.f32.mrf.mxu0
      %6814 = vdwg.mxu0
      %6815 = vrot.lane.b32.xlu0 %v6637, 96
      %v6816 = vpop.permute.xlu0 %6815
      %6817 = vrot.lane.b32.xlu0 %v6638, 96
      %v6818 = vpop.permute.xlu0 %6817
      %6819 = vrot.lane.b32.xlu0 %v6639, 96
      %v6820 = vpop.permute.xlu0 %6819
      %6821 = vrot.lane.b32.xlu0 %v6640, 96
      %v6822 = vpop.permute.xlu0 %6821
      %6823 = vrot.lane.b32.xlu0 %v6641, 96
      %v6824 = vpop.permute.xlu0 %6823
      %6825 = vrot.lane.b32.xlu0 %v6642, 96
      %v6826 = vpop.permute.xlu0 %6825
      %6827 = vrot.lane.b32.xlu0 %v6643, 96
      %v6828 = vpop.permute.xlu0 %6827
      %6829 = vrot.lane.b32.xlu0 %v6644, 96
      %v6830 = vpop.permute.xlu0 %6829
      %6831 = vrot.lane.b32.xlu0 %v6665, 126
      %v6832 = vpop.permute.xlu0 %6831
      %v6835 = vsel %vm6669, %v6816, 0
      %v6838 = vsel %vm6669, %v6818, 0
      %v6841 = vsel %vm6669, %v6820, 0
      %v6844 = vsel %vm6669, %v6822, 0
      %v6847 = vsel %vm6669, %v6824, 0
      %v6850 = vsel %vm6669, %v6826, 0
      %v6853 = vsel %vm6669, %v6828, 0
      %v6856 = vsel %vm6669, %v6830, 0
      %6858 = vmatpush.bf16.msra.mxu0 0
      %6859 = vmatpush.bf16.msra.mxu0 0
      %6860 = vmatpush.bf16.msra.mxu0 0
      %6861 = vmatpush.bf16.msra.mxu0 0
      %6862 = vmatpush.bf16.msra.mxu0 0
      %6863 = vmatpush.bf16.msra.mxu0 0
      %6864 = vmatpush.bf16.msra.mxu0 0
      %6865 = vmatpush.bf16.msra.mxu0 %v6832
      %6866 = vmatmul.bf16.gmra.mxu0 %v6835
      %v6867 = vpop.f32.mrf.mxu0
      %v6868 = vadd.f32 0.0, %v6867
      %v6869 = vpop.f32.mrf.mxu0
      %v6870 = vadd.f32 0.0, %v6869
      %6871 = vmatmul.bf16.gmra.mxu0 %v6838
      %v6872 = vpop.f32.mrf.mxu0
      %v6873 = vadd.f32 0.0, %v6872
      %v6874 = vpop.f32.mrf.mxu0
      %v6875 = vadd.f32 0.0, %v6874
      %6876 = vmatmul.bf16.gmra.mxu0 %v6841
      %v6877 = vpop.f32.mrf.mxu0
      %v6878 = vadd.f32 0.0, %v6877
      %v6879 = vpop.f32.mrf.mxu0
      %v6880 = vadd.f32 0.0, %v6879
      %6881 = vmatmul.bf16.gmra.mxu0 %v6844
      %v6882 = vpop.f32.mrf.mxu0
      %v6883 = vadd.f32 0.0, %v6882
      %v6884 = vpop.f32.mrf.mxu0
      %v6885 = vadd.f32 0.0, %v6884
      %6886 = vmatmul.bf16.gmra.mxu0 %v6847
      %v6887 = vpop.f32.mrf.mxu0
      %v6888 = vadd.f32 0.0, %v6887
      %v6889 = vpop.f32.mrf.mxu0
      %v6890 = vadd.f32 0.0, %v6889
      %6891 = vmatmul.bf16.gmra.mxu0 %v6850
      %v6892 = vpop.f32.mrf.mxu0
      %v6893 = vadd.f32 0.0, %v6892
      %v6894 = vpop.f32.mrf.mxu0
      %v6895 = vadd.f32 0.0, %v6894
      %6896 = vmatmul.bf16.gmra.mxu0 %v6853
      %v6897 = vpop.f32.mrf.mxu0
      %v6898 = vadd.f32 0.0, %v6897
      %v6899 = vpop.f32.mrf.mxu0
      %v6900 = vadd.f32 0.0, %v6899
      %6901 = vmatmul.bf16.gmra.mxu0 %v6856
      %v6902 = vpop.f32.mrf.mxu0
      %v6903 = vadd.f32 0.0, %v6902
      %v6904 = vpop.f32.mrf.mxu0
      %6905 = vdwg.mxu0
      %v6906 = vadd.f32 %v6777, %v6868
      %v6907 = vadd.f32 %v6779, %v6870
      %v6908 = vadd.f32 %v6782, %v6873
      %v6909 = vadd.f32 %v6784, %v6875
      %v6910 = vadd.f32 %v6787, %v6878
      %v6911 = vadd.f32 %v6789, %v6880
      %v6912 = vadd.f32 %v6792, %v6883
      %v6913 = vadd.f32 %v6794, %v6885
      %v6914 = vadd.f32 %v6797, %v6888
      %v6915 = vadd.f32 %v6799, %v6890
      %v6916 = vadd.f32 %v6802, %v6893
      %v6917 = vadd.f32 %v6804, %v6895
      %v6918 = vadd.f32 %v6807, %v6898
      %v6919 = vadd.f32 %v6809, %v6900
      %v6920 = vadd.f32 %v6812, %v6903
      %6921 = vrot.lane.b32.xlu0 %v6637, 80
      %v6922 = vpop.permute.xlu0 %6921
      %6923 = vrot.lane.b32.xlu0 %v6638, 80
      %v6924 = vpop.permute.xlu0 %6923
      %6925 = vrot.lane.b32.xlu0 %v6639, 80
      %v6926 = vpop.permute.xlu0 %6925
      %6927 = vrot.lane.b32.xlu0 %v6640, 80
      %v6928 = vpop.permute.xlu0 %6927
      %6929 = vrot.lane.b32.xlu0 %v6641, 80
      %v6930 = vpop.permute.xlu0 %6929
      %6931 = vrot.lane.b32.xlu0 %v6642, 80
      %v6932 = vpop.permute.xlu0 %6931
      %6933 = vrot.lane.b32.xlu0 %v6643, 80
      %v6934 = vpop.permute.xlu0 %6933
      %6935 = vrot.lane.b32.xlu0 %v6644, 80
      %v6936 = vpop.permute.xlu0 %6935
      %6937 = vrot.lane.b32.xlu0 %v6665, 125
      %v6938 = vpop.permute.xlu0 %6937
      %v6941 = vsel %vm6669, %v6922, 0
      %v6944 = vsel %vm6669, %v6924, 0
      %v6947 = vsel %vm6669, %v6926, 0
      %v6950 = vsel %vm6669, %v6928, 0
      %v6953 = vsel %vm6669, %v6930, 0
      %v6956 = vsel %vm6669, %v6932, 0
      %v6959 = vsel %vm6669, %v6934, 0
      %v6962 = vsel %vm6669, %v6936, 0
      %6964 = vmatpush.bf16.msra.mxu0 0
      %6965 = vmatpush.bf16.msra.mxu0 0
      %6966 = vmatpush.bf16.msra.mxu0 0
      %6967 = vmatpush.bf16.msra.mxu0 0
      %6968 = vmatpush.bf16.msra.mxu0 0
      %6969 = vmatpush.bf16.msra.mxu0 0
      %6970 = vmatpush.bf16.msra.mxu0 0
      %6971 = vmatpush.bf16.msra.mxu0 %v6938
      %6972 = vmatmul.bf16.gmra.mxu0 %v6941
      %v6973 = vpop.f32.mrf.mxu0
      %v6974 = vadd.f32 0.0, %v6973
      %v6975 = vpop.f32.mrf.mxu0
      %v6976 = vadd.f32 0.0, %v6975
      %6977 = vmatmul.bf16.gmra.mxu0 %v6944
      %v6978 = vpop.f32.mrf.mxu0
      %v6979 = vadd.f32 0.0, %v6978
      %v6980 = vpop.f32.mrf.mxu0
      %v6981 = vadd.f32 0.0, %v6980
      %6982 = vmatmul.bf16.gmra.mxu0 %v6947
      %v6983 = vpop.f32.mrf.mxu0
      %v6984 = vadd.f32 0.0, %v6983
      %v6985 = vpop.f32.mrf.mxu0
      %v6986 = vadd.f32 0.0, %v6985
      %6987 = vmatmul.bf16.gmra.mxu0 %v6950
      %v6988 = vpop.f32.mrf.mxu0
      %v6989 = vadd.f32 0.0, %v6988
      %v6990 = vpop.f32.mrf.mxu0
      %v6991 = vadd.f32 0.0, %v6990
      %6992 = vmatmul.bf16.gmra.mxu0 %v6953
      %v6993 = vpop.f32.mrf.mxu0
      %v6994 = vadd.f32 0.0, %v6993
      %v6995 = vpop.f32.mrf.mxu0
      %v6996 = vadd.f32 0.0, %v6995
      %6997 = vmatmul.bf16.gmra.mxu0 %v6956
      %v6998 = vpop.f32.mrf.mxu0
      %v6999 = vadd.f32 0.0, %v6998
      %v7000 = vpop.f32.mrf.mxu0
      %v7001 = vadd.f32 0.0, %v7000
      %7002 = vmatmul.bf16.gmra.mxu0 %v6959
      %v7003 = vpop.f32.mrf.mxu0
      %v7004 = vadd.f32 0.0, %v7003
      %v7005 = vpop.f32.mrf.mxu0
      %v7006 = vadd.f32 0.0, %v7005
      %7007 = vmatmul.bf16.gmra.mxu0 %v6962
      %v7008 = vpop.f32.mrf.mxu0
      %v7009 = vadd.f32 0.0, %v7008
      %v7010 = vpop.f32.mrf.mxu0
      %7011 = vdwg.mxu0
      %v7012 = vadd.f32 %v6906, %v6974
      %v7013 = vadd.f32 %v6907, %v6976
      %v7014 = vadd.f32 %v6908, %v6979
      %v7015 = vadd.f32 %v6909, %v6981
      %v7016 = vadd.f32 %v6910, %v6984
      %v7017 = vadd.f32 %v6911, %v6986
      %v7018 = vadd.f32 %v6912, %v6989
      %v7019 = vadd.f32 %v6913, %v6991
      %v7020 = vadd.f32 %v6914, %v6994
      %v7021 = vadd.f32 %v6915, %v6996
      %v7022 = vadd.f32 %v6916, %v6999
      %v7023 = vadd.f32 %v6917, %v7001
      %v7024 = vadd.f32 %v6918, %v7004
      %v7025 = vadd.f32 %v6919, %v7006
      %v7026 = vadd.f32 %v6920, %v7009
      %7027 = vrot.lane.b32.xlu0 %v6637, 64
      %v7028 = vpop.permute.xlu0 %7027
      %7029 = vrot.lane.b32.xlu0 %v6638, 64
      %v7030 = vpop.permute.xlu0 %7029
      %7031 = vrot.lane.b32.xlu0 %v6639, 64
      %v7032 = vpop.permute.xlu0 %7031
      %7033 = vrot.lane.b32.xlu0 %v6640, 64
      %v7034 = vpop.permute.xlu0 %7033
      %7035 = vrot.lane.b32.xlu0 %v6641, 64
      %v7036 = vpop.permute.xlu0 %7035
      %7037 = vrot.lane.b32.xlu0 %v6642, 64
      %v7038 = vpop.permute.xlu0 %7037
      %7039 = vrot.lane.b32.xlu0 %v6643, 64
      %v7040 = vpop.permute.xlu0 %7039
      %7041 = vrot.lane.b32.xlu0 %v6644, 64
      %v7042 = vpop.permute.xlu0 %7041
      %7043 = vrot.lane.b32.xlu0 %v6665, 124
      %v7044 = vpop.permute.xlu0 %7043
      %v7047 = vsel %vm6669, %v7028, 0
      %v7050 = vsel %vm6669, %v7030, 0
      %v7053 = vsel %vm6669, %v7032, 0
      %v7056 = vsel %vm6669, %v7034, 0
      %v7059 = vsel %vm6669, %v7036, 0
      %v7062 = vsel %vm6669, %v7038, 0
      %v7065 = vsel %vm6669, %v7040, 0
      %v7068 = vsel %vm6669, %v7042, 0
      %7070 = vmatpush.bf16.msra.mxu0 0
      %7071 = vmatpush.bf16.msra.mxu0 0
      %7072 = vmatpush.bf16.msra.mxu0 0
      %7073 = vmatpush.bf16.msra.mxu0 0
      %7074 = vmatpush.bf16.msra.mxu0 0
      %7075 = vmatpush.bf16.msra.mxu0 0
      %7076 = vmatpush.bf16.msra.mxu0 0
      %7077 = vmatpush.bf16.msra.mxu0 %v7044
      %7078 = vmatmul.bf16.gmra.mxu0 %v7047
      %v7079 = vpop.f32.mrf.mxu0
      %v7080 = vadd.f32 0.0, %v7079
      %v7081 = vpop.f32.mrf.mxu0
      %v7082 = vadd.f32 0.0, %v7081
      %7083 = vmatmul.bf16.gmra.mxu0 %v7050
      %v7084 = vpop.f32.mrf.mxu0
      %v7085 = vadd.f32 0.0, %v7084
      %v7086 = vpop.f32.mrf.mxu0
      %v7087 = vadd.f32 0.0, %v7086
      %7088 = vmatmul.bf16.gmra.mxu0 %v7053
      %v7089 = vpop.f32.mrf.mxu0
      %v7090 = vadd.f32 0.0, %v7089
      %v7091 = vpop.f32.mrf.mxu0
      %v7092 = vadd.f32 0.0, %v7091
      %7093 = vmatmul.bf16.gmra.mxu0 %v7056
      %v7094 = vpop.f32.mrf.mxu0
      %v7095 = vadd.f32 0.0, %v7094
      %v7096 = vpop.f32.mrf.mxu0
      %v7097 = vadd.f32 0.0, %v7096
      %7098 = vmatmul.bf16.gmra.mxu0 %v7059
      %v7099 = vpop.f32.mrf.mxu0
      %v7100 = vadd.f32 0.0, %v7099
      %v7101 = vpop.f32.mrf.mxu0
      %v7102 = vadd.f32 0.0, %v7101
      %7103 = vmatmul.bf16.gmra.mxu0 %v7062
      %v7104 = vpop.f32.mrf.mxu0
      %v7105 = vadd.f32 0.0, %v7104
      %v7106 = vpop.f32.mrf.mxu0
      %v7107 = vadd.f32 0.0, %v7106
      %7108 = vmatmul.bf16.gmra.mxu0 %v7065
      %v7109 = vpop.f32.mrf.mxu0
      %v7110 = vadd.f32 0.0, %v7109
      %v7111 = vpop.f32.mrf.mxu0
      %v7112 = vadd.f32 0.0, %v7111
      %7113 = vmatmul.bf16.gmra.mxu0 %v7068
      %v7114 = vpop.f32.mrf.mxu0
      %v7115 = vadd.f32 0.0, %v7114
      %v7116 = vpop.f32.mrf.mxu0
      %7117 = vdwg.mxu0
      %v7118 = vadd.f32 %v7012, %v7080
      %v7119 = vadd.f32 %v7013, %v7082
      %v7120 = vadd.f32 %v7014, %v7085
      %v7121 = vadd.f32 %v7015, %v7087
      %v7122 = vadd.f32 %v7016, %v7090
      %v7123 = vadd.f32 %v7017, %v7092
      %v7124 = vadd.f32 %v7018, %v7095
      %v7125 = vadd.f32 %v7019, %v7097
      %v7126 = vadd.f32 %v7020, %v7100
      %v7127 = vadd.f32 %v7021, %v7102
      %v7128 = vadd.f32 %v7022, %v7105
      %v7129 = vadd.f32 %v7023, %v7107
      %v7130 = vadd.f32 %v7024, %v7110
      %v7131 = vadd.f32 %v7025, %v7112
      %v7132 = vadd.f32 %v7026, %v7115
      %7133 = vrot.lane.b32.xlu0 %v6637, 48
      %v7134 = vpop.permute.xlu0 %7133
      %7135 = vrot.lane.b32.xlu0 %v6638, 48
      %v7136 = vpop.permute.xlu0 %7135
      %7137 = vrot.lane.b32.xlu0 %v6639, 48
      %v7138 = vpop.permute.xlu0 %7137
      %7139 = vrot.lane.b32.xlu0 %v6640, 48
      %v7140 = vpop.permute.xlu0 %7139
      %7141 = vrot.lane.b32.xlu0 %v6641, 48
      %v7142 = vpop.permute.xlu0 %7141
      %7143 = vrot.lane.b32.xlu0 %v6642, 48
      %v7144 = vpop.permute.xlu0 %7143
      %7145 = vrot.lane.b32.xlu0 %v6643, 48
      %v7146 = vpop.permute.xlu0 %7145
      %7147 = vrot.lane.b32.xlu0 %v6644, 48
      %v7148 = vpop.permute.xlu0 %7147
      %7149 = vrot.lane.b32.xlu0 %v6665, 123
      %v7150 = vpop.permute.xlu0 %7149
      %v7153 = vsel %vm6669, %v7134, 0
      %v7156 = vsel %vm6669, %v7136, 0
      %v7159 = vsel %vm6669, %v7138, 0
      %v7162 = vsel %vm6669, %v7140, 0
      %v7165 = vsel %vm6669, %v7142, 0
      %v7168 = vsel %vm6669, %v7144, 0
      %v7171 = vsel %vm6669, %v7146, 0
      %v7174 = vsel %vm6669, %v7148, 0
      %7176 = vmatpush.bf16.msra.mxu0 0
      %7177 = vmatpush.bf16.msra.mxu0 0
      %7178 = vmatpush.bf16.msra.mxu0 0
      %7179 = vmatpush.bf16.msra.mxu0 0
      %7180 = vmatpush.bf16.msra.mxu0 0
      %7181 = vmatpush.bf16.msra.mxu0 0
      %7182 = vmatpush.bf16.msra.mxu0 0
      %7183 = vmatpush.bf16.msra.mxu0 %v7150
      %7184 = vmatmul.bf16.gmra.mxu0 %v7153
      %v7185 = vpop.f32.mrf.mxu0
      %v7186 = vadd.f32 0.0, %v7185
      %v7187 = vpop.f32.mrf.mxu0
      %v7188 = vadd.f32 0.0, %v7187
      %7189 = vmatmul.bf16.gmra.mxu0 %v7156
      %v7190 = vpop.f32.mrf.mxu0
      %v7191 = vadd.f32 0.0, %v7190
      %v7192 = vpop.f32.mrf.mxu0
      %v7193 = vadd.f32 0.0, %v7192
      %7194 = vmatmul.bf16.gmra.mxu0 %v7159
      %v7195 = vpop.f32.mrf.mxu0
      %v7196 = vadd.f32 0.0, %v7195
      %v7197 = vpop.f32.mrf.mxu0
      %v7198 = vadd.f32 0.0, %v7197
      %7199 = vmatmul.bf16.gmra.mxu0 %v7162
      %v7200 = vpop.f32.mrf.mxu0
      %v7201 = vadd.f32 0.0, %v7200
      %v7202 = vpop.f32.mrf.mxu0
      %v7203 = vadd.f32 0.0, %v7202
      %7204 = vmatmul.bf16.gmra.mxu0 %v7165
      %v7205 = vpop.f32.mrf.mxu0
      %v7206 = vadd.f32 0.0, %v7205
      %v7207 = vpop.f32.mrf.mxu0
      %v7208 = vadd.f32 0.0, %v7207
      %7209 = vmatmul.bf16.gmra.mxu0 %v7168
      %v7210 = vpop.f32.mrf.mxu0
      %v7211 = vadd.f32 0.0, %v7210
      %v7212 = vpop.f32.mrf.mxu0
      %v7213 = vadd.f32 0.0, %v7212
      %7214 = vmatmul.bf16.gmra.mxu0 %v7171
      %v7215 = vpop.f32.mrf.mxu0
      %v7216 = vadd.f32 0.0, %v7215
      %v7217 = vpop.f32.mrf.mxu0
      %v7218 = vadd.f32 0.0, %v7217
      %7219 = vmatmul.bf16.gmra.mxu0 %v7174
      %v7220 = vpop.f32.mrf.mxu0
      %v7221 = vadd.f32 0.0, %v7220
      %v7222 = vpop.f32.mrf.mxu0
      %7223 = vdwg.mxu0
      %v7224 = vadd.f32 %v7118, %v7186
      %v7225 = vadd.f32 %v7119, %v7188
      %v7226 = vadd.f32 %v7120, %v7191
      %v7227 = vadd.f32 %v7121, %v7193
      %v7228 = vadd.f32 %v7122, %v7196
      %v7229 = vadd.f32 %v7123, %v7198
      %v7230 = vadd.f32 %v7124, %v7201
      %v7231 = vadd.f32 %v7125, %v7203
      %v7232 = vadd.f32 %v7126, %v7206
      %v7233 = vadd.f32 %v7127, %v7208
      %v7234 = vadd.f32 %v7128, %v7211
      %v7235 = vadd.f32 %v7129, %v7213
      %v7236 = vadd.f32 %v7130, %v7216
      %v7237 = vadd.f32 %v7131, %v7218
      %v7238 = vadd.f32 %v7132, %v7221
      %7239 = vrot.lane.b32.xlu0 %v6637, 32
      %v7240 = vpop.permute.xlu0 %7239
      %7241 = vrot.lane.b32.xlu0 %v6638, 32
      %v7242 = vpop.permute.xlu0 %7241
      %7243 = vrot.lane.b32.xlu0 %v6639, 32
      %v7244 = vpop.permute.xlu0 %7243
      %7245 = vrot.lane.b32.xlu0 %v6640, 32
      %v7246 = vpop.permute.xlu0 %7245
      %7247 = vrot.lane.b32.xlu0 %v6641, 32
      %v7248 = vpop.permute.xlu0 %7247
      %7249 = vrot.lane.b32.xlu0 %v6642, 32
      %v7250 = vpop.permute.xlu0 %7249
      %7251 = vrot.lane.b32.xlu0 %v6643, 32
      %v7252 = vpop.permute.xlu0 %7251
      %7253 = vrot.lane.b32.xlu0 %v6644, 32
      %v7254 = vpop.permute.xlu0 %7253
      %7255 = vrot.lane.b32.xlu0 %v6665, 122
      %v7256 = vpop.permute.xlu0 %7255
      %v7259 = vsel %vm6669, %v7240, 0
      %v7262 = vsel %vm6669, %v7242, 0
      %v7265 = vsel %vm6669, %v7244, 0
      %v7268 = vsel %vm6669, %v7246, 0
      %v7271 = vsel %vm6669, %v7248, 0
      %v7274 = vsel %vm6669, %v7250, 0
      %v7277 = vsel %vm6669, %v7252, 0
      %v7280 = vsel %vm6669, %v7254, 0
      %7282 = vmatpush.bf16.msra.mxu0 0
      %7283 = vmatpush.bf16.msra.mxu0 0
      %7284 = vmatpush.bf16.msra.mxu0 0
      %7285 = vmatpush.bf16.msra.mxu0 0
      %7286 = vmatpush.bf16.msra.mxu0 0
      %7287 = vmatpush.bf16.msra.mxu0 0
      %7288 = vmatpush.bf16.msra.mxu0 0
      %7289 = vmatpush.bf16.msra.mxu0 %v7256
      %7290 = vmatmul.bf16.gmra.mxu0 %v7259
      %v7291 = vpop.f32.mrf.mxu0
      %v7292 = vadd.f32 0.0, %v7291
      %v7293 = vpop.f32.mrf.mxu0
      %v7294 = vadd.f32 0.0, %v7293
      %7295 = vmatmul.bf16.gmra.mxu0 %v7262
      %v7296 = vpop.f32.mrf.mxu0
      %v7297 = vadd.f32 0.0, %v7296
      %v7298 = vpop.f32.mrf.mxu0
      %v7299 = vadd.f32 0.0, %v7298
      %7300 = vmatmul.bf16.gmra.mxu0 %v7265
      %v7301 = vpop.f32.mrf.mxu0
      %v7302 = vadd.f32 0.0, %v7301
      %v7303 = vpop.f32.mrf.mxu0
      %v7304 = vadd.f32 0.0, %v7303
      %7305 = vmatmul.bf16.gmra.mxu0 %v7268
      %v7306 = vpop.f32.mrf.mxu0
      %v7307 = vadd.f32 0.0, %v7306
      %v7308 = vpop.f32.mrf.mxu0
      %v7309 = vadd.f32 0.0, %v7308
      %7310 = vmatmul.bf16.gmra.mxu0 %v7271
      %v7311 = vpop.f32.mrf.mxu0
      %v7312 = vadd.f32 0.0, %v7311
      %v7313 = vpop.f32.mrf.mxu0
      %v7314 = vadd.f32 0.0, %v7313
      %7315 = vmatmul.bf16.gmra.mxu0 %v7274
      %v7316 = vpop.f32.mrf.mxu0
      %v7317 = vadd.f32 0.0, %v7316
      %v7318 = vpop.f32.mrf.mxu0
      %v7319 = vadd.f32 0.0, %v7318
      %7320 = vmatmul.bf16.gmra.mxu0 %v7277
      %v7321 = vpop.f32.mrf.mxu0
      %v7322 = vadd.f32 0.0, %v7321
      %v7323 = vpop.f32.mrf.mxu0
      %v7324 = vadd.f32 0.0, %v7323
      %7325 = vmatmul.bf16.gmra.mxu0 %v7280
      %v7326 = vpop.f32.mrf.mxu0
      %v7327 = vadd.f32 0.0, %v7326
      %v7328 = vpop.f32.mrf.mxu0
      %7329 = vdwg.mxu0
      %v7330 = vadd.f32 %v7224, %v7292
      %v7331 = vadd.f32 %v7225, %v7294
      %v7332 = vadd.f32 %v7226, %v7297
      %v7333 = vadd.f32 %v7227, %v7299
      %v7334 = vadd.f32 %v7228, %v7302
      %v7335 = vadd.f32 %v7229, %v7304
      %v7336 = vadd.f32 %v7230, %v7307
      %v7337 = vadd.f32 %v7231, %v7309
      %v7338 = vadd.f32 %v7232, %v7312
      %v7339 = vadd.f32 %v7233, %v7314
      %v7340 = vadd.f32 %v7234, %v7317
      %v7341 = vadd.f32 %v7235, %v7319
      %v7342 = vadd.f32 %v7236, %v7322
      %v7343 = vadd.f32 %v7237, %v7324
      %v7344 = vadd.f32 %v7238, %v7327
      %7345 = vrot.lane.b32.xlu0 %v6637, 16
      %v7346 = vpop.permute.xlu0 %7345
      %7347 = vrot.lane.b32.xlu0 %v6638, 16
      %v7348 = vpop.permute.xlu0 %7347
      %7349 = vrot.lane.b32.xlu0 %v6639, 16
      %v7350 = vpop.permute.xlu0 %7349
      %7351 = vrot.lane.b32.xlu0 %v6640, 16
      %v7352 = vpop.permute.xlu0 %7351
      %7353 = vrot.lane.b32.xlu0 %v6641, 16
      %v7354 = vpop.permute.xlu0 %7353
      %7355 = vrot.lane.b32.xlu0 %v6642, 16
      %v7356 = vpop.permute.xlu0 %7355
      %7357 = vrot.lane.b32.xlu0 %v6643, 16
      %v7358 = vpop.permute.xlu0 %7357
      %7359 = vrot.lane.b32.xlu0 %v6644, 16
      %v7360 = vpop.permute.xlu0 %7359
      %7361 = vrot.lane.b32.xlu0 %v6665, 121
      %v7362 = vpop.permute.xlu0 %7361
      %v7365 = vsel %vm6669, %v7346, 0
      %v7368 = vsel %vm6669, %v7348, 0
      %v7371 = vsel %vm6669, %v7350, 0
      %v7374 = vsel %vm6669, %v7352, 0
      %v7377 = vsel %vm6669, %v7354, 0
      %v7380 = vsel %vm6669, %v7356, 0
      %v7383 = vsel %vm6669, %v7358, 0
      %v7386 = vsel %vm6669, %v7360, 0
      %7388 = vmatpush.bf16.msra.mxu0 0
      %7389 = vmatpush.bf16.msra.mxu0 0
      %7390 = vmatpush.bf16.msra.mxu0 0
      %7391 = vmatpush.bf16.msra.mxu0 0
      %7392 = vmatpush.bf16.msra.mxu0 0
      %7393 = vmatpush.bf16.msra.mxu0 0
      %7394 = vmatpush.bf16.msra.mxu0 0
      %7395 = vmatpush.bf16.msra.mxu0 %v7362
      %7396 = vmatmul.bf16.gmra.mxu0 %v7365
      %v7397 = vpop.f32.mrf.mxu0
      %v7398 = vadd.f32 0.0, %v7397
      %v7399 = vpop.f32.mrf.mxu0
      %v7400 = vadd.f32 0.0, %v7399
      %7401 = vmatmul.bf16.gmra.mxu0 %v7368
      %v7402 = vpop.f32.mrf.mxu0
      %v7403 = vadd.f32 0.0, %v7402
      %v7404 = vpop.f32.mrf.mxu0
      %v7405 = vadd.f32 0.0, %v7404
      %7406 = vmatmul.bf16.gmra.mxu0 %v7371
      %v7407 = vpop.f32.mrf.mxu0
      %v7408 = vadd.f32 0.0, %v7407
      %v7409 = vpop.f32.mrf.mxu0
      %v7410 = vadd.f32 0.0, %v7409
      %7411 = vmatmul.bf16.gmra.mxu0 %v7374
      %v7412 = vpop.f32.mrf.mxu0
      %v7413 = vadd.f32 0.0, %v7412
      %v7414 = vpop.f32.mrf.mxu0
      %v7415 = vadd.f32 0.0, %v7414
      %7416 = vmatmul.bf16.gmra.mxu0 %v7377
      %v7417 = vpop.f32.mrf.mxu0
      %v7418 = vadd.f32 0.0, %v7417
      %v7419 = vpop.f32.mrf.mxu0
      %v7420 = vadd.f32 0.0, %v7419
      %7421 = vmatmul.bf16.gmra.mxu0 %v7380
      %v7422 = vpop.f32.mrf.mxu0
      %v7423 = vadd.f32 0.0, %v7422
      %v7424 = vpop.f32.mrf.mxu0
      %v7425 = vadd.f32 0.0, %v7424
      %7426 = vmatmul.bf16.gmra.mxu0 %v7383
      %v7427 = vpop.f32.mrf.mxu0
      %v7428 = vadd.f32 0.0, %v7427
      %v7429 = vpop.f32.mrf.mxu0
      %v7430 = vadd.f32 0.0, %v7429
      %7431 = vmatmul.bf16.gmra.mxu0 %v7386
      %v7432 = vpop.f32.mrf.mxu0
      %v7433 = vadd.f32 0.0, %v7432
      %v7434 = vpop.f32.mrf.mxu0
      %7435 = vdwg.mxu0
      %v7436 = vadd.f32 %v7330, %v7398
      %v7437 = vadd.f32 %v7331, %v7400
      %v7438 = vadd.f32 %v7332, %v7403
      %v7439 = vadd.f32 %v7333, %v7405
      %v7440 = vadd.f32 %v7334, %v7408
      %v7441 = vadd.f32 %v7335, %v7410
      %v7442 = vadd.f32 %v7336, %v7413
      %v7443 = vadd.f32 %v7337, %v7415
      %v7444 = vadd.f32 %v7338, %v7418
      %v7445 = vadd.f32 %v7339, %v7420
      %v7446 = vadd.f32 %v7340, %v7423
      %v7447 = vadd.f32 %v7341, %v7425
      %v7448 = vadd.f32 %v7342, %v7428
      %v7449 = vadd.f32 %v7343, %v7430
      %v7450 = vadd.f32 %v7344, %v7433
      %v7451 = vld [vmem:[%s5 + $0x4] sm:$0xf]
      %v7452 = vld [vmem:[%s5 + $0x14] sm:$0xf]
      %v7453 = vld [vmem:[%s5 + $0x24] sm:$0xf]
      %v7454 = vld [vmem:[%s5 + $0x34] sm:$0xf]
      %v7455 = vld [vmem:[%s5 + $0x44] sm:$0xf]
      %v7456 = vld [vmem:[%s5 + $0x54] sm:$0xf]
      %v7457 = vld [vmem:[%s5 + $0x64] sm:$0xf]
      %v7458 = vld [vmem:[%s5 + $0x74] sm:$0xf]
      %v7459 = vld [vmem:[%s5 + $0x84] sm:$0xf]
      %v7460 = vld [vmem:[%s5 + $0x94] sm:$0xf]
      %v7461 = vld [vmem:[%s5 + $0xa4] sm:$0xf]
      %v7462 = vld [vmem:[%s5 + $0xb4] sm:$0xf]
      %v7463 = vld [vmem:[%s5 + $0xc4] sm:$0xf]
      %v7464 = vld [vmem:[%s5 + $0xd4] sm:$0xf]
      %v7465 = vld [vmem:[%s5 + $0xe4] sm:$0xf]
      %v7481 = vunpack.c.l.b16 %v7451
      %v7482 = vunpack.c.l.b16 %v7452
      %v7483 = vunpack.c.l.b16 %v7453
      %v7484 = vunpack.c.l.b16 %v7454
      %v7485 = vunpack.c.l.b16 %v7455
      %v7486 = vunpack.c.l.b16 %v7456
      %v7487 = vunpack.c.l.b16 %v7457
      %v7488 = vunpack.c.l.b16 %v7458
      %v7489 = vunpack.c.l.b16 %v7459
      %v7490 = vunpack.c.l.b16 %v7460
      %v7491 = vunpack.c.l.b16 %v7461
      %v7492 = vunpack.c.l.b16 %v7462
      %v7493 = vunpack.c.l.b16 %v7463
      %v7494 = vunpack.c.l.b16 %v7464
      %v7495 = vunpack.c.l.b16 %v7465
      %v7496 = vpack.c.b16 %v7482, %v7481
      %v7497 = vpack.c.b16 %v7484, %v7483
      %v7498 = vpack.c.b16 %v7486, %v7485
      %v7499 = vpack.c.b16 %v7488, %v7487
      %v7500 = vpack.c.b16 %v7490, %v7489
      %v7501 = vpack.c.b16 %v7492, %v7491
      %v7502 = vpack.c.b16 %v7494, %v7493
      %v7503 = vpack.c.b16 %v7495, %v7495
      %7504 = vrot.lane.b32.xlu0 %v6665, 120
      %v7505 = vpop.permute.xlu0 %7504
      %v7508 = vsel %vm6669, %v7496, 0
      %v7511 = vsel %vm6669, %v7497, 0
      %v7514 = vsel %vm6669, %v7498, 0
      %v7517 = vsel %vm6669, %v7499, 0
      %v7520 = vsel %vm6669, %v7500, 0
      %v7523 = vsel %vm6669, %v7501, 0
      %v7526 = vsel %vm6669, %v7502, 0
      %v7529 = vsel %vm6669, %v7503, 0
      %7531 = vmatpush.bf16.msra.mxu0 0
      %7532 = vmatpush.bf16.msra.mxu0 0
      %7533 = vmatpush.bf16.msra.mxu0 0
      %7534 = vmatpush.bf16.msra.mxu0 0
      %7535 = vmatpush.bf16.msra.mxu0 0
      %7536 = vmatpush.bf16.msra.mxu0 0
      %7537 = vmatpush.bf16.msra.mxu0 0
      %7538 = vmatpush.bf16.msra.mxu0 %v7505
      %7539 = vmatmul.bf16.gmra.mxu0 %v7508
      %v7540 = vpop.f32.mrf.mxu0
      %v7541 = vadd.f32 0.0, %v7540
      %v7542 = vpop.f32.mrf.mxu0
      %v7543 = vadd.f32 0.0, %v7542
      %7544 = vmatmul.bf16.gmra.mxu0 %v7511
      %v7545 = vpop.f32.mrf.mxu0
      %v7546 = vadd.f32 0.0, %v7545
      %v7547 = vpop.f32.mrf.mxu0
      %v7548 = vadd.f32 0.0, %v7547
      %7549 = vmatmul.bf16.gmra.mxu0 %v7514
      %v7550 = vpop.f32.mrf.mxu0
      %v7551 = vadd.f32 0.0, %v7550
      %v7552 = vpop.f32.mrf.mxu0
      %v7553 = vadd.f32 0.0, %v7552
      %7554 = vmatmul.bf16.gmra.mxu0 %v7517
      %v7555 = vpop.f32.mrf.mxu0
      %v7556 = vadd.f32 0.0, %v7555
      %v7557 = vpop.f32.mrf.mxu0
      %v7558 = vadd.f32 0.0, %v7557
      %7559 = vmatmul.bf16.gmra.mxu0 %v7520
      %v7560 = vpop.f32.mrf.mxu0
      %v7561 = vadd.f32 0.0, %v7560
      %v7562 = vpop.f32.mrf.mxu0
      %v7563 = vadd.f32 0.0, %v7562
      %7564 = vmatmul.bf16.gmra.mxu0 %v7523
      %v7565 = vpop.f32.mrf.mxu0
      %v7566 = vadd.f32 0.0, %v7565
      %v7567 = vpop.f32.mrf.mxu0
      %v7568 = vadd.f32 0.0, %v7567
      %7569 = vmatmul.bf16.gmra.mxu0 %v7526
      %v7570 = vpop.f32.mrf.mxu0
      %v7571 = vadd.f32 0.0, %v7570
      %v7572 = vpop.f32.mrf.mxu0
      %v7573 = vadd.f32 0.0, %v7572
      %7574 = vmatmul.bf16.gmra.mxu0 %v7529
      %v7575 = vpop.f32.mrf.mxu0
      %v7576 = vadd.f32 0.0, %v7575
      %v7577 = vpop.f32.mrf.mxu0
      %7578 = vdwg.mxu0
      %v7579 = vadd.f32 %v7436, %v7541
      %v7580 = vadd.f32 %v7437, %v7543
      %v7581 = vadd.f32 %v7438, %v7546
      %v7582 = vadd.f32 %v7439, %v7548
      %v7583 = vadd.f32 %v7440, %v7551
      %v7584 = vadd.f32 %v7441, %v7553
      %v7585 = vadd.f32 %v7442, %v7556
      %v7586 = vadd.f32 %v7443, %v7558
      %v7587 = vadd.f32 %v7444, %v7561
      %v7588 = vadd.f32 %v7445, %v7563
      %v7589 = vadd.f32 %v7446, %v7566
      %v7590 = vadd.f32 %v7447, %v7568
      %v7591 = vadd.f32 %v7448, %v7571
      %v7592 = vadd.f32 %v7449, %v7573
      %v7593 = vadd.f32 %v7450, %v7576
      %7594 = vrot.lane.b32.xlu0 %v7496, 112
      %v7595 = vpop.permute.xlu0 %7594
      %7596 = vrot.lane.b32.xlu0 %v7497, 112
      %v7597 = vpop.permute.xlu0 %7596
      %7598 = vrot.lane.b32.xlu0 %v7498, 112
      %v7599 = vpop.permute.xlu0 %7598
      %7600 = vrot.lane.b32.xlu0 %v7499, 112
      %v7601 = vpop.permute.xlu0 %7600
      %7602 = vrot.lane.b32.xlu0 %v7500, 112
      %v7603 = vpop.permute.xlu0 %7602
      %7604 = vrot.lane.b32.xlu0 %v7501, 112
      %v7605 = vpop.permute.xlu0 %7604
      %7606 = vrot.lane.b32.xlu0 %v7502, 112
      %v7607 = vpop.permute.xlu0 %7606
      %7608 = vrot.lane.b32.xlu0 %v7503, 112
      %v7609 = vpop.permute.xlu0 %7608
      %7610 = vrot.lane.b32.xlu0 %v6665, 119
      %v7611 = vpop.permute.xlu0 %7610
      %v7614 = vsel %vm6669, %v7595, 0
      %v7617 = vsel %vm6669, %v7597, 0
      %v7620 = vsel %vm6669, %v7599, 0
      %v7623 = vsel %vm6669, %v7601, 0
      %v7626 = vsel %vm6669, %v7603, 0
      %v7629 = vsel %vm6669, %v7605, 0
      %v7632 = vsel %vm6669, %v7607, 0
      %v7635 = vsel %vm6669, %v7609, 0
      %7637 = vmatpush.bf16.msra.mxu0 0
      %7638 = vmatpush.bf16.msra.mxu0 0
      %7639 = vmatpush.bf16.msra.mxu0 0
      %7640 = vmatpush.bf16.msra.mxu0 0
      %7641 = vmatpush.bf16.msra.mxu0 0
      %7642 = vmatpush.bf16.msra.mxu0 0
      %7643 = vmatpush.bf16.msra.mxu0 0
      %7644 = vmatpush.bf16.msra.mxu0 %v7611
      %7645 = vmatmul.bf16.gmra.mxu0 %v7614
      %v7646 = vpop.f32.mrf.mxu0
      %v7647 = vadd.f32 0.0, %v7646
      %v7648 = vpop.f32.mrf.mxu0
      %v7649 = vadd.f32 0.0, %v7648
      %7650 = vmatmul.bf16.gmra.mxu0 %v7617
      %v7651 = vpop.f32.mrf.mxu0
      %v7652 = vadd.f32 0.0, %v7651
      %v7653 = vpop.f32.mrf.mxu0
      %v7654 = vadd.f32 0.0, %v7653
      %7655 = vmatmul.bf16.gmra.mxu0 %v7620
      %v7656 = vpop.f32.mrf.mxu0
      %v7657 = vadd.f32 0.0, %v7656
      %v7658 = vpop.f32.mrf.mxu0
      %v7659 = vadd.f32 0.0, %v7658
      %7660 = vmatmul.bf16.gmra.mxu0 %v7623
      %v7661 = vpop.f32.mrf.mxu0
      %v7662 = vadd.f32 0.0, %v7661
      %v7663 = vpop.f32.mrf.mxu0
      %v7664 = vadd.f32 0.0, %v7663
      %7665 = vmatmul.bf16.gmra.mxu0 %v7626
      %v7666 = vpop.f32.mrf.mxu0
      %v7667 = vadd.f32 0.0, %v7666
      %v7668 = vpop.f32.mrf.mxu0
      %v7669 = vadd.f32 0.0, %v7668
      %7670 = vmatmul.bf16.gmra.mxu0 %v7629
      %v7671 = vpop.f32.mrf.mxu0
      %v7672 = vadd.f32 0.0, %v7671
      %v7673 = vpop.f32.mrf.mxu0
      %v7674 = vadd.f32 0.0, %v7673
      %7675 = vmatmul.bf16.gmra.mxu0 %v7632
      %v7676 = vpop.f32.mrf.mxu0
      %v7677 = vadd.f32 0.0, %v7676
      %v7678 = vpop.f32.mrf.mxu0
      %v7679 = vadd.f32 0.0, %v7678
      %7680 = vmatmul.bf16.gmra.mxu0 %v7635
      %v7681 = vpop.f32.mrf.mxu0
      %v7682 = vadd.f32 0.0, %v7681
      %v7683 = vpop.f32.mrf.mxu0
      %7684 = vdwg.mxu0
      %v7685 = vadd.f32 %v7579, %v7647
      %v7686 = vadd.f32 %v7580, %v7649
      %v7687 = vadd.f32 %v7581, %v7652
      %v7688 = vadd.f32 %v7582, %v7654
      %v7689 = vadd.f32 %v7583, %v7657
      %v7690 = vadd.f32 %v7584, %v7659
      %v7691 = vadd.f32 %v7585, %v7662
      %v7692 = vadd.f32 %v7586, %v7664
      %v7693 = vadd.f32 %v7587, %v7667
      %v7694 = vadd.f32 %v7588, %v7669
      %v7695 = vadd.f32 %v7589, %v7672
      %v7696 = vadd.f32 %v7590, %v7674
      %v7697 = vadd.f32 %v7591, %v7677
      %v7698 = vadd.f32 %v7592, %v7679
      %v7699 = vadd.f32 %v7593, %v7682
      %7700 = vrot.lane.b32.xlu0 %v7496, 96
      %v7701 = vpop.permute.xlu0 %7700
      %7702 = vrot.lane.b32.xlu0 %v7497, 96
      %v7703 = vpop.permute.xlu0 %7702
      %7704 = vrot.lane.b32.xlu0 %v7498, 96
      %v7705 = vpop.permute.xlu0 %7704
      %7706 = vrot.lane.b32.xlu0 %v7499, 96
      %v7707 = vpop.permute.xlu0 %7706
      %7708 = vrot.lane.b32.xlu0 %v7500, 96
      %v7709 = vpop.permute.xlu0 %7708
      %7710 = vrot.lane.b32.xlu0 %v7501, 96
      %v7711 = vpop.permute.xlu0 %7710
      %7712 = vrot.lane.b32.xlu0 %v7502, 96
      %v7713 = vpop.permute.xlu0 %7712
      %7714 = vrot.lane.b32.xlu0 %v7503, 96
      %v7715 = vpop.permute.xlu0 %7714
      %7716 = vrot.lane.b32.xlu0 %v6665, 118
      %v7717 = vpop.permute.xlu0 %7716
      %v7720 = vsel %vm6669, %v7701, 0
      %v7723 = vsel %vm6669, %v7703, 0
      %v7726 = vsel %vm6669, %v7705, 0
      %v7729 = vsel %vm6669, %v7707, 0
      %v7732 = vsel %vm6669, %v7709, 0
      %v7735 = vsel %vm6669, %v7711, 0
      %v7738 = vsel %vm6669, %v7713, 0
      %v7741 = vsel %vm6669, %v7715, 0
      %7743 = vmatpush.bf16.msra.mxu0 0
      %7744 = vmatpush.bf16.msra.mxu0 0
      %7745 = vmatpush.bf16.msra.mxu0 0
      %7746 = vmatpush.bf16.msra.mxu0 0
      %7747 = vmatpush.bf16.msra.mxu0 0
      %7748 = vmatpush.bf16.msra.mxu0 0
      %7749 = vmatpush.bf16.msra.mxu0 0
      %7750 = vmatpush.bf16.msra.mxu0 %v7717
      %7751 = vmatmul.bf16.gmra.mxu0 %v7720
      %v7752 = vpop.f32.mrf.mxu0
      %v7753 = vadd.f32 0.0, %v7752
      %v7754 = vpop.f32.mrf.mxu0
      %v7755 = vadd.f32 0.0, %v7754
      %7756 = vmatmul.bf16.gmra.mxu0 %v7723
      %v7757 = vpop.f32.mrf.mxu0
      %v7758 = vadd.f32 0.0, %v7757
      %v7759 = vpop.f32.mrf.mxu0
      %v7760 = vadd.f32 0.0, %v7759
      %7761 = vmatmul.bf16.gmra.mxu0 %v7726
      %v7762 = vpop.f32.mrf.mxu0
      %v7763 = vadd.f32 0.0, %v7762
      %v7764 = vpop.f32.mrf.mxu0
      %v7765 = vadd.f32 0.0, %v7764
      %7766 = vmatmul.bf16.gmra.mxu0 %v7729
      %v7767 = vpop.f32.mrf.mxu0
      %v7768 = vadd.f32 0.0, %v7767
      %v7769 = vpop.f32.mrf.mxu0
      %v7770 = vadd.f32 0.0, %v7769
      %7771 = vmatmul.bf16.gmra.mxu0 %v7732
      %v7772 = vpop.f32.mrf.mxu0
      %v7773 = vadd.f32 0.0, %v7772
      %v7774 = vpop.f32.mrf.mxu0
      %v7775 = vadd.f32 0.0, %v7774
      %7776 = vmatmul.bf16.gmra.mxu0 %v7735
      %v7777 = vpop.f32.mrf.mxu0
      %v7778 = vadd.f32 0.0, %v7777
      %v7779 = vpop.f32.mrf.mxu0
      %v7780 = vadd.f32 0.0, %v7779
      %7781 = vmatmul.bf16.gmra.mxu0 %v7738
      %v7782 = vpop.f32.mrf.mxu0
      %v7783 = vadd.f32 0.0, %v7782
      %v7784 = vpop.f32.mrf.mxu0
      %v7785 = vadd.f32 0.0, %v7784
      %7786 = vmatmul.bf16.gmra.mxu0 %v7741
      %v7787 = vpop.f32.mrf.mxu0
      %v7788 = vadd.f32 0.0, %v7787
      %v7789 = vpop.f32.mrf.mxu0
      %7790 = vdwg.mxu0
      %v7791 = vadd.f32 %v7685, %v7753
      %v7792 = vadd.f32 %v7686, %v7755
      %v7793 = vadd.f32 %v7687, %v7758
      %v7794 = vadd.f32 %v7688, %v7760
      %v7795 = vadd.f32 %v7689, %v7763
      %v7796 = vadd.f32 %v7690, %v7765
      %v7797 = vadd.f32 %v7691, %v7768
      %v7798 = vadd.f32 %v7692, %v7770
      %v7799 = vadd.f32 %v7693, %v7773
      %v7800 = vadd.f32 %v7694, %v7775
      %v7801 = vadd.f32 %v7695, %v7778
      %v7802 = vadd.f32 %v7696, %v7780
      %v7803 = vadd.f32 %v7697, %v7783
      %v7804 = vadd.f32 %v7698, %v7785
      %v7805 = vadd.f32 %v7699, %v7788
      %7806 = vrot.lane.b32.xlu0 %v7496, 80
      %v7807 = vpop.permute.xlu0 %7806
      %7808 = vrot.lane.b32.xlu0 %v7497, 80
      %v7809 = vpop.permute.xlu0 %7808
      %7810 = vrot.lane.b32.xlu0 %v7498, 80
      %v7811 = vpop.permute.xlu0 %7810
      %7812 = vrot.lane.b32.xlu0 %v7499, 80
      %v7813 = vpop.permute.xlu0 %7812
      %7814 = vrot.lane.b32.xlu0 %v7500, 80
      %v7815 = vpop.permute.xlu0 %7814
      %7816 = vrot.lane.b32.xlu0 %v7501, 80
      %v7817 = vpop.permute.xlu0 %7816
      %7818 = vrot.lane.b32.xlu0 %v7502, 80
      %v7819 = vpop.permute.xlu0 %7818
      %7820 = vrot.lane.b32.xlu0 %v7503, 80
      %v7821 = vpop.permute.xlu0 %7820
      %7822 = vrot.lane.b32.xlu0 %v6665, 117
      %v7823 = vpop.permute.xlu0 %7822
      %v7826 = vsel %vm6669, %v7807, 0
      %v7829 = vsel %vm6669, %v7809, 0
      %v7832 = vsel %vm6669, %v7811, 0
      %v7835 = vsel %vm6669, %v7813, 0
      %v7838 = vsel %vm6669, %v7815, 0
      %v7841 = vsel %vm6669, %v7817, 0
      %v7844 = vsel %vm6669, %v7819, 0
      %v7847 = vsel %vm6669, %v7821, 0
      %7849 = vmatpush.bf16.msra.mxu0 0
      %7850 = vmatpush.bf16.msra.mxu0 0
      %7851 = vmatpush.bf16.msra.mxu0 0
      %7852 = vmatpush.bf16.msra.mxu0 0
      %7853 = vmatpush.bf16.msra.mxu0 0
      %7854 = vmatpush.bf16.msra.mxu0 0
      %7855 = vmatpush.bf16.msra.mxu0 0
      %7856 = vmatpush.bf16.msra.mxu0 %v7823
      %7857 = vmatmul.bf16.gmra.mxu0 %v7826
      %v7858 = vpop.f32.mrf.mxu0
      %v7859 = vadd.f32 0.0, %v7858
      %v7860 = vpop.f32.mrf.mxu0
      %v7861 = vadd.f32 0.0, %v7860
      %7862 = vmatmul.bf16.gmra.mxu0 %v7829
      %v7863 = vpop.f32.mrf.mxu0
      %v7864 = vadd.f32 0.0, %v7863
      %v7865 = vpop.f32.mrf.mxu0
      %v7866 = vadd.f32 0.0, %v7865
      %7867 = vmatmul.bf16.gmra.mxu0 %v7832
      %v7868 = vpop.f32.mrf.mxu0
      %v7869 = vadd.f32 0.0, %v7868
      %v7870 = vpop.f32.mrf.mxu0
      %v7871 = vadd.f32 0.0, %v7870
      %7872 = vmatmul.bf16.gmra.mxu0 %v7835
      %v7873 = vpop.f32.mrf.mxu0
      %v7874 = vadd.f32 0.0, %v7873
      %v7875 = vpop.f32.mrf.mxu0
      %v7876 = vadd.f32 0.0, %v7875
      %7877 = vmatmul.bf16.gmra.mxu0 %v7838
      %v7878 = vpop.f32.mrf.mxu0
      %v7879 = vadd.f32 0.0, %v7878
      %v7880 = vpop.f32.mrf.mxu0
      %v7881 = vadd.f32 0.0, %v7880
      %7882 = vmatmul.bf16.gmra.mxu0 %v7841
      %v7883 = vpop.f32.mrf.mxu0
      %v7884 = vadd.f32 0.0, %v7883
      %v7885 = vpop.f32.mrf.mxu0
      %v7886 = vadd.f32 0.0, %v7885
      %7887 = vmatmul.bf16.gmra.mxu0 %v7844
      %v7888 = vpop.f32.mrf.mxu0
      %v7889 = vadd.f32 0.0, %v7888
      %v7890 = vpop.f32.mrf.mxu0
      %v7891 = vadd.f32 0.0, %v7890
      %7892 = vmatmul.bf16.gmra.mxu0 %v7847
      %v7893 = vpop.f32.mrf.mxu0
      %v7894 = vadd.f32 0.0, %v7893
      %v7895 = vpop.f32.mrf.mxu0
      %7896 = vdwg.mxu0
      %v7897 = vadd.f32 %v7791, %v7859
      %v7898 = vadd.f32 %v7792, %v7861
      %v7899 = vadd.f32 %v7793, %v7864
      %v7900 = vadd.f32 %v7794, %v7866
      %v7901 = vadd.f32 %v7795, %v7869
      %v7902 = vadd.f32 %v7796, %v7871
      %v7903 = vadd.f32 %v7797, %v7874
      %v7904 = vadd.f32 %v7798, %v7876
      %v7905 = vadd.f32 %v7799, %v7879
      %v7906 = vadd.f32 %v7800, %v7881
      %v7907 = vadd.f32 %v7801, %v7884
      %v7908 = vadd.f32 %v7802, %v7886
      %v7909 = vadd.f32 %v7803, %v7889
      %v7910 = vadd.f32 %v7804, %v7891
      %v7911 = vadd.f32 %v7805, %v7894
      %7912 = vrot.lane.b32.xlu0 %v7496, 64
      %v7913 = vpop.permute.xlu0 %7912
      %7914 = vrot.lane.b32.xlu0 %v7497, 64
      %v7915 = vpop.permute.xlu0 %7914
      %7916 = vrot.lane.b32.xlu0 %v7498, 64
      %v7917 = vpop.permute.xlu0 %7916
      %7918 = vrot.lane.b32.xlu0 %v7499, 64
      %v7919 = vpop.permute.xlu0 %7918
      %7920 = vrot.lane.b32.xlu0 %v7500, 64
      %v7921 = vpop.permute.xlu0 %7920
      %7922 = vrot.lane.b32.xlu0 %v7501, 64
      %v7923 = vpop.permute.xlu0 %7922
      %7924 = vrot.lane.b32.xlu0 %v7502, 64
      %v7925 = vpop.permute.xlu0 %7924
      %7926 = vrot.lane.b32.xlu0 %v7503, 64
      %v7927 = vpop.permute.xlu0 %7926
      %7928 = vrot.lane.b32.xlu0 %v6665, 116
      %v7929 = vpop.permute.xlu0 %7928
      %v7932 = vsel %vm6669, %v7913, 0
      %v7935 = vsel %vm6669, %v7915, 0
      %v7938 = vsel %vm6669, %v7917, 0
      %v7941 = vsel %vm6669, %v7919, 0
      %v7944 = vsel %vm6669, %v7921, 0
      %v7947 = vsel %vm6669, %v7923, 0
      %v7950 = vsel %vm6669, %v7925, 0
      %v7953 = vsel %vm6669, %v7927, 0
      %7955 = vmatpush.bf16.msra.mxu0 0
      %7956 = vmatpush.bf16.msra.mxu0 0
      %7957 = vmatpush.bf16.msra.mxu0 0
      %7958 = vmatpush.bf16.msra.mxu0 0
      %7959 = vmatpush.bf16.msra.mxu0 0
      %7960 = vmatpush.bf16.msra.mxu0 0
      %7961 = vmatpush.bf16.msra.mxu0 0
      %7962 = vmatpush.bf16.msra.mxu0 %v7929
      %7963 = vmatmul.bf16.gmra.mxu0 %v7932
      %v7964 = vpop.f32.mrf.mxu0
      %v7965 = vadd.f32 0.0, %v7964
      %v7966 = vpop.f32.mrf.mxu0
      %v7967 = vadd.f32 0.0, %v7966
      %7968 = vmatmul.bf16.gmra.mxu0 %v7935
      %v7969 = vpop.f32.mrf.mxu0
      %v7970 = vadd.f32 0.0, %v7969
      %v7971 = vpop.f32.mrf.mxu0
      %v7972 = vadd.f32 0.0, %v7971
      %7973 = vmatmul.bf16.gmra.mxu0 %v7938
      %v7974 = vpop.f32.mrf.mxu0
      %v7975 = vadd.f32 0.0, %v7974
      %v7976 = vpop.f32.mrf.mxu0
      %v7977 = vadd.f32 0.0, %v7976
      %7978 = vmatmul.bf16.gmra.mxu0 %v7941
      %v7979 = vpop.f32.mrf.mxu0
      %v7980 = vadd.f32 0.0, %v7979
      %v7981 = vpop.f32.mrf.mxu0
      %v7982 = vadd.f32 0.0, %v7981
      %7983 = vmatmul.bf16.gmra.mxu0 %v7944
      %v7984 = vpop.f32.mrf.mxu0
      %v7985 = vadd.f32 0.0, %v7984
      %v7986 = vpop.f32.mrf.mxu0
      %v7987 = vadd.f32 0.0, %v7986
      %7988 = vmatmul.bf16.gmra.mxu0 %v7947
      %v7989 = vpop.f32.mrf.mxu0
      %v7990 = vadd.f32 0.0, %v7989
      %v7991 = vpop.f32.mrf.mxu0
      %v7992 = vadd.f32 0.0, %v7991
      %7993 = vmatmul.bf16.gmra.mxu0 %v7950
      %v7994 = vpop.f32.mrf.mxu0
      %v7995 = vadd.f32 0.0, %v7994
      %v7996 = vpop.f32.mrf.mxu0
      %v7997 = vadd.f32 0.0, %v7996
      %7998 = vmatmul.bf16.gmra.mxu0 %v7953
      %v7999 = vpop.f32.mrf.mxu0
      %v8000 = vadd.f32 0.0, %v7999
      %v8001 = vpop.f32.mrf.mxu0
      %8002 = vdwg.mxu0
      %v8003 = vadd.f32 %v7897, %v7965
      %v8004 = vadd.f32 %v7898, %v7967
      %v8005 = vadd.f32 %v7899, %v7970
      %v8006 = vadd.f32 %v7900, %v7972
      %v8007 = vadd.f32 %v7901, %v7975
      %v8008 = vadd.f32 %v7902, %v7977
      %v8009 = vadd.f32 %v7903, %v7980
      %v8010 = vadd.f32 %v7904, %v7982
      %v8011 = vadd.f32 %v7905, %v7985
      %v8012 = vadd.f32 %v7906, %v7987
      %v8013 = vadd.f32 %v7907, %v7990
      %v8014 = vadd.f32 %v7908, %v7992
      %v8015 = vadd.f32 %v7909, %v7995
      %v8016 = vadd.f32 %v7910, %v7997
      %v8017 = vadd.f32 %v7911, %v8000
      %8018 = vrot.lane.b32.xlu0 %v7496, 48
      %v8019 = vpop.permute.xlu0 %8018
      %8020 = vrot.lane.b32.xlu0 %v7497, 48
      %v8021 = vpop.permute.xlu0 %8020
      %8022 = vrot.lane.b32.xlu0 %v7498, 48
      %v8023 = vpop.permute.xlu0 %8022
      %8024 = vrot.lane.b32.xlu0 %v7499, 48
      %v8025 = vpop.permute.xlu0 %8024
      %8026 = vrot.lane.b32.xlu0 %v7500, 48
      %v8027 = vpop.permute.xlu0 %8026
      %8028 = vrot.lane.b32.xlu0 %v7501, 48
      %v8029 = vpop.permute.xlu0 %8028
      %8030 = vrot.lane.b32.xlu0 %v7502, 48
      %v8031 = vpop.permute.xlu0 %8030
      %8032 = vrot.lane.b32.xlu0 %v7503, 48
      %v8033 = vpop.permute.xlu0 %8032
      %8034 = vrot.lane.b32.xlu0 %v6665, 115
      %v8035 = vpop.permute.xlu0 %8034
      %v8038 = vsel %vm6669, %v8019, 0
      %v8041 = vsel %vm6669, %v8021, 0
      %v8044 = vsel %vm6669, %v8023, 0
      %v8047 = vsel %vm6669, %v8025, 0
      %v8050 = vsel %vm6669, %v8027, 0
      %v8053 = vsel %vm6669, %v8029, 0
      %v8056 = vsel %vm6669, %v8031, 0
      %v8059 = vsel %vm6669, %v8033, 0
      %8061 = vmatpush.bf16.msra.mxu0 0
      %8062 = vmatpush.bf16.msra.mxu0 0
      %8063 = vmatpush.bf16.msra.mxu0 0
      %8064 = vmatpush.bf16.msra.mxu0 0
      %8065 = vmatpush.bf16.msra.mxu0 0
      %8066 = vmatpush.bf16.msra.mxu0 0
      %8067 = vmatpush.bf16.msra.mxu0 0
      %8068 = vmatpush.bf16.msra.mxu0 %v8035
      %8069 = vmatmul.bf16.gmra.mxu0 %v8038
      %v8070 = vpop.f32.mrf.mxu0
      %v8071 = vadd.f32 0.0, %v8070
      %v8072 = vpop.f32.mrf.mxu0
      %v8073 = vadd.f32 0.0, %v8072
      %8074 = vmatmul.bf16.gmra.mxu0 %v8041
      %v8075 = vpop.f32.mrf.mxu0
      %v8076 = vadd.f32 0.0, %v8075
      %v8077 = vpop.f32.mrf.mxu0
      %v8078 = vadd.f32 0.0, %v8077
      %8079 = vmatmul.bf16.gmra.mxu0 %v8044
      %v8080 = vpop.f32.mrf.mxu0
      %v8081 = vadd.f32 0.0, %v8080
      %v8082 = vpop.f32.mrf.mxu0
      %v8083 = vadd.f32 0.0, %v8082
      %8084 = vmatmul.bf16.gmra.mxu0 %v8047
      %v8085 = vpop.f32.mrf.mxu0
      %v8086 = vadd.f32 0.0, %v8085
      %v8087 = vpop.f32.mrf.mxu0
      %v8088 = vadd.f32 0.0, %v8087
      %8089 = vmatmul.bf16.gmra.mxu0 %v8050
      %v8090 = vpop.f32.mrf.mxu0
      %v8091 = vadd.f32 0.0, %v8090
      %v8092 = vpop.f32.mrf.mxu0
      %v8093 = vadd.f32 0.0, %v8092
      %8094 = vmatmul.bf16.gmra.mxu0 %v8053
      %v8095 = vpop.f32.mrf.mxu0
      %v8096 = vadd.f32 0.0, %v8095
      %v8097 = vpop.f32.mrf.mxu0
      %v8098 = vadd.f32 0.0, %v8097
      %8099 = vmatmul.bf16.gmra.mxu0 %v8056
      %v8100 = vpop.f32.mrf.mxu0
      %v8101 = vadd.f32 0.0, %v8100
      %v8102 = vpop.f32.mrf.mxu0
      %v8103 = vadd.f32 0.0, %v8102
      %8104 = vmatmul.bf16.gmra.mxu0 %v8059
      %v8105 = vpop.f32.mrf.mxu0
      %v8106 = vadd.f32 0.0, %v8105
      %v8107 = vpop.f32.mrf.mxu0
      %8108 = vdwg.mxu0
      %v8109 = vadd.f32 %v8003, %v8071
      %v8110 = vadd.f32 %v8004, %v8073
      %v8111 = vadd.f32 %v8005, %v8076
      %v8112 = vadd.f32 %v8006, %v8078
      %v8113 = vadd.f32 %v8007, %v8081
      %v8114 = vadd.f32 %v8008, %v8083
      %v8115 = vadd.f32 %v8009, %v8086
      %v8116 = vadd.f32 %v8010, %v8088
      %v8117 = vadd.f32 %v8011, %v8091
      %v8118 = vadd.f32 %v8012, %v8093
      %v8119 = vadd.f32 %v8013, %v8096
      %v8120 = vadd.f32 %v8014, %v8098
      %v8121 = vadd.f32 %v8015, %v8101
      %v8122 = vadd.f32 %v8016, %v8103
      %v8123 = vadd.f32 %v8017, %v8106
      %8124 = vrot.lane.b32.xlu0 %v7496, 32
      %v8125 = vpop.permute.xlu0 %8124
      %8126 = vrot.lane.b32.xlu0 %v7497, 32
      %v8127 = vpop.permute.xlu0 %8126
      %8128 = vrot.lane.b32.xlu0 %v7498, 32
      %v8129 = vpop.permute.xlu0 %8128
      %8130 = vrot.lane.b32.xlu0 %v7499, 32
      %v8131 = vpop.permute.xlu0 %8130
      %8132 = vrot.lane.b32.xlu0 %v7500, 32
      %v8133 = vpop.permute.xlu0 %8132
      %8134 = vrot.lane.b32.xlu0 %v7501, 32
      %v8135 = vpop.permute.xlu0 %8134
      %8136 = vrot.lane.b32.xlu0 %v7502, 32
      %v8137 = vpop.permute.xlu0 %8136
      %8138 = vrot.lane.b32.xlu0 %v7503, 32
      %v8139 = vpop.permute.xlu0 %8138
      %8140 = vrot.lane.b32.xlu0 %v6665, 114
      %v8141 = vpop.permute.xlu0 %8140
      %v8144 = vsel %vm6669, %v8125, 0
      %v8147 = vsel %vm6669, %v8127, 0
      %v8150 = vsel %vm6669, %v8129, 0
      %v8153 = vsel %vm6669, %v8131, 0
      %v8156 = vsel %vm6669, %v8133, 0
      %v8159 = vsel %vm6669, %v8135, 0
      %v8162 = vsel %vm6669, %v8137, 0
      %v8165 = vsel %vm6669, %v8139, 0
      %8167 = vmatpush.bf16.msra.mxu0 0
      %8168 = vmatpush.bf16.msra.mxu0 0
      %8169 = vmatpush.bf16.msra.mxu0 0
      %8170 = vmatpush.bf16.msra.mxu0 0
      %8171 = vmatpush.bf16.msra.mxu0 0
      %8172 = vmatpush.bf16.msra.mxu0 0
      %8173 = vmatpush.bf16.msra.mxu0 0
      %8174 = vmatpush.bf16.msra.mxu0 %v8141
      %8175 = vmatmul.bf16.gmra.mxu0 %v8144
      %v8176 = vpop.f32.mrf.mxu0
      %v8177 = vadd.f32 0.0, %v8176
      %v8178 = vpop.f32.mrf.mxu0
      %v8179 = vadd.f32 0.0, %v8178
      %8180 = vmatmul.bf16.gmra.mxu0 %v8147
      %v8181 = vpop.f32.mrf.mxu0
      %v8182 = vadd.f32 0.0, %v8181
      %v8183 = vpop.f32.mrf.mxu0
      %v8184 = vadd.f32 0.0, %v8183
      %8185 = vmatmul.bf16.gmra.mxu0 %v8150
      %v8186 = vpop.f32.mrf.mxu0
      %v8187 = vadd.f32 0.0, %v8186
      %v8188 = vpop.f32.mrf.mxu0
      %v8189 = vadd.f32 0.0, %v8188
      %8190 = vmatmul.bf16.gmra.mxu0 %v8153
      %v8191 = vpop.f32.mrf.mxu0
      %v8192 = vadd.f32 0.0, %v8191
      %v8193 = vpop.f32.mrf.mxu0
      %v8194 = vadd.f32 0.0, %v8193
      %8195 = vmatmul.bf16.gmra.mxu0 %v8156
      %v8196 = vpop.f32.mrf.mxu0
      %v8197 = vadd.f32 0.0, %v8196
      %v8198 = vpop.f32.mrf.mxu0
      %v8199 = vadd.f32 0.0, %v8198
      %8200 = vmatmul.bf16.gmra.mxu0 %v8159
      %v8201 = vpop.f32.mrf.mxu0
      %v8202 = vadd.f32 0.0, %v8201
      %v8203 = vpop.f32.mrf.mxu0
      %v8204 = vadd.f32 0.0, %v8203
      %8205 = vmatmul.bf16.gmra.mxu0 %v8162
      %v8206 = vpop.f32.mrf.mxu0
      %v8207 = vadd.f32 0.0, %v8206
      %v8208 = vpop.f32.mrf.mxu0
      %v8209 = vadd.f32 0.0, %v8208
      %8210 = vmatmul.bf16.gmra.mxu0 %v8165
      %v8211 = vpop.f32.mrf.mxu0
      %v8212 = vadd.f32 0.0, %v8211
      %v8213 = vpop.f32.mrf.mxu0
      %8214 = vdwg.mxu0
      %v8215 = vadd.f32 %v8109, %v8177
      %v8216 = vadd.f32 %v8110, %v8179
      %v8217 = vadd.f32 %v8111, %v8182
      %v8218 = vadd.f32 %v8112, %v8184
      %v8219 = vadd.f32 %v8113, %v8187
      %v8220 = vadd.f32 %v8114, %v8189
      %v8221 = vadd.f32 %v8115, %v8192
      %v8222 = vadd.f32 %v8116, %v8194
      %v8223 = vadd.f32 %v8117, %v8197
      %v8224 = vadd.f32 %v8118, %v8199
      %v8225 = vadd.f32 %v8119, %v8202
      %v8226 = vadd.f32 %v8120, %v8204
      %v8227 = vadd.f32 %v8121, %v8207
      %v8228 = vadd.f32 %v8122, %v8209
      %v8229 = vadd.f32 %v8123, %v8212
      %8230 = vrot.lane.b32.xlu0 %v7496, 16
      %v8231 = vpop.permute.xlu0 %8230
      %8232 = vrot.lane.b32.xlu0 %v7497, 16
      %v8233 = vpop.permute.xlu0 %8232
      %8234 = vrot.lane.b32.xlu0 %v7498, 16
      %v8235 = vpop.permute.xlu0 %8234
      %8236 = vrot.lane.b32.xlu0 %v7499, 16
      %v8237 = vpop.permute.xlu0 %8236
      %8238 = vrot.lane.b32.xlu0 %v7500, 16
      %v8239 = vpop.permute.xlu0 %8238
      %8240 = vrot.lane.b32.xlu0 %v7501, 16
      %v8241 = vpop.permute.xlu0 %8240
      %8242 = vrot.lane.b32.xlu0 %v7502, 16
      %v8243 = vpop.permute.xlu0 %8242
      %8244 = vrot.lane.b32.xlu0 %v7503, 16
      %v8245 = vpop.permute.xlu0 %8244
      %8246 = vrot.lane.b32.xlu0 %v6665, 113
      %v8247 = vpop.permute.xlu0 %8246
      %v8250 = vsel %vm6669, %v8231, 0
      %v8253 = vsel %vm6669, %v8233, 0
      %v8256 = vsel %vm6669, %v8235, 0
      %v8259 = vsel %vm6669, %v8237, 0
      %v8262 = vsel %vm6669, %v8239, 0
      %v8265 = vsel %vm6669, %v8241, 0
      %v8268 = vsel %vm6669, %v8243, 0
      %v8271 = vsel %vm6669, %v8245, 0
      %8273 = vmatpush.bf16.msra.mxu0 0
      %8274 = vmatpush.bf16.msra.mxu0 0
      %8275 = vmatpush.bf16.msra.mxu0 0
      %8276 = vmatpush.bf16.msra.mxu0 0
      %8277 = vmatpush.bf16.msra.mxu0 0
      %8278 = vmatpush.bf16.msra.mxu0 0
      %8279 = vmatpush.bf16.msra.mxu0 0
      %8280 = vmatpush.bf16.msra.mxu0 %v8247
      %8281 = vmatmul.bf16.gmra.mxu0 %v8250
      %v8282 = vpop.f32.mrf.mxu0
      %v8283 = vadd.f32 0.0, %v8282
      %v8284 = vpop.f32.mrf.mxu0
      %v8285 = vadd.f32 0.0, %v8284
      %8286 = vmatmul.bf16.gmra.mxu0 %v8253
      %v8287 = vpop.f32.mrf.mxu0
      %v8288 = vadd.f32 0.0, %v8287
      %v8289 = vpop.f32.mrf.mxu0
      %v8290 = vadd.f32 0.0, %v8289
      %8291 = vmatmul.bf16.gmra.mxu0 %v8256
      %v8292 = vpop.f32.mrf.mxu0
      %v8293 = vadd.f32 0.0, %v8292
      %v8294 = vpop.f32.mrf.mxu0
      %v8295 = vadd.f32 0.0, %v8294
      %8296 = vmatmul.bf16.gmra.mxu0 %v8259
      %v8297 = vpop.f32.mrf.mxu0
      %v8298 = vadd.f32 0.0, %v8297
      %v8299 = vpop.f32.mrf.mxu0
      %v8300 = vadd.f32 0.0, %v8299
      %8301 = vmatmul.bf16.gmra.mxu0 %v8262
      %v8302 = vpop.f32.mrf.mxu0
      %v8303 = vadd.f32 0.0, %v8302
      %v8304 = vpop.f32.mrf.mxu0
      %v8305 = vadd.f32 0.0, %v8304
      %8306 = vmatmul.bf16.gmra.mxu0 %v8265
      %v8307 = vpop.f32.mrf.mxu0
      %v8308 = vadd.f32 0.0, %v8307
      %v8309 = vpop.f32.mrf.mxu0
      %v8310 = vadd.f32 0.0, %v8309
      %8311 = vmatmul.bf16.gmra.mxu0 %v8268
      %v8312 = vpop.f32.mrf.mxu0
      %v8313 = vadd.f32 0.0, %v8312
      %v8314 = vpop.f32.mrf.mxu0
      %v8315 = vadd.f32 0.0, %v8314
      %8316 = vmatmul.bf16.gmra.mxu0 %v8271
      %v8317 = vpop.f32.mrf.mxu0
      %v8318 = vadd.f32 0.0, %v8317
      %v8319 = vpop.f32.mrf.mxu0
      %8320 = vdwg.mxu0
      %v8321 = vadd.f32 %v8215, %v8283
      %v8322 = vadd.f32 %v8216, %v8285
      %v8323 = vadd.f32 %v8217, %v8288
      %v8324 = vadd.f32 %v8218, %v8290
      %v8325 = vadd.f32 %v8219, %v8293
      %v8326 = vadd.f32 %v8220, %v8295
      %v8327 = vadd.f32 %v8221, %v8298
      %v8328 = vadd.f32 %v8222, %v8300
      %v8329 = vadd.f32 %v8223, %v8303
      %v8330 = vadd.f32 %v8224, %v8305
      %v8331 = vadd.f32 %v8225, %v8308
      %v8332 = vadd.f32 %v8226, %v8310
      %v8333 = vadd.f32 %v8227, %v8313
      %v8334 = vadd.f32 %v8228, %v8315
      %v8335 = vadd.f32 %v8229, %v8318
      %v8336 = vld [vmem:[%s5 + $0x8] sm:$0xf]
      %v8337 = vld [vmem:[%s5 + $0x18] sm:$0xf]
      %v8338 = vld [vmem:[%s5 + $0x28] sm:$0xf]
      %v8339 = vld [vmem:[%s5 + $0x38] sm:$0xf]
      %v8340 = vld [vmem:[%s5 + $0x48] sm:$0xf]
      %v8341 = vld [vmem:[%s5 + $0x58] sm:$0xf]
      %v8342 = vld [vmem:[%s5 + $0x68] sm:$0xf]
      %v8343 = vld [vmem:[%s5 + $0x78] sm:$0xf]
      %v8344 = vld [vmem:[%s5 + $0x88] sm:$0xf]
      %v8345 = vld [vmem:[%s5 + $0x98] sm:$0xf]
      %v8346 = vld [vmem:[%s5 + $0xa8] sm:$0xf]
      %v8347 = vld [vmem:[%s5 + $0xb8] sm:$0xf]
      %v8348 = vld [vmem:[%s5 + $0xc8] sm:$0xf]
      %v8349 = vld [vmem:[%s5 + $0xd8] sm:$0xf]
      %v8350 = vld [vmem:[%s5 + $0xe8] sm:$0xf]
      %v8366 = vunpack.c.l.b16 %v8336
      %v8367 = vunpack.c.l.b16 %v8337
      %v8368 = vunpack.c.l.b16 %v8338
      %v8369 = vunpack.c.l.b16 %v8339
      %v8370 = vunpack.c.l.b16 %v8340
      %v8371 = vunpack.c.l.b16 %v8341
      %v8372 = vunpack.c.l.b16 %v8342
      %v8373 = vunpack.c.l.b16 %v8343
      %v8374 = vunpack.c.l.b16 %v8344
      %v8375 = vunpack.c.l.b16 %v8345
      %v8376 = vunpack.c.l.b16 %v8346
      %v8377 = vunpack.c.l.b16 %v8347
      %v8378 = vunpack.c.l.b16 %v8348
      %v8379 = vunpack.c.l.b16 %v8349
      %v8380 = vunpack.c.l.b16 %v8350
      %v8381 = vpack.c.b16 %v8367, %v8366
      %v8382 = vpack.c.b16 %v8369, %v8368
      %v8383 = vpack.c.b16 %v8371, %v8370
      %v8384 = vpack.c.b16 %v8373, %v8372
      %v8385 = vpack.c.b16 %v8375, %v8374
      %v8386 = vpack.c.b16 %v8377, %v8376
      %v8387 = vpack.c.b16 %v8379, %v8378
      %v8388 = vpack.c.b16 %v8380, %v8380
      %8389 = vrot.lane.b32.xlu0 %v6665, 112
      %v8390 = vpop.permute.xlu0 %8389
      %v8393 = vsel %vm6669, %v8381, 0
      %v8396 = vsel %vm6669, %v8382, 0
      %v8399 = vsel %vm6669, %v8383, 0
      %v8402 = vsel %vm6669, %v8384, 0
      %v8405 = vsel %vm6669, %v8385, 0
      %v8408 = vsel %vm6669, %v8386, 0
      %v8411 = vsel %vm6669, %v8387, 0
      %v8414 = vsel %vm6669, %v8388, 0
      %8416 = vmatpush.bf16.msra.mxu0 0
      %8417 = vmatpush.bf16.msra.mxu0 0
      %8418 = vmatpush.bf16.msra.mxu0 0
      %8419 = vmatpush.bf16.msra.mxu0 0
      %8420 = vmatpush.bf16.msra.mxu0 0
      %8421 = vmatpush.bf16.msra.mxu0 0
      %8422 = vmatpush.bf16.msra.mxu0 0
      %8423 = vmatpush.bf16.msra.mxu0 %v8390
      %8424 = vmatmul.bf16.gmra.mxu0 %v8393
      %v8425 = vpop.f32.mrf.mxu0
      %v8426 = vadd.f32 0.0, %v8425
      %v8427 = vpop.f32.mrf.mxu0
      %v8428 = vadd.f32 0.0, %v8427
      %8429 = vmatmul.bf16.gmra.mxu0 %v8396
      %v8430 = vpop.f32.mrf.mxu0
      %v8431 = vadd.f32 0.0, %v8430
      %v8432 = vpop.f32.mrf.mxu0
      %v8433 = vadd.f32 0.0, %v8432
      %8434 = vmatmul.bf16.gmra.mxu0 %v8399
      %v8435 = vpop.f32.mrf.mxu0
      %v8436 = vadd.f32 0.0, %v8435
      %v8437 = vpop.f32.mrf.mxu0
      %v8438 = vadd.f32 0.0, %v8437
      %8439 = vmatmul.bf16.gmra.mxu0 %v8402
      %v8440 = vpop.f32.mrf.mxu0
      %v8441 = vadd.f32 0.0, %v8440
      %v8442 = vpop.f32.mrf.mxu0
      %v8443 = vadd.f32 0.0, %v8442
      %8444 = vmatmul.bf16.gmra.mxu0 %v8405
      %v8445 = vpop.f32.mrf.mxu0
      %v8446 = vadd.f32 0.0, %v8445
      %v8447 = vpop.f32.mrf.mxu0
      %v8448 = vadd.f32 0.0, %v8447
      %8449 = vmatmul.bf16.gmra.mxu0 %v8408
      %v8450 = vpop.f32.mrf.mxu0
      %v8451 = vadd.f32 0.0, %v8450
      %v8452 = vpop.f32.mrf.mxu0
      %v8453 = vadd.f32 0.0, %v8452
      %8454 = vmatmul.bf16.gmra.mxu0 %v8411
      %v8455 = vpop.f32.mrf.mxu0
      %v8456 = vadd.f32 0.0, %v8455
      %v8457 = vpop.f32.mrf.mxu0
      %v8458 = vadd.f32 0.0, %v8457
      %8459 = vmatmul.bf16.gmra.mxu0 %v8414
      %v8460 = vpop.f32.mrf.mxu0
      %v8461 = vadd.f32 0.0, %v8460
      %v8462 = vpop.f32.mrf.mxu0
      %8463 = vdwg.mxu0
      %v8464 = vadd.f32 %v8321, %v8426
      %v8465 = vadd.f32 %v8322, %v8428
      %v8466 = vadd.f32 %v8323, %v8431
      %v8467 = vadd.f32 %v8324, %v8433
      %v8468 = vadd.f32 %v8325, %v8436
      %v8469 = vadd.f32 %v8326, %v8438
      %v8470 = vadd.f32 %v8327, %v8441
      %v8471 = vadd.f32 %v8328, %v8443
      %v8472 = vadd.f32 %v8329, %v8446
      %v8473 = vadd.f32 %v8330, %v8448
      %v8474 = vadd.f32 %v8331, %v8451
      %v8475 = vadd.f32 %v8332, %v8453
      %v8476 = vadd.f32 %v8333, %v8456
      %v8477 = vadd.f32 %v8334, %v8458
      %v8478 = vadd.f32 %v8335, %v8461
      %8479 = vrot.lane.b32.xlu0 %v8381, 112
      %v8480 = vpop.permute.xlu0 %8479
      %8481 = vrot.lane.b32.xlu0 %v8382, 112
      %v8482 = vpop.permute.xlu0 %8481
      %8483 = vrot.lane.b32.xlu0 %v8383, 112
      %v8484 = vpop.permute.xlu0 %8483
      %8485 = vrot.lane.b32.xlu0 %v8384, 112
      %v8486 = vpop.permute.xlu0 %8485
      %8487 = vrot.lane.b32.xlu0 %v8385, 112
      %v8488 = vpop.permute.xlu0 %8487
      %8489 = vrot.lane.b32.xlu0 %v8386, 112
      %v8490 = vpop.permute.xlu0 %8489
      %8491 = vrot.lane.b32.xlu0 %v8387, 112
      %v8492 = vpop.permute.xlu0 %8491
      %8493 = vrot.lane.b32.xlu0 %v8388, 112
      %v8494 = vpop.permute.xlu0 %8493
      %8495 = vrot.lane.b32.xlu0 %v6665, 111
      %v8496 = vpop.permute.xlu0 %8495
      %v8499 = vsel %vm6669, %v8480, 0
      %v8502 = vsel %vm6669, %v8482, 0
      %v8505 = vsel %vm6669, %v8484, 0
      %v8508 = vsel %vm6669, %v8486, 0
      %v8511 = vsel %vm6669, %v8488, 0
      %v8514 = vsel %vm6669, %v8490, 0
      %v8517 = vsel %vm6669, %v8492, 0
      %v8520 = vsel %vm6669, %v8494, 0
      %8522 = vmatpush.bf16.msra.mxu0 0
      %8523 = vmatpush.bf16.msra.mxu0 0
      %8524 = vmatpush.bf16.msra.mxu0 0
      %8525 = vmatpush.bf16.msra.mxu0 0
      %8526 = vmatpush.bf16.msra.mxu0 0
      %8527 = vmatpush.bf16.msra.mxu0 0
      %8528 = vmatpush.bf16.msra.mxu0 0
      %8529 = vmatpush.bf16.msra.mxu0 %v8496
      %8530 = vmatmul.bf16.gmra.mxu0 %v8499
      %v8531 = vpop.f32.mrf.mxu0
      %v8532 = vadd.f32 0.0, %v8531
      %v8533 = vpop.f32.mrf.mxu0
      %v8534 = vadd.f32 0.0, %v8533
      %8535 = vmatmul.bf16.gmra.mxu0 %v8502
      %v8536 = vpop.f32.mrf.mxu0
      %v8537 = vadd.f32 0.0, %v8536
      %v8538 = vpop.f32.mrf.mxu0
      %v8539 = vadd.f32 0.0, %v8538
      %8540 = vmatmul.bf16.gmra.mxu0 %v8505
      %v8541 = vpop.f32.mrf.mxu0
      %v8542 = vadd.f32 0.0, %v8541
      %v8543 = vpop.f32.mrf.mxu0
      %v8544 = vadd.f32 0.0, %v8543
      %8545 = vmatmul.bf16.gmra.mxu0 %v8508
      %v8546 = vpop.f32.mrf.mxu0
      %v8547 = vadd.f32 0.0, %v8546
      %v8548 = vpop.f32.mrf.mxu0
      %v8549 = vadd.f32 0.0, %v8548
      %8550 = vmatmul.bf16.gmra.mxu0 %v8511
      %v8551 = vpop.f32.mrf.mxu0
      %v8552 = vadd.f32 0.0, %v8551
      %v8553 = vpop.f32.mrf.mxu0
      %v8554 = vadd.f32 0.0, %v8553
      %8555 = vmatmul.bf16.gmra.mxu0 %v8514
      %v8556 = vpop.f32.mrf.mxu0
      %v8557 = vadd.f32 0.0, %v8556
      %v8558 = vpop.f32.mrf.mxu0
      %v8559 = vadd.f32 0.0, %v8558
      %8560 = vmatmul.bf16.gmra.mxu0 %v8517
      %v8561 = vpop.f32.mrf.mxu0
      %v8562 = vadd.f32 0.0, %v8561
      %v8563 = vpop.f32.mrf.mxu0
      %v8564 = vadd.f32 0.0, %v8563
      %8565 = vmatmul.bf16.gmra.mxu0 %v8520
      %v8566 = vpop.f32.mrf.mxu0
      %v8567 = vadd.f32 0.0, %v8566
      %v8568 = vpop.f32.mrf.mxu0
      %8569 = vdwg.mxu0
      %v8570 = vadd.f32 %v8464, %v8532
      %v8571 = vadd.f32 %v8465, %v8534
      %v8572 = vadd.f32 %v8466, %v8537
      %v8573 = vadd.f32 %v8467, %v8539
      %v8574 = vadd.f32 %v8468, %v8542
      %v8575 = vadd.f32 %v8469, %v8544
      %v8576 = vadd.f32 %v8470, %v8547
      %v8577 = vadd.f32 %v8471, %v8549
      %v8578 = vadd.f32 %v8472, %v8552
      %v8579 = vadd.f32 %v8473, %v8554
      %v8580 = vadd.f32 %v8474, %v8557
      %v8581 = vadd.f32 %v8475, %v8559
      %v8582 = vadd.f32 %v8476, %v8562
      %v8583 = vadd.f32 %v8477, %v8564
      %v8584 = vadd.f32 %v8478, %v8567
      %8585 = vrot.lane.b32.xlu0 %v8381, 96
      %v8586 = vpop.permute.xlu0 %8585
      %8587 = vrot.lane.b32.xlu0 %v8382, 96
      %v8588 = vpop.permute.xlu0 %8587
      %8589 = vrot.lane.b32.xlu0 %v8383, 96
      %v8590 = vpop.permute.xlu0 %8589
      %8591 = vrot.lane.b32.xlu0 %v8384, 96
      %v8592 = vpop.permute.xlu0 %8591
      %8593 = vrot.lane.b32.xlu0 %v8385, 96
      %v8594 = vpop.permute.xlu0 %8593
      %8595 = vrot.lane.b32.xlu0 %v8386, 96
      %v8596 = vpop.permute.xlu0 %8595
      %8597 = vrot.lane.b32.xlu0 %v8387, 96
      %v8598 = vpop.permute.xlu0 %8597
      %8599 = vrot.lane.b32.xlu0 %v8388, 96
      %v8600 = vpop.permute.xlu0 %8599
      %8601 = vrot.lane.b32.xlu0 %v6665, 110
      %v8602 = vpop.permute.xlu0 %8601
      %v8605 = vsel %vm6669, %v8586, 0
      %v8608 = vsel %vm6669, %v8588, 0
      %v8611 = vsel %vm6669, %v8590, 0
      %v8614 = vsel %vm6669, %v8592, 0
      %v8617 = vsel %vm6669, %v8594, 0
      %v8620 = vsel %vm6669, %v8596, 0
      %v8623 = vsel %vm6669, %v8598, 0
      %v8626 = vsel %vm6669, %v8600, 0
      %8628 = vmatpush.bf16.msra.mxu0 0
      %8629 = vmatpush.bf16.msra.mxu0 0
      %8630 = vmatpush.bf16.msra.mxu0 0
      %8631 = vmatpush.bf16.msra.mxu0 0
      %8632 = vmatpush.bf16.msra.mxu0 0
      %8633 = vmatpush.bf16.msra.mxu0 0
      %8634 = vmatpush.bf16.msra.mxu0 0
      %8635 = vmatpush.bf16.msra.mxu0 %v8602
      %8636 = vmatmul.bf16.gmra.mxu0 %v8605
      %v8637 = vpop.f32.mrf.mxu0
      %v8638 = vadd.f32 0.0, %v8637
      %v8639 = vpop.f32.mrf.mxu0
      %v8640 = vadd.f32 0.0, %v8639
      %8641 = vmatmul.bf16.gmra.mxu0 %v8608
      %v8642 = vpop.f32.mrf.mxu0
      %v8643 = vadd.f32 0.0, %v8642
      %v8644 = vpop.f32.mrf.mxu0
      %v8645 = vadd.f32 0.0, %v8644
      %8646 = vmatmul.bf16.gmra.mxu0 %v8611
      %v8647 = vpop.f32.mrf.mxu0
      %v8648 = vadd.f32 0.0, %v8647
      %v8649 = vpop.f32.mrf.mxu0
      %v8650 = vadd.f32 0.0, %v8649
      %8651 = vmatmul.bf16.gmra.mxu0 %v8614
      %v8652 = vpop.f32.mrf.mxu0
      %v8653 = vadd.f32 0.0, %v8652
      %v8654 = vpop.f32.mrf.mxu0
      %v8655 = vadd.f32 0.0, %v8654
      %8656 = vmatmul.bf16.gmra.mxu0 %v8617
      %v8657 = vpop.f32.mrf.mxu0
      %v8658 = vadd.f32 0.0, %v8657
      %v8659 = vpop.f32.mrf.mxu0
      %v8660 = vadd.f32 0.0, %v8659
      %8661 = vmatmul.bf16.gmra.mxu0 %v8620
      %v8662 = vpop.f32.mrf.mxu0
      %v8663 = vadd.f32 0.0, %v8662
      %v8664 = vpop.f32.mrf.mxu0
      %v8665 = vadd.f32 0.0, %v8664
      %8666 = vmatmul.bf16.gmra.mxu0 %v8623
      %v8667 = vpop.f32.mrf.mxu0
      %v8668 = vadd.f32 0.0, %v8667
      %v8669 = vpop.f32.mrf.mxu0
      %v8670 = vadd.f32 0.0, %v8669
      %8671 = vmatmul.bf16.gmra.mxu0 %v8626
      %v8672 = vpop.f32.mrf.mxu0
      %v8673 = vadd.f32 0.0, %v8672
      %v8674 = vpop.f32.mrf.mxu0
      %8675 = vdwg.mxu0
      %v8676 = vadd.f32 %v8570, %v8638
      %v8677 = vadd.f32 %v8571, %v8640
      %v8678 = vadd.f32 %v8572, %v8643
      %v8679 = vadd.f32 %v8573, %v8645
      %v8680 = vadd.f32 %v8574, %v8648
      %v8681 = vadd.f32 %v8575, %v8650
      %v8682 = vadd.f32 %v8576, %v8653
      %v8683 = vadd.f32 %v8577, %v8655
      %v8684 = vadd.f32 %v8578, %v8658
      %v8685 = vadd.f32 %v8579, %v8660
      %v8686 = vadd.f32 %v8580, %v8663
      %v8687 = vadd.f32 %v8581, %v8665
      %v8688 = vadd.f32 %v8582, %v8668
      %v8689 = vadd.f32 %v8583, %v8670
      %v8690 = vadd.f32 %v8584, %v8673
      %8691 = vrot.lane.b32.xlu0 %v8381, 80
      %v8692 = vpop.permute.xlu0 %8691
      %8693 = vrot.lane.b32.xlu0 %v8382, 80
      %v8694 = vpop.permute.xlu0 %8693
      %8695 = vrot.lane.b32.xlu0 %v8383, 80
      %v8696 = vpop.permute.xlu0 %8695
      %8697 = vrot.lane.b32.xlu0 %v8384, 80
      %v8698 = vpop.permute.xlu0 %8697
      %8699 = vrot.lane.b32.xlu0 %v8385, 80
      %v8700 = vpop.permute.xlu0 %8699
      %8701 = vrot.lane.b32.xlu0 %v8386, 80
      %v8702 = vpop.permute.xlu0 %8701
      %8703 = vrot.lane.b32.xlu0 %v8387, 80
      %v8704 = vpop.permute.xlu0 %8703
      %8705 = vrot.lane.b32.xlu0 %v8388, 80
      %v8706 = vpop.permute.xlu0 %8705
      %8707 = vrot.lane.b32.xlu0 %v6665, 109
      %v8708 = vpop.permute.xlu0 %8707
      %v8711 = vsel %vm6669, %v8692, 0
      %v8714 = vsel %vm6669, %v8694, 0
      %v8717 = vsel %vm6669, %v8696, 0
      %v8720 = vsel %vm6669, %v8698, 0
      %v8723 = vsel %vm6669, %v8700, 0
      %v8726 = vsel %vm6669, %v8702, 0
      %v8729 = vsel %vm6669, %v8704, 0
      %v8732 = vsel %vm6669, %v8706, 0
      %8734 = vmatpush.bf16.msra.mxu0 0
      %8735 = vmatpush.bf16.msra.mxu0 0
      %8736 = vmatpush.bf16.msra.mxu0 0
      %8737 = vmatpush.bf16.msra.mxu0 0
      %8738 = vmatpush.bf16.msra.mxu0 0
      %8739 = vmatpush.bf16.msra.mxu0 0
      %8740 = vmatpush.bf16.msra.mxu0 0
      %8741 = vmatpush.bf16.msra.mxu0 %v8708
      %8742 = vmatmul.bf16.gmra.mxu0 %v8711
      %v8743 = vpop.f32.mrf.mxu0
      %v8744 = vadd.f32 0.0, %v8743
      %v8745 = vpop.f32.mrf.mxu0
      %v8746 = vadd.f32 0.0, %v8745
      %8747 = vmatmul.bf16.gmra.mxu0 %v8714
      %v8748 = vpop.f32.mrf.mxu0
      %v8749 = vadd.f32 0.0, %v8748
      %v8750 = vpop.f32.mrf.mxu0
      %v8751 = vadd.f32 0.0, %v8750
      %8752 = vmatmul.bf16.gmra.mxu0 %v8717
      %v8753 = vpop.f32.mrf.mxu0
      %v8754 = vadd.f32 0.0, %v8753
      %v8755 = vpop.f32.mrf.mxu0
      %v8756 = vadd.f32 0.0, %v8755
      %8757 = vmatmul.bf16.gmra.mxu0 %v8720
      %v8758 = vpop.f32.mrf.mxu0
      %v8759 = vadd.f32 0.0, %v8758
      %v8760 = vpop.f32.mrf.mxu0
      %v8761 = vadd.f32 0.0, %v8760
      %8762 = vmatmul.bf16.gmra.mxu0 %v8723
      %v8763 = vpop.f32.mrf.mxu0
      %v8764 = vadd.f32 0.0, %v8763
      %v8765 = vpop.f32.mrf.mxu0
      %v8766 = vadd.f32 0.0, %v8765
      %8767 = vmatmul.bf16.gmra.mxu0 %v8726
      %v8768 = vpop.f32.mrf.mxu0
      %v8769 = vadd.f32 0.0, %v8768
      %v8770 = vpop.f32.mrf.mxu0
      %v8771 = vadd.f32 0.0, %v8770
      %8772 = vmatmul.bf16.gmra.mxu0 %v8729
      %v8773 = vpop.f32.mrf.mxu0
      %v8774 = vadd.f32 0.0, %v8773
      %v8775 = vpop.f32.mrf.mxu0
      %v8776 = vadd.f32 0.0, %v8775
      %8777 = vmatmul.bf16.gmra.mxu0 %v8732
      %v8778 = vpop.f32.mrf.mxu0
      %v8779 = vadd.f32 0.0, %v8778
      %v8780 = vpop.f32.mrf.mxu0
      %8781 = vdwg.mxu0
      %v8782 = vadd.f32 %v8676, %v8744
      %v8783 = vadd.f32 %v8677, %v8746
      %v8784 = vadd.f32 %v8678, %v8749
      %v8785 = vadd.f32 %v8679, %v8751
      %v8786 = vadd.f32 %v8680, %v8754
      %v8787 = vadd.f32 %v8681, %v8756
      %v8788 = vadd.f32 %v8682, %v8759
      %v8789 = vadd.f32 %v8683, %v8761
      %v8790 = vadd.f32 %v8684, %v8764
      %v8791 = vadd.f32 %v8685, %v8766
      %v8792 = vadd.f32 %v8686, %v8769
      %v8793 = vadd.f32 %v8687, %v8771
      %v8794 = vadd.f32 %v8688, %v8774
      %v8795 = vadd.f32 %v8689, %v8776
      %v8796 = vadd.f32 %v8690, %v8779
      %8797 = vrot.lane.b32.xlu0 %v8381, 64
      %v8798 = vpop.permute.xlu0 %8797
      %8799 = vrot.lane.b32.xlu0 %v8382, 64
      %v8800 = vpop.permute.xlu0 %8799
      %8801 = vrot.lane.b32.xlu0 %v8383, 64
      %v8802 = vpop.permute.xlu0 %8801
      %8803 = vrot.lane.b32.xlu0 %v8384, 64
      %v8804 = vpop.permute.xlu0 %8803
      %8805 = vrot.lane.b32.xlu0 %v8385, 64
      %v8806 = vpop.permute.xlu0 %8805
      %8807 = vrot.lane.b32.xlu0 %v8386, 64
      %v8808 = vpop.permute.xlu0 %8807
      %8809 = vrot.lane.b32.xlu0 %v8387, 64
      %v8810 = vpop.permute.xlu0 %8809
      %8811 = vrot.lane.b32.xlu0 %v8388, 64
      %v8812 = vpop.permute.xlu0 %8811
      %8813 = vrot.lane.b32.xlu0 %v6665, 108
      %v8814 = vpop.permute.xlu0 %8813
      %v8817 = vsel %vm6669, %v8798, 0
      %v8820 = vsel %vm6669, %v8800, 0
      %v8823 = vsel %vm6669, %v8802, 0
      %v8826 = vsel %vm6669, %v8804, 0
      %v8829 = vsel %vm6669, %v8806, 0
      %v8832 = vsel %vm6669, %v8808, 0
      %v8835 = vsel %vm6669, %v8810, 0
      %v8838 = vsel %vm6669, %v8812, 0
      %8840 = vmatpush.bf16.msra.mxu0 0
      %8841 = vmatpush.bf16.msra.mxu0 0
      %8842 = vmatpush.bf16.msra.mxu0 0
      %8843 = vmatpush.bf16.msra.mxu0 0
      %8844 = vmatpush.bf16.msra.mxu0 0
      %8845 = vmatpush.bf16.msra.mxu0 0
      %8846 = vmatpush.bf16.msra.mxu0 0
      %8847 = vmatpush.bf16.msra.mxu0 %v8814
      %8848 = vmatmul.bf16.gmra.mxu0 %v8817
      %v8849 = vpop.f32.mrf.mxu0
      %v8850 = vadd.f32 0.0, %v8849
      %v8851 = vpop.f32.mrf.mxu0
      %v8852 = vadd.f32 0.0, %v8851
      %8853 = vmatmul.bf16.gmra.mxu0 %v8820
      %v8854 = vpop.f32.mrf.mxu0
      %v8855 = vadd.f32 0.0, %v8854
      %v8856 = vpop.f32.mrf.mxu0
      %v8857 = vadd.f32 0.0, %v8856
      %8858 = vmatmul.bf16.gmra.mxu0 %v8823
      %v8859 = vpop.f32.mrf.mxu0
      %v8860 = vadd.f32 0.0, %v8859
      %v8861 = vpop.f32.mrf.mxu0
      %v8862 = vadd.f32 0.0, %v8861
      %8863 = vmatmul.bf16.gmra.mxu0 %v8826
      %v8864 = vpop.f32.mrf.mxu0
      %v8865 = vadd.f32 0.0, %v8864
      %v8866 = vpop.f32.mrf.mxu0
      %v8867 = vadd.f32 0.0, %v8866
      %8868 = vmatmul.bf16.gmra.mxu0 %v8829
      %v8869 = vpop.f32.mrf.mxu0
      %v8870 = vadd.f32 0.0, %v8869
      %v8871 = vpop.f32.mrf.mxu0
      %v8872 = vadd.f32 0.0, %v8871
      %8873 = vmatmul.bf16.gmra.mxu0 %v8832
      %v8874 = vpop.f32.mrf.mxu0
      %v8875 = vadd.f32 0.0, %v8874
      %v8876 = vpop.f32.mrf.mxu0
      %v8877 = vadd.f32 0.0, %v8876
      %8878 = vmatmul.bf16.gmra.mxu0 %v8835
      %v8879 = vpop.f32.mrf.mxu0
      %v8880 = vadd.f32 0.0, %v8879
      %v8881 = vpop.f32.mrf.mxu0
      %v8882 = vadd.f32 0.0, %v8881
      %8883 = vmatmul.bf16.gmra.mxu0 %v8838
      %v8884 = vpop.f32.mrf.mxu0
      %v8885 = vadd.f32 0.0, %v8884
      %v8886 = vpop.f32.mrf.mxu0
      %8887 = vdwg.mxu0
      %v8888 = vadd.f32 %v8782, %v8850
      %v8889 = vadd.f32 %v8783, %v8852
      %v8890 = vadd.f32 %v8784, %v8855
      %v8891 = vadd.f32 %v8785, %v8857
      %v8892 = vadd.f32 %v8786, %v8860
      %v8893 = vadd.f32 %v8787, %v8862
      %v8894 = vadd.f32 %v8788, %v8865
      %v8895 = vadd.f32 %v8789, %v8867
      %v8896 = vadd.f32 %v8790, %v8870
      %v8897 = vadd.f32 %v8791, %v8872
      %v8898 = vadd.f32 %v8792, %v8875
      %v8899 = vadd.f32 %v8793, %v8877
      %v8900 = vadd.f32 %v8794, %v8880
      %v8901 = vadd.f32 %v8795, %v8882
      %v8902 = vadd.f32 %v8796, %v8885
      %8903 = vrot.lane.b32.xlu0 %v8381, 48
      %v8904 = vpop.permute.xlu0 %8903
      %8905 = vrot.lane.b32.xlu0 %v8382, 48
      %v8906 = vpop.permute.xlu0 %8905
      %8907 = vrot.lane.b32.xlu0 %v8383, 48
      %v8908 = vpop.permute.xlu0 %8907
      %8909 = vrot.lane.b32.xlu0 %v8384, 48
      %v8910 = vpop.permute.xlu0 %8909
      %8911 = vrot.lane.b32.xlu0 %v8385, 48
      %v8912 = vpop.permute.xlu0 %8911
      %8913 = vrot.lane.b32.xlu0 %v8386, 48
      %v8914 = vpop.permute.xlu0 %8913
      %8915 = vrot.lane.b32.xlu0 %v8387, 48
      %v8916 = vpop.permute.xlu0 %8915
      %8917 = vrot.lane.b32.xlu0 %v8388, 48
      %v8918 = vpop.permute.xlu0 %8917
      %8919 = vrot.lane.b32.xlu0 %v6665, 107
      %v8920 = vpop.permute.xlu0 %8919
      %v8923 = vsel %vm6669, %v8904, 0
      %v8926 = vsel %vm6669, %v8906, 0
      %v8929 = vsel %vm6669, %v8908, 0
      %v8932 = vsel %vm6669, %v8910, 0
      %v8935 = vsel %vm6669, %v8912, 0
      %v8938 = vsel %vm6669, %v8914, 0
      %v8941 = vsel %vm6669, %v8916, 0
      %v8944 = vsel %vm6669, %v8918, 0
      %8946 = vmatpush.bf16.msra.mxu0 0
      %8947 = vmatpush.bf16.msra.mxu0 0
      %8948 = vmatpush.bf16.msra.mxu0 0
      %8949 = vmatpush.bf16.msra.mxu0 0
      %8950 = vmatpush.bf16.msra.mxu0 0
      %8951 = vmatpush.bf16.msra.mxu0 0
      %8952 = vmatpush.bf16.msra.mxu0 0
      %8953 = vmatpush.bf16.msra.mxu0 %v8920
      %8954 = vmatmul.bf16.gmra.mxu0 %v8923
      %v8955 = vpop.f32.mrf.mxu0
      %v8956 = vadd.f32 0.0, %v8955
      %v8957 = vpop.f32.mrf.mxu0
      %v8958 = vadd.f32 0.0, %v8957
      %8959 = vmatmul.bf16.gmra.mxu0 %v8926
      %v8960 = vpop.f32.mrf.mxu0
      %v8961 = vadd.f32 0.0, %v8960
      %v8962 = vpop.f32.mrf.mxu0
      %v8963 = vadd.f32 0.0, %v8962
      %8964 = vmatmul.bf16.gmra.mxu0 %v8929
      %v8965 = vpop.f32.mrf.mxu0
      %v8966 = vadd.f32 0.0, %v8965
      %v8967 = vpop.f32.mrf.mxu0
      %v8968 = vadd.f32 0.0, %v8967
      %8969 = vmatmul.bf16.gmra.mxu0 %v8932
      %v8970 = vpop.f32.mrf.mxu0
      %v8971 = vadd.f32 0.0, %v8970
      %v8972 = vpop.f32.mrf.mxu0
      %v8973 = vadd.f32 0.0, %v8972
      %8974 = vmatmul.bf16.gmra.mxu0 %v8935
      %v8975 = vpop.f32.mrf.mxu0
      %v8976 = vadd.f32 0.0, %v8975
      %v8977 = vpop.f32.mrf.mxu0
      %v8978 = vadd.f32 0.0, %v8977
      %8979 = vmatmul.bf16.gmra.mxu0 %v8938
      %v8980 = vpop.f32.mrf.mxu0
      %v8981 = vadd.f32 0.0, %v8980
      %v8982 = vpop.f32.mrf.mxu0
      %v8983 = vadd.f32 0.0, %v8982
      %8984 = vmatmul.bf16.gmra.mxu0 %v8941
      %v8985 = vpop.f32.mrf.mxu0
      %v8986 = vadd.f32 0.0, %v8985
      %v8987 = vpop.f32.mrf.mxu0
      %v8988 = vadd.f32 0.0, %v8987
      %8989 = vmatmul.bf16.gmra.mxu0 %v8944
      %v8990 = vpop.f32.mrf.mxu0
      %v8991 = vadd.f32 0.0, %v8990
      %v8992 = vpop.f32.mrf.mxu0
      %8993 = vdwg.mxu0
      %v8994 = vadd.f32 %v8888, %v8956
      %v8995 = vadd.f32 %v8889, %v8958
      %v8996 = vadd.f32 %v8890, %v8961
      %v8997 = vadd.f32 %v8891, %v8963
      %v8998 = vadd.f32 %v8892, %v8966
      %v8999 = vadd.f32 %v8893, %v8968
      %v9000 = vadd.f32 %v8894, %v8971
      %v9001 = vadd.f32 %v8895, %v8973
      %v9002 = vadd.f32 %v8896, %v8976
      %v9003 = vadd.f32 %v8897, %v8978
      %v9004 = vadd.f32 %v8898, %v8981
      %v9005 = vadd.f32 %v8899, %v8983
      %v9006 = vadd.f32 %v8900, %v8986
      %v9007 = vadd.f32 %v8901, %v8988
      %v9008 = vadd.f32 %v8902, %v8991
      %9009 = vrot.lane.b32.xlu0 %v8381, 32
      %v9010 = vpop.permute.xlu0 %9009
      %9011 = vrot.lane.b32.xlu0 %v8382, 32
      %v9012 = vpop.permute.xlu0 %9011
      %9013 = vrot.lane.b32.xlu0 %v8383, 32
      %v9014 = vpop.permute.xlu0 %9013
      %9015 = vrot.lane.b32.xlu0 %v8384, 32
      %v9016 = vpop.permute.xlu0 %9015
      %9017 = vrot.lane.b32.xlu0 %v8385, 32
      %v9018 = vpop.permute.xlu0 %9017
      %9019 = vrot.lane.b32.xlu0 %v8386, 32
      %v9020 = vpop.permute.xlu0 %9019
      %9021 = vrot.lane.b32.xlu0 %v8387, 32
      %v9022 = vpop.permute.xlu0 %9021
      %9023 = vrot.lane.b32.xlu0 %v8388, 32
      %v9024 = vpop.permute.xlu0 %9023
      %9025 = vrot.lane.b32.xlu0 %v6665, 106
      %v9026 = vpop.permute.xlu0 %9025
      %v9029 = vsel %vm6669, %v9010, 0
      %v9032 = vsel %vm6669, %v9012, 0
      %v9035 = vsel %vm6669, %v9014, 0
      %v9038 = vsel %vm6669, %v9016, 0
      %v9041 = vsel %vm6669, %v9018, 0
      %v9044 = vsel %vm6669, %v9020, 0
      %v9047 = vsel %vm6669, %v9022, 0
      %v9050 = vsel %vm6669, %v9024, 0
      %9052 = vmatpush.bf16.msra.mxu0 0
      %9053 = vmatpush.bf16.msra.mxu0 0
      %9054 = vmatpush.bf16.msra.mxu0 0
      %9055 = vmatpush.bf16.msra.mxu0 0
      %9056 = vmatpush.bf16.msra.mxu0 0
      %9057 = vmatpush.bf16.msra.mxu0 0
      %9058 = vmatpush.bf16.msra.mxu0 0
      %9059 = vmatpush.bf16.msra.mxu0 %v9026
      %9060 = vmatmul.bf16.gmra.mxu0 %v9029
      %v9061 = vpop.f32.mrf.mxu0
      %v9062 = vadd.f32 0.0, %v9061
      %v9063 = vpop.f32.mrf.mxu0
      %v9064 = vadd.f32 0.0, %v9063
      %9065 = vmatmul.bf16.gmra.mxu0 %v9032
      %v9066 = vpop.f32.mrf.mxu0
      %v9067 = vadd.f32 0.0, %v9066
      %v9068 = vpop.f32.mrf.mxu0
      %v9069 = vadd.f32 0.0, %v9068
      %9070 = vmatmul.bf16.gmra.mxu0 %v9035
      %v9071 = vpop.f32.mrf.mxu0
      %v9072 = vadd.f32 0.0, %v9071
      %v9073 = vpop.f32.mrf.mxu0
      %v9074 = vadd.f32 0.0, %v9073
      %9075 = vmatmul.bf16.gmra.mxu0 %v9038
      %v9076 = vpop.f32.mrf.mxu0
      %v9077 = vadd.f32 0.0, %v9076
      %v9078 = vpop.f32.mrf.mxu0
      %v9079 = vadd.f32 0.0, %v9078
      %9080 = vmatmul.bf16.gmra.mxu0 %v9041
      %v9081 = vpop.f32.mrf.mxu0
      %v9082 = vadd.f32 0.0, %v9081
      %v9083 = vpop.f32.mrf.mxu0
      %v9084 = vadd.f32 0.0, %v9083
      %9085 = vmatmul.bf16.gmra.mxu0 %v9044
      %v9086 = vpop.f32.mrf.mxu0
      %v9087 = vadd.f32 0.0, %v9086
      %v9088 = vpop.f32.mrf.mxu0
      %v9089 = vadd.f32 0.0, %v9088
      %9090 = vmatmul.bf16.gmra.mxu0 %v9047
      %v9091 = vpop.f32.mrf.mxu0
      %v9092 = vadd.f32 0.0, %v9091
      %v9093 = vpop.f32.mrf.mxu0
      %v9094 = vadd.f32 0.0, %v9093
      %9095 = vmatmul.bf16.gmra.mxu0 %v9050
      %v9096 = vpop.f32.mrf.mxu0
      %v9097 = vadd.f32 0.0, %v9096
      %v9098 = vpop.f32.mrf.mxu0
      %9099 = vdwg.mxu0
      %v9100 = vadd.f32 %v8994, %v9062
      %v9101 = vadd.f32 %v8995, %v9064
      %v9102 = vadd.f32 %v8996, %v9067
      %v9103 = vadd.f32 %v8997, %v9069
      %v9104 = vadd.f32 %v8998, %v9072
      %v9105 = vadd.f32 %v8999, %v9074
      %v9106 = vadd.f32 %v9000, %v9077
      %v9107 = vadd.f32 %v9001, %v9079
      %v9108 = vadd.f32 %v9002, %v9082
      %v9109 = vadd.f32 %v9003, %v9084
      %v9110 = vadd.f32 %v9004, %v9087
      %v9111 = vadd.f32 %v9005, %v9089
      %v9112 = vadd.f32 %v9006, %v9092
      %v9113 = vadd.f32 %v9007, %v9094
      %v9114 = vadd.f32 %v9008, %v9097
      %9115 = vrot.lane.b32.xlu0 %v8381, 16
      %v9116 = vpop.permute.xlu0 %9115
      %9117 = vrot.lane.b32.xlu0 %v8382, 16
      %v9118 = vpop.permute.xlu0 %9117
      %9119 = vrot.lane.b32.xlu0 %v8383, 16
      %v9120 = vpop.permute.xlu0 %9119
      %9121 = vrot.lane.b32.xlu0 %v8384, 16
      %v9122 = vpop.permute.xlu0 %9121
      %9123 = vrot.lane.b32.xlu0 %v8385, 16
      %v9124 = vpop.permute.xlu0 %9123
      %9125 = vrot.lane.b32.xlu0 %v8386, 16
      %v9126 = vpop.permute.xlu0 %9125
      %9127 = vrot.lane.b32.xlu0 %v8387, 16
      %v9128 = vpop.permute.xlu0 %9127
      %9129 = vrot.lane.b32.xlu0 %v8388, 16
      %v9130 = vpop.permute.xlu0 %9129
      %9131 = vrot.lane.b32.xlu0 %v6665, 105
      %v9132 = vpop.permute.xlu0 %9131
      %v9135 = vsel %vm6669, %v9116, 0
      %v9138 = vsel %vm6669, %v9118, 0
      %v9141 = vsel %vm6669, %v9120, 0
      %v9144 = vsel %vm6669, %v9122, 0
      %v9147 = vsel %vm6669, %v9124, 0
      %v9150 = vsel %vm6669, %v9126, 0
      %v9153 = vsel %vm6669, %v9128, 0
      %v9156 = vsel %vm6669, %v9130, 0
      %9158 = vmatpush.bf16.msra.mxu0 0
      %9159 = vmatpush.bf16.msra.mxu0 0
      %9160 = vmatpush.bf16.msra.mxu0 0
      %9161 = vmatpush.bf16.msra.mxu0 0
      %9162 = vmatpush.bf16.msra.mxu0 0
      %9163 = vmatpush.bf16.msra.mxu0 0
      %9164 = vmatpush.bf16.msra.mxu0 0
      %9165 = vmatpush.bf16.msra.mxu0 %v9132
      %9166 = vmatmul.bf16.gmra.mxu0 %v9135
      %v9167 = vpop.f32.mrf.mxu0
      %v9168 = vadd.f32 0.0, %v9167
      %v9169 = vpop.f32.mrf.mxu0
      %v9170 = vadd.f32 0.0, %v9169
      %9171 = vmatmul.bf16.gmra.mxu0 %v9138
      %v9172 = vpop.f32.mrf.mxu0
      %v9173 = vadd.f32 0.0, %v9172
      %v9174 = vpop.f32.mrf.mxu0
      %v9175 = vadd.f32 0.0, %v9174
      %9176 = vmatmul.bf16.gmra.mxu0 %v9141
      %v9177 = vpop.f32.mrf.mxu0
      %v9178 = vadd.f32 0.0, %v9177
      %v9179 = vpop.f32.mrf.mxu0
      %v9180 = vadd.f32 0.0, %v9179
      %9181 = vmatmul.bf16.gmra.mxu0 %v9144
      %v9182 = vpop.f32.mrf.mxu0
      %v9183 = vadd.f32 0.0, %v9182
      %v9184 = vpop.f32.mrf.mxu0
      %v9185 = vadd.f32 0.0, %v9184
      %9186 = vmatmul.bf16.gmra.mxu0 %v9147
      %v9187 = vpop.f32.mrf.mxu0
      %v9188 = vadd.f32 0.0, %v9187
      %v9189 = vpop.f32.mrf.mxu0
      %v9190 = vadd.f32 0.0, %v9189
      %9191 = vmatmul.bf16.gmra.mxu0 %v9150
      %v9192 = vpop.f32.mrf.mxu0
      %v9193 = vadd.f32 0.0, %v9192
      %v9194 = vpop.f32.mrf.mxu0
      %v9195 = vadd.f32 0.0, %v9194
      %9196 = vmatmul.bf16.gmra.mxu0 %v9153
      %v9197 = vpop.f32.mrf.mxu0
      %v9198 = vadd.f32 0.0, %v9197
      %v9199 = vpop.f32.mrf.mxu0
      %v9200 = vadd.f32 0.0, %v9199
      %9201 = vmatmul.bf16.gmra.mxu0 %v9156
      %v9202 = vpop.f32.mrf.mxu0
      %v9203 = vadd.f32 0.0, %v9202
      %v9204 = vpop.f32.mrf.mxu0
      %9205 = vdwg.mxu0
      %v9206 = vadd.f32 %v9100, %v9168
      %v9207 = vadd.f32 %v9101, %v9170
      %v9208 = vadd.f32 %v9102, %v9173
      %v9209 = vadd.f32 %v9103, %v9175
      %v9210 = vadd.f32 %v9104, %v9178
      %v9211 = vadd.f32 %v9105, %v9180
      %v9212 = vadd.f32 %v9106, %v9183
      %v9213 = vadd.f32 %v9107, %v9185
      %v9214 = vadd.f32 %v9108, %v9188
      %v9215 = vadd.f32 %v9109, %v9190
      %v9216 = vadd.f32 %v9110, %v9193
      %v9217 = vadd.f32 %v9111, %v9195
      %v9218 = vadd.f32 %v9112, %v9198
      %v9219 = vadd.f32 %v9113, %v9200
      %v9220 = vadd.f32 %v9114, %v9203
      %v9221 = vld [vmem:[%s5 + $0xc] sm:$0xf]
      %v9222 = vld [vmem:[%s5 + $0x1c] sm:$0xf]
      %v9223 = vld [vmem:[%s5 + $0x2c] sm:$0xf]
      %v9224 = vld [vmem:[%s5 + $0x3c] sm:$0xf]
      %v9225 = vld [vmem:[%s5 + $0x4c] sm:$0xf]
      %v9226 = vld [vmem:[%s5 + $0x5c] sm:$0xf]
      %v9227 = vld [vmem:[%s5 + $0x6c] sm:$0xf]
      %v9228 = vld [vmem:[%s5 + $0x7c] sm:$0xf]
      %v9229 = vld [vmem:[%s5 + $0x8c] sm:$0xf]
      %v9230 = vld [vmem:[%s5 + $0x9c] sm:$0xf]
      %v9231 = vld [vmem:[%s5 + $0xac] sm:$0xf]
      %v9232 = vld [vmem:[%s5 + $0xbc] sm:$0xf]
      %v9233 = vld [vmem:[%s5 + $0xcc] sm:$0xf]
      %v9234 = vld [vmem:[%s5 + $0xdc] sm:$0xf]
      %v9235 = vld [vmem:[%s5 + $0xec] sm:$0xf]
      %v9251 = vunpack.c.l.b16 %v9221
      %v9252 = vunpack.c.l.b16 %v9222
      %v9253 = vunpack.c.l.b16 %v9223
      %v9254 = vunpack.c.l.b16 %v9224
      %v9255 = vunpack.c.l.b16 %v9225
      %v9256 = vunpack.c.l.b16 %v9226
      %v9257 = vunpack.c.l.b16 %v9227
      %v9258 = vunpack.c.l.b16 %v9228
      %v9259 = vunpack.c.l.b16 %v9229
      %v9260 = vunpack.c.l.b16 %v9230
      %v9261 = vunpack.c.l.b16 %v9231
      %v9262 = vunpack.c.l.b16 %v9232
      %v9263 = vunpack.c.l.b16 %v9233
      %v9264 = vunpack.c.l.b16 %v9234
      %v9265 = vunpack.c.l.b16 %v9235
      %v9266 = vpack.c.b16 %v9252, %v9251
      %v9267 = vpack.c.b16 %v9254, %v9253
      %v9268 = vpack.c.b16 %v9256, %v9255
      %v9269 = vpack.c.b16 %v9258, %v9257
      %v9270 = vpack.c.b16 %v9260, %v9259
      %v9271 = vpack.c.b16 %v9262, %v9261
      %v9272 = vpack.c.b16 %v9264, %v9263
      %v9273 = vpack.c.b16 %v9265, %v9265
      %9274 = vrot.lane.b32.xlu0 %v6665, 104
      %v9275 = vpop.permute.xlu0 %9274
      %v9278 = vsel %vm6669, %v9266, 0
      %v9281 = vsel %vm6669, %v9267, 0
      %v9284 = vsel %vm6669, %v9268, 0
      %v9287 = vsel %vm6669, %v9269, 0
      %v9290 = vsel %vm6669, %v9270, 0
      %v9293 = vsel %vm6669, %v9271, 0
      %v9296 = vsel %vm6669, %v9272, 0
      %v9299 = vsel %vm6669, %v9273, 0
      %9301 = vmatpush.bf16.msra.mxu0 0
      %9302 = vmatpush.bf16.msra.mxu0 0
      %9303 = vmatpush.bf16.msra.mxu0 0
      %9304 = vmatpush.bf16.msra.mxu0 0
      %9305 = vmatpush.bf16.msra.mxu0 0
      %9306 = vmatpush.bf16.msra.mxu0 0
      %9307 = vmatpush.bf16.msra.mxu0 0
      %9308 = vmatpush.bf16.msra.mxu0 %v9275
      %9309 = vmatmul.bf16.gmra.mxu0 %v9278
      %v9310 = vpop.f32.mrf.mxu0
      %v9311 = vadd.f32 0.0, %v9310
      %v9312 = vpop.f32.mrf.mxu0
      %v9313 = vadd.f32 0.0, %v9312
      %9314 = vmatmul.bf16.gmra.mxu0 %v9281
      %v9315 = vpop.f32.mrf.mxu0
      %v9316 = vadd.f32 0.0, %v9315
      %v9317 = vpop.f32.mrf.mxu0
      %v9318 = vadd.f32 0.0, %v9317
      %9319 = vmatmul.bf16.gmra.mxu0 %v9284
      %v9320 = vpop.f32.mrf.mxu0
      %v9321 = vadd.f32 0.0, %v9320
      %v9322 = vpop.f32.mrf.mxu0
      %v9323 = vadd.f32 0.0, %v9322
      %9324 = vmatmul.bf16.gmra.mxu0 %v9287
      %v9325 = vpop.f32.mrf.mxu0
      %v9326 = vadd.f32 0.0, %v9325
      %v9327 = vpop.f32.mrf.mxu0
      %v9328 = vadd.f32 0.0, %v9327
      %9329 = vmatmul.bf16.gmra.mxu0 %v9290
      %v9330 = vpop.f32.mrf.mxu0
      %v9331 = vadd.f32 0.0, %v9330
      %v9332 = vpop.f32.mrf.mxu0
      %v9333 = vadd.f32 0.0, %v9332
      %9334 = vmatmul.bf16.gmra.mxu0 %v9293
      %v9335 = vpop.f32.mrf.mxu0
      %v9336 = vadd.f32 0.0, %v9335
      %v9337 = vpop.f32.mrf.mxu0
      %v9338 = vadd.f32 0.0, %v9337
      %9339 = vmatmul.bf16.gmra.mxu0 %v9296
      %v9340 = vpop.f32.mrf.mxu0
      %v9341 = vadd.f32 0.0, %v9340
      %v9342 = vpop.f32.mrf.mxu0
      %v9343 = vadd.f32 0.0, %v9342
      %9344 = vmatmul.bf16.gmra.mxu0 %v9299
      %v9345 = vpop.f32.mrf.mxu0
      %v9346 = vadd.f32 0.0, %v9345
      %v9347 = vpop.f32.mrf.mxu0
      %9348 = vdwg.mxu0
      %v9349 = vadd.f32 %v9206, %v9311
      %v9350 = vadd.f32 %v9207, %v9313
      %v9351 = vadd.f32 %v9208, %v9316
      %v9352 = vadd.f32 %v9209, %v9318
      %v9353 = vadd.f32 %v9210, %v9321
      %v9354 = vadd.f32 %v9211, %v9323
      %v9355 = vadd.f32 %v9212, %v9326
      %v9356 = vadd.f32 %v9213, %v9328
      %v9357 = vadd.f32 %v9214, %v9331
      %v9358 = vadd.f32 %v9215, %v9333
      %v9359 = vadd.f32 %v9216, %v9336
      %v9360 = vadd.f32 %v9217, %v9338
      %v9361 = vadd.f32 %v9218, %v9341
      %v9362 = vadd.f32 %v9219, %v9343
      %v9363 = vadd.f32 %v9220, %v9346
      %v9364 = vld [vmem:[%s6] sm:$0xff]
      %v9365 = vld [vmem:[%s6 + $0x8] sm:$0xff]
      %v9366 = vld [vmem:[%s6 + $0x10] sm:$0xff]
      %v9367 = vld [vmem:[%s6 + $0x18] sm:$0xff]
      %v9368 = vld [vmem:[%s6 + $0x20] sm:$0xff]
      %v9369 = vld [vmem:[%s6 + $0x28] sm:$0xff]
      %v9370 = vld [vmem:[%s6 + $0x30] sm:$0xff]
      %v9371 = vld [vmem:[%s6 + $0x38] sm:$0xff]
      %v9372 = vld [vmem:[%s6 + $0x40] sm:$0xff]
      %v9373 = vld [vmem:[%s6 + $0x48] sm:$0xff]
      %v9374 = vld [vmem:[%s6 + $0x50] sm:$0xff]
      %v9375 = vld [vmem:[%s6 + $0x58] sm:$0xff]
      %v9376 = vld [vmem:[%s6 + $0x60] sm:$0xff]
      %v9377 = vld [vmem:[%s6 + $0x68] sm:$0xff]
      %v9378 = vld [vmem:[%s6 + $0x70] sm:$0xff]
      %9380 = vset.pattern.permute.xlu0 0
      %9381 = vperm.xlu0 %9380, %v9364
      %v9382 = vpop.permute.xlu0 %9381
      %9385 = vset.pattern.permute.xlu0 0
      %9386 = vperm.xlu0 %9385, %v9365
      %v9387 = vpop.permute.xlu0 %9386
      %9390 = vset.pattern.permute.xlu0 0
      %9391 = vperm.xlu0 %9390, %v9366
      %v9392 = vpop.permute.xlu0 %9391
      %9395 = vset.pattern.permute.xlu0 0
      %9396 = vperm.xlu0 %9395, %v9367
      %v9397 = vpop.permute.xlu0 %9396
      %9400 = vset.pattern.permute.xlu0 0
      %9401 = vperm.xlu0 %9400, %v9368
      %v9402 = vpop.permute.xlu0 %9401
      %9405 = vset.pattern.permute.xlu0 0
      %9406 = vperm.xlu0 %9405, %v9369
      %v9407 = vpop.permute.xlu0 %9406
      %9410 = vset.pattern.permute.xlu0 0
      %9411 = vperm.xlu0 %9410, %v9370
      %v9412 = vpop.permute.xlu0 %9411
      %9415 = vset.pattern.permute.xlu0 0
      %9416 = vperm.xlu0 %9415, %v9371
      %v9417 = vpop.permute.xlu0 %9416
      %9420 = vset.pattern.permute.xlu0 0
      %9421 = vperm.xlu0 %9420, %v9372
      %v9422 = vpop.permute.xlu0 %9421
      %9425 = vset.pattern.permute.xlu0 0
      %9426 = vperm.xlu0 %9425, %v9373
      %v9427 = vpop.permute.xlu0 %9426
      %9430 = vset.pattern.permute.xlu0 0
      %9431 = vperm.xlu0 %9430, %v9374
      %v9432 = vpop.permute.xlu0 %9431
      %9435 = vset.pattern.permute.xlu0 0
      %9436 = vperm.xlu0 %9435, %v9375
      %v9437 = vpop.permute.xlu0 %9436
      %9440 = vset.pattern.permute.xlu0 0
      %9441 = vperm.xlu0 %9440, %v9376
      %v9442 = vpop.permute.xlu0 %9441
      %9445 = vset.pattern.permute.xlu0 0
      %9446 = vperm.xlu0 %9445, %v9377
      %v9447 = vpop.permute.xlu0 %9446
      %9450 = vset.pattern.permute.xlu0 0
      %9451 = vperm.xlu0 %9450, %v9378
      %v9452 = vpop.permute.xlu0 %9451
      %v9454 = vadd.f32 %v9349, %v9382
      %v9455 = vadd.f32 %v9350, %v9387
      %v9456 = vadd.f32 %v9351, %v9392
      %v9457 = vadd.f32 %v9352, %v9397
      %v9458 = vadd.f32 %v9353, %v9402
      %v9459 = vadd.f32 %v9354, %v9407
      %v9460 = vadd.f32 %v9355, %v9412
      %v9461 = vadd.f32 %v9356, %v9417
      %v9462 = vadd.f32 %v9357, %v9422
      %v9463 = vadd.f32 %v9358, %v9427
      %v9464 = vadd.f32 %v9359, %v9432
      %v9465 = vadd.f32 %v9360, %v9437
      %v9466 = vadd.f32 %v9361, %v9442
      %v9467 = vadd.f32 %v9362, %v9447
      %v9468 = vadd.f32 %v9363, %v9452
      %v9469 = vtanh.pop %v9454
      %v9470 = vtanh.pop %v9455
      %v9471 = vtanh.pop %v9456
      %v9472 = vtanh.pop %v9457
      %v9473 = vtanh.pop %v9458
      %v9474 = vtanh.pop %v9459
      %v9475 = vtanh.pop %v9460
      %v9476 = vtanh.pop %v9461
      %v9477 = vtanh.pop %v9462
      %v9478 = vtanh.pop %v9463
      %v9479 = vtanh.pop %v9464
      %v9480 = vtanh.pop %v9465
      %v9481 = vtanh.pop %v9466
      %v9482 = vtanh.pop %v9467
      %v9483 = vtanh.pop %v9468
      %v9484 = vpack.c.bf16 %v9470, %v9469
      %v9485 = vpack.c.bf16 %v9472, %v9471
      %v9486 = vpack.c.bf16 %v9474, %v9473
      %v9487 = vpack.c.bf16 %v9476, %v9475
      %v9488 = vpack.c.bf16 %v9478, %v9477
      %v9489 = vpack.c.bf16 %v9480, %v9479
      %v9490 = vpack.c.bf16 %v9482, %v9481
      %v9491 = vpack.c.bf16 %v9483, %v9483
      %v9492 = vld [vmem:[%s7] sm:$0xf]
      %v9493 = vld [vmem:[%s7 + $0x4] sm:$0xf]
      %v9494 = vld [vmem:[%s7 + $0x8] sm:$0xf]
      %v9495 = vld [vmem:[%s7 + $0xc] sm:$0xf]
      %v9496 = vld [vmem:[%s7 + $0x10] sm:$0xf]
      %v9497 = vld [vmem:[%s7 + $0x14] sm:$0xf]
      %v9498 = vld [vmem:[%s7 + $0x18] sm:$0xf]
      %v9499 = vld [vmem:[%s7 + $0x1c] sm:$0xf]
      %v9500 = vld [vmem:[%s7 + $0x20] sm:$0xf]
      %v9501 = vld [vmem:[%s7 + $0x24] sm:$0xf]
      %v9502 = vld [vmem:[%s7 + $0x28] sm:$0x3]
      %v9503 = vld [vmem:[%s8] sm:$0xff]
      %v9504 = vld [vmem:[%s8 + $0x8] sm:$0xff]
      %v9505 = vld [vmem:[%s8 + $0x10] sm:$0xff]
      %v9506 = vld [vmem:[%s8 + $0x18] sm:$0xff]
      %v9507 = vld [vmem:[%s8 + $0x20] sm:$0xff]
      %v9508 = vld [vmem:[%s8 + $0x28] sm:$0xff]
      %v9509 = vld [vmem:[%s8 + $0x30] sm:$0xff]
      %v9510 = vld [vmem:[%s8 + $0x38] sm:$0xff]
      %v9511 = vld [vmem:[%s8 + $0x40] sm:$0xff]
      %v9512 = vld [vmem:[%s8 + $0x48] sm:$0xff]
      %v9513 = vld [vmem:[%s8 + $0x50] sm:$0xf]
      %v9525 = vunpack.c.l.b16 %v9492
      %v9526 = vunpack.c.l.b16 %v9493
      %v9527 = vunpack.c.l.b16 %v9494
      %v9528 = vunpack.c.l.b16 %v9495
      %v9529 = vunpack.c.l.b16 %v9496
      %v9530 = vunpack.c.l.b16 %v9497
      %v9531 = vunpack.c.l.b16 %v9498
      %v9532 = vunpack.c.l.b16 %v9499
      %v9533 = vunpack.c.l.b16 %v9500
      %v9534 = vunpack.c.l.b16 %v9501
      %v9535 = vunpack.c.l.b16 %v9502
      %v9536 = vpack.c.b16 %v9526, %v9525
      %v9537 = vpack.c.b16 %v9528, %v9527
      %v9538 = vpack.c.b16 %v9530, %v9529
      %v9539 = vpack.c.b16 %v9532, %v9531
      %v9540 = vpack.c.b16 %v9534, %v9533
      %v9541 = vpack.c.b16 %v9535, %v9535
      %vm9542 = vcmask 982016
      %v9544 = vsel %vm9542, %v9536, 0
      %v9547 = vsel %vm9542, %v9537, 0
      %v9550 = vsel %vm9542, %v9538, 0
      %v9553 = vsel %vm9542, %v9539, 0
      %v9556 = vsel %vm9542, %v9540, 0
      %v9559 = vsel %vm9542, %v9541, 0
      %vm9561 = vcmask 1043456
      %v9563 = vsel %vm9561, %v9491, 0
      %9565 = vmatpush.bf16.msra.mxu0 %v9563
      %9566 = vmatpush.bf16.msra.mxu0 %v9490
      %9567 = vmatpush.bf16.msra.mxu0 %v9489
      %9568 = vmatpush.bf16.msra.mxu0 %v9488
      %9569 = vmatpush.bf16.msra.mxu0 %v9487
      %9570 = vmatpush.bf16.msra.mxu0 %v9486
      %9571 = vmatpush.bf16.msra.mxu0 %v9485
      %9572 = vmatpush.bf16.msra.mxu0 %v9484
      %9573 = vmatmul.bf16.gmra.mxu0 %v9544
      %v9574 = vpop.f32.mrf.mxu0
      %v9575 = vadd.f32 %v9503, %v9574
      %v9576 = vpop.f32.mrf.mxu0
      %v9577 = vadd.f32 %v9504, %v9576
      %9578 = vmatmul.bf16.gmra.mxu0 %v9547
      %v9579 = vpop.f32.mrf.mxu0
      %v9580 = vadd.f32 %v9505, %v9579
      %v9581 = vpop.f32.mrf.mxu0
      %v9582 = vadd.f32 %v9506, %v9581
      %9583 = vmatmul.bf16.gmra.mxu0 %v9550
      %v9584 = vpop.f32.mrf.mxu0
      %v9585 = vadd.f32 %v9507, %v9584
      %v9586 = vpop.f32.mrf.mxu0
      %v9587 = vadd.f32 %v9508, %v9586
      %9588 = vmatmul.bf16.gmra.mxu0 %v9553
      %v9589 = vpop.f32.mrf.mxu0
      %v9590 = vadd.f32 %v9509, %v9589
      %v9591 = vpop.f32.mrf.mxu0
      %v9592 = vadd.f32 %v9510, %v9591
      %9593 = vmatmul.bf16.gmra.mxu0 %v9556
      %v9594 = vpop.f32.mrf.mxu0
      %v9595 = vadd.f32 %v9511, %v9594
      %v9596 = vpop.f32.mrf.mxu0
      %v9597 = vadd.f32 %v9512, %v9596
      %9598 = vmatmul.bf16.gmra.mxu0 %v9559
      %v9599 = vpop.f32.mrf.mxu0
      %v9600 = vadd.f32 %v9513, %v9599
      %v9601 = vpop.f32.mrf.mxu0
      %9602 = vdwg.mxu0
      %v9603 = vtanh.pop %v9575
      %v9604 = vtanh.pop %v9577
      %v9605 = vtanh.pop %v9580
      %v9606 = vtanh.pop %v9582
      %v9607 = vtanh.pop %v9585
      %v9608 = vtanh.pop %v9587
      %v9609 = vtanh.pop %v9590
      %v9610 = vtanh.pop %v9592
      %v9611 = vtanh.pop %v9595
      %v9612 = vtanh.pop %v9597
      %v9613 = vtanh.pop %v9600
      %v9614 = vld [vmem:[%s9] sm:$0xf]
      %v9615 = vld [vmem:[%s9 + $0x4] sm:$0xf]
      %v9616 = vpack.c.bf16 %v9604, %v9603
      %v9617 = vpack.c.bf16 %v9606, %v9605
      %v9618 = vpack.c.bf16 %v9608, %v9607
      %v9619 = vpack.c.bf16 %v9610, %v9609
      %v9620 = vpack.c.bf16 %v9612, %v9611
      %v9621 = vpack.c.bf16 %v9613, %v9613
      %v9622 = vld [vmem:[%s10] sm:$0xff]
      %v9623 = vld [vmem:[%s10 + $0x8] sm:$0xff]
      %v9626 = vunpack.c.l.b16 %v9614
      %v9627 = vunpack.c.l.b16 %v9615
      %v9628 = vpack.c.b16 %v9627, %v9626
      %vm9629 = vcmask 687104
      %v9631 = vsel %vm9629, %v9628, 0
      %v9634 = vsel %vm501, %v9621, 0
      %9636 = vmatpush.bf16.msra.mxu0 0
      %9637 = vmatpush.bf16.msra.mxu0 0
      %9638 = vmatpush.bf16.msra.mxu0 %v9634
      %9639 = vmatpush.bf16.msra.mxu0 %v9620
      %9640 = vmatpush.bf16.msra.mxu0 %v9619
      %9641 = vmatpush.bf16.msra.mxu0 %v9618
      %9642 = vmatpush.bf16.msra.mxu0 %v9617
      %9643 = vmatpush.bf16.msra.mxu0 %v9616
      %9644 = vmatmul.bf16.gmra.mxu0 %v9631
      %v9645 = vpop.f32.mrf.mxu0
      %v9646 = vadd.f32 %v9622, %v9645
      %v9647 = vpop.f32.mrf.mxu0
      %v9648 = vadd.f32 %v9623, %v9647
      %9649 = vdwg.mxu0
      %v9650 = vmax.f32 %v9646, %v9648
      %v9652 = vrot.slane %v9650, 4
      %v9654 = vmax.f32 %v9650, %v9652
      %v9656 = vrot.slane %v9654, 2
      %v9658 = vmax.f32 %v9654, %v9656
      %v9660 = vrot.slane %v9658, 1
      %v9662 = vmax.f32 %v9658, %v9660
      %v9663 = vperm.slane %v9662, 0
      %v9664 = vsub.f32 %v9646, %v9663
      %v9665 = vsub.f32 %v9648, %v9663
      %v9666 = vmul.f32 %v9664, 1.442695
      %v9667 = vpow.pop %v9666
      %v9668 = vmul.f32 %v9665, 1.442695
      %v9669 = vpow.pop %v9668
      %v9670 = vadd.f32 %v9667, %v9669
      %v9672 = vrot.slane %v9670, 4
      %v9674 = vadd.f32 %v9670, %v9672
      %v9676 = vrot.slane %v9674, 2
      %v9678 = vadd.f32 %v9674, %v9676
      %v9680 = vrot.slane %v9678, 1
      %v9682 = vadd.f32 %v9678, %v9680
      %v9683 = vrcp.pop %v9682
      %v9684 = vmul.f32 %v9682, %v9683
      %v9685 = vsub.f32 2.0, %v9684
      %v9686 = vmul.f32 %v9683, %v9685
      %v9687 = vperm.slane %v9686, 0
      %v9688 = vmul.f32 %v9667, %v9687
      %v9689 = vmul.f32 %v9669, %v9687
      %vm9690 = vcmask 7168
      %9691 = vst.msk [vmem:[%s440] sm:$0xff] %vm9690, %v9688
      %9692 = vst.msk [vmem:[%s440 + $0x8] sm:$0xff] %vm9690, %v9689
      %p9693 = scmp.lt.s32.totalorder %s24, 1
      %s9694 = scalar_select %p9693, %s24, 1
      %s9695 = smul.addr %s9694, 2
      %s9696 = smul.addr %s9695, 8
      %s9697 = scalar_lea.vmem %s13, %s9696
      // Predicated region
      $region73: #{lenet5_forward.1} parent=71 // pred_check
        %p9698 = pneg %p320
      $region74: #{lenet5_forward.1} parent=71 // pred_check_branch
        %9700 = sbr.rel (%p9698) target = $region76
      $region75: #{lenet5_forward.1} parent=71 // pred_region
        _
      $region76: #{lenet5_forward.1} parent=71 // pred_fallthru
        _
    $region72: #{lenet5_forward.1} parent=5 // pred_fallthru
      _
    %p9701 = scmp.le.s32.totalorder 2, %s19
    // Predicated region
    $region77: #{lenet5_forward.1} parent=5 // pred_check
      %p9702 = pneg %p9701
    $region78: #{lenet5_forward.1} parent=5 // pred_check_branch
      %9704 = sbr.rel (%p9702) target = $region80
    $region79: #{lenet5_forward.1} parent=5 // pred_region
      %s9705 = ssub.s32 %s19, 2
      // Predicated region
      $region81: #{lenet5_forward.1} parent=79 // pred_check
        %p9706 = pneg %p326
      $region82: #{lenet5_forward.1} parent=79 // pred_check_branch
        %9708 = sbr.rel (%p9706) target = $region84
      $region83: #{lenet5_forward.1} parent=79 // pred_region
        %p9709 = scmp.lt.s32.totalorder %s25, 1
        %s9710 = scalar_select %p9709, %s25, 1
        %s9711 = smul.addr %s9710, 2
        %s9712 = smul.addr %s9711, 8
        %s9713 = scalar_lea.vmem %s13, %s9712
      $region84: #{lenet5_forward.1} parent=79 // pred_fallthru
        _
    $region80: #{lenet5_forward.1} parent=5 // pred_fallthru
      _
  $region6: #{lenet5_forward.1} parent=0 // loop_footer
    %s23 = sadd.s32 1, %s19
  $region7: #{lenet5_forward.1} parent=0 // loop_footer_branch
    %18 = sbr.rel target = $region3
  $region8: #{lenet5_forward.1} parent=0 // loop_exit
    _

</llo_original>
